<compile_context>
chip_gen: v6e
topology: v6e:2x2x1
jax: 0.10.0
libtpu: 0.0.40
codegen_flags: <defaults>
</compile_context>

<pallas_src>
import functools

import jax
import jax.numpy as jnp
from jax import lax
from jax.experimental import pallas as pl
from jax.experimental.pallas import tpu as pltpu


# ------------------------------ Fused kernel ---------------------------------
def _fused_kernel(x_ref, wbig_ref, wdw_ref, bias_ref, out_ref, y_scr,
                  *, P, Cin, Cout, K, stride, pad, H, Hp, Ho, Wo):
    # x_ref   : (1, Cin, H, W)           one input image, NCHW (no host transpose)
    # wbig_ref: (Cin, W, P*K*Wo*Cout)    block-diagonal pointwise+layout weights
    # wdw_ref : (P, K*K, Wo*Cout)        depthwise taps, tiled across Wo lanes
    # bias_ref: (1, Wo*Cout)             total bias, tiled across Wo lanes
    # out_ref : (1, Ho, Wo*Cout)         lane-dense output tile
    # y_scr   : (Hp, P*K*Wo*Cout)        VMEM scratch: all paths' pointwise results
    WoC = Wo * Cout
    lane_w = P * K * WoC

    # h-side zero padding rows of the scratch.  (The w-side padding columns are
    # produced as exact zeros by the block-diagonal matmul below.)
    if pad > 0:
        y_scr[0:pad, :] = jnp.zeros((pad, lane_w), jnp.float32)
        y_scr[Hp - pad:Hp, :] = jnp.zeros((pad, lane_w), jnp.float32)

    # ---- pointwise 1x1 convs of ALL paths in one shot (MXU) ------------------
    # y[h, ((p*K+kw)*Wo+wo)*Cout+co] = sum_ci x[ci,h, wo*stride+kw-pad] * wpw[p,co,ci]
    y = jnp.dot(x_ref[0, 0, :, :], wbig_ref[0],
                precision=lax.Precision.HIGHEST,
                preferred_element_type=jnp.float32)
    for ci in range(1, Cin):
        y = y + jnp.dot(x_ref[0, ci, :, :], wbig_ref[ci],
                        precision=lax.Precision.HIGHEST,
                        preferred_element_type=jnp.float32)
    y_scr[pad:pad + H, :] = y            # stays in VMEM; never touches HBM

    # ---- depthwise KxK convs, summed across (unrolled) paths (VPU) -----------
    acc = jnp.broadcast_to(bias_ref[...], (Ho, WoC))      # init with total bias
    for p in range(P):
        for kh in range(K):
            for kw in range(K):
                lane0 = (p * K + kw) * WoC                 # 128-aligned at test shape
                if stride == 1:
                    patch = y_scr[kh:kh + Ho, lane0:lane0 + WoC]
                else:
                    # strided ref load over rows; kw/stride along w was already
                    # folded into the wbig lane layout.
                    patch = y_scr[pl.ds(kh, Ho, stride), pl.ds(lane0, WoC)]
                w_tap = wdw_ref[p, kh * K + kw:kh * K + kw + 1, :]   # (1, WoC)
                acc = acc + patch * w_tap
    out_ref[0, :, :] = acc               # single lane-dense store per image


# --------------------------------- Wrapper -----------------------------------
@functools.partial(jax.jit, static_argnames=("kernel", "pad", "stride"))
def multipath_conv(x_nchw, w_pw, w_dw, bias, *, kernel, pad, stride):
    """
    x_nchw: (N, Cin, H, W)
    w_pw  : (P, Cout, Cin)   per-path 1x1 conv weights (torch (Cout,Cin,1,1) squeezed)
    w_dw  : (P, Cout, K, K)  per-path depthwise weights (torch (Cout,1,K,K) squeezed)
    bias  : (P, Cout)        only row 0 nonzero (matches `bias=i==0 and bias`)
    returns (N, Cout, Ho, Wo) in NCHW.
    """
    P, Cout, Cin = w_pw.shape
    K = kernel
    N, _, H, W = x_nchw.shape
    Hp, Wp = H + 2 * pad, W + 2 * pad
    Ho = (Hp - K) // stride + 1
    Wo = (Wp - K) // stride + 1
    lane_w = P * K * Wo * Cout

    x = x_nchw.astype(jnp.float32)

    # ---- host-side weight packing (tiny tensors; fused under jit) -----------
    # wbig[ci, w, ((p*K+kw)*Wo + wo)*Cout + co] =
    #     w_pw[p, co, ci]  if  wo*stride + kw - pad == w  else 0
    wpw = w_pw.astype(jnp.float32)
    src_w = jnp.arange(K)[:, None] + jnp.arange(Wo)[None, :] * stride - pad   # (K, Wo)
    onehot = (src_w[:, :, None] == jnp.arange(W)[None, None, :]).astype(jnp.float32)
    wbig = jnp.einsum('kow,pcd->dwpkoc', onehot, wpw)        # (Cin, W, P, K, Wo, Cout)
    wbig = wbig.reshape(Cin, W, lane_w)

    # depthwise taps tiled across Wo so they broadcast over the collapsed lanes
    wdw_t = jnp.transpose(w_dw.astype(jnp.float32), (0, 2, 3, 1)).reshape(P, K * K, 1, Cout)
    wdw_tiled = jnp.broadcast_to(wdw_t, (P, K * K, Wo, Cout)).reshape(P, K * K, Wo * Cout)

    bias_tiled = jnp.tile(jnp.sum(bias.astype(jnp.float32), axis=0), Wo)[None, :]  # (1, Wo*Cout)

    kern = functools.partial(
        _fused_kernel, P=P, Cin=Cin, Cout=Cout, K=K,
        stride=stride, pad=pad, H=H, Hp=Hp, Ho=Ho, Wo=Wo)

    out = pl.pallas_call(
        kern,
        out_shape=jax.ShapeDtypeStruct((N, Ho, Wo * Cout), jnp.float32),
        grid_spec=pltpu.PrefetchScalarGridSpec(
            num_scalar_prefetch=0,
            grid=(N,),                                    # one image per step
            in_specs=[
                pl.BlockSpec((1, Cin, H, W), lambda n: (n, 0, 0, 0)),   # image (NCHW)
                pl.BlockSpec((Cin, W, lane_w), lambda n: (0, 0, 0)),    # pw weights (resident)
                pl.BlockSpec((P, K * K, Wo * Cout), lambda n: (0, 0, 0)),  # dw taps (resident)
                pl.BlockSpec((1, Wo * Cout), lambda n: (0, 0)),         # bias (resident)
            ],
            out_specs=pl.BlockSpec((1, Ho, Wo * Cout), lambda n: (n, 0, 0)),
            scratch_shapes=[pltpu.VMEM((Hp, lane_w), jnp.float32)],
        ),
        compiler_params=pltpu.CompilerParams(
            dimension_semantics=("parallel",),            # megacore on v7x
            vmem_limit_bytes=32 * 1024 * 1024,            # headroom on v7x's 64 MiB
        ),
    )(x, wbig, wdw_tiled, bias_tiled)

    out = out.reshape(N, Ho, Wo, Cout)
    return jnp.transpose(out, (0, 3, 1, 2))               # back to NCHW


# ----------------------------- Pure-JAX reference ----------------------------
def reference(x, w_pw, w_dw, bias, kernel, pad, stride):
    P, Cout, _ = w_pw.shape
    out = 0.0
    for p in range(P):
        y = lax.conv_general_dilated(
            x, w_pw[p][:, :, None, None], (1, 1), 'VALID',
            dimension_numbers=('NCHW', 'OIHW', 'NCHW'))
        z = lax.conv_general_dilated(
            y, w_dw[p][:, None, :, :], (stride, stride),
            [(pad, pad), (pad, pad)],
            dimension_numbers=('NCHW', 'OIHW', 'NCHW'),
            feature_group_count=Cout)
        z = z + bias[p][None, :, None, None]
        out = out + z
    return out


if __name__ == "__main__":
    # MultiPathConv(n=2, cin=4, cout=8, kernel=3, pad=1, stride=1, bias=True)
    N, Cin, Cout, H, W = 2, 4, 8, 16, 16
    P, K, PAD, STRIDE = 2, 3, 1, 1

    key = jax.random.PRNGKey(0)
    k1, k2, k3, k4 = jax.random.split(key, 4)
    x = jax.random.normal(k1, (N, Cin, H, W), jnp.float32)
    w_pw = jax.random.normal(k2, (P, Cout, Cin), jnp.float32) * 0.2
    w_dw = jax.random.normal(k3, (P, Cout, K, K), jnp.float32) * 0.2
    b0 = jax.random.normal(k4, (Cout,), jnp.float32) * 0.2
    bias = jnp.zeros((P, Cout), jnp.float32).at[0].set(b0)   # bias only on path 0

    out = multipath_conv(x, w_pw, w_dw, bias, kernel=K, pad=PAD, stride=STRIDE)
    out = jax.block_until_ready(out)

    ref = reference(x, w_pw, w_dw, bias, K, PAD, STRIDE)
    assert out.shape == ref.shape, (out.shape, ref.shape)
    # tolerance leaves margin for MXU f32 multi-pass rounding; still far below
    # any structural error (a single missing tap would be ~1e-1).
    assert jnp.allclose(out, ref, atol=1e-3, rtol=1e-3), \
        float(jnp.max(jnp.abs(out - ref)))
    print("KERNEL_OK")
</pallas_src>

<mosaic_0001>
module attributes {stable_mosaic.version = 11 : i64} {
  func.func @_fused_kernel(%arg0: i32, %arg1: memref<1x4x16x16xf32, #tpu.memory_space<vmem>>, %arg2: memref<4x16x768xf32, #tpu.memory_space<vmem>>, %arg3: memref<2x9x128xf32, #tpu.memory_space<vmem>>, %arg4: memref<1x128xf32, #tpu.memory_space<vmem>>, %arg5: memref<1x16x128xf32, #tpu.memory_space<vmem>>, %arg6: memref<18x768xf32, #tpu.memory_space<vmem>>) attributes {dimension_semantics = [#tpu.dimension_semantics<parallel>], iteration_bounds = array<i64: 2>, scalar_prefetch = 0 : i64, scratch_operands = 1 : i64, tpu.core_type = #tpu.core_type<tc>, window_params = [{transform_indices = @transform_0, window_bounds = array<i64: 1, 4, 16, 16>}, {pipeline_mode = #tpu.pipeline_mode<synchronous>, transform_indices = @transform_1, window_bounds = array<i64: 4, 16, 768>}, {pipeline_mode = #tpu.pipeline_mode<synchronous>, transform_indices = @transform_2, window_bounds = array<i64: 2, 9, 128>}, {pipeline_mode = #tpu.pipeline_mode<synchronous>, transform_indices = @transform_3, window_bounds = array<i64: 1, 128>}, {transform_indices = @transform_4, window_bounds = array<i64: 1, 16, 128>}]} {
    %cst = arith.constant 0.000000e+00 : f32
    %0 = vector.broadcast %cst : f32 to vector<1x768xf32>
    %c0 = arith.constant 0 : index
    %c0_0 = arith.constant 0 : index
    %1 = vector.load %arg6[%c0, %c0_0] : memref<18x768xf32, #tpu.memory_space<vmem>>, vector<1x768xf32>
    tpu.vector_store %arg6[%c0, %c0_0], %0 {strides = array<i32>} : memref<18x768xf32, #tpu.memory_space<vmem>>, vector<1x768xf32>,
    %cst_1 = arith.constant 0.000000e+00 : f32
    %2 = vector.broadcast %cst_1 : f32 to vector<1x768xf32>
    %c17 = arith.constant 17 : index
    %c0_2 = arith.constant 0 : index
    %3 = vector.load %arg6[%c17, %c0_2] : memref<18x768xf32, #tpu.memory_space<vmem>>, vector<1x768xf32>
    tpu.vector_store %arg6[%c17, %c0_2], %2 {strides = array<i32>} : memref<18x768xf32, #tpu.memory_space<vmem>>, vector<1x768xf32>,
    %c0_3 = arith.constant 0 : index
    %c0_4 = arith.constant 0 : index
    %c0_5 = arith.constant 0 : index
    %c0_6 = arith.constant 0 : index
    %4 = vector.load %arg1[%c0_3, %c0_4, %c0_5, %c0_6] : memref<1x4x16x16xf32, #tpu.memory_space<vmem>>, vector<1x1x16x16xf32>
    %5 = vector.shape_cast %4 : vector<1x1x16x16xf32> to vector<16x16xf32>
    %c0_7 = arith.constant 0 : index
    %c0_8 = arith.constant 0 : index
    %c0_9 = arith.constant 0 : index
    %6 = vector.load %arg2[%c0_7, %c0_8, %c0_9] : memref<4x16x768xf32, #tpu.memory_space<vmem>>, vector<1x16x768xf32>
    %7 = vector.shape_cast %6 : vector<1x16x768xf32> to vector<16x768xf32>
    %cst_10 = arith.constant dense<0.000000e+00> : vector<16x768xf32>
    %8 = tpu.matmul %5, %7, %cst_10 {dimension_numbers = #tpu.dot_dimension_numbers<[1], [0], [0], [1], [0, 0, 1, 1], [], []>, precision = #tpu.contract_precision<fp32>} : vector<16x16xf32>, vector<16x768xf32>, vector<16x768xf32> -> vector<16x768xf32>
    %c0_11 = arith.constant 0 : index
    %c1 = arith.constant 1 : index
    %c0_12 = arith.constant 0 : index
    %c0_13 = arith.constant 0 : index
    %9 = vector.load %arg1[%c0_11, %c1, %c0_12, %c0_13] : memref<1x4x16x16xf32, #tpu.memory_space<vmem>>, vector<1x1x16x16xf32>
    %10 = vector.shape_cast %9 : vector<1x1x16x16xf32> to vector<16x16xf32>
    %c1_14 = arith.constant 1 : index
    %c0_15 = arith.constant 0 : index
    %c0_16 = arith.constant 0 : index
    %11 = vector.load %arg2[%c1_14, %c0_15, %c0_16] : memref<4x16x768xf32, #tpu.memory_space<vmem>>, vector<1x16x768xf32>
    %12 = vector.shape_cast %11 : vector<1x16x768xf32> to vector<16x768xf32>
    %cst_17 = arith.constant dense<0.000000e+00> : vector<16x768xf32>
    %13 = tpu.matmul %10, %12, %cst_17 {dimension_numbers = #tpu.dot_dimension_numbers<[1], [0], [0], [1], [0, 0, 1, 1], [], []>, precision = #tpu.contract_precision<fp32>} : vector<16x16xf32>, vector<16x768xf32>, vector<16x768xf32> -> vector<16x768xf32>
    %14 = arith.addf %8, %13 : vector<16x768xf32>
    %c0_18 = arith.constant 0 : index
    %c2 = arith.constant 2 : index
    %c0_19 = arith.constant 0 : index
    %c0_20 = arith.constant 0 : index
    %15 = vector.load %arg1[%c0_18, %c2, %c0_19, %c0_20] : memref<1x4x16x16xf32, #tpu.memory_space<vmem>>, vector<1x1x16x16xf32>
    %16 = vector.shape_cast %15 : vector<1x1x16x16xf32> to vector<16x16xf32>
    %c2_21 = arith.constant 2 : index
    %c0_22 = arith.constant 0 : index
    %c0_23 = arith.constant 0 : index
    %17 = vector.load %arg2[%c2_21, %c0_22, %c0_23] : memref<4x16x768xf32, #tpu.memory_space<vmem>>, vector<1x16x768xf32>
    %18 = vector.shape_cast %17 : vector<1x16x768xf32> to vector<16x768xf32>
    %cst_24 = arith.constant dense<0.000000e+00> : vector<16x768xf32>
    %19 = tpu.matmul %16, %18, %cst_24 {dimension_numbers = #tpu.dot_dimension_numbers<[1], [0], [0], [1], [0, 0, 1, 1], [], []>, precision = #tpu.contract_precision<fp32>} : vector<16x16xf32>, vector<16x768xf32>, vector<16x768xf32> -> vector<16x768xf32>
    %20 = arith.addf %14, %19 : vector<16x768xf32>
    %c0_25 = arith.constant 0 : index
    %c3 = arith.constant 3 : index
    %c0_26 = arith.constant 0 : index
    %c0_27 = arith.constant 0 : index
    %21 = vector.load %arg1[%c0_25, %c3, %c0_26, %c0_27] : memref<1x4x16x16xf32, #tpu.memory_space<vmem>>, vector<1x1x16x16xf32>
    %22 = vector.shape_cast %21 : vector<1x1x16x16xf32> to vector<16x16xf32>
    %c3_28 = arith.constant 3 : index
    %c0_29 = arith.constant 0 : index
    %c0_30 = arith.constant 0 : index
    %23 = vector.load %arg2[%c3_28, %c0_29, %c0_30] : memref<4x16x768xf32, #tpu.memory_space<vmem>>, vector<1x16x768xf32>
    %24 = vector.shape_cast %23 : vector<1x16x768xf32> to vector<16x768xf32>
    %cst_31 = arith.constant dense<0.000000e+00> : vector<16x768xf32>
    %25 = tpu.matmul %22, %24, %cst_31 {dimension_numbers = #tpu.dot_dimension_numbers<[1], [0], [0], [1], [0, 0, 1, 1], [], []>, precision = #tpu.contract_precision<fp32>} : vector<16x16xf32>, vector<16x768xf32>, vector<16x768xf32> -> vector<16x768xf32>
    %26 = arith.addf %20, %25 : vector<16x768xf32>
    %c1_32 = arith.constant 1 : index
    %c0_33 = arith.constant 0 : index
    %27 = vector.load %arg6[%c1_32, %c0_33] : memref<18x768xf32, #tpu.memory_space<vmem>>, vector<16x768xf32>
    tpu.vector_store %arg6[%c1_32, %c0_33], %26 {strides = array<i32>} : memref<18x768xf32, #tpu.memory_space<vmem>>, vector<16x768xf32>,
    %c0_34 = arith.constant 0 : index
    %c0_35 = arith.constant 0 : index
    %28 = vector.load %arg4[%c0_34, %c0_35] : memref<1x128xf32, #tpu.memory_space<vmem>>, vector<1x128xf32>
    %29 = vector.shape_cast %28 : vector<1x128xf32> to vector<1x128xf32>
    %30 = vector.broadcast %29 : vector<1x128xf32> to vector<16x128xf32>
    %c0_36 = arith.constant 0 : index
    %c0_37 = arith.constant 0 : index
    %31 = vector.load %arg6[%c0_36, %c0_37] : memref<18x768xf32, #tpu.memory_space<vmem>>, vector<16x128xf32>
    %c0_38 = arith.constant 0 : index
    %c0_39 = arith.constant 0 : index
    %c0_40 = arith.constant 0 : index
    %32 = vector.load %arg3[%c0_38, %c0_39, %c0_40] : memref<2x9x128xf32, #tpu.memory_space<vmem>>, vector<1x1x128xf32>
    %33 = vector.shape_cast %32 : vector<1x1x128xf32> to vector<1x128xf32>
    %34 = vector.broadcast %33 : vector<1x128xf32> to vector<16x128xf32>
    %35 = arith.mulf %31, %34 : vector<16x128xf32>
    %36 = arith.addf %30, %35 : vector<16x128xf32>
    %c0_41 = arith.constant 0 : index
    %c128 = arith.constant 128 : index
    %37 = vector.load %arg6[%c0_41, %c128] : memref<18x768xf32, #tpu.memory_space<vmem>>, vector<16x128xf32>
    %c0_42 = arith.constant 0 : index
    %c1_43 = arith.constant 1 : index
    %c0_44 = arith.constant 0 : index
    %38 = vector.load %arg3[%c0_42, %c1_43, %c0_44] : memref<2x9x128xf32, #tpu.memory_space<vmem>>, vector<1x1x128xf32>
    %39 = vector.shape_cast %38 : vector<1x1x128xf32> to vector<1x128xf32>
    %40 = vector.broadcast %39 : vector<1x128xf32> to vector<16x128xf32>
    %41 = arith.mulf %37, %40 : vector<16x128xf32>
    %42 = arith.addf %36, %41 : vector<16x128xf32>
    %c0_45 = arith.constant 0 : index
    %c256 = arith.constant 256 : index
    %43 = vector.load %arg6[%c0_45, %c256] : memref<18x768xf32, #tpu.memory_space<vmem>>, vector<16x128xf32>
    %c0_46 = arith.constant 0 : index
    %c2_47 = arith.constant 2 : index
    %c0_48 = arith.constant 0 : index
    %44 = vector.load %arg3[%c0_46, %c2_47, %c0_48] : memref<2x9x128xf32, #tpu.memory_space<vmem>>, vector<1x1x128xf32>
    %45 = vector.shape_cast %44 : vector<1x1x128xf32> to vector<1x128xf32>
    %46 = vector.broadcast %45 : vector<1x128xf32> to vector<16x128xf32>
    %47 = arith.mulf %43, %46 : vector<16x128xf32>
    %48 = arith.addf %42, %47 : vector<16x128xf32>
    %c1_49 = arith.constant 1 : index
    %c0_50 = arith.constant 0 : index
    %49 = vector.load %arg6[%c1_49, %c0_50] : memref<18x768xf32, #tpu.memory_space<vmem>>, vector<16x128xf32>
    %c0_51 = arith.constant 0 : index
    %c3_52 = arith.constant 3 : index
    %c0_53 = arith.constant 0 : index
    %50 = vector.load %arg3[%c0_51, %c3_52, %c0_53] : memref<2x9x128xf32, #tpu.memory_space<vmem>>, vector<1x1x128xf32>
    %51 = vector.shape_cast %50 : vector<1x1x128xf32> to vector<1x128xf32>
    %52 = vector.broadcast %51 : vector<1x128xf32> to vector<16x128xf32>
    %53 = arith.mulf %49, %52 : vector<16x128xf32>
    %54 = arith.addf %48, %53 : vector<16x128xf32>
    %c1_54 = arith.constant 1 : index
    %c128_55 = arith.constant 128 : index
    %55 = vector.load %arg6[%c1_54, %c128_55] : memref<18x768xf32, #tpu.memory_space<vmem>>, vector<16x128xf32>
    %c0_56 = arith.constant 0 : index
    %c4 = arith.constant 4 : index
    %c0_57 = arith.constant 0 : index
    %56 = vector.load %arg3[%c0_56, %c4, %c0_57] : memref<2x9x128xf32, #tpu.memory_space<vmem>>, vector<1x1x128xf32>
    %57 = vector.shape_cast %56 : vector<1x1x128xf32> to vector<1x128xf32>
    %58 = vector.broadcast %57 : vector<1x128xf32> to vector<16x128xf32>
    %59 = arith.mulf %55, %58 : vector<16x128xf32>
    %60 = arith.addf %54, %59 : vector<16x128xf32>
    %c1_58 = arith.constant 1 : index
    %c256_59 = arith.constant 256 : index
    %61 = vector.load %arg6[%c1_58, %c256_59] : memref<18x768xf32, #tpu.memory_space<vmem>>, vector<16x128xf32>
    %c0_60 = arith.constant 0 : index
    %c5 = arith.constant 5 : index
    %c0_61 = arith.constant 0 : index
    %62 = vector.load %arg3[%c0_60, %c5, %c0_61] : memref<2x9x128xf32, #tpu.memory_space<vmem>>, vector<1x1x128xf32>
    %63 = vector.shape_cast %62 : vector<1x1x128xf32> to vector<1x128xf32>
    %64 = vector.broadcast %63 : vector<1x128xf32> to vector<16x128xf32>
    %65 = arith.mulf %61, %64 : vector<16x128xf32>
    %66 = arith.addf %60, %65 : vector<16x128xf32>
    %c2_62 = arith.constant 2 : index
    %c0_63 = arith.constant 0 : index
    %67 = vector.load %arg6[%c2_62, %c0_63] : memref<18x768xf32, #tpu.memory_space<vmem>>, vector<16x128xf32>
    %c0_64 = arith.constant 0 : index
    %c6 = arith.constant 6 : index
    %c0_65 = arith.constant 0 : index
    %68 = vector.load %arg3[%c0_64, %c6, %c0_65] : memref<2x9x128xf32, #tpu.memory_space<vmem>>, vector<1x1x128xf32>
    %69 = vector.shape_cast %68 : vector<1x1x128xf32> to vector<1x128xf32>
    %70 = vector.broadcast %69 : vector<1x128xf32> to vector<16x128xf32>
    %71 = arith.mulf %67, %70 : vector<16x128xf32>
    %72 = arith.addf %66, %71 : vector<16x128xf32>
    %c2_66 = arith.constant 2 : index
    %c128_67 = arith.constant 128 : index
    %73 = vector.load %arg6[%c2_66, %c128_67] : memref<18x768xf32, #tpu.memory_space<vmem>>, vector<16x128xf32>
    %c0_68 = arith.constant 0 : index
    %c7 = arith.constant 7 : index
    %c0_69 = arith.constant 0 : index
    %74 = vector.load %arg3[%c0_68, %c7, %c0_69] : memref<2x9x128xf32, #tpu.memory_space<vmem>>, vector<1x1x128xf32>
    %75 = vector.shape_cast %74 : vector<1x1x128xf32> to vector<1x128xf32>
    %76 = vector.broadcast %75 : vector<1x128xf32> to vector<16x128xf32>
    %77 = arith.mulf %73, %76 : vector<16x128xf32>
    %78 = arith.addf %72, %77 : vector<16x128xf32>
    %c2_70 = arith.constant 2 : index
    %c256_71 = arith.constant 256 : index
    %79 = vector.load %arg6[%c2_70, %c256_71] : memref<18x768xf32, #tpu.memory_space<vmem>>, vector<16x128xf32>
    %c0_72 = arith.constant 0 : index
    %c8 = arith.constant 8 : index
    %c0_73 = arith.constant 0 : index
    %80 = vector.load %arg3[%c0_72, %c8, %c0_73] : memref<2x9x128xf32, #tpu.memory_space<vmem>>, vector<1x1x128xf32>
    %81 = vector.shape_cast %80 : vector<1x1x128xf32> to vector<1x128xf32>
    %82 = vector.broadcast %81 : vector<1x128xf32> to vector<16x128xf32>
    %83 = arith.mulf %79, %82 : vector<16x128xf32>
    %84 = arith.addf %78, %83 : vector<16x128xf32>
    %c0_74 = arith.constant 0 : index
    %c384 = arith.constant 384 : index
    %85 = vector.load %arg6[%c0_74, %c384] : memref<18x768xf32, #tpu.memory_space<vmem>>, vector<16x128xf32>
    %c1_75 = arith.constant 1 : index
    %c0_76 = arith.constant 0 : index
    %c0_77 = arith.constant 0 : index
    %86 = vector.load %arg3[%c1_75, %c0_76, %c0_77] : memref<2x9x128xf32, #tpu.memory_space<vmem>>, vector<1x1x128xf32>
    %87 = vector.shape_cast %86 : vector<1x1x128xf32> to vector<1x128xf32>
    %88 = vector.broadcast %87 : vector<1x128xf32> to vector<16x128xf32>
    %89 = arith.mulf %85, %88 : vector<16x128xf32>
    %90 = arith.addf %84, %89 : vector<16x128xf32>
    %c0_78 = arith.constant 0 : index
    %c512 = arith.constant 512 : index
    %91 = vector.load %arg6[%c0_78, %c512] : memref<18x768xf32, #tpu.memory_space<vmem>>, vector<16x128xf32>
    %c1_79 = arith.constant 1 : index
    %c1_80 = arith.constant 1 : index
    %c0_81 = arith.constant 0 : index
    %92 = vector.load %arg3[%c1_79, %c1_80, %c0_81] : memref<2x9x128xf32, #tpu.memory_space<vmem>>, vector<1x1x128xf32>
    %93 = vector.shape_cast %92 : vector<1x1x128xf32> to vector<1x128xf32>
    %94 = vector.broadcast %93 : vector<1x128xf32> to vector<16x128xf32>
    %95 = arith.mulf %91, %94 : vector<16x128xf32>
    %96 = arith.addf %90, %95 : vector<16x128xf32>
    %c0_82 = arith.constant 0 : index
    %c640 = arith.constant 640 : index
    %97 = vector.load %arg6[%c0_82, %c640] : memref<18x768xf32, #tpu.memory_space<vmem>>, vector<16x128xf32>
    %c1_83 = arith.constant 1 : index
    %c2_84 = arith.constant 2 : index
    %c0_85 = arith.constant 0 : index
    %98 = vector.load %arg3[%c1_83, %c2_84, %c0_85] : memref<2x9x128xf32, #tpu.memory_space<vmem>>, vector<1x1x128xf32>
    %99 = vector.shape_cast %98 : vector<1x1x128xf32> to vector<1x128xf32>
    %100 = vector.broadcast %99 : vector<1x128xf32> to vector<16x128xf32>
    %101 = arith.mulf %97, %100 : vector<16x128xf32>
    %102 = arith.addf %96, %101 : vector<16x128xf32>
    %c1_86 = arith.constant 1 : index
    %c384_87 = arith.constant 384 : index
    %103 = vector.load %arg6[%c1_86, %c384_87] : memref<18x768xf32, #tpu.memory_space<vmem>>, vector<16x128xf32>
    %c1_88 = arith.constant 1 : index
    %c3_89 = arith.constant 3 : index
    %c0_90 = arith.constant 0 : index
    %104 = vector.load %arg3[%c1_88, %c3_89, %c0_90] : memref<2x9x128xf32, #tpu.memory_space<vmem>>, vector<1x1x128xf32>
    %105 = vector.shape_cast %104 : vector<1x1x128xf32> to vector<1x128xf32>
    %106 = vector.broadcast %105 : vector<1x128xf32> to vector<16x128xf32>
    %107 = arith.mulf %103, %106 : vector<16x128xf32>
    %108 = arith.addf %102, %107 : vector<16x128xf32>
    %c1_91 = arith.constant 1 : index
    %c512_92 = arith.constant 512 : index
    %109 = vector.load %arg6[%c1_91, %c512_92] : memref<18x768xf32, #tpu.memory_space<vmem>>, vector<16x128xf32>
    %c1_93 = arith.constant 1 : index
    %c4_94 = arith.constant 4 : index
    %c0_95 = arith.constant 0 : index
    %110 = vector.load %arg3[%c1_93, %c4_94, %c0_95] : memref<2x9x128xf32, #tpu.memory_space<vmem>>, vector<1x1x128xf32>
    %111 = vector.shape_cast %110 : vector<1x1x128xf32> to vector<1x128xf32>
    %112 = vector.broadcast %111 : vector<1x128xf32> to vector<16x128xf32>
    %113 = arith.mulf %109, %112 : vector<16x128xf32>
    %114 = arith.addf %108, %113 : vector<16x128xf32>
    %c1_96 = arith.constant 1 : index
    %c640_97 = arith.constant 640 : index
    %115 = vector.load %arg6[%c1_96, %c640_97] : memref<18x768xf32, #tpu.memory_space<vmem>>, vector<16x128xf32>
    %c1_98 = arith.constant 1 : index
    %c5_99 = arith.constant 5 : index
    %c0_100 = arith.constant 0 : index
    %116 = vector.load %arg3[%c1_98, %c5_99, %c0_100] : memref<2x9x128xf32, #tpu.memory_space<vmem>>, vector<1x1x128xf32>
    %117 = vector.shape_cast %116 : vector<1x1x128xf32> to vector<1x128xf32>
    %118 = vector.broadcast %117 : vector<1x128xf32> to vector<16x128xf32>
    %119 = arith.mulf %115, %118 : vector<16x128xf32>
    %120 = arith.addf %114, %119 : vector<16x128xf32>
    %c2_101 = arith.constant 2 : index
    %c384_102 = arith.constant 384 : index
    %121 = vector.load %arg6[%c2_101, %c384_102] : memref<18x768xf32, #tpu.memory_space<vmem>>, vector<16x128xf32>
    %c1_103 = arith.constant 1 : index
    %c6_104 = arith.constant 6 : index
    %c0_105 = arith.constant 0 : index
    %122 = vector.load %arg3[%c1_103, %c6_104, %c0_105] : memref<2x9x128xf32, #tpu.memory_space<vmem>>, vector<1x1x128xf32>
    %123 = vector.shape_cast %122 : vector<1x1x128xf32> to vector<1x128xf32>
    %124 = vector.broadcast %123 : vector<1x128xf32> to vector<16x128xf32>
    %125 = arith.mulf %121, %124 : vector<16x128xf32>
    %126 = arith.addf %120, %125 : vector<16x128xf32>
    %c2_106 = arith.constant 2 : index
    %c512_107 = arith.constant 512 : index
    %127 = vector.load %arg6[%c2_106, %c512_107] : memref<18x768xf32, #tpu.memory_space<vmem>>, vector<16x128xf32>
    %c1_108 = arith.constant 1 : index
    %c7_109 = arith.constant 7 : index
    %c0_110 = arith.constant 0 : index
    %128 = vector.load %arg3[%c1_108, %c7_109, %c0_110] : memref<2x9x128xf32, #tpu.memory_space<vmem>>, vector<1x1x128xf32>
    %129 = vector.shape_cast %128 : vector<1x1x128xf32> to vector<1x128xf32>
    %130 = vector.broadcast %129 : vector<1x128xf32> to vector<16x128xf32>
    %131 = arith.mulf %127, %130 : vector<16x128xf32>
    %132 = arith.addf %126, %131 : vector<16x128xf32>
    %c2_111 = arith.constant 2 : index
    %c640_112 = arith.constant 640 : index
    %133 = vector.load %arg6[%c2_111, %c640_112] : memref<18x768xf32, #tpu.memory_space<vmem>>, vector<16x128xf32>
    %c1_113 = arith.constant 1 : index
    %c8_114 = arith.constant 8 : index
    %c0_115 = arith.constant 0 : index
    %134 = vector.load %arg3[%c1_113, %c8_114, %c0_115] : memref<2x9x128xf32, #tpu.memory_space<vmem>>, vector<1x1x128xf32>
    %135 = vector.shape_cast %134 : vector<1x1x128xf32> to vector<1x128xf32>
    %136 = vector.broadcast %135 : vector<1x128xf32> to vector<16x128xf32>
    %137 = arith.mulf %133, %136 : vector<16x128xf32>
    %138 = arith.addf %132, %137 : vector<16x128xf32>
    %c0_116 = arith.constant 0 : index
    %c0_117 = arith.constant 0 : index
    %c0_118 = arith.constant 0 : index
    %139 = vector.load %arg5[%c0_116, %c0_117, %c0_118] : memref<1x16x128xf32, #tpu.memory_space<vmem>>, vector<1x16x128xf32>
    %140 = vector.shape_cast %139 : vector<1x16x128xf32> to vector<16x128xf32>
    %141 = vector.shape_cast %138 : vector<16x128xf32> to vector<1x16x128xf32>
    tpu.vector_store %arg5[%c0_116, %c0_117, %c0_118], %141 {strides = array<i32>} : memref<1x16x128xf32, #tpu.memory_space<vmem>>, vector<1x16x128xf32>,
    return
  }
  func.func @transform_0(%arg0: i32) -> (i32, i32, i32, i32) {
    %c0_i32 = arith.constant 0 : i32
    %c0_i32_0 = arith.constant 0 : i32
    %c0_i32_1 = arith.constant 0 : i32
    %c0_i32_2 = arith.constant 0 : i32
    return %arg0, %c0_i32, %c0_i32_0, %c0_i32_1 : i32, i32, i32, i32
  }
  func.func @transform_1(%arg0: i32) -> (i32, i32, i32) {
    %c0_i32 = arith.constant 0 : i32
    %c0_i32_0 = arith.constant 0 : i32
    %c0_i32_1 = arith.constant 0 : i32
    %c0_i32_2 = arith.constant 0 : i32
    return %c0_i32, %c0_i32_0, %c0_i32_1 : i32, i32, i32
  }
  func.func @transform_2(%arg0: i32) -> (i32, i32, i32) {
    %c0_i32 = arith.constant 0 : i32
    %c0_i32_0 = arith.constant 0 : i32
    %c0_i32_1 = arith.constant 0 : i32
    %c0_i32_2 = arith.constant 0 : i32
    return %c0_i32, %c0_i32_0, %c0_i32_1 : i32, i32, i32
  }
  func.func @transform_3(%arg0: i32) -> (i32, i32) {
    %c0_i32 = arith.constant 0 : i32
    %c0_i32_0 = arith.constant 0 : i32
    %c0_i32_1 = arith.constant 0 : i32
    return %c0_i32, %c0_i32_0 : i32, i32
  }
  func.func @transform_4(%arg0: i32) -> (i32, i32, i32) {
    %c0_i32 = arith.constant 0 : i32
    %c0_i32_0 = arith.constant 0 : i32
    %c0_i32_1 = arith.constant 0 : i32
    return %arg0, %c0_i32, %c0_i32_0 : i32, i32, i32
  }
}

</mosaic_0001>

<llo_original>
// kernel: tile.8
$region0: #{tile.8}
  #allocation0 [shape = 's32[1]{0}', space=sflag, size = 0x4, scoped, tag = 'scoped memory for tile.8']
  %s0 = inlined_call_operand.vmem [shape: f32[8], index: 0, kind: input, shape index: {}]
  %s1 = inlined_call_operand.vmem [shape: f32[16,8], index: 1, kind: output, shape index: {}]
  // Predicated region
  $region2: #{tile.8} parent=0 // pred_check
    _
  $region3: #{tile.8} parent=0 // pred_check_branch
    %3 = sbr.rel (0) target = $region5
  $region4: #{tile.8} parent=0 // pred_region
    _
  $region5: #{tile.8} parent=0 // pred_fallthru
    _
  %v4 = vld [vmem:[%s0] ss:$0 sm:$0xff]
  %5 = vst [vmem:[%s1] sm:$0xff] %v4
  %s6 = scalar_lea.vmem %s1, 8
  %7 = vst [vmem:[%s6] sm:$0xff] %v4

// kernel: tile.9
$region0: #{tile.9}
  %s0 = inlined_call_operand.vmem [shape: f32[16,8], index: 0, kind: input, shape index: {}]
  %s1 = inlined_call_operand.vmem [shape: f32[1,128], index: 1, kind: output, shape index: {}]
  $region1: #{tile.9} parent=0
    #allocation0 [shape = 'u8[4096]{0}', space=vmem, size = 0x1000, scoped, tag = 'scoped mem for output reshape']
    %v2 = vld [vmem:[%s0] sm:$0x1]
    %vm3 = vcmask 64512
    %4 = vst.msk [vmem:[#allocation0] sm:$0x1] %vm3, %v2
    %s5 = scalar_lea.vmem %s0, 15
    %v6 = vld [vmem:[%s5] sm:$0x1]
    %7 = vrot.lane.b32.xlu0 %v6, 120
    %v8 = vpop.permute.xlu0 %7
    %vm9 = vcmask 1048512
    %10 = vst.msk [vmem:[#allocation0] sm:$0x1] %vm9, %v8
    %s11 = scalar_lea.vmem %s0, 14
    %v12 = vld [vmem:[%s11] sm:$0x1]
    %13 = vrot.lane.b32.xlu0 %v12, 112
    %v14 = vpop.permute.xlu0 %13
    %vm15 = vcmask 982912
    %16 = vst.msk [vmem:[#allocation0] sm:$0x1] %vm15, %v14
    %s17 = scalar_lea.vmem %s0, 13
    %v18 = vld [vmem:[%s17] sm:$0x1]
    %19 = vrot.lane.b32.xlu0 %v18, 104
    %v20 = vpop.permute.xlu0 %19
    %vm21 = vcmask 917312
    %22 = vst.msk [vmem:[#allocation0] sm:$0x1] %vm21, %v20
    %s23 = scalar_lea.vmem %s0, 12
    %v24 = vld [vmem:[%s23] sm:$0x1]
    %25 = vrot.lane.b32.xlu0 %v24, 96
    %v26 = vpop.permute.xlu0 %25
    %vm27 = vcmask 851712
    %28 = vst.msk [vmem:[#allocation0] sm:$0x1] %vm27, %v26
    %s29 = scalar_lea.vmem %s0, 11
    %v30 = vld [vmem:[%s29] sm:$0x1]
    %31 = vrot.lane.b32.xlu0 %v30, 88
    %v32 = vpop.permute.xlu0 %31
    %vm33 = vcmask 786112
    %34 = vst.msk [vmem:[#allocation0] sm:$0x1] %vm33, %v32
    %s35 = scalar_lea.vmem %s0, 10
    %v36 = vld [vmem:[%s35] sm:$0x1]
    %37 = vrot.lane.b32.xlu0 %v36, 80
    %v38 = vpop.permute.xlu0 %37
    %vm39 = vcmask 720512
    %40 = vst.msk [vmem:[#allocation0] sm:$0x1] %vm39, %v38
    %s41 = scalar_lea.vmem %s0, 9
    %v42 = vld [vmem:[%s41] sm:$0x1]
    %43 = vrot.lane.b32.xlu0 %v42, 72
    %v44 = vpop.permute.xlu0 %43
    %vm45 = vcmask 654912
    %46 = vst.msk [vmem:[#allocation0] sm:$0x1] %vm45, %v44
    %s47 = scalar_lea.vmem %s0, 8
    %v48 = vld [vmem:[%s47] sm:$0x1]
    %49 = vrot.lane.b32.xlu0 %v48, 64
    %v50 = vpop.permute.xlu0 %49
    %vm51 = vcmask 589312
    %52 = vst.msk [vmem:[#allocation0] sm:$0x1] %vm51, %v50
    %s53 = scalar_lea.vmem %s0, 7
    %v54 = vld [vmem:[%s53] sm:$0x1]
    %55 = vrot.lane.b32.xlu0 %v54, 56
    %v56 = vpop.permute.xlu0 %55
    %vm57 = vcmask 523712
    %58 = vst.msk [vmem:[#allocation0] sm:$0x1] %vm57, %v56
    %s59 = scalar_lea.vmem %s0, 6
    %v60 = vld [vmem:[%s59] sm:$0x1]
    %61 = vrot.lane.b32.xlu0 %v60, 48
    %v62 = vpop.permute.xlu0 %61
    %vm63 = vcmask 458112
    %64 = vst.msk [vmem:[#allocation0] sm:$0x1] %vm63, %v62
    %s65 = scalar_lea.vmem %s0, 5
    %v66 = vld [vmem:[%s65] sm:$0x1]
    %67 = vrot.lane.b32.xlu0 %v66, 40
    %v68 = vpop.permute.xlu0 %67
    %vm69 = vcmask 392512
    %70 = vst.msk [vmem:[#allocation0] sm:$0x1] %vm69, %v68
    %s71 = scalar_lea.vmem %s0, 4
    %v72 = vld [vmem:[%s71] sm:$0x1]
    %73 = vrot.lane.b32.xlu0 %v72, 32
    %v74 = vpop.permute.xlu0 %73
    %vm75 = vcmask 326912
    %76 = vst.msk [vmem:[#allocation0] sm:$0x1] %vm75, %v74
    %s77 = scalar_lea.vmem %s0, 3
    %v78 = vld [vmem:[%s77] sm:$0x1]
    %79 = vrot.lane.b32.xlu0 %v78, 24
    %v80 = vpop.permute.xlu0 %79
    %vm81 = vcmask 261312
    %82 = vst.msk [vmem:[#allocation0] sm:$0x1] %vm81, %v80
    %s83 = scalar_lea.vmem %s0, 2
    %v84 = vld [vmem:[%s83] sm:$0x1]
    %85 = vrot.lane.b32.xlu0 %v84, 16
    %v86 = vpop.permute.xlu0 %85
    %vm87 = vcmask 195712
    %88 = vst.msk [vmem:[#allocation0] sm:$0x1] %vm87, %v86
    %s89 = scalar_lea.vmem %s0, 1
    %v90 = vld [vmem:[%s89] sm:$0x1]
    %91 = vrot.lane.b32.xlu0 %v90, 8
    %v92 = vpop.permute.xlu0 %91
    %vm93 = vcmask 130112
    %94 = vst.msk [vmem:[#allocation0] sm:$0x1] %vm93, %v92
    %s96 = sshll.u32 1, 1
    %s97 = ssub.s32 %s96, 1
    %v99 = vld [vmem:[#allocation0] sm:%s97]
    %s100 = sshll.u32 1, 1
    %s101 = ssub.s32 %s100, 1
    %102 = vst [vmem:[%s1] sm:%s101] %v99

// kernel: multipath_conv.1
$region0: #{multipath_conv.1}
  #allocation0 [shape = 'u32[]', space=smem, size = 0x4, offset = 0x4, fixed_abs, tag = 'smem constant byte address 0x4 - core index']
  #allocation1 [shape = 'u32[144,128]{1,0:T(1,128)}', space=vmem, size = 0x12000, scoped, tag = 'internal scratch']
  #allocation2 [shape = 'f32[18,768]{1,0:T(8,128)}', space=vmem, size = 0x12000, scoped, tag = 'scratch operand']
  %s0 = inlined_call_operand.vmem [shape: f32[2,4,16,16], index: 0, kind: input, shape index: {}]
  %s1 = inlined_call_operand.vmem [shape: f32[4,16,768], index: 1, kind: input, shape index: {}]
  %s2 = inlined_call_operand.vmem [shape: f32[2,9,128], index: 2, kind: input, shape index: {}]
  %s3 = inlined_call_operand.vmem [shape: f32[1,128], index: 3, kind: input, shape index: {}]
  %s4 = inlined_call_operand.vmem [shape: f32[2,16,128], index: 4, kind: output, shape index: {}]
  %s5 = sld [smem:[#allocation0]]
  $region49: #{multipath_conv.1} parent=0
    _
  %s7 = ssub.s32 1, %s5
  %s8 = scalar_select 0, %s7, %s5
  loop: start=0, step=1, limit=4
  $region2: #{multipath_conv.1} parent=0 // loop_pre_header
    _
  $region3: #{multipath_conv.1} parent=0 // loop_header
    %s10 = sphi 0, %s14
    %p11 = scmp.ge.s32.totalorder %s10, 4
    %s20 = sphi 0, %s22
    %s23 = sphi 0, %s20
    %s24 = sphi 0, %s23
    %s40 = sphi 0, %s24
    %s44 = sphi 0, %s44
    %s46 = sphi 0, %s44
    %s47 = sphi 0, %s46
    %s61 = sphi 0, %s47
    %s65 = sphi 0, %s65
    %s67 = sphi 0, %s65
    %s68 = sphi 0, %s67
    %s82 = sphi 0, %s68
    %s86 = sphi 0, %s86
    %s88 = sphi 0, %s86
    %s89 = sphi 0, %s88
    %s103 = sphi 0, %s89
    %s109 = sphi 0, %s111
    %s112 = sphi 0, %s109
    %s113 = sphi 0, %s112
    %s129 = sphi 0, %s113
  $region4: #{multipath_conv.1} parent=0 // loop_header_branch
    %13 = sbr.rel (%p11) target = $region8
  $region5: #{multipath_conv.1} parent=0 // loop_body
    %s15 = ssub.s32 %s10, 1
    %s16 = ssub.s32 %s10, 2
    %s17 = sadd.s32 %s10, 1
    %s18 = ssub.s32 %s10, %s17
    %p19 = scmp.eq.s32.totalorder %s18, 0
    %s21 = sadd.s32 %s20, 1
    %s22 = scalar_select %p19, %s20, %s21
    %p25 = pneg %p19
    %p26 = scmp.eq.s32.totalorder %s10, 1
    %p27 = por %p25, %p26
    %p28 = scmp.ne.s32.totalorder %s20, %s23
    %p29 = scmp.eq.s32.totalorder %s10, 0
    %p30 = por %p28, %p29
    %p31 = scmp.ne.s32.totalorder %s20, %s23
    %p32 = scmp.eq.s32.totalorder %s15, 1
    %p33 = por %p31, %p32
    %p34 = scmp.ne.s32.totalorder %s23, %s24
    %p35 = scmp.eq.s32.totalorder %s15, 0
    %p36 = por %p34, %p35
    %p37 = scmp.ne.s32.totalorder %s23, %s24
    %p38 = scmp.eq.s32.totalorder %s16, 1
    %p39 = por %p37, %p38
    %p41 = scmp.ne.s32.totalorder %s24, %s40
    %p42 = scmp.eq.s32.totalorder %s16, 0
    %p43 = por %p41, %p42
    %s45 = sadd.s32 %s44, 1
    %p48 = scmp.eq.s32.totalorder %s10, 1
    %p49 = scmp.ne.s32.totalorder %s44, %s46
    %p50 = scmp.eq.s32.totalorder %s10, 0
    %p51 = por %p49, %p50
    %p52 = scmp.ne.s32.totalorder %s44, %s46
    %p53 = scmp.eq.s32.totalorder %s15, 1
    %p54 = por %p52, %p53
    %p55 = scmp.ne.s32.totalorder %s46, %s47
    %p56 = scmp.eq.s32.totalorder %s15, 0
    %p57 = por %p55, %p56
    %p58 = scmp.ne.s32.totalorder %s46, %s47
    %p59 = scmp.eq.s32.totalorder %s16, 1
    %p60 = por %p58, %p59
    %p62 = scmp.ne.s32.totalorder %s47, %s61
    %p63 = scmp.eq.s32.totalorder %s16, 0
    %p64 = por %p62, %p63
    %s66 = sadd.s32 %s65, 1
    %p69 = scmp.eq.s32.totalorder %s10, 1
    %p70 = scmp.ne.s32.totalorder %s65, %s67
    %p71 = scmp.eq.s32.totalorder %s10, 0
    %p72 = por %p70, %p71
    %p73 = scmp.ne.s32.totalorder %s65, %s67
    %p74 = scmp.eq.s32.totalorder %s15, 1
    %p75 = por %p73, %p74
    %p76 = scmp.ne.s32.totalorder %s67, %s68
    %p77 = scmp.eq.s32.totalorder %s15, 0
    %p78 = por %p76, %p77
    %p79 = scmp.ne.s32.totalorder %s67, %s68
    %p80 = scmp.eq.s32.totalorder %s16, 1
    %p81 = por %p79, %p80
    %p83 = scmp.ne.s32.totalorder %s68, %s82
    %p84 = scmp.eq.s32.totalorder %s16, 0
    %p85 = por %p83, %p84
    %s87 = sadd.s32 %s86, 1
    %p90 = scmp.eq.s32.totalorder %s10, 1
    %p91 = scmp.ne.s32.totalorder %s86, %s88
    %p92 = scmp.eq.s32.totalorder %s10, 0
    %p93 = por %p91, %p92
    %p94 = scmp.ne.s32.totalorder %s86, %s88
    %p95 = scmp.eq.s32.totalorder %s15, 1
    %p96 = por %p94, %p95
    %p97 = scmp.ne.s32.totalorder %s88, %s89
    %p98 = scmp.eq.s32.totalorder %s15, 0
    %p99 = por %p97, %p98
    %p100 = scmp.ne.s32.totalorder %s88, %s89
    %p101 = scmp.eq.s32.totalorder %s16, 1
    %p102 = por %p100, %p101
    %p104 = scmp.ne.s32.totalorder %s89, %s103
    %p105 = scmp.eq.s32.totalorder %s16, 0
    %p106 = por %p104, %p105
    %s107 = ssub.s32 %s10, %s17
    %p108 = scmp.eq.s32.totalorder %s107, 0
    %s110 = sadd.s32 %s109, 1
    %s111 = scalar_select %p108, %s109, %s110
    %p114 = pneg %p108
    %p115 = scmp.eq.s32.totalorder %s10, 1
    %p116 = por %p114, %p115
    %p117 = scmp.ne.s32.totalorder %s109, %s112
    %p118 = scmp.eq.s32.totalorder %s10, 0
    %p119 = por %p117, %p118
    %p120 = scmp.ne.s32.totalorder %s109, %s112
    %p121 = scmp.eq.s32.totalorder %s15, 1
    %p122 = por %p120, %p121
    %p123 = scmp.ne.s32.totalorder %s112, %s113
    %p124 = scmp.eq.s32.totalorder %s15, 0
    %p125 = por %p123, %p124
    %p126 = scmp.ne.s32.totalorder %s112, %s113
    %p127 = scmp.eq.s32.totalorder %s16, 1
    %p128 = por %p126, %p127
    %p130 = scmp.ne.s32.totalorder %s113, %s129
    %p131 = scmp.eq.s32.totalorder %s16, 0
    %p132 = por %p130, %p131
    %p133 = scmp.le.s32.totalorder 1, %s10
    %p134 = scmp.lt.s32.totalorder %s10, 3
    %p135 = pnand %p133, %p134
    %p136 = pneg %p135
    // Predicated region
    $region9: #{multipath_conv.1} parent=5 // pred_check
      _
    $region10: #{multipath_conv.1} parent=5 // pred_check_branch
      %138 = sbr.rel (%p135) target = $region12
    $region11: #{multipath_conv.1} parent=5 // pred_region
      %s139 = ssub.s32 %s10, 1
      // Predicated region
      $region13: #{multipath_conv.1} parent=11 // pred_check
        %p140 = pneg %p57
      $region14: #{multipath_conv.1} parent=11 // pred_check_branch
        %142 = sbr.rel (%p140) target = $region16
      $region15: #{multipath_conv.1} parent=11 // pred_region
        _
      $region16: #{multipath_conv.1} parent=11 // pred_fallthru
        _
      // Predicated region
      $region17: #{multipath_conv.1} parent=11 // pred_check
        %p143 = pneg %p78
      $region18: #{multipath_conv.1} parent=11 // pred_check_branch
        %145 = sbr.rel (%p143) target = $region20
      $region19: #{multipath_conv.1} parent=11 // pred_region
        _
      $region20: #{multipath_conv.1} parent=11 // pred_fallthru
        _
      // Predicated region
      $region21: #{multipath_conv.1} parent=11 // pred_check
        %p146 = pneg %p99
      $region22: #{multipath_conv.1} parent=11 // pred_check_branch
        %148 = sbr.rel (%p146) target = $region24
      $region23: #{multipath_conv.1} parent=11 // pred_region
        _
      $region24: #{multipath_conv.1} parent=11 // pred_fallthru
        _
    $region12: #{multipath_conv.1} parent=5 // pred_fallthru
      _
    %p149 = scmp.lt.s32.totalorder %s10, 2
    // Predicated region
    $region25: #{multipath_conv.1} parent=5 // pred_check
      %p150 = pneg %p149
    $region26: #{multipath_conv.1} parent=5 // pred_check_branch
      %152 = sbr.rel (%p150) target = $region28
    $region27: #{multipath_conv.1} parent=5 // pred_region
      // Predicated region
      $region29: #{multipath_conv.1} parent=27 // pred_check
        %p153 = pneg %p30
      $region30: #{multipath_conv.1} parent=27 // pred_check_branch
        %155 = sbr.rel (%p153) target = $region32
      $region31: #{multipath_conv.1} parent=27 // pred_region
        %p156 = scmp.lt.s32.totalorder %s10, 1
        %s157 = scalar_select %p156, %s10, 1
        %s158 = smul.addr %s157, 8
        %s159 = smul.addr %s158, 8
        %s160 = scalar_lea.vmem %s0, %s159
      $region32: #{multipath_conv.1} parent=27 // pred_fallthru
        _
    $region28: #{multipath_conv.1} parent=5 // pred_fallthru
      _
    %p161 = scmp.le.s32.totalorder 1, %s10
    %p162 = scmp.lt.s32.totalorder %s10, 3
    %p163 = pnand %p161, %p162
    %p164 = pneg %p163
    // Predicated region
    $region33: #{multipath_conv.1} parent=5 // pred_check
      _
    $region34: #{multipath_conv.1} parent=5 // pred_check_branch
      %166 = sbr.rel (%p163) target = $region36
    $region35: #{multipath_conv.1} parent=5 // pred_region
      %s167 = ssub.s32 %s10, 1
      %p168 = scmp.lt.s32.totalorder %s15, 1
      %s169 = scalar_select %p168, %s15, 1
      %s170 = smul.addr %s169, 8
      %s171 = smul.addr %s170, 8
      %s172 = scalar_lea.vmem %s0, %s171
      %p173 = pneg %p36
      %p174 = pneg %p33
      %p175 = pneg %p57
      %p176 = pneg %p54
      %p177 = pneg %p78
      %p178 = pneg %p75
      %p179 = pneg %p99
      %p180 = pneg %p96
      %p181 = pneg %p125
      %p182 = pneg %p122
      %p183 = scmp.lt.s32.totalorder %s15, 1
      %s184 = scalar_select %p183, %s15, 1
      %s185 = smul.addr %s184, 2
      %s186 = smul.addr %s185, 8
      %s187 = scalar_lea.vmem %s4, %s186
      %p188 = scmp.lt.s32.totalorder %s15, 1
      %s189 = scalar_select %p188, %s15, 1
      %s190 = smul.addr %s189, 8
      %s191 = smul.addr %s190, 8
      %s192 = scalar_lea.vmem %s0, %s191
      %p193 = scmp.lt.s32.totalorder %s15, 1
      %s194 = scalar_select %p193, %s15, 1
      %s195 = smul.addr %s194, 2
      %s196 = smul.addr %s195, 8
      %s197 = scalar_lea.vmem %s4, %s196
      %v198 = vlaneseq
      %vm199 = vcmp.ge.s32.totalorder %v198, 0
      %vm200 = vcmp.lt.s32.totalorder %v198, 768
      %vm201 = vmand %vm199, %vm200
      %202 = vst.msk [vmem:[#allocation2] ss:$8 sm:$0xf] %vm201, 0.0
      %203 = vst.msk [vmem:[#allocation2] ss:$8 sm:$0x30] %vm201, 0.0
      %s204 = scalar_lea.vmem [#allocation2], 97
      %205 = vst.msk [vmem:[%s204] ss:$8 sm:$0xf] %vm201, 0.0
      %206 = vst.msk [vmem:[%s204] ss:$8 sm:$0x30] %vm201, 0.0
      %v207 = vld [vmem:[%s192] sm:$0xff]
      %v208 = vld [vmem:[%s192 + $0x8] sm:$0xff]
      %v209 = vld [vmem:[%s1] sm:$0xff]
      %v210 = vld [vmem:[%s1 + $0x8] sm:$0xff]
      %v211 = vld [vmem:[%s1 + $0x10] sm:$0xff]
      %v212 = vld [vmem:[%s1 + $0x18] sm:$0xff]
      %v213 = vld [vmem:[%s1 + $0x20] sm:$0xff]
      %v214 = vld [vmem:[%s1 + $0x28] sm:$0xff]
      %v215 = vld [vmem:[%s1 + $0x30] sm:$0xff]
      %v216 = vld [vmem:[%s1 + $0x38] sm:$0xff]
      %v217 = vld [vmem:[%s1 + $0x40] sm:$0xff]
      %v218 = vld [vmem:[%s1 + $0x48] sm:$0xff]
      %v219 = vld [vmem:[%s1 + $0x50] sm:$0xff]
      %v220 = vld [vmem:[%s1 + $0x58] sm:$0xff]
      %s221 = scalar_lea.vmem %s192, 16
      %v222 = vld [vmem:[%s221] sm:$0xff]
      %v223 = vld [vmem:[%s221 + $0x8] sm:$0xff]
      %s224 = scalar_lea.vmem %s1, 96
      %v225 = vld [vmem:[%s224] sm:$0xff]
      %v226 = vld [vmem:[%s224 + $0x8] sm:$0xff]
      %v227 = vld [vmem:[%s224 + $0x10] sm:$0xff]
      %v228 = vld [vmem:[%s224 + $0x18] sm:$0xff]
      %v229 = vld [vmem:[%s224 + $0x20] sm:$0xff]
      %v230 = vld [vmem:[%s224 + $0x28] sm:$0xff]
      %v231 = vld [vmem:[%s224 + $0x30] sm:$0xff]
      %v232 = vld [vmem:[%s224 + $0x38] sm:$0xff]
      %v233 = vld [vmem:[%s224 + $0x40] sm:$0xff]
      %v234 = vld [vmem:[%s224 + $0x48] sm:$0xff]
      %v235 = vld [vmem:[%s224 + $0x50] sm:$0xff]
      %v236 = vld [vmem:[%s224 + $0x58] sm:$0xff]
      %vm237 = vcmask 130048
      %v239 = vsel %vm237, %v222, 0
      %v242 = vsel %vm237, %v223, 0
      %244 = vmatprep.subr.mxu0 0.0
      %245 = vmatpush1.msra.mxu0 0.0
      %246 = vmatprep.subr.mxu0 0.0
      %247 = vmatpush1.msra.mxu0 0.0
      %248 = vmatprep.subr.mxu0 0.0
      %249 = vmatpush1.msra.mxu0 0.0
      %250 = vmatprep.subr.mxu0 0.0
      %251 = vmatpush1.msra.mxu0 0.0
      %252 = vmatprep.subr.mxu0 0.0
      %253 = vmatpush1.msra.mxu0 0.0
      %254 = vmatprep.subr.mxu0 0.0
      %255 = vmatpush1.msra.mxu0 0.0
      %256 = vmatprep.subr.mxu0 0.0
      %257 = vmatpush1.msra.mxu0 0.0
      %258 = vmatprep.subr.mxu0 0.0
      %259 = vmatpush1.msra.mxu0 0.0
      %260 = vmatprep.subr.mxu0 0.0
      %261 = vmatpush1.msra.mxu0 0.0
      %262 = vmatprep.subr.mxu0 0.0
      %263 = vmatpush1.msra.mxu0 0.0
      %264 = vmatprep.subr.mxu0 0.0
      %265 = vmatpush1.msra.mxu0 0.0
      %266 = vmatprep.subr.mxu0 0.0
      %267 = vmatpush1.msra.mxu0 0.0
      %268 = vmatprep.subr.mxu0 0.0
      %269 = vmatpush1.msra.mxu0 0.0
      %270 = vmatprep.subr.mxu0 0.0
      %271 = vmatpush1.msra.mxu0 0.0
      %v272 = vand.u32 %v232, 4294901760
      %273 = vmatprep.subr.mxu0 %v272
      %v274 = vand.u32 %v231, 4294901760
      %275 = vmatpush1.msra.mxu0 %v274
      %v276 = vand.u32 %v226, 4294901760
      %277 = vmatprep.subr.mxu0 %v276
      %v278 = vand.u32 %v225, 4294901760
      %279 = vmatpush1.msra.mxu0 %v278
      %280 = vmatprep.subr.mxu0 0.0
      %281 = vmatpush2.msra.mxu0 0.0
      %282 = vmatprep.subr.mxu0 0.0
      %283 = vmatpush2.msra.mxu0 0.0
      %284 = vmatprep.subr.mxu0 0.0
      %285 = vmatpush2.msra.mxu0 0.0
      %286 = vmatprep.subr.mxu0 0.0
      %287 = vmatpush2.msra.mxu0 0.0
      %288 = vmatprep.subr.mxu0 0.0
      %289 = vmatpush2.msra.mxu0 0.0
      %290 = vmatprep.subr.mxu0 0.0
      %291 = vmatpush2.msra.mxu0 0.0
      %292 = vmatprep.subr.mxu0 0.0
      %293 = vmatpush2.msra.mxu0 0.0
      %294 = vmatprep.subr.mxu0 0.0
      %295 = vmatpush2.msra.mxu0 0.0
      %296 = vmatprep.subr.mxu0 0.0
      %297 = vmatpush2.msra.mxu0 0.0
      %298 = vmatprep.subr.mxu0 0.0
      %299 = vmatpush2.msra.mxu0 0.0
      %300 = vmatprep.subr.mxu0 0.0
      %301 = vmatpush2.msra.mxu0 0.0
      %302 = vmatprep.subr.mxu0 0.0
      %303 = vmatpush2.msra.mxu0 0.0
      %304 = vmatprep.subr.mxu0 0.0
      %305 = vmatpush2.msra.mxu0 0.0
      %306 = vmatprep.subr.mxu0 0.0
      %307 = vmatpush2.msra.mxu0 0.0
      %308 = vmatprep.subr.mxu0 0.0
      %309 = vmatpush2.msra.mxu0 0.0
      %310 = vmatprep.subr.mxu0 0.0
      %311 = vmatpush2.msra.mxu0 0.0
      %312 = vmatprep.mubr.f32.mxu0 0.0
      %v313 = vand.u32 %v239, 4294901760
      %v314 = vsub.f32 %v239, %v313
      %v315 = vand.u32 %v314, 4294901760
      %v316 = vsub.f32 %v314, %v315
      %v317 = vand.u32 %v316, 4294901760
      %318 = vmatmul.mubr.f32.gmra.mxu0 %v317
      %v319 = vpop.f32.mrf.mxu0
      %v320 = vadd.f32 0.0, %v319
      %v321 = vpop.f32.mrf.mxu0
      %v322 = vadd.f32 0.0, %v321
      %323 = vmatprep.mubr.f32.mxu0 0.0
      %v324 = vand.u32 %v242, 4294901760
      %v325 = vsub.f32 %v242, %v324
      %v326 = vand.u32 %v325, 4294901760
      %v327 = vsub.f32 %v325, %v326
      %v328 = vand.u32 %v327, 4294901760
      %329 = vmatmul.mubr.f32.gmra.mxu0 %v328
      %v330 = vpop.f32.mrf.mxu0
      %v331 = vadd.f32 0.0, %v330
      %v332 = vpop.f32.mrf.mxu0
      %v333 = vadd.f32 0.0, %v332
      %334 = vdwg.mxu0
      %335 = vmatprep.subr.mxu0 0.0
      %336 = vmatpush1.msra.mxu0 0.0
      %337 = vmatprep.subr.mxu0 0.0
      %338 = vmatpush1.msra.mxu0 0.0
      %339 = vmatprep.subr.mxu0 0.0
      %340 = vmatpush1.msra.mxu0 0.0
      %341 = vmatprep.subr.mxu0 0.0
      %342 = vmatpush1.msra.mxu0 0.0
      %343 = vmatprep.subr.mxu0 0.0
      %344 = vmatpush1.msra.mxu0 0.0
      %345 = vmatprep.subr.mxu0 0.0
      %346 = vmatpush1.msra.mxu0 0.0
      %347 = vmatprep.subr.mxu0 0.0
      %348 = vmatpush1.msra.mxu0 0.0
      %349 = vmatprep.subr.mxu0 0.0
      %350 = vmatpush1.msra.mxu0 0.0
      %351 = vmatprep.subr.mxu0 0.0
      %352 = vmatpush1.msra.mxu0 0.0
      %353 = vmatprep.subr.mxu0 0.0
      %354 = vmatpush1.msra.mxu0 0.0
      %355 = vmatprep.subr.mxu0 0.0
      %356 = vmatpush1.msra.mxu0 0.0
      %357 = vmatprep.subr.mxu0 0.0
      %358 = vmatpush1.msra.mxu0 0.0
      %359 = vmatprep.subr.mxu0 0.0
      %360 = vmatpush1.msra.mxu0 0.0
      %361 = vmatprep.subr.mxu0 0.0
      %362 = vmatpush1.msra.mxu0 0.0
      %v363 = vand.u32 %v232, 4294901760
      %v364 = vsub.f32 %v232, %v363
      %v365 = vand.u32 %v364, 4294901760
      %v366 = vsub.f32 %v364, %v365
      %v367 = vand.u32 %v366, 4294901760
      %368 = vmatprep.subr.mxu0 %v367
      %v369 = vand.u32 %v231, 4294901760
      %v370 = vsub.f32 %v231, %v369
      %v371 = vand.u32 %v370, 4294901760
      %v372 = vsub.f32 %v370, %v371
      %v373 = vand.u32 %v372, 4294901760
      %374 = vmatpush1.msra.mxu0 %v373
      %v375 = vand.u32 %v226, 4294901760
      %v376 = vsub.f32 %v226, %v375
      %v377 = vand.u32 %v376, 4294901760
      %v378 = vsub.f32 %v376, %v377
      %v379 = vand.u32 %v378, 4294901760
      %380 = vmatprep.subr.mxu0 %v379
      %v381 = vand.u32 %v225, 4294901760
      %v382 = vsub.f32 %v225, %v381
      %v383 = vand.u32 %v382, 4294901760
      %v384 = vsub.f32 %v382, %v383
      %v385 = vand.u32 %v384, 4294901760
      %386 = vmatpush1.msra.mxu0 %v385
      %387 = vmatprep.subr.mxu0 0.0
      %388 = vmatpush2.msra.mxu0 0.0
      %389 = vmatprep.subr.mxu0 0.0
      %390 = vmatpush2.msra.mxu0 0.0
      %391 = vmatprep.subr.mxu0 0.0
      %392 = vmatpush2.msra.mxu0 0.0
      %393 = vmatprep.subr.mxu0 0.0
      %394 = vmatpush2.msra.mxu0 0.0
      %395 = vmatprep.subr.mxu0 0.0
      %396 = vmatpush2.msra.mxu0 0.0
      %397 = vmatprep.subr.mxu0 0.0
      %398 = vmatpush2.msra.mxu0 0.0
      %399 = vmatprep.subr.mxu0 0.0
      %400 = vmatpush2.msra.mxu0 0.0
      %401 = vmatprep.subr.mxu0 0.0
      %402 = vmatpush2.msra.mxu0 0.0
      %403 = vmatprep.subr.mxu0 0.0
      %404 = vmatpush2.msra.mxu0 0.0
      %405 = vmatprep.subr.mxu0 0.0
      %406 = vmatpush2.msra.mxu0 0.0
      %407 = vmatprep.subr.mxu0 0.0
      %408 = vmatpush2.msra.mxu0 0.0
      %409 = vmatprep.subr.mxu0 0.0
      %410 = vmatpush2.msra.mxu0 0.0
      %411 = vmatprep.subr.mxu0 0.0
      %412 = vmatpush2.msra.mxu0 0.0
      %413 = vmatprep.subr.mxu0 0.0
      %414 = vmatpush2.msra.mxu0 0.0
      %415 = vmatprep.subr.mxu0 0.0
      %416 = vmatpush2.msra.mxu0 0.0
      %417 = vmatprep.subr.mxu0 0.0
      %418 = vmatpush2.msra.mxu0 0.0
      %419 = vmatprep.mubr.f32.mxu0 0.0
      %v420 = vand.u32 %v239, 4294901760
      %421 = vmatmul.mubr.f32.gmra.mxu0 %v420
      %v422 = vpop.f32.mrf.mxu0
      %v423 = vadd.f32 %v320, %v422
      %v424 = vpop.f32.mrf.mxu0
      %v425 = vadd.f32 %v322, %v424
      %426 = vmatprep.mubr.f32.mxu0 0.0
      %v427 = vand.u32 %v242, 4294901760
      %428 = vmatmul.mubr.f32.gmra.mxu0 %v427
      %v429 = vpop.f32.mrf.mxu0
      %v430 = vadd.f32 %v331, %v429
      %v431 = vpop.f32.mrf.mxu0
      %v432 = vadd.f32 %v333, %v431
      %433 = vdwg.mxu0
      %434 = vmatprep.subr.mxu0 0.0
      %435 = vmatpush1.msra.mxu0 0.0
      %436 = vmatprep.subr.mxu0 0.0
      %437 = vmatpush1.msra.mxu0 0.0
      %438 = vmatprep.subr.mxu0 0.0
      %439 = vmatpush1.msra.mxu0 0.0
      %440 = vmatprep.subr.mxu0 0.0
      %441 = vmatpush1.msra.mxu0 0.0
      %442 = vmatprep.subr.mxu0 0.0
      %443 = vmatpush1.msra.mxu0 0.0
      %444 = vmatprep.subr.mxu0 0.0
      %445 = vmatpush1.msra.mxu0 0.0
      %446 = vmatprep.subr.mxu0 0.0
      %447 = vmatpush1.msra.mxu0 0.0
      %448 = vmatprep.subr.mxu0 0.0
      %449 = vmatpush1.msra.mxu0 0.0
      %450 = vmatprep.subr.mxu0 0.0
      %451 = vmatpush1.msra.mxu0 0.0
      %452 = vmatprep.subr.mxu0 0.0
      %453 = vmatpush1.msra.mxu0 0.0
      %454 = vmatprep.subr.mxu0 0.0
      %455 = vmatpush1.msra.mxu0 0.0
      %456 = vmatprep.subr.mxu0 0.0
      %457 = vmatpush1.msra.mxu0 0.0
      %458 = vmatprep.subr.mxu0 0.0
      %459 = vmatpush1.msra.mxu0 0.0
      %460 = vmatprep.subr.mxu0 0.0
      %461 = vmatpush1.msra.mxu0 0.0
      %v462 = vand.u32 %v232, 4294901760
      %v463 = vsub.f32 %v232, %v462
      %464 = vmatprep.subr.mxu0 %v463
      %v465 = vand.u32 %v231, 4294901760
      %v466 = vsub.f32 %v231, %v465
      %467 = vmatpush1.msra.mxu0 %v466
      %v468 = vand.u32 %v226, 4294901760
      %v469 = vsub.f32 %v226, %v468
      %470 = vmatprep.subr.mxu0 %v469
      %v471 = vand.u32 %v225, 4294901760
      %v472 = vsub.f32 %v225, %v471
      %473 = vmatpush1.msra.mxu0 %v472
      %474 = vmatprep.subr.mxu0 0.0
      %475 = vmatpush2.msra.mxu0 0.0
      %476 = vmatprep.subr.mxu0 0.0
      %477 = vmatpush2.msra.mxu0 0.0
      %478 = vmatprep.subr.mxu0 0.0
      %479 = vmatpush2.msra.mxu0 0.0
      %480 = vmatprep.subr.mxu0 0.0
      %481 = vmatpush2.msra.mxu0 0.0
      %482 = vmatprep.subr.mxu0 0.0
      %483 = vmatpush2.msra.mxu0 0.0
      %484 = vmatprep.subr.mxu0 0.0
      %485 = vmatpush2.msra.mxu0 0.0
      %486 = vmatprep.subr.mxu0 0.0
      %487 = vmatpush2.msra.mxu0 0.0
      %488 = vmatprep.subr.mxu0 0.0
      %489 = vmatpush2.msra.mxu0 0.0
      %490 = vmatprep.subr.mxu0 0.0
      %491 = vmatpush2.msra.mxu0 0.0
      %492 = vmatprep.subr.mxu0 0.0
      %493 = vmatpush2.msra.mxu0 0.0
      %494 = vmatprep.subr.mxu0 0.0
      %495 = vmatpush2.msra.mxu0 0.0
      %496 = vmatprep.subr.mxu0 0.0
      %497 = vmatpush2.msra.mxu0 0.0
      %498 = vmatprep.subr.mxu0 0.0
      %499 = vmatpush2.msra.mxu0 0.0
      %500 = vmatprep.subr.mxu0 0.0
      %501 = vmatpush2.msra.mxu0 0.0
      %502 = vmatprep.subr.mxu0 0.0
      %503 = vmatpush2.msra.mxu0 0.0
      %504 = vmatprep.subr.mxu0 0.0
      %505 = vmatpush2.msra.mxu0 0.0
      %506 = vmatprep.mubr.f32.mxu0 0.0
      %v507 = vand.u32 %v239, 4294901760
      %v508 = vsub.f32 %v239, %v507
      %509 = vmatmul.mubr.f32.gmra.mxu0 %v508
      %v510 = vpop.f32.mrf.mxu0
      %v511 = vadd.f32 %v423, %v510
      %v512 = vpop.f32.mrf.mxu0
      %v513 = vadd.f32 %v425, %v512
      %514 = vmatprep.mubr.f32.mxu0 0.0
      %v515 = vand.u32 %v242, 4294901760
      %v516 = vsub.f32 %v242, %v515
      %517 = vmatmul.mubr.f32.gmra.mxu0 %v516
      %v518 = vpop.f32.mrf.mxu0
      %v519 = vadd.f32 %v430, %v518
      %v520 = vpop.f32.mrf.mxu0
      %v521 = vadd.f32 %v432, %v520
      %522 = vdwg.mxu0
      %523 = vmatprep.subr.mxu0 0.0
      %524 = vmatpush1.msra.mxu0 0.0
      %525 = vmatprep.subr.mxu0 0.0
      %526 = vmatpush1.msra.mxu0 0.0
      %527 = vmatprep.subr.mxu0 0.0
      %528 = vmatpush1.msra.mxu0 0.0
      %529 = vmatprep.subr.mxu0 0.0
      %530 = vmatpush1.msra.mxu0 0.0
      %531 = vmatprep.subr.mxu0 0.0
      %532 = vmatpush1.msra.mxu0 0.0
      %533 = vmatprep.subr.mxu0 0.0
      %534 = vmatpush1.msra.mxu0 0.0
      %535 = vmatprep.subr.mxu0 0.0
      %536 = vmatpush1.msra.mxu0 0.0
      %537 = vmatprep.subr.mxu0 0.0
      %538 = vmatpush1.msra.mxu0 0.0
      %539 = vmatprep.subr.mxu0 0.0
      %540 = vmatpush1.msra.mxu0 0.0
      %541 = vmatprep.subr.mxu0 0.0
      %542 = vmatpush1.msra.mxu0 0.0
      %543 = vmatprep.subr.mxu0 0.0
      %544 = vmatpush1.msra.mxu0 0.0
      %545 = vmatprep.subr.mxu0 0.0
      %546 = vmatpush1.msra.mxu0 0.0
      %547 = vmatprep.subr.mxu0 0.0
      %548 = vmatpush1.msra.mxu0 0.0
      %549 = vmatprep.subr.mxu0 0.0
      %550 = vmatpush1.msra.mxu0 0.0
      %v551 = vand.u32 %v232, 4294901760
      %552 = vmatprep.subr.mxu0 %v551
      %v553 = vand.u32 %v231, 4294901760
      %554 = vmatpush1.msra.mxu0 %v553
      %v555 = vand.u32 %v226, 4294901760
      %556 = vmatprep.subr.mxu0 %v555
      %v557 = vand.u32 %v225, 4294901760
      %558 = vmatpush1.msra.mxu0 %v557
      %559 = vmatprep.subr.mxu0 0.0
      %560 = vmatpush2.msra.mxu0 0.0
      %561 = vmatprep.subr.mxu0 0.0
      %562 = vmatpush2.msra.mxu0 0.0
      %563 = vmatprep.subr.mxu0 0.0
      %564 = vmatpush2.msra.mxu0 0.0
      %565 = vmatprep.subr.mxu0 0.0
      %566 = vmatpush2.msra.mxu0 0.0
      %567 = vmatprep.subr.mxu0 0.0
      %568 = vmatpush2.msra.mxu0 0.0
      %569 = vmatprep.subr.mxu0 0.0
      %570 = vmatpush2.msra.mxu0 0.0
      %571 = vmatprep.subr.mxu0 0.0
      %572 = vmatpush2.msra.mxu0 0.0
      %573 = vmatprep.subr.mxu0 0.0
      %574 = vmatpush2.msra.mxu0 0.0
      %575 = vmatprep.subr.mxu0 0.0
      %576 = vmatpush2.msra.mxu0 0.0
      %577 = vmatprep.subr.mxu0 0.0
      %578 = vmatpush2.msra.mxu0 0.0
      %579 = vmatprep.subr.mxu0 0.0
      %580 = vmatpush2.msra.mxu0 0.0
      %581 = vmatprep.subr.mxu0 0.0
      %582 = vmatpush2.msra.mxu0 0.0
      %583 = vmatprep.subr.mxu0 0.0
      %584 = vmatpush2.msra.mxu0 0.0
      %585 = vmatprep.subr.mxu0 0.0
      %586 = vmatpush2.msra.mxu0 0.0
      %587 = vmatprep.subr.mxu0 0.0
      %588 = vmatpush2.msra.mxu0 0.0
      %589 = vmatprep.subr.mxu0 0.0
      %590 = vmatpush2.msra.mxu0 0.0
      %591 = vmatprep.mubr.f32.mxu0 0.0
      %v592 = vand.u32 %v239, 4294901760
      %v593 = vsub.f32 %v239, %v592
      %v594 = vand.u32 %v593, 4294901760
      %595 = vmatmul.mubr.f32.gmra.mxu0 %v594
      %v596 = vpop.f32.mrf.mxu0
      %v597 = vadd.f32 %v511, %v596
      %v598 = vpop.f32.mrf.mxu0
      %v599 = vadd.f32 %v513, %v598
      %600 = vmatprep.mubr.f32.mxu0 0.0
      %v601 = vand.u32 %v242, 4294901760
      %v602 = vsub.f32 %v242, %v601
      %v603 = vand.u32 %v602, 4294901760
      %604 = vmatmul.mubr.f32.gmra.mxu0 %v603
      %v605 = vpop.f32.mrf.mxu0
      %v606 = vadd.f32 %v519, %v605
      %v607 = vpop.f32.mrf.mxu0
      %v608 = vadd.f32 %v521, %v607
      %609 = vdwg.mxu0
      %610 = vmatprep.subr.mxu0 0.0
      %611 = vmatpush1.msra.mxu0 0.0
      %612 = vmatprep.subr.mxu0 0.0
      %613 = vmatpush1.msra.mxu0 0.0
      %614 = vmatprep.subr.mxu0 0.0
      %615 = vmatpush1.msra.mxu0 0.0
      %616 = vmatprep.subr.mxu0 0.0
      %617 = vmatpush1.msra.mxu0 0.0
      %618 = vmatprep.subr.mxu0 0.0
      %619 = vmatpush1.msra.mxu0 0.0
      %620 = vmatprep.subr.mxu0 0.0
      %621 = vmatpush1.msra.mxu0 0.0
      %622 = vmatprep.subr.mxu0 0.0
      %623 = vmatpush1.msra.mxu0 0.0
      %624 = vmatprep.subr.mxu0 0.0
      %625 = vmatpush1.msra.mxu0 0.0
      %626 = vmatprep.subr.mxu0 0.0
      %627 = vmatpush1.msra.mxu0 0.0
      %628 = vmatprep.subr.mxu0 0.0
      %629 = vmatpush1.msra.mxu0 0.0
      %630 = vmatprep.subr.mxu0 0.0
      %631 = vmatpush1.msra.mxu0 0.0
      %632 = vmatprep.subr.mxu0 0.0
      %633 = vmatpush1.msra.mxu0 0.0
      %634 = vmatprep.subr.mxu0 0.0
      %635 = vmatpush1.msra.mxu0 0.0
      %636 = vmatprep.subr.mxu0 0.0
      %637 = vmatpush1.msra.mxu0 0.0
      %v638 = vand.u32 %v232, 4294901760
      %v639 = vsub.f32 %v232, %v638
      %v640 = vand.u32 %v639, 4294901760
      %641 = vmatprep.subr.mxu0 %v640
      %v642 = vand.u32 %v231, 4294901760
      %v643 = vsub.f32 %v231, %v642
      %v644 = vand.u32 %v643, 4294901760
      %645 = vmatpush1.msra.mxu0 %v644
      %v646 = vand.u32 %v226, 4294901760
      %v647 = vsub.f32 %v226, %v646
      %v648 = vand.u32 %v647, 4294901760
      %649 = vmatprep.subr.mxu0 %v648
      %v650 = vand.u32 %v225, 4294901760
      %v651 = vsub.f32 %v225, %v650
      %v652 = vand.u32 %v651, 4294901760
      %653 = vmatpush1.msra.mxu0 %v652
      %654 = vmatprep.subr.mxu0 0.0
      %655 = vmatpush2.msra.mxu0 0.0
      %656 = vmatprep.subr.mxu0 0.0
      %657 = vmatpush2.msra.mxu0 0.0
      %658 = vmatprep.subr.mxu0 0.0
      %659 = vmatpush2.msra.mxu0 0.0
      %660 = vmatprep.subr.mxu0 0.0
      %661 = vmatpush2.msra.mxu0 0.0
      %662 = vmatprep.subr.mxu0 0.0
      %663 = vmatpush2.msra.mxu0 0.0
      %664 = vmatprep.subr.mxu0 0.0
      %665 = vmatpush2.msra.mxu0 0.0
      %666 = vmatprep.subr.mxu0 0.0
      %667 = vmatpush2.msra.mxu0 0.0
      %668 = vmatprep.subr.mxu0 0.0
      %669 = vmatpush2.msra.mxu0 0.0
      %670 = vmatprep.subr.mxu0 0.0
      %671 = vmatpush2.msra.mxu0 0.0
      %672 = vmatprep.subr.mxu0 0.0
      %673 = vmatpush2.msra.mxu0 0.0
      %674 = vmatprep.subr.mxu0 0.0
      %675 = vmatpush2.msra.mxu0 0.0
      %676 = vmatprep.subr.mxu0 0.0
      %677 = vmatpush2.msra.mxu0 0.0
      %678 = vmatprep.subr.mxu0 0.0
      %679 = vmatpush2.msra.mxu0 0.0
      %680 = vmatprep.subr.mxu0 0.0
      %681 = vmatpush2.msra.mxu0 0.0
      %682 = vmatprep.subr.mxu0 0.0
      %683 = vmatpush2.msra.mxu0 0.0
      %684 = vmatprep.subr.mxu0 0.0
      %685 = vmatpush2.msra.mxu0 0.0
      %686 = vmatprep.mubr.f32.mxu0 0.0
      %v687 = vand.u32 %v239, 4294901760
      %688 = vmatmul.mubr.f32.gmra.mxu0 %v687
      %v689 = vpop.f32.mrf.mxu0
      %v690 = vadd.f32 %v597, %v689
      %v691 = vpop.f32.mrf.mxu0
      %v692 = vadd.f32 %v599, %v691
      %693 = vmatprep.mubr.f32.mxu0 0.0
      %v694 = vand.u32 %v242, 4294901760
      %695 = vmatmul.mubr.f32.gmra.mxu0 %v694
      %v696 = vpop.f32.mrf.mxu0
      %v697 = vadd.f32 %v606, %v696
      %v698 = vpop.f32.mrf.mxu0
      %v699 = vadd.f32 %v608, %v698
      %700 = vdwg.mxu0
      %701 = vmatprep.subr.mxu0 0.0
      %702 = vmatpush1.msra.mxu0 0.0
      %703 = vmatprep.subr.mxu0 0.0
      %704 = vmatpush1.msra.mxu0 0.0
      %705 = vmatprep.subr.mxu0 0.0
      %706 = vmatpush1.msra.mxu0 0.0
      %707 = vmatprep.subr.mxu0 0.0
      %708 = vmatpush1.msra.mxu0 0.0
      %709 = vmatprep.subr.mxu0 0.0
      %710 = vmatpush1.msra.mxu0 0.0
      %711 = vmatprep.subr.mxu0 0.0
      %712 = vmatpush1.msra.mxu0 0.0
      %713 = vmatprep.subr.mxu0 0.0
      %714 = vmatpush1.msra.mxu0 0.0
      %715 = vmatprep.subr.mxu0 0.0
      %716 = vmatpush1.msra.mxu0 0.0
      %717 = vmatprep.subr.mxu0 0.0
      %718 = vmatpush1.msra.mxu0 0.0
      %719 = vmatprep.subr.mxu0 0.0
      %720 = vmatpush1.msra.mxu0 0.0
      %721 = vmatprep.subr.mxu0 0.0
      %722 = vmatpush1.msra.mxu0 0.0
      %723 = vmatprep.subr.mxu0 0.0
      %724 = vmatpush1.msra.mxu0 0.0
      %725 = vmatprep.subr.mxu0 0.0
      %726 = vmatpush1.msra.mxu0 0.0
      %727 = vmatprep.subr.mxu0 0.0
      %728 = vmatpush1.msra.mxu0 0.0
      %v729 = vand.u32 %v232, 4294901760
      %730 = vmatprep.subr.mxu0 %v729
      %v731 = vand.u32 %v231, 4294901760
      %732 = vmatpush1.msra.mxu0 %v731
      %v733 = vand.u32 %v226, 4294901760
      %734 = vmatprep.subr.mxu0 %v733
      %v735 = vand.u32 %v225, 4294901760
      %736 = vmatpush1.msra.mxu0 %v735
      %737 = vmatprep.subr.mxu0 0.0
      %738 = vmatpush2.msra.mxu0 0.0
      %739 = vmatprep.subr.mxu0 0.0
      %740 = vmatpush2.msra.mxu0 0.0
      %741 = vmatprep.subr.mxu0 0.0
      %742 = vmatpush2.msra.mxu0 0.0
      %743 = vmatprep.subr.mxu0 0.0
      %744 = vmatpush2.msra.mxu0 0.0
      %745 = vmatprep.subr.mxu0 0.0
      %746 = vmatpush2.msra.mxu0 0.0
      %747 = vmatprep.subr.mxu0 0.0
      %748 = vmatpush2.msra.mxu0 0.0
      %749 = vmatprep.subr.mxu0 0.0
      %750 = vmatpush2.msra.mxu0 0.0
      %751 = vmatprep.subr.mxu0 0.0
      %752 = vmatpush2.msra.mxu0 0.0
      %753 = vmatprep.subr.mxu0 0.0
      %754 = vmatpush2.msra.mxu0 0.0
      %755 = vmatprep.subr.mxu0 0.0
      %756 = vmatpush2.msra.mxu0 0.0
      %757 = vmatprep.subr.mxu0 0.0
      %758 = vmatpush2.msra.mxu0 0.0
      %759 = vmatprep.subr.mxu0 0.0
      %760 = vmatpush2.msra.mxu0 0.0
      %761 = vmatprep.subr.mxu0 0.0
      %762 = vmatpush2.msra.mxu0 0.0
      %763 = vmatprep.subr.mxu0 0.0
      %764 = vmatpush2.msra.mxu0 0.0
      %765 = vmatprep.subr.mxu0 0.0
      %766 = vmatpush2.msra.mxu0 0.0
      %767 = vmatprep.subr.mxu0 0.0
      %768 = vmatpush2.msra.mxu0 0.0
      %769 = vmatprep.mubr.f32.mxu0 0.0
      %v770 = vand.u32 %v239, 4294901760
      %771 = vmatmul.mubr.f32.gmra.mxu0 %v770
      %v772 = vpop.f32.mrf.mxu0
      %v773 = vadd.f32 %v690, %v772
      %v774 = vpop.f32.mrf.mxu0
      %v775 = vadd.f32 %v692, %v774
      %776 = vmatprep.mubr.f32.mxu0 0.0
      %v777 = vand.u32 %v242, 4294901760
      %778 = vmatmul.mubr.f32.gmra.mxu0 %v777
      %v779 = vpop.f32.mrf.mxu0
      %v780 = vadd.f32 %v697, %v779
      %v781 = vpop.f32.mrf.mxu0
      %v782 = vadd.f32 %v699, %v781
      %783 = vdwg.mxu0
      %784 = vmatprep.subr.mxu0 0.0
      %785 = vmatpush1.msra.mxu0 0.0
      %786 = vmatprep.subr.mxu0 0.0
      %787 = vmatpush1.msra.mxu0 0.0
      %788 = vmatprep.subr.mxu0 0.0
      %789 = vmatpush1.msra.mxu0 0.0
      %790 = vmatprep.subr.mxu0 0.0
      %791 = vmatpush1.msra.mxu0 0.0
      %792 = vmatprep.subr.mxu0 0.0
      %793 = vmatpush1.msra.mxu0 0.0
      %794 = vmatprep.subr.mxu0 0.0
      %795 = vmatpush1.msra.mxu0 0.0
      %796 = vmatprep.subr.mxu0 0.0
      %797 = vmatpush1.msra.mxu0 0.0
      %798 = vmatprep.subr.mxu0 0.0
      %799 = vmatpush1.msra.mxu0 0.0
      %800 = vmatprep.subr.mxu0 0.0
      %801 = vmatpush1.msra.mxu0 0.0
      %802 = vmatprep.subr.mxu0 0.0
      %803 = vmatpush1.msra.mxu0 0.0
      %804 = vmatprep.subr.mxu0 0.0
      %805 = vmatpush1.msra.mxu0 0.0
      %806 = vmatprep.subr.mxu0 0.0
      %807 = vmatpush1.msra.mxu0 0.0
      %808 = vmatprep.subr.mxu0 0.0
      %809 = vmatpush1.msra.mxu0 0.0
      %810 = vmatprep.subr.mxu0 0.0
      %811 = vmatpush1.msra.mxu0 0.0
      %v812 = vand.u32 %v234, 4294901760
      %813 = vmatprep.subr.mxu0 %v812
      %v814 = vand.u32 %v233, 4294901760
      %815 = vmatpush1.msra.mxu0 %v814
      %v816 = vand.u32 %v228, 4294901760
      %817 = vmatprep.subr.mxu0 %v816
      %v818 = vand.u32 %v227, 4294901760
      %819 = vmatpush1.msra.mxu0 %v818
      %820 = vmatprep.subr.mxu0 0.0
      %821 = vmatpush2.msra.mxu0 0.0
      %822 = vmatprep.subr.mxu0 0.0
      %823 = vmatpush2.msra.mxu0 0.0
      %824 = vmatprep.subr.mxu0 0.0
      %825 = vmatpush2.msra.mxu0 0.0
      %826 = vmatprep.subr.mxu0 0.0
      %827 = vmatpush2.msra.mxu0 0.0
      %828 = vmatprep.subr.mxu0 0.0
      %829 = vmatpush2.msra.mxu0 0.0
      %830 = vmatprep.subr.mxu0 0.0
      %831 = vmatpush2.msra.mxu0 0.0
      %832 = vmatprep.subr.mxu0 0.0
      %833 = vmatpush2.msra.mxu0 0.0
      %834 = vmatprep.subr.mxu0 0.0
      %835 = vmatpush2.msra.mxu0 0.0
      %836 = vmatprep.subr.mxu0 0.0
      %837 = vmatpush2.msra.mxu0 0.0
      %838 = vmatprep.subr.mxu0 0.0
      %839 = vmatpush2.msra.mxu0 0.0
      %840 = vmatprep.subr.mxu0 0.0
      %841 = vmatpush2.msra.mxu0 0.0
      %842 = vmatprep.subr.mxu0 0.0
      %843 = vmatpush2.msra.mxu0 0.0
      %844 = vmatprep.subr.mxu0 0.0
      %845 = vmatpush2.msra.mxu0 0.0
      %846 = vmatprep.subr.mxu0 0.0
      %847 = vmatpush2.msra.mxu0 0.0
      %848 = vmatprep.subr.mxu0 0.0
      %849 = vmatpush2.msra.mxu0 0.0
      %850 = vmatprep.subr.mxu0 0.0
      %851 = vmatpush2.msra.mxu0 0.0
      %852 = vmatprep.mubr.f32.mxu0 0.0
      %v853 = vand.u32 %v239, 4294901760
      %v854 = vsub.f32 %v239, %v853
      %v855 = vand.u32 %v854, 4294901760
      %v856 = vsub.f32 %v854, %v855
      %v857 = vand.u32 %v856, 4294901760
      %858 = vmatmul.mubr.f32.gmra.mxu0 %v857
      %v859 = vpop.f32.mrf.mxu0
      %v860 = vadd.f32 0.0, %v859
      %v861 = vpop.f32.mrf.mxu0
      %v862 = vadd.f32 0.0, %v861
      %863 = vmatprep.mubr.f32.mxu0 0.0
      %v864 = vand.u32 %v242, 4294901760
      %v865 = vsub.f32 %v242, %v864
      %v866 = vand.u32 %v865, 4294901760
      %v867 = vsub.f32 %v865, %v866
      %v868 = vand.u32 %v867, 4294901760
      %869 = vmatmul.mubr.f32.gmra.mxu0 %v868
      %v870 = vpop.f32.mrf.mxu0
      %v871 = vadd.f32 0.0, %v870
      %v872 = vpop.f32.mrf.mxu0
      %v873 = vadd.f32 0.0, %v872
      %874 = vdwg.mxu0
      %875 = vmatprep.subr.mxu0 0.0
      %876 = vmatpush1.msra.mxu0 0.0
      %877 = vmatprep.subr.mxu0 0.0
      %878 = vmatpush1.msra.mxu0 0.0
      %879 = vmatprep.subr.mxu0 0.0
      %880 = vmatpush1.msra.mxu0 0.0
      %881 = vmatprep.subr.mxu0 0.0
      %882 = vmatpush1.msra.mxu0 0.0
      %883 = vmatprep.subr.mxu0 0.0
      %884 = vmatpush1.msra.mxu0 0.0
      %885 = vmatprep.subr.mxu0 0.0
      %886 = vmatpush1.msra.mxu0 0.0
      %887 = vmatprep.subr.mxu0 0.0
      %888 = vmatpush1.msra.mxu0 0.0
      %889 = vmatprep.subr.mxu0 0.0
      %890 = vmatpush1.msra.mxu0 0.0
      %891 = vmatprep.subr.mxu0 0.0
      %892 = vmatpush1.msra.mxu0 0.0
      %893 = vmatprep.subr.mxu0 0.0
      %894 = vmatpush1.msra.mxu0 0.0
      %895 = vmatprep.subr.mxu0 0.0
      %896 = vmatpush1.msra.mxu0 0.0
      %897 = vmatprep.subr.mxu0 0.0
      %898 = vmatpush1.msra.mxu0 0.0
      %899 = vmatprep.subr.mxu0 0.0
      %900 = vmatpush1.msra.mxu0 0.0
      %901 = vmatprep.subr.mxu0 0.0
      %902 = vmatpush1.msra.mxu0 0.0
      %v903 = vand.u32 %v234, 4294901760
      %v904 = vsub.f32 %v234, %v903
      %v905 = vand.u32 %v904, 4294901760
      %v906 = vsub.f32 %v904, %v905
      %v907 = vand.u32 %v906, 4294901760
      %908 = vmatprep.subr.mxu0 %v907
      %v909 = vand.u32 %v233, 4294901760
      %v910 = vsub.f32 %v233, %v909
      %v911 = vand.u32 %v910, 4294901760
      %v912 = vsub.f32 %v910, %v911
      %v913 = vand.u32 %v912, 4294901760
      %914 = vmatpush1.msra.mxu0 %v913
      %v915 = vand.u32 %v228, 4294901760
      %v916 = vsub.f32 %v228, %v915
      %v917 = vand.u32 %v916, 4294901760
      %v918 = vsub.f32 %v916, %v917
      %v919 = vand.u32 %v918, 4294901760
      %920 = vmatprep.subr.mxu0 %v919
      %v921 = vand.u32 %v227, 4294901760
      %v922 = vsub.f32 %v227, %v921
      %v923 = vand.u32 %v922, 4294901760
      %v924 = vsub.f32 %v922, %v923
      %v925 = vand.u32 %v924, 4294901760
      %926 = vmatpush1.msra.mxu0 %v925
      %927 = vmatprep.subr.mxu0 0.0
      %928 = vmatpush2.msra.mxu0 0.0
      %929 = vmatprep.subr.mxu0 0.0
      %930 = vmatpush2.msra.mxu0 0.0
      %931 = vmatprep.subr.mxu0 0.0
      %932 = vmatpush2.msra.mxu0 0.0
      %933 = vmatprep.subr.mxu0 0.0
      %934 = vmatpush2.msra.mxu0 0.0
      %935 = vmatprep.subr.mxu0 0.0
      %936 = vmatpush2.msra.mxu0 0.0
      %937 = vmatprep.subr.mxu0 0.0
      %938 = vmatpush2.msra.mxu0 0.0
      %939 = vmatprep.subr.mxu0 0.0
      %940 = vmatpush2.msra.mxu0 0.0
      %941 = vmatprep.subr.mxu0 0.0
      %942 = vmatpush2.msra.mxu0 0.0
      %943 = vmatprep.subr.mxu0 0.0
      %944 = vmatpush2.msra.mxu0 0.0
      %945 = vmatprep.subr.mxu0 0.0
      %946 = vmatpush2.msra.mxu0 0.0
      %947 = vmatprep.subr.mxu0 0.0
      %948 = vmatpush2.msra.mxu0 0.0
      %949 = vmatprep.subr.mxu0 0.0
      %950 = vmatpush2.msra.mxu0 0.0
      %951 = vmatprep.subr.mxu0 0.0
      %952 = vmatpush2.msra.mxu0 0.0
      %953 = vmatprep.subr.mxu0 0.0
      %954 = vmatpush2.msra.mxu0 0.0
      %955 = vmatprep.subr.mxu0 0.0
      %956 = vmatpush2.msra.mxu0 0.0
      %957 = vmatprep.subr.mxu0 0.0
      %958 = vmatpush2.msra.mxu0 0.0
      %959 = vmatprep.mubr.f32.mxu0 0.0
      %v960 = vand.u32 %v239, 4294901760
      %961 = vmatmul.mubr.f32.gmra.mxu0 %v960
      %v962 = vpop.f32.mrf.mxu0
      %v963 = vadd.f32 %v860, %v962
      %v964 = vpop.f32.mrf.mxu0
      %v965 = vadd.f32 %v862, %v964
      %966 = vmatprep.mubr.f32.mxu0 0.0
      %v967 = vand.u32 %v242, 4294901760
      %968 = vmatmul.mubr.f32.gmra.mxu0 %v967
      %v969 = vpop.f32.mrf.mxu0
      %v970 = vadd.f32 %v871, %v969
      %v971 = vpop.f32.mrf.mxu0
      %v972 = vadd.f32 %v873, %v971
      %973 = vdwg.mxu0
      %974 = vmatprep.subr.mxu0 0.0
      %975 = vmatpush1.msra.mxu0 0.0
      %976 = vmatprep.subr.mxu0 0.0
      %977 = vmatpush1.msra.mxu0 0.0
      %978 = vmatprep.subr.mxu0 0.0
      %979 = vmatpush1.msra.mxu0 0.0
      %980 = vmatprep.subr.mxu0 0.0
      %981 = vmatpush1.msra.mxu0 0.0
      %982 = vmatprep.subr.mxu0 0.0
      %983 = vmatpush1.msra.mxu0 0.0
      %984 = vmatprep.subr.mxu0 0.0
      %985 = vmatpush1.msra.mxu0 0.0
      %986 = vmatprep.subr.mxu0 0.0
      %987 = vmatpush1.msra.mxu0 0.0
      %988 = vmatprep.subr.mxu0 0.0
      %989 = vmatpush1.msra.mxu0 0.0
      %990 = vmatprep.subr.mxu0 0.0
      %991 = vmatpush1.msra.mxu0 0.0
      %992 = vmatprep.subr.mxu0 0.0
      %993 = vmatpush1.msra.mxu0 0.0
      %994 = vmatprep.subr.mxu0 0.0
      %995 = vmatpush1.msra.mxu0 0.0
      %996 = vmatprep.subr.mxu0 0.0
      %997 = vmatpush1.msra.mxu0 0.0
      %998 = vmatprep.subr.mxu0 0.0
      %999 = vmatpush1.msra.mxu0 0.0
      %1000 = vmatprep.subr.mxu0 0.0
      %1001 = vmatpush1.msra.mxu0 0.0
      %v1002 = vand.u32 %v234, 4294901760
      %v1003 = vsub.f32 %v234, %v1002
      %1004 = vmatprep.subr.mxu0 %v1003
      %v1005 = vand.u32 %v233, 4294901760
      %v1006 = vsub.f32 %v233, %v1005
      %1007 = vmatpush1.msra.mxu0 %v1006
      %v1008 = vand.u32 %v228, 4294901760
      %v1009 = vsub.f32 %v228, %v1008
      %1010 = vmatprep.subr.mxu0 %v1009
      %v1011 = vand.u32 %v227, 4294901760
      %v1012 = vsub.f32 %v227, %v1011
      %1013 = vmatpush1.msra.mxu0 %v1012
      %1014 = vmatprep.subr.mxu0 0.0
      %1015 = vmatpush2.msra.mxu0 0.0
      %1016 = vmatprep.subr.mxu0 0.0
      %1017 = vmatpush2.msra.mxu0 0.0
      %1018 = vmatprep.subr.mxu0 0.0
      %1019 = vmatpush2.msra.mxu0 0.0
      %1020 = vmatprep.subr.mxu0 0.0
      %1021 = vmatpush2.msra.mxu0 0.0
      %1022 = vmatprep.subr.mxu0 0.0
      %1023 = vmatpush2.msra.mxu0 0.0
      %1024 = vmatprep.subr.mxu0 0.0
      %1025 = vmatpush2.msra.mxu0 0.0
      %1026 = vmatprep.subr.mxu0 0.0
      %1027 = vmatpush2.msra.mxu0 0.0
      %1028 = vmatprep.subr.mxu0 0.0
      %1029 = vmatpush2.msra.mxu0 0.0
      %1030 = vmatprep.subr.mxu0 0.0
      %1031 = vmatpush2.msra.mxu0 0.0
      %1032 = vmatprep.subr.mxu0 0.0
      %1033 = vmatpush2.msra.mxu0 0.0
      %1034 = vmatprep.subr.mxu0 0.0
      %1035 = vmatpush2.msra.mxu0 0.0
      %1036 = vmatprep.subr.mxu0 0.0
      %1037 = vmatpush2.msra.mxu0 0.0
      %1038 = vmatprep.subr.mxu0 0.0
      %1039 = vmatpush2.msra.mxu0 0.0
      %1040 = vmatprep.subr.mxu0 0.0
      %1041 = vmatpush2.msra.mxu0 0.0
      %1042 = vmatprep.subr.mxu0 0.0
      %1043 = vmatpush2.msra.mxu0 0.0
      %1044 = vmatprep.subr.mxu0 0.0
      %1045 = vmatpush2.msra.mxu0 0.0
      %1046 = vmatprep.mubr.f32.mxu0 0.0
      %v1047 = vand.u32 %v239, 4294901760
      %v1048 = vsub.f32 %v239, %v1047
      %1049 = vmatmul.mubr.f32.gmra.mxu0 %v1048
      %v1050 = vpop.f32.mrf.mxu0
      %v1051 = vadd.f32 %v963, %v1050
      %v1052 = vpop.f32.mrf.mxu0
      %v1053 = vadd.f32 %v965, %v1052
      %1054 = vmatprep.mubr.f32.mxu0 0.0
      %v1055 = vand.u32 %v242, 4294901760
      %v1056 = vsub.f32 %v242, %v1055
      %1057 = vmatmul.mubr.f32.gmra.mxu0 %v1056
      %v1058 = vpop.f32.mrf.mxu0
      %v1059 = vadd.f32 %v970, %v1058
      %v1060 = vpop.f32.mrf.mxu0
      %v1061 = vadd.f32 %v972, %v1060
      %1062 = vdwg.mxu0
      %1063 = vmatprep.subr.mxu0 0.0
      %1064 = vmatpush1.msra.mxu0 0.0
      %1065 = vmatprep.subr.mxu0 0.0
      %1066 = vmatpush1.msra.mxu0 0.0
      %1067 = vmatprep.subr.mxu0 0.0
      %1068 = vmatpush1.msra.mxu0 0.0
      %1069 = vmatprep.subr.mxu0 0.0
      %1070 = vmatpush1.msra.mxu0 0.0
      %1071 = vmatprep.subr.mxu0 0.0
      %1072 = vmatpush1.msra.mxu0 0.0
      %1073 = vmatprep.subr.mxu0 0.0
      %1074 = vmatpush1.msra.mxu0 0.0
      %1075 = vmatprep.subr.mxu0 0.0
      %1076 = vmatpush1.msra.mxu0 0.0
      %1077 = vmatprep.subr.mxu0 0.0
      %1078 = vmatpush1.msra.mxu0 0.0
      %1079 = vmatprep.subr.mxu0 0.0
      %1080 = vmatpush1.msra.mxu0 0.0
      %1081 = vmatprep.subr.mxu0 0.0
      %1082 = vmatpush1.msra.mxu0 0.0
      %1083 = vmatprep.subr.mxu0 0.0
      %1084 = vmatpush1.msra.mxu0 0.0
      %1085 = vmatprep.subr.mxu0 0.0
      %1086 = vmatpush1.msra.mxu0 0.0
      %1087 = vmatprep.subr.mxu0 0.0
      %1088 = vmatpush1.msra.mxu0 0.0
      %1089 = vmatprep.subr.mxu0 0.0
      %1090 = vmatpush1.msra.mxu0 0.0
      %v1091 = vand.u32 %v234, 4294901760
      %1092 = vmatprep.subr.mxu0 %v1091
      %v1093 = vand.u32 %v233, 4294901760
      %1094 = vmatpush1.msra.mxu0 %v1093
      %v1095 = vand.u32 %v228, 4294901760
      %1096 = vmatprep.subr.mxu0 %v1095
      %v1097 = vand.u32 %v227, 4294901760
      %1098 = vmatpush1.msra.mxu0 %v1097
      %1099 = vmatprep.subr.mxu0 0.0
      %1100 = vmatpush2.msra.mxu0 0.0
      %1101 = vmatprep.subr.mxu0 0.0
      %1102 = vmatpush2.msra.mxu0 0.0
      %1103 = vmatprep.subr.mxu0 0.0
      %1104 = vmatpush2.msra.mxu0 0.0
      %1105 = vmatprep.subr.mxu0 0.0
      %1106 = vmatpush2.msra.mxu0 0.0
      %1107 = vmatprep.subr.mxu0 0.0
      %1108 = vmatpush2.msra.mxu0 0.0
      %1109 = vmatprep.subr.mxu0 0.0
      %1110 = vmatpush2.msra.mxu0 0.0
      %1111 = vmatprep.subr.mxu0 0.0
      %1112 = vmatpush2.msra.mxu0 0.0
      %1113 = vmatprep.subr.mxu0 0.0
      %1114 = vmatpush2.msra.mxu0 0.0
      %1115 = vmatprep.subr.mxu0 0.0
      %1116 = vmatpush2.msra.mxu0 0.0
      %1117 = vmatprep.subr.mxu0 0.0
      %1118 = vmatpush2.msra.mxu0 0.0
      %1119 = vmatprep.subr.mxu0 0.0
      %1120 = vmatpush2.msra.mxu0 0.0
      %1121 = vmatprep.subr.mxu0 0.0
      %1122 = vmatpush2.msra.mxu0 0.0
      %1123 = vmatprep.subr.mxu0 0.0
      %1124 = vmatpush2.msra.mxu0 0.0
      %1125 = vmatprep.subr.mxu0 0.0
      %1126 = vmatpush2.msra.mxu0 0.0
      %1127 = vmatprep.subr.mxu0 0.0
      %1128 = vmatpush2.msra.mxu0 0.0
      %1129 = vmatprep.subr.mxu0 0.0
      %1130 = vmatpush2.msra.mxu0 0.0
      %1131 = vmatprep.mubr.f32.mxu0 0.0
      %v1132 = vand.u32 %v239, 4294901760
      %v1133 = vsub.f32 %v239, %v1132
      %v1134 = vand.u32 %v1133, 4294901760
      %1135 = vmatmul.mubr.f32.gmra.mxu0 %v1134
      %v1136 = vpop.f32.mrf.mxu0
      %v1137 = vadd.f32 %v1051, %v1136
      %v1138 = vpop.f32.mrf.mxu0
      %v1139 = vadd.f32 %v1053, %v1138
      %1140 = vmatprep.mubr.f32.mxu0 0.0
      %v1141 = vand.u32 %v242, 4294901760
      %v1142 = vsub.f32 %v242, %v1141
      %v1143 = vand.u32 %v1142, 4294901760
      %1144 = vmatmul.mubr.f32.gmra.mxu0 %v1143
      %v1145 = vpop.f32.mrf.mxu0
      %v1146 = vadd.f32 %v1059, %v1145
      %v1147 = vpop.f32.mrf.mxu0
      %v1148 = vadd.f32 %v1061, %v1147
      %1149 = vdwg.mxu0
      %1150 = vmatprep.subr.mxu0 0.0
      %1151 = vmatpush1.msra.mxu0 0.0
      %1152 = vmatprep.subr.mxu0 0.0
      %1153 = vmatpush1.msra.mxu0 0.0
      %1154 = vmatprep.subr.mxu0 0.0
      %1155 = vmatpush1.msra.mxu0 0.0
      %1156 = vmatprep.subr.mxu0 0.0
      %1157 = vmatpush1.msra.mxu0 0.0
      %1158 = vmatprep.subr.mxu0 0.0
      %1159 = vmatpush1.msra.mxu0 0.0
      %1160 = vmatprep.subr.mxu0 0.0
      %1161 = vmatpush1.msra.mxu0 0.0
      %1162 = vmatprep.subr.mxu0 0.0
      %1163 = vmatpush1.msra.mxu0 0.0
      %1164 = vmatprep.subr.mxu0 0.0
      %1165 = vmatpush1.msra.mxu0 0.0
      %1166 = vmatprep.subr.mxu0 0.0
      %1167 = vmatpush1.msra.mxu0 0.0
      %1168 = vmatprep.subr.mxu0 0.0
      %1169 = vmatpush1.msra.mxu0 0.0
      %1170 = vmatprep.subr.mxu0 0.0
      %1171 = vmatpush1.msra.mxu0 0.0
      %1172 = vmatprep.subr.mxu0 0.0
      %1173 = vmatpush1.msra.mxu0 0.0
      %1174 = vmatprep.subr.mxu0 0.0
      %1175 = vmatpush1.msra.mxu0 0.0
      %1176 = vmatprep.subr.mxu0 0.0
      %1177 = vmatpush1.msra.mxu0 0.0
      %v1178 = vand.u32 %v234, 4294901760
      %v1179 = vsub.f32 %v234, %v1178
      %v1180 = vand.u32 %v1179, 4294901760
      %1181 = vmatprep.subr.mxu0 %v1180
      %v1182 = vand.u32 %v233, 4294901760
      %v1183 = vsub.f32 %v233, %v1182
      %v1184 = vand.u32 %v1183, 4294901760
      %1185 = vmatpush1.msra.mxu0 %v1184
      %v1186 = vand.u32 %v228, 4294901760
      %v1187 = vsub.f32 %v228, %v1186
      %v1188 = vand.u32 %v1187, 4294901760
      %1189 = vmatprep.subr.mxu0 %v1188
      %v1190 = vand.u32 %v227, 4294901760
      %v1191 = vsub.f32 %v227, %v1190
      %v1192 = vand.u32 %v1191, 4294901760
      %1193 = vmatpush1.msra.mxu0 %v1192
      %1194 = vmatprep.subr.mxu0 0.0
      %1195 = vmatpush2.msra.mxu0 0.0
      %1196 = vmatprep.subr.mxu0 0.0
      %1197 = vmatpush2.msra.mxu0 0.0
      %1198 = vmatprep.subr.mxu0 0.0
      %1199 = vmatpush2.msra.mxu0 0.0
      %1200 = vmatprep.subr.mxu0 0.0
      %1201 = vmatpush2.msra.mxu0 0.0
      %1202 = vmatprep.subr.mxu0 0.0
      %1203 = vmatpush2.msra.mxu0 0.0
      %1204 = vmatprep.subr.mxu0 0.0
      %1205 = vmatpush2.msra.mxu0 0.0
      %1206 = vmatprep.subr.mxu0 0.0
      %1207 = vmatpush2.msra.mxu0 0.0
      %1208 = vmatprep.subr.mxu0 0.0
      %1209 = vmatpush2.msra.mxu0 0.0
      %1210 = vmatprep.subr.mxu0 0.0
      %1211 = vmatpush2.msra.mxu0 0.0
      %1212 = vmatprep.subr.mxu0 0.0
      %1213 = vmatpush2.msra.mxu0 0.0
      %1214 = vmatprep.subr.mxu0 0.0
      %1215 = vmatpush2.msra.mxu0 0.0
      %1216 = vmatprep.subr.mxu0 0.0
      %1217 = vmatpush2.msra.mxu0 0.0
      %1218 = vmatprep.subr.mxu0 0.0
      %1219 = vmatpush2.msra.mxu0 0.0
      %1220 = vmatprep.subr.mxu0 0.0
      %1221 = vmatpush2.msra.mxu0 0.0
      %1222 = vmatprep.subr.mxu0 0.0
      %1223 = vmatpush2.msra.mxu0 0.0
      %1224 = vmatprep.subr.mxu0 0.0
      %1225 = vmatpush2.msra.mxu0 0.0
      %1226 = vmatprep.mubr.f32.mxu0 0.0
      %v1227 = vand.u32 %v239, 4294901760
      %1228 = vmatmul.mubr.f32.gmra.mxu0 %v1227
      %v1229 = vpop.f32.mrf.mxu0
      %v1230 = vadd.f32 %v1137, %v1229
      %v1231 = vpop.f32.mrf.mxu0
      %v1232 = vadd.f32 %v1139, %v1231
      %1233 = vmatprep.mubr.f32.mxu0 0.0
      %v1234 = vand.u32 %v242, 4294901760
      %1235 = vmatmul.mubr.f32.gmra.mxu0 %v1234
      %v1236 = vpop.f32.mrf.mxu0
      %v1237 = vadd.f32 %v1146, %v1236
      %v1238 = vpop.f32.mrf.mxu0
      %v1239 = vadd.f32 %v1148, %v1238
      %1240 = vdwg.mxu0
      %1241 = vmatprep.subr.mxu0 0.0
      %1242 = vmatpush1.msra.mxu0 0.0
      %1243 = vmatprep.subr.mxu0 0.0
      %1244 = vmatpush1.msra.mxu0 0.0
      %1245 = vmatprep.subr.mxu0 0.0
      %1246 = vmatpush1.msra.mxu0 0.0
      %1247 = vmatprep.subr.mxu0 0.0
      %1248 = vmatpush1.msra.mxu0 0.0
      %1249 = vmatprep.subr.mxu0 0.0
      %1250 = vmatpush1.msra.mxu0 0.0
      %1251 = vmatprep.subr.mxu0 0.0
      %1252 = vmatpush1.msra.mxu0 0.0
      %1253 = vmatprep.subr.mxu0 0.0
      %1254 = vmatpush1.msra.mxu0 0.0
      %1255 = vmatprep.subr.mxu0 0.0
      %1256 = vmatpush1.msra.mxu0 0.0
      %1257 = vmatprep.subr.mxu0 0.0
      %1258 = vmatpush1.msra.mxu0 0.0
      %1259 = vmatprep.subr.mxu0 0.0
      %1260 = vmatpush1.msra.mxu0 0.0
      %1261 = vmatprep.subr.mxu0 0.0
      %1262 = vmatpush1.msra.mxu0 0.0
      %1263 = vmatprep.subr.mxu0 0.0
      %1264 = vmatpush1.msra.mxu0 0.0
      %1265 = vmatprep.subr.mxu0 0.0
      %1266 = vmatpush1.msra.mxu0 0.0
      %1267 = vmatprep.subr.mxu0 0.0
      %1268 = vmatpush1.msra.mxu0 0.0
      %v1269 = vand.u32 %v234, 4294901760
      %1270 = vmatprep.subr.mxu0 %v1269
      %v1271 = vand.u32 %v233, 4294901760
      %1272 = vmatpush1.msra.mxu0 %v1271
      %v1273 = vand.u32 %v228, 4294901760
      %1274 = vmatprep.subr.mxu0 %v1273
      %v1275 = vand.u32 %v227, 4294901760
      %1276 = vmatpush1.msra.mxu0 %v1275
      %1277 = vmatprep.subr.mxu0 0.0
      %1278 = vmatpush2.msra.mxu0 0.0
      %1279 = vmatprep.subr.mxu0 0.0
      %1280 = vmatpush2.msra.mxu0 0.0
      %1281 = vmatprep.subr.mxu0 0.0
      %1282 = vmatpush2.msra.mxu0 0.0
      %1283 = vmatprep.subr.mxu0 0.0
      %1284 = vmatpush2.msra.mxu0 0.0
      %1285 = vmatprep.subr.mxu0 0.0
      %1286 = vmatpush2.msra.mxu0 0.0
      %1287 = vmatprep.subr.mxu0 0.0
      %1288 = vmatpush2.msra.mxu0 0.0
      %1289 = vmatprep.subr.mxu0 0.0
      %1290 = vmatpush2.msra.mxu0 0.0
      %1291 = vmatprep.subr.mxu0 0.0
      %1292 = vmatpush2.msra.mxu0 0.0
      %1293 = vmatprep.subr.mxu0 0.0
      %1294 = vmatpush2.msra.mxu0 0.0
      %1295 = vmatprep.subr.mxu0 0.0
      %1296 = vmatpush2.msra.mxu0 0.0
      %1297 = vmatprep.subr.mxu0 0.0
      %1298 = vmatpush2.msra.mxu0 0.0
      %1299 = vmatprep.subr.mxu0 0.0
      %1300 = vmatpush2.msra.mxu0 0.0
      %1301 = vmatprep.subr.mxu0 0.0
      %1302 = vmatpush2.msra.mxu0 0.0
      %1303 = vmatprep.subr.mxu0 0.0
      %1304 = vmatpush2.msra.mxu0 0.0
      %1305 = vmatprep.subr.mxu0 0.0
      %1306 = vmatpush2.msra.mxu0 0.0
      %1307 = vmatprep.subr.mxu0 0.0
      %1308 = vmatpush2.msra.mxu0 0.0
      %1309 = vmatprep.mubr.f32.mxu0 0.0
      %v1310 = vand.u32 %v239, 4294901760
      %1311 = vmatmul.mubr.f32.gmra.mxu0 %v1310
      %v1312 = vpop.f32.mrf.mxu0
      %v1313 = vadd.f32 %v1230, %v1312
      %v1314 = vpop.f32.mrf.mxu0
      %v1315 = vadd.f32 %v1232, %v1314
      %1316 = vmatprep.mubr.f32.mxu0 0.0
      %v1317 = vand.u32 %v242, 4294901760
      %1318 = vmatmul.mubr.f32.gmra.mxu0 %v1317
      %v1319 = vpop.f32.mrf.mxu0
      %v1320 = vadd.f32 %v1237, %v1319
      %v1321 = vpop.f32.mrf.mxu0
      %v1322 = vadd.f32 %v1239, %v1321
      %1323 = vdwg.mxu0
      %1324 = vmatprep.subr.mxu0 0.0
      %1325 = vmatpush1.msra.mxu0 0.0
      %1326 = vmatprep.subr.mxu0 0.0
      %1327 = vmatpush1.msra.mxu0 0.0
      %1328 = vmatprep.subr.mxu0 0.0
      %1329 = vmatpush1.msra.mxu0 0.0
      %1330 = vmatprep.subr.mxu0 0.0
      %1331 = vmatpush1.msra.mxu0 0.0
      %1332 = vmatprep.subr.mxu0 0.0
      %1333 = vmatpush1.msra.mxu0 0.0
      %1334 = vmatprep.subr.mxu0 0.0
      %1335 = vmatpush1.msra.mxu0 0.0
      %1336 = vmatprep.subr.mxu0 0.0
      %1337 = vmatpush1.msra.mxu0 0.0
      %1338 = vmatprep.subr.mxu0 0.0
      %1339 = vmatpush1.msra.mxu0 0.0
      %1340 = vmatprep.subr.mxu0 0.0
      %1341 = vmatpush1.msra.mxu0 0.0
      %1342 = vmatprep.subr.mxu0 0.0
      %1343 = vmatpush1.msra.mxu0 0.0
      %1344 = vmatprep.subr.mxu0 0.0
      %1345 = vmatpush1.msra.mxu0 0.0
      %1346 = vmatprep.subr.mxu0 0.0
      %1347 = vmatpush1.msra.mxu0 0.0
      %1348 = vmatprep.subr.mxu0 0.0
      %1349 = vmatpush1.msra.mxu0 0.0
      %1350 = vmatprep.subr.mxu0 0.0
      %1351 = vmatpush1.msra.mxu0 0.0
      %v1352 = vand.u32 %v236, 4294901760
      %1353 = vmatprep.subr.mxu0 %v1352
      %v1354 = vand.u32 %v235, 4294901760
      %1355 = vmatpush1.msra.mxu0 %v1354
      %v1356 = vand.u32 %v230, 4294901760
      %1357 = vmatprep.subr.mxu0 %v1356
      %v1358 = vand.u32 %v229, 4294901760
      %1359 = vmatpush1.msra.mxu0 %v1358
      %1360 = vmatprep.subr.mxu0 0.0
      %1361 = vmatpush2.msra.mxu0 0.0
      %1362 = vmatprep.subr.mxu0 0.0
      %1363 = vmatpush2.msra.mxu0 0.0
      %1364 = vmatprep.subr.mxu0 0.0
      %1365 = vmatpush2.msra.mxu0 0.0
      %1366 = vmatprep.subr.mxu0 0.0
      %1367 = vmatpush2.msra.mxu0 0.0
      %1368 = vmatprep.subr.mxu0 0.0
      %1369 = vmatpush2.msra.mxu0 0.0
      %1370 = vmatprep.subr.mxu0 0.0
      %1371 = vmatpush2.msra.mxu0 0.0
      %1372 = vmatprep.subr.mxu0 0.0
      %1373 = vmatpush2.msra.mxu0 0.0
      %1374 = vmatprep.subr.mxu0 0.0
      %1375 = vmatpush2.msra.mxu0 0.0
      %1376 = vmatprep.subr.mxu0 0.0
      %1377 = vmatpush2.msra.mxu0 0.0
      %1378 = vmatprep.subr.mxu0 0.0
      %1379 = vmatpush2.msra.mxu0 0.0
      %1380 = vmatprep.subr.mxu0 0.0
      %1381 = vmatpush2.msra.mxu0 0.0
      %1382 = vmatprep.subr.mxu0 0.0
      %1383 = vmatpush2.msra.mxu0 0.0
      %1384 = vmatprep.subr.mxu0 0.0
      %1385 = vmatpush2.msra.mxu0 0.0
      %1386 = vmatprep.subr.mxu0 0.0
      %1387 = vmatpush2.msra.mxu0 0.0
      %1388 = vmatprep.subr.mxu0 0.0
      %1389 = vmatpush2.msra.mxu0 0.0
      %1390 = vmatprep.subr.mxu0 0.0
      %1391 = vmatpush2.msra.mxu0 0.0
      %1392 = vmatprep.mubr.f32.mxu0 0.0
      %v1393 = vand.u32 %v239, 4294901760
      %v1394 = vsub.f32 %v239, %v1393
      %v1395 = vand.u32 %v1394, 4294901760
      %v1396 = vsub.f32 %v1394, %v1395
      %v1397 = vand.u32 %v1396, 4294901760
      %1398 = vmatmul.mubr.f32.gmra.mxu0 %v1397
      %v1399 = vpop.f32.mrf.mxu0
      %v1400 = vadd.f32 0.0, %v1399
      %v1401 = vpop.f32.mrf.mxu0
      %v1402 = vadd.f32 0.0, %v1401
      %1403 = vmatprep.mubr.f32.mxu0 0.0
      %v1404 = vand.u32 %v242, 4294901760
      %v1405 = vsub.f32 %v242, %v1404
      %v1406 = vand.u32 %v1405, 4294901760
      %v1407 = vsub.f32 %v1405, %v1406
      %v1408 = vand.u32 %v1407, 4294901760
      %1409 = vmatmul.mubr.f32.gmra.mxu0 %v1408
      %v1410 = vpop.f32.mrf.mxu0
      %v1411 = vadd.f32 0.0, %v1410
      %v1412 = vpop.f32.mrf.mxu0
      %v1413 = vadd.f32 0.0, %v1412
      %1414 = vdwg.mxu0
      %1415 = vmatprep.subr.mxu0 0.0
      %1416 = vmatpush1.msra.mxu0 0.0
      %1417 = vmatprep.subr.mxu0 0.0
      %1418 = vmatpush1.msra.mxu0 0.0
      %1419 = vmatprep.subr.mxu0 0.0
      %1420 = vmatpush1.msra.mxu0 0.0
      %1421 = vmatprep.subr.mxu0 0.0
      %1422 = vmatpush1.msra.mxu0 0.0
      %1423 = vmatprep.subr.mxu0 0.0
      %1424 = vmatpush1.msra.mxu0 0.0
      %1425 = vmatprep.subr.mxu0 0.0
      %1426 = vmatpush1.msra.mxu0 0.0
      %1427 = vmatprep.subr.mxu0 0.0
      %1428 = vmatpush1.msra.mxu0 0.0
      %1429 = vmatprep.subr.mxu0 0.0
      %1430 = vmatpush1.msra.mxu0 0.0
      %1431 = vmatprep.subr.mxu0 0.0
      %1432 = vmatpush1.msra.mxu0 0.0
      %1433 = vmatprep.subr.mxu0 0.0
      %1434 = vmatpush1.msra.mxu0 0.0
      %1435 = vmatprep.subr.mxu0 0.0
      %1436 = vmatpush1.msra.mxu0 0.0
      %1437 = vmatprep.subr.mxu0 0.0
      %1438 = vmatpush1.msra.mxu0 0.0
      %1439 = vmatprep.subr.mxu0 0.0
      %1440 = vmatpush1.msra.mxu0 0.0
      %1441 = vmatprep.subr.mxu0 0.0
      %1442 = vmatpush1.msra.mxu0 0.0
      %v1443 = vand.u32 %v236, 4294901760
      %v1444 = vsub.f32 %v236, %v1443
      %v1445 = vand.u32 %v1444, 4294901760
      %v1446 = vsub.f32 %v1444, %v1445
      %v1447 = vand.u32 %v1446, 4294901760
      %1448 = vmatprep.subr.mxu0 %v1447
      %v1449 = vand.u32 %v235, 4294901760
      %v1450 = vsub.f32 %v235, %v1449
      %v1451 = vand.u32 %v1450, 4294901760
      %v1452 = vsub.f32 %v1450, %v1451
      %v1453 = vand.u32 %v1452, 4294901760
      %1454 = vmatpush1.msra.mxu0 %v1453
      %v1455 = vand.u32 %v230, 4294901760
      %v1456 = vsub.f32 %v230, %v1455
      %v1457 = vand.u32 %v1456, 4294901760
      %v1458 = vsub.f32 %v1456, %v1457
      %v1459 = vand.u32 %v1458, 4294901760
      %1460 = vmatprep.subr.mxu0 %v1459
      %v1461 = vand.u32 %v229, 4294901760
      %v1462 = vsub.f32 %v229, %v1461
      %v1463 = vand.u32 %v1462, 4294901760
      %v1464 = vsub.f32 %v1462, %v1463
      %v1465 = vand.u32 %v1464, 4294901760
      %1466 = vmatpush1.msra.mxu0 %v1465
      %1467 = vmatprep.subr.mxu0 0.0
      %1468 = vmatpush2.msra.mxu0 0.0
      %1469 = vmatprep.subr.mxu0 0.0
      %1470 = vmatpush2.msra.mxu0 0.0
      %1471 = vmatprep.subr.mxu0 0.0
      %1472 = vmatpush2.msra.mxu0 0.0
      %1473 = vmatprep.subr.mxu0 0.0
      %1474 = vmatpush2.msra.mxu0 0.0
      %1475 = vmatprep.subr.mxu0 0.0
      %1476 = vmatpush2.msra.mxu0 0.0
      %1477 = vmatprep.subr.mxu0 0.0
      %1478 = vmatpush2.msra.mxu0 0.0
      %1479 = vmatprep.subr.mxu0 0.0
      %1480 = vmatpush2.msra.mxu0 0.0
      %1481 = vmatprep.subr.mxu0 0.0
      %1482 = vmatpush2.msra.mxu0 0.0
      %1483 = vmatprep.subr.mxu0 0.0
      %1484 = vmatpush2.msra.mxu0 0.0
      %1485 = vmatprep.subr.mxu0 0.0
      %1486 = vmatpush2.msra.mxu0 0.0
      %1487 = vmatprep.subr.mxu0 0.0
      %1488 = vmatpush2.msra.mxu0 0.0
      %1489 = vmatprep.subr.mxu0 0.0
      %1490 = vmatpush2.msra.mxu0 0.0
      %1491 = vmatprep.subr.mxu0 0.0
      %1492 = vmatpush2.msra.mxu0 0.0
      %1493 = vmatprep.subr.mxu0 0.0
      %1494 = vmatpush2.msra.mxu0 0.0
      %1495 = vmatprep.subr.mxu0 0.0
      %1496 = vmatpush2.msra.mxu0 0.0
      %1497 = vmatprep.subr.mxu0 0.0
      %1498 = vmatpush2.msra.mxu0 0.0
      %1499 = vmatprep.mubr.f32.mxu0 0.0
      %v1500 = vand.u32 %v239, 4294901760
      %1501 = vmatmul.mubr.f32.gmra.mxu0 %v1500
      %v1502 = vpop.f32.mrf.mxu0
      %v1503 = vadd.f32 %v1400, %v1502
      %v1504 = vpop.f32.mrf.mxu0
      %v1505 = vadd.f32 %v1402, %v1504
      %1506 = vmatprep.mubr.f32.mxu0 0.0
      %v1507 = vand.u32 %v242, 4294901760
      %1508 = vmatmul.mubr.f32.gmra.mxu0 %v1507
      %v1509 = vpop.f32.mrf.mxu0
      %v1510 = vadd.f32 %v1411, %v1509
      %v1511 = vpop.f32.mrf.mxu0
      %v1512 = vadd.f32 %v1413, %v1511
      %1513 = vdwg.mxu0
      %1514 = vmatprep.subr.mxu0 0.0
      %1515 = vmatpush1.msra.mxu0 0.0
      %1516 = vmatprep.subr.mxu0 0.0
      %1517 = vmatpush1.msra.mxu0 0.0
      %1518 = vmatprep.subr.mxu0 0.0
      %1519 = vmatpush1.msra.mxu0 0.0
      %1520 = vmatprep.subr.mxu0 0.0
      %1521 = vmatpush1.msra.mxu0 0.0
      %1522 = vmatprep.subr.mxu0 0.0
      %1523 = vmatpush1.msra.mxu0 0.0
      %1524 = vmatprep.subr.mxu0 0.0
      %1525 = vmatpush1.msra.mxu0 0.0
      %1526 = vmatprep.subr.mxu0 0.0
      %1527 = vmatpush1.msra.mxu0 0.0
      %1528 = vmatprep.subr.mxu0 0.0
      %1529 = vmatpush1.msra.mxu0 0.0
      %1530 = vmatprep.subr.mxu0 0.0
      %1531 = vmatpush1.msra.mxu0 0.0
      %1532 = vmatprep.subr.mxu0 0.0
      %1533 = vmatpush1.msra.mxu0 0.0
      %1534 = vmatprep.subr.mxu0 0.0
      %1535 = vmatpush1.msra.mxu0 0.0
      %1536 = vmatprep.subr.mxu0 0.0
      %1537 = vmatpush1.msra.mxu0 0.0
      %1538 = vmatprep.subr.mxu0 0.0
      %1539 = vmatpush1.msra.mxu0 0.0
      %1540 = vmatprep.subr.mxu0 0.0
      %1541 = vmatpush1.msra.mxu0 0.0
      %v1542 = vand.u32 %v236, 4294901760
      %v1543 = vsub.f32 %v236, %v1542
      %1544 = vmatprep.subr.mxu0 %v1543
      %v1545 = vand.u32 %v235, 4294901760
      %v1546 = vsub.f32 %v235, %v1545
      %1547 = vmatpush1.msra.mxu0 %v1546
      %v1548 = vand.u32 %v230, 4294901760
      %v1549 = vsub.f32 %v230, %v1548
      %1550 = vmatprep.subr.mxu0 %v1549
      %v1551 = vand.u32 %v229, 4294901760
      %v1552 = vsub.f32 %v229, %v1551
      %1553 = vmatpush1.msra.mxu0 %v1552
      %1554 = vmatprep.subr.mxu0 0.0
      %1555 = vmatpush2.msra.mxu0 0.0
      %1556 = vmatprep.subr.mxu0 0.0
      %1557 = vmatpush2.msra.mxu0 0.0
      %1558 = vmatprep.subr.mxu0 0.0
      %1559 = vmatpush2.msra.mxu0 0.0
      %1560 = vmatprep.subr.mxu0 0.0
      %1561 = vmatpush2.msra.mxu0 0.0
      %1562 = vmatprep.subr.mxu0 0.0
      %1563 = vmatpush2.msra.mxu0 0.0
      %1564 = vmatprep.subr.mxu0 0.0
      %1565 = vmatpush2.msra.mxu0 0.0
      %1566 = vmatprep.subr.mxu0 0.0
      %1567 = vmatpush2.msra.mxu0 0.0
      %1568 = vmatprep.subr.mxu0 0.0
      %1569 = vmatpush2.msra.mxu0 0.0
      %1570 = vmatprep.subr.mxu0 0.0
      %1571 = vmatpush2.msra.mxu0 0.0
      %1572 = vmatprep.subr.mxu0 0.0
      %1573 = vmatpush2.msra.mxu0 0.0
      %1574 = vmatprep.subr.mxu0 0.0
      %1575 = vmatpush2.msra.mxu0 0.0
      %1576 = vmatprep.subr.mxu0 0.0
      %1577 = vmatpush2.msra.mxu0 0.0
      %1578 = vmatprep.subr.mxu0 0.0
      %1579 = vmatpush2.msra.mxu0 0.0
      %1580 = vmatprep.subr.mxu0 0.0
      %1581 = vmatpush2.msra.mxu0 0.0
      %1582 = vmatprep.subr.mxu0 0.0
      %1583 = vmatpush2.msra.mxu0 0.0
      %1584 = vmatprep.subr.mxu0 0.0
      %1585 = vmatpush2.msra.mxu0 0.0
      %1586 = vmatprep.mubr.f32.mxu0 0.0
      %v1587 = vand.u32 %v239, 4294901760
      %v1588 = vsub.f32 %v239, %v1587
      %1589 = vmatmul.mubr.f32.gmra.mxu0 %v1588
      %v1590 = vpop.f32.mrf.mxu0
      %v1591 = vadd.f32 %v1503, %v1590
      %v1592 = vpop.f32.mrf.mxu0
      %v1593 = vadd.f32 %v1505, %v1592
      %1594 = vmatprep.mubr.f32.mxu0 0.0
      %v1595 = vand.u32 %v242, 4294901760
      %v1596 = vsub.f32 %v242, %v1595
      %1597 = vmatmul.mubr.f32.gmra.mxu0 %v1596
      %v1598 = vpop.f32.mrf.mxu0
      %v1599 = vadd.f32 %v1510, %v1598
      %v1600 = vpop.f32.mrf.mxu0
      %v1601 = vadd.f32 %v1512, %v1600
      %1602 = vdwg.mxu0
      %1603 = vmatprep.subr.mxu0 0.0
      %1604 = vmatpush1.msra.mxu0 0.0
      %1605 = vmatprep.subr.mxu0 0.0
      %1606 = vmatpush1.msra.mxu0 0.0
      %1607 = vmatprep.subr.mxu0 0.0
      %1608 = vmatpush1.msra.mxu0 0.0
      %1609 = vmatprep.subr.mxu0 0.0
      %1610 = vmatpush1.msra.mxu0 0.0
      %1611 = vmatprep.subr.mxu0 0.0
      %1612 = vmatpush1.msra.mxu0 0.0
      %1613 = vmatprep.subr.mxu0 0.0
      %1614 = vmatpush1.msra.mxu0 0.0
      %1615 = vmatprep.subr.mxu0 0.0
      %1616 = vmatpush1.msra.mxu0 0.0
      %1617 = vmatprep.subr.mxu0 0.0
      %1618 = vmatpush1.msra.mxu0 0.0
      %1619 = vmatprep.subr.mxu0 0.0
      %1620 = vmatpush1.msra.mxu0 0.0
      %1621 = vmatprep.subr.mxu0 0.0
      %1622 = vmatpush1.msra.mxu0 0.0
      %1623 = vmatprep.subr.mxu0 0.0
      %1624 = vmatpush1.msra.mxu0 0.0
      %1625 = vmatprep.subr.mxu0 0.0
      %1626 = vmatpush1.msra.mxu0 0.0
      %1627 = vmatprep.subr.mxu0 0.0
      %1628 = vmatpush1.msra.mxu0 0.0
      %1629 = vmatprep.subr.mxu0 0.0
      %1630 = vmatpush1.msra.mxu0 0.0
      %v1631 = vand.u32 %v236, 4294901760
      %1632 = vmatprep.subr.mxu0 %v1631
      %v1633 = vand.u32 %v235, 4294901760
      %1634 = vmatpush1.msra.mxu0 %v1633
      %v1635 = vand.u32 %v230, 4294901760
      %1636 = vmatprep.subr.mxu0 %v1635
      %v1637 = vand.u32 %v229, 4294901760
      %1638 = vmatpush1.msra.mxu0 %v1637
      %1639 = vmatprep.subr.mxu0 0.0
      %1640 = vmatpush2.msra.mxu0 0.0
      %1641 = vmatprep.subr.mxu0 0.0
      %1642 = vmatpush2.msra.mxu0 0.0
      %1643 = vmatprep.subr.mxu0 0.0
      %1644 = vmatpush2.msra.mxu0 0.0
      %1645 = vmatprep.subr.mxu0 0.0
      %1646 = vmatpush2.msra.mxu0 0.0
      %1647 = vmatprep.subr.mxu0 0.0
      %1648 = vmatpush2.msra.mxu0 0.0
      %1649 = vmatprep.subr.mxu0 0.0
      %1650 = vmatpush2.msra.mxu0 0.0
      %1651 = vmatprep.subr.mxu0 0.0
      %1652 = vmatpush2.msra.mxu0 0.0
      %1653 = vmatprep.subr.mxu0 0.0
      %1654 = vmatpush2.msra.mxu0 0.0
      %1655 = vmatprep.subr.mxu0 0.0
      %1656 = vmatpush2.msra.mxu0 0.0
      %1657 = vmatprep.subr.mxu0 0.0
      %1658 = vmatpush2.msra.mxu0 0.0
      %1659 = vmatprep.subr.mxu0 0.0
      %1660 = vmatpush2.msra.mxu0 0.0
      %1661 = vmatprep.subr.mxu0 0.0
      %1662 = vmatpush2.msra.mxu0 0.0
      %1663 = vmatprep.subr.mxu0 0.0
      %1664 = vmatpush2.msra.mxu0 0.0
      %1665 = vmatprep.subr.mxu0 0.0
      %1666 = vmatpush2.msra.mxu0 0.0
      %1667 = vmatprep.subr.mxu0 0.0
      %1668 = vmatpush2.msra.mxu0 0.0
      %1669 = vmatprep.subr.mxu0 0.0
      %1670 = vmatpush2.msra.mxu0 0.0
      %1671 = vmatprep.mubr.f32.mxu0 0.0
      %v1672 = vand.u32 %v239, 4294901760
      %v1673 = vsub.f32 %v239, %v1672
      %v1674 = vand.u32 %v1673, 4294901760
      %1675 = vmatmul.mubr.f32.gmra.mxu0 %v1674
      %v1676 = vpop.f32.mrf.mxu0
      %v1677 = vadd.f32 %v1591, %v1676
      %v1678 = vpop.f32.mrf.mxu0
      %v1679 = vadd.f32 %v1593, %v1678
      %1680 = vmatprep.mubr.f32.mxu0 0.0
      %v1681 = vand.u32 %v242, 4294901760
      %v1682 = vsub.f32 %v242, %v1681
      %v1683 = vand.u32 %v1682, 4294901760
      %1684 = vmatmul.mubr.f32.gmra.mxu0 %v1683
      %v1685 = vpop.f32.mrf.mxu0
      %v1686 = vadd.f32 %v1599, %v1685
      %v1687 = vpop.f32.mrf.mxu0
      %v1688 = vadd.f32 %v1601, %v1687
      %1689 = vdwg.mxu0
      %1690 = vmatprep.subr.mxu0 0.0
      %1691 = vmatpush1.msra.mxu0 0.0
      %1692 = vmatprep.subr.mxu0 0.0
      %1693 = vmatpush1.msra.mxu0 0.0
      %1694 = vmatprep.subr.mxu0 0.0
      %1695 = vmatpush1.msra.mxu0 0.0
      %1696 = vmatprep.subr.mxu0 0.0
      %1697 = vmatpush1.msra.mxu0 0.0
      %1698 = vmatprep.subr.mxu0 0.0
      %1699 = vmatpush1.msra.mxu0 0.0
      %1700 = vmatprep.subr.mxu0 0.0
      %1701 = vmatpush1.msra.mxu0 0.0
      %1702 = vmatprep.subr.mxu0 0.0
      %1703 = vmatpush1.msra.mxu0 0.0
      %1704 = vmatprep.subr.mxu0 0.0
      %1705 = vmatpush1.msra.mxu0 0.0
      %1706 = vmatprep.subr.mxu0 0.0
      %1707 = vmatpush1.msra.mxu0 0.0
      %1708 = vmatprep.subr.mxu0 0.0
      %1709 = vmatpush1.msra.mxu0 0.0
      %1710 = vmatprep.subr.mxu0 0.0
      %1711 = vmatpush1.msra.mxu0 0.0
      %1712 = vmatprep.subr.mxu0 0.0
      %1713 = vmatpush1.msra.mxu0 0.0
      %1714 = vmatprep.subr.mxu0 0.0
      %1715 = vmatpush1.msra.mxu0 0.0
      %1716 = vmatprep.subr.mxu0 0.0
      %1717 = vmatpush1.msra.mxu0 0.0
      %v1718 = vand.u32 %v236, 4294901760
      %v1719 = vsub.f32 %v236, %v1718
      %v1720 = vand.u32 %v1719, 4294901760
      %1721 = vmatprep.subr.mxu0 %v1720
      %v1722 = vand.u32 %v235, 4294901760
      %v1723 = vsub.f32 %v235, %v1722
      %v1724 = vand.u32 %v1723, 4294901760
      %1725 = vmatpush1.msra.mxu0 %v1724
      %v1726 = vand.u32 %v230, 4294901760
      %v1727 = vsub.f32 %v230, %v1726
      %v1728 = vand.u32 %v1727, 4294901760
      %1729 = vmatprep.subr.mxu0 %v1728
      %v1730 = vand.u32 %v229, 4294901760
      %v1731 = vsub.f32 %v229, %v1730
      %v1732 = vand.u32 %v1731, 4294901760
      %1733 = vmatpush1.msra.mxu0 %v1732
      %1734 = vmatprep.subr.mxu0 0.0
      %1735 = vmatpush2.msra.mxu0 0.0
      %1736 = vmatprep.subr.mxu0 0.0
      %1737 = vmatpush2.msra.mxu0 0.0
      %1738 = vmatprep.subr.mxu0 0.0
      %1739 = vmatpush2.msra.mxu0 0.0
      %1740 = vmatprep.subr.mxu0 0.0
      %1741 = vmatpush2.msra.mxu0 0.0
      %1742 = vmatprep.subr.mxu0 0.0
      %1743 = vmatpush2.msra.mxu0 0.0
      %1744 = vmatprep.subr.mxu0 0.0
      %1745 = vmatpush2.msra.mxu0 0.0
      %1746 = vmatprep.subr.mxu0 0.0
      %1747 = vmatpush2.msra.mxu0 0.0
      %1748 = vmatprep.subr.mxu0 0.0
      %1749 = vmatpush2.msra.mxu0 0.0
      %1750 = vmatprep.subr.mxu0 0.0
      %1751 = vmatpush2.msra.mxu0 0.0
      %1752 = vmatprep.subr.mxu0 0.0
      %1753 = vmatpush2.msra.mxu0 0.0
      %1754 = vmatprep.subr.mxu0 0.0
      %1755 = vmatpush2.msra.mxu0 0.0
      %1756 = vmatprep.subr.mxu0 0.0
      %1757 = vmatpush2.msra.mxu0 0.0
      %1758 = vmatprep.subr.mxu0 0.0
      %1759 = vmatpush2.msra.mxu0 0.0
      %1760 = vmatprep.subr.mxu0 0.0
      %1761 = vmatpush2.msra.mxu0 0.0
      %1762 = vmatprep.subr.mxu0 0.0
      %1763 = vmatpush2.msra.mxu0 0.0
      %1764 = vmatprep.subr.mxu0 0.0
      %1765 = vmatpush2.msra.mxu0 0.0
      %1766 = vmatprep.mubr.f32.mxu0 0.0
      %v1767 = vand.u32 %v239, 4294901760
      %1768 = vmatmul.mubr.f32.gmra.mxu0 %v1767
      %v1769 = vpop.f32.mrf.mxu0
      %v1770 = vadd.f32 %v1677, %v1769
      %v1771 = vpop.f32.mrf.mxu0
      %v1772 = vadd.f32 %v1679, %v1771
      %1773 = vmatprep.mubr.f32.mxu0 0.0
      %v1774 = vand.u32 %v242, 4294901760
      %1775 = vmatmul.mubr.f32.gmra.mxu0 %v1774
      %v1776 = vpop.f32.mrf.mxu0
      %v1777 = vadd.f32 %v1686, %v1776
      %v1778 = vpop.f32.mrf.mxu0
      %v1779 = vadd.f32 %v1688, %v1778
      %1780 = vdwg.mxu0
      %1781 = vmatprep.subr.mxu0 0.0
      %1782 = vmatpush1.msra.mxu0 0.0
      %1783 = vmatprep.subr.mxu0 0.0
      %1784 = vmatpush1.msra.mxu0 0.0
      %1785 = vmatprep.subr.mxu0 0.0
      %1786 = vmatpush1.msra.mxu0 0.0
      %1787 = vmatprep.subr.mxu0 0.0
      %1788 = vmatpush1.msra.mxu0 0.0
      %1789 = vmatprep.subr.mxu0 0.0
      %1790 = vmatpush1.msra.mxu0 0.0
      %1791 = vmatprep.subr.mxu0 0.0
      %1792 = vmatpush1.msra.mxu0 0.0
      %1793 = vmatprep.subr.mxu0 0.0
      %1794 = vmatpush1.msra.mxu0 0.0
      %1795 = vmatprep.subr.mxu0 0.0
      %1796 = vmatpush1.msra.mxu0 0.0
      %1797 = vmatprep.subr.mxu0 0.0
      %1798 = vmatpush1.msra.mxu0 0.0
      %1799 = vmatprep.subr.mxu0 0.0
      %1800 = vmatpush1.msra.mxu0 0.0
      %1801 = vmatprep.subr.mxu0 0.0
      %1802 = vmatpush1.msra.mxu0 0.0
      %1803 = vmatprep.subr.mxu0 0.0
      %1804 = vmatpush1.msra.mxu0 0.0
      %1805 = vmatprep.subr.mxu0 0.0
      %1806 = vmatpush1.msra.mxu0 0.0
      %1807 = vmatprep.subr.mxu0 0.0
      %1808 = vmatpush1.msra.mxu0 0.0
      %v1809 = vand.u32 %v236, 4294901760
      %1810 = vmatprep.subr.mxu0 %v1809
      %v1811 = vand.u32 %v235, 4294901760
      %1812 = vmatpush1.msra.mxu0 %v1811
      %v1813 = vand.u32 %v230, 4294901760
      %1814 = vmatprep.subr.mxu0 %v1813
      %v1815 = vand.u32 %v229, 4294901760
      %1816 = vmatpush1.msra.mxu0 %v1815
      %1817 = vmatprep.subr.mxu0 0.0
      %1818 = vmatpush2.msra.mxu0 0.0
      %1819 = vmatprep.subr.mxu0 0.0
      %1820 = vmatpush2.msra.mxu0 0.0
      %1821 = vmatprep.subr.mxu0 0.0
      %1822 = vmatpush2.msra.mxu0 0.0
      %1823 = vmatprep.subr.mxu0 0.0
      %1824 = vmatpush2.msra.mxu0 0.0
      %1825 = vmatprep.subr.mxu0 0.0
      %1826 = vmatpush2.msra.mxu0 0.0
      %1827 = vmatprep.subr.mxu0 0.0
      %1828 = vmatpush2.msra.mxu0 0.0
      %1829 = vmatprep.subr.mxu0 0.0
      %1830 = vmatpush2.msra.mxu0 0.0
      %1831 = vmatprep.subr.mxu0 0.0
      %1832 = vmatpush2.msra.mxu0 0.0
      %1833 = vmatprep.subr.mxu0 0.0
      %1834 = vmatpush2.msra.mxu0 0.0
      %1835 = vmatprep.subr.mxu0 0.0
      %1836 = vmatpush2.msra.mxu0 0.0
      %1837 = vmatprep.subr.mxu0 0.0
      %1838 = vmatpush2.msra.mxu0 0.0
      %1839 = vmatprep.subr.mxu0 0.0
      %1840 = vmatpush2.msra.mxu0 0.0
      %1841 = vmatprep.subr.mxu0 0.0
      %1842 = vmatpush2.msra.mxu0 0.0
      %1843 = vmatprep.subr.mxu0 0.0
      %1844 = vmatpush2.msra.mxu0 0.0
      %1845 = vmatprep.subr.mxu0 0.0
      %1846 = vmatpush2.msra.mxu0 0.0
      %1847 = vmatprep.subr.mxu0 0.0
      %1848 = vmatpush2.msra.mxu0 0.0
      %1849 = vmatprep.mubr.f32.mxu0 0.0
      %v1850 = vand.u32 %v239, 4294901760
      %1851 = vmatmul.mubr.f32.gmra.mxu0 %v1850
      %v1852 = vpop.f32.mrf.mxu0
      %v1853 = vadd.f32 %v1770, %v1852
      %v1854 = vpop.f32.mrf.mxu0
      %v1855 = vadd.f32 %v1772, %v1854
      %1856 = vmatprep.mubr.f32.mxu0 0.0
      %v1857 = vand.u32 %v242, 4294901760
      %1858 = vmatmul.mubr.f32.gmra.mxu0 %v1857
      %v1859 = vpop.f32.mrf.mxu0
      %v1860 = vadd.f32 %v1777, %v1859
      %v1861 = vpop.f32.mrf.mxu0
      %v1862 = vadd.f32 %v1779, %v1861
      %1863 = vdwg.mxu0
      %v1865 = vsel %vm237, %v207, 0
      %v1868 = vsel %vm237, %v208, 0
      %1870 = vmatprep.subr.mxu0 0.0
      %1871 = vmatpush1.msra.mxu0 0.0
      %1872 = vmatprep.subr.mxu0 0.0
      %1873 = vmatpush1.msra.mxu0 0.0
      %1874 = vmatprep.subr.mxu0 0.0
      %1875 = vmatpush1.msra.mxu0 0.0
      %1876 = vmatprep.subr.mxu0 0.0
      %1877 = vmatpush1.msra.mxu0 0.0
      %1878 = vmatprep.subr.mxu0 0.0
      %1879 = vmatpush1.msra.mxu0 0.0
      %1880 = vmatprep.subr.mxu0 0.0
      %1881 = vmatpush1.msra.mxu0 0.0
      %1882 = vmatprep.subr.mxu0 0.0
      %1883 = vmatpush1.msra.mxu0 0.0
      %1884 = vmatprep.subr.mxu0 0.0
      %1885 = vmatpush1.msra.mxu0 0.0
      %1886 = vmatprep.subr.mxu0 0.0
      %1887 = vmatpush1.msra.mxu0 0.0
      %1888 = vmatprep.subr.mxu0 0.0
      %1889 = vmatpush1.msra.mxu0 0.0
      %1890 = vmatprep.subr.mxu0 0.0
      %1891 = vmatpush1.msra.mxu0 0.0
      %1892 = vmatprep.subr.mxu0 0.0
      %1893 = vmatpush1.msra.mxu0 0.0
      %1894 = vmatprep.subr.mxu0 0.0
      %1895 = vmatpush1.msra.mxu0 0.0
      %1896 = vmatprep.subr.mxu0 0.0
      %1897 = vmatpush1.msra.mxu0 0.0
      %v1898 = vand.u32 %v216, 4294901760
      %1899 = vmatprep.subr.mxu0 %v1898
      %v1900 = vand.u32 %v215, 4294901760
      %1901 = vmatpush1.msra.mxu0 %v1900
      %v1902 = vand.u32 %v210, 4294901760
      %1903 = vmatprep.subr.mxu0 %v1902
      %v1904 = vand.u32 %v209, 4294901760
      %1905 = vmatpush1.msra.mxu0 %v1904
      %1906 = vmatprep.subr.mxu0 0.0
      %1907 = vmatpush2.msra.mxu0 0.0
      %1908 = vmatprep.subr.mxu0 0.0
      %1909 = vmatpush2.msra.mxu0 0.0
      %1910 = vmatprep.subr.mxu0 0.0
      %1911 = vmatpush2.msra.mxu0 0.0
      %1912 = vmatprep.subr.mxu0 0.0
      %1913 = vmatpush2.msra.mxu0 0.0
      %1914 = vmatprep.subr.mxu0 0.0
      %1915 = vmatpush2.msra.mxu0 0.0
      %1916 = vmatprep.subr.mxu0 0.0
      %1917 = vmatpush2.msra.mxu0 0.0
      %1918 = vmatprep.subr.mxu0 0.0
      %1919 = vmatpush2.msra.mxu0 0.0
      %1920 = vmatprep.subr.mxu0 0.0
      %1921 = vmatpush2.msra.mxu0 0.0
      %1922 = vmatprep.subr.mxu0 0.0
      %1923 = vmatpush2.msra.mxu0 0.0
      %1924 = vmatprep.subr.mxu0 0.0
      %1925 = vmatpush2.msra.mxu0 0.0
      %1926 = vmatprep.subr.mxu0 0.0
      %1927 = vmatpush2.msra.mxu0 0.0
      %1928 = vmatprep.subr.mxu0 0.0
      %1929 = vmatpush2.msra.mxu0 0.0
      %1930 = vmatprep.subr.mxu0 0.0
      %1931 = vmatpush2.msra.mxu0 0.0
      %1932 = vmatprep.subr.mxu0 0.0
      %1933 = vmatpush2.msra.mxu0 0.0
      %1934 = vmatprep.subr.mxu0 0.0
      %1935 = vmatpush2.msra.mxu0 0.0
      %1936 = vmatprep.subr.mxu0 0.0
      %1937 = vmatpush2.msra.mxu0 0.0
      %1938 = vmatprep.mubr.f32.mxu0 0.0
      %v1939 = vand.u32 %v1865, 4294901760
      %v1940 = vsub.f32 %v1865, %v1939
      %v1941 = vand.u32 %v1940, 4294901760
      %v1942 = vsub.f32 %v1940, %v1941
      %v1943 = vand.u32 %v1942, 4294901760
      %1944 = vmatmul.mubr.f32.gmra.mxu0 %v1943
      %v1945 = vpop.f32.mrf.mxu0
      %v1946 = vadd.f32 %v773, %v1945
      %v1947 = vpop.f32.mrf.mxu0
      %v1948 = vadd.f32 %v775, %v1947
      %1949 = vmatprep.mubr.f32.mxu0 0.0
      %v1950 = vand.u32 %v1868, 4294901760
      %v1951 = vsub.f32 %v1868, %v1950
      %v1952 = vand.u32 %v1951, 4294901760
      %v1953 = vsub.f32 %v1951, %v1952
      %v1954 = vand.u32 %v1953, 4294901760
      %1955 = vmatmul.mubr.f32.gmra.mxu0 %v1954
      %v1956 = vpop.f32.mrf.mxu0
      %v1957 = vadd.f32 %v780, %v1956
      %v1958 = vpop.f32.mrf.mxu0
      %v1959 = vadd.f32 %v782, %v1958
      %1960 = vdwg.mxu0
      %1961 = vmatprep.subr.mxu0 0.0
      %1962 = vmatpush1.msra.mxu0 0.0
      %1963 = vmatprep.subr.mxu0 0.0
      %1964 = vmatpush1.msra.mxu0 0.0
      %1965 = vmatprep.subr.mxu0 0.0
      %1966 = vmatpush1.msra.mxu0 0.0
      %1967 = vmatprep.subr.mxu0 0.0
      %1968 = vmatpush1.msra.mxu0 0.0
      %1969 = vmatprep.subr.mxu0 0.0
      %1970 = vmatpush1.msra.mxu0 0.0
      %1971 = vmatprep.subr.mxu0 0.0
      %1972 = vmatpush1.msra.mxu0 0.0
      %1973 = vmatprep.subr.mxu0 0.0
      %1974 = vmatpush1.msra.mxu0 0.0
      %1975 = vmatprep.subr.mxu0 0.0
      %1976 = vmatpush1.msra.mxu0 0.0
      %1977 = vmatprep.subr.mxu0 0.0
      %1978 = vmatpush1.msra.mxu0 0.0
      %1979 = vmatprep.subr.mxu0 0.0
      %1980 = vmatpush1.msra.mxu0 0.0
      %1981 = vmatprep.subr.mxu0 0.0
      %1982 = vmatpush1.msra.mxu0 0.0
      %1983 = vmatprep.subr.mxu0 0.0
      %1984 = vmatpush1.msra.mxu0 0.0
      %1985 = vmatprep.subr.mxu0 0.0
      %1986 = vmatpush1.msra.mxu0 0.0
      %1987 = vmatprep.subr.mxu0 0.0
      %1988 = vmatpush1.msra.mxu0 0.0
      %v1989 = vand.u32 %v216, 4294901760
      %v1990 = vsub.f32 %v216, %v1989
      %v1991 = vand.u32 %v1990, 4294901760
      %v1992 = vsub.f32 %v1990, %v1991
      %v1993 = vand.u32 %v1992, 4294901760
      %1994 = vmatprep.subr.mxu0 %v1993
      %v1995 = vand.u32 %v215, 4294901760
      %v1996 = vsub.f32 %v215, %v1995
      %v1997 = vand.u32 %v1996, 4294901760
      %v1998 = vsub.f32 %v1996, %v1997
      %v1999 = vand.u32 %v1998, 4294901760
      %2000 = vmatpush1.msra.mxu0 %v1999
      %v2001 = vand.u32 %v210, 4294901760
      %v2002 = vsub.f32 %v210, %v2001
      %v2003 = vand.u32 %v2002, 4294901760
      %v2004 = vsub.f32 %v2002, %v2003
      %v2005 = vand.u32 %v2004, 4294901760
      %2006 = vmatprep.subr.mxu0 %v2005
      %v2007 = vand.u32 %v209, 4294901760
      %v2008 = vsub.f32 %v209, %v2007
      %v2009 = vand.u32 %v2008, 4294901760
      %v2010 = vsub.f32 %v2008, %v2009
      %v2011 = vand.u32 %v2010, 4294901760
      %2012 = vmatpush1.msra.mxu0 %v2011
      %2013 = vmatprep.subr.mxu0 0.0
      %2014 = vmatpush2.msra.mxu0 0.0
      %2015 = vmatprep.subr.mxu0 0.0
      %2016 = vmatpush2.msra.mxu0 0.0
      %2017 = vmatprep.subr.mxu0 0.0
      %2018 = vmatpush2.msra.mxu0 0.0
      %2019 = vmatprep.subr.mxu0 0.0
      %2020 = vmatpush2.msra.mxu0 0.0
      %2021 = vmatprep.subr.mxu0 0.0
      %2022 = vmatpush2.msra.mxu0 0.0
      %2023 = vmatprep.subr.mxu0 0.0
      %2024 = vmatpush2.msra.mxu0 0.0
      %2025 = vmatprep.subr.mxu0 0.0
      %2026 = vmatpush2.msra.mxu0 0.0
      %2027 = vmatprep.subr.mxu0 0.0
      %2028 = vmatpush2.msra.mxu0 0.0
      %2029 = vmatprep.subr.mxu0 0.0
      %2030 = vmatpush2.msra.mxu0 0.0
      %2031 = vmatprep.subr.mxu0 0.0
      %2032 = vmatpush2.msra.mxu0 0.0
      %2033 = vmatprep.subr.mxu0 0.0
      %2034 = vmatpush2.msra.mxu0 0.0
      %2035 = vmatprep.subr.mxu0 0.0
      %2036 = vmatpush2.msra.mxu0 0.0
      %2037 = vmatprep.subr.mxu0 0.0
      %2038 = vmatpush2.msra.mxu0 0.0
      %2039 = vmatprep.subr.mxu0 0.0
      %2040 = vmatpush2.msra.mxu0 0.0
      %2041 = vmatprep.subr.mxu0 0.0
      %2042 = vmatpush2.msra.mxu0 0.0
      %2043 = vmatprep.subr.mxu0 0.0
      %2044 = vmatpush2.msra.mxu0 0.0
      %2045 = vmatprep.mubr.f32.mxu0 0.0
      %v2046 = vand.u32 %v1865, 4294901760
      %2047 = vmatmul.mubr.f32.gmra.mxu0 %v2046
      %v2048 = vpop.f32.mrf.mxu0
      %v2049 = vadd.f32 %v1946, %v2048
      %v2050 = vpop.f32.mrf.mxu0
      %v2051 = vadd.f32 %v1948, %v2050
      %2052 = vmatprep.mubr.f32.mxu0 0.0
      %v2053 = vand.u32 %v1868, 4294901760
      %2054 = vmatmul.mubr.f32.gmra.mxu0 %v2053
      %v2055 = vpop.f32.mrf.mxu0
      %v2056 = vadd.f32 %v1957, %v2055
      %v2057 = vpop.f32.mrf.mxu0
      %v2058 = vadd.f32 %v1959, %v2057
      %2059 = vdwg.mxu0
      %2060 = vmatprep.subr.mxu0 0.0
      %2061 = vmatpush1.msra.mxu0 0.0
      %2062 = vmatprep.subr.mxu0 0.0
      %2063 = vmatpush1.msra.mxu0 0.0
      %2064 = vmatprep.subr.mxu0 0.0
      %2065 = vmatpush1.msra.mxu0 0.0
      %2066 = vmatprep.subr.mxu0 0.0
      %2067 = vmatpush1.msra.mxu0 0.0
      %2068 = vmatprep.subr.mxu0 0.0
      %2069 = vmatpush1.msra.mxu0 0.0
      %2070 = vmatprep.subr.mxu0 0.0
      %2071 = vmatpush1.msra.mxu0 0.0
      %2072 = vmatprep.subr.mxu0 0.0
      %2073 = vmatpush1.msra.mxu0 0.0
      %2074 = vmatprep.subr.mxu0 0.0
      %2075 = vmatpush1.msra.mxu0 0.0
      %2076 = vmatprep.subr.mxu0 0.0
      %2077 = vmatpush1.msra.mxu0 0.0
      %2078 = vmatprep.subr.mxu0 0.0
      %2079 = vmatpush1.msra.mxu0 0.0
      %2080 = vmatprep.subr.mxu0 0.0
      %2081 = vmatpush1.msra.mxu0 0.0
      %2082 = vmatprep.subr.mxu0 0.0
      %2083 = vmatpush1.msra.mxu0 0.0
      %2084 = vmatprep.subr.mxu0 0.0
      %2085 = vmatpush1.msra.mxu0 0.0
      %2086 = vmatprep.subr.mxu0 0.0
      %2087 = vmatpush1.msra.mxu0 0.0
      %v2088 = vand.u32 %v216, 4294901760
      %v2089 = vsub.f32 %v216, %v2088
      %2090 = vmatprep.subr.mxu0 %v2089
      %v2091 = vand.u32 %v215, 4294901760
      %v2092 = vsub.f32 %v215, %v2091
      %2093 = vmatpush1.msra.mxu0 %v2092
      %v2094 = vand.u32 %v210, 4294901760
      %v2095 = vsub.f32 %v210, %v2094
      %2096 = vmatprep.subr.mxu0 %v2095
      %v2097 = vand.u32 %v209, 4294901760
      %v2098 = vsub.f32 %v209, %v2097
      %2099 = vmatpush1.msra.mxu0 %v2098
      %2100 = vmatprep.subr.mxu0 0.0
      %2101 = vmatpush2.msra.mxu0 0.0
      %2102 = vmatprep.subr.mxu0 0.0
      %2103 = vmatpush2.msra.mxu0 0.0
      %2104 = vmatprep.subr.mxu0 0.0
      %2105 = vmatpush2.msra.mxu0 0.0
      %2106 = vmatprep.subr.mxu0 0.0
      %2107 = vmatpush2.msra.mxu0 0.0
      %2108 = vmatprep.subr.mxu0 0.0
      %2109 = vmatpush2.msra.mxu0 0.0
      %2110 = vmatprep.subr.mxu0 0.0
      %2111 = vmatpush2.msra.mxu0 0.0
      %2112 = vmatprep.subr.mxu0 0.0
      %2113 = vmatpush2.msra.mxu0 0.0
      %2114 = vmatprep.subr.mxu0 0.0
      %2115 = vmatpush2.msra.mxu0 0.0
      %2116 = vmatprep.subr.mxu0 0.0
      %2117 = vmatpush2.msra.mxu0 0.0
      %2118 = vmatprep.subr.mxu0 0.0
      %2119 = vmatpush2.msra.mxu0 0.0
      %2120 = vmatprep.subr.mxu0 0.0
      %2121 = vmatpush2.msra.mxu0 0.0
      %2122 = vmatprep.subr.mxu0 0.0
      %2123 = vmatpush2.msra.mxu0 0.0
      %2124 = vmatprep.subr.mxu0 0.0
      %2125 = vmatpush2.msra.mxu0 0.0
      %2126 = vmatprep.subr.mxu0 0.0
      %2127 = vmatpush2.msra.mxu0 0.0
      %2128 = vmatprep.subr.mxu0 0.0
      %2129 = vmatpush2.msra.mxu0 0.0
      %2130 = vmatprep.subr.mxu0 0.0
      %2131 = vmatpush2.msra.mxu0 0.0
      %2132 = vmatprep.mubr.f32.mxu0 0.0
      %v2133 = vand.u32 %v1865, 4294901760
      %v2134 = vsub.f32 %v1865, %v2133
      %2135 = vmatmul.mubr.f32.gmra.mxu0 %v2134
      %v2136 = vpop.f32.mrf.mxu0
      %v2137 = vadd.f32 %v2049, %v2136
      %v2138 = vpop.f32.mrf.mxu0
      %v2139 = vadd.f32 %v2051, %v2138
      %2140 = vmatprep.mubr.f32.mxu0 0.0
      %v2141 = vand.u32 %v1868, 4294901760
      %v2142 = vsub.f32 %v1868, %v2141
      %2143 = vmatmul.mubr.f32.gmra.mxu0 %v2142
      %v2144 = vpop.f32.mrf.mxu0
      %v2145 = vadd.f32 %v2056, %v2144
      %v2146 = vpop.f32.mrf.mxu0
      %v2147 = vadd.f32 %v2058, %v2146
      %2148 = vdwg.mxu0
      %2149 = vmatprep.subr.mxu0 0.0
      %2150 = vmatpush1.msra.mxu0 0.0
      %2151 = vmatprep.subr.mxu0 0.0
      %2152 = vmatpush1.msra.mxu0 0.0
      %2153 = vmatprep.subr.mxu0 0.0
      %2154 = vmatpush1.msra.mxu0 0.0
      %2155 = vmatprep.subr.mxu0 0.0
      %2156 = vmatpush1.msra.mxu0 0.0
      %2157 = vmatprep.subr.mxu0 0.0
      %2158 = vmatpush1.msra.mxu0 0.0
      %2159 = vmatprep.subr.mxu0 0.0
      %2160 = vmatpush1.msra.mxu0 0.0
      %2161 = vmatprep.subr.mxu0 0.0
      %2162 = vmatpush1.msra.mxu0 0.0
      %2163 = vmatprep.subr.mxu0 0.0
      %2164 = vmatpush1.msra.mxu0 0.0
      %2165 = vmatprep.subr.mxu0 0.0
      %2166 = vmatpush1.msra.mxu0 0.0
      %2167 = vmatprep.subr.mxu0 0.0
      %2168 = vmatpush1.msra.mxu0 0.0
      %2169 = vmatprep.subr.mxu0 0.0
      %2170 = vmatpush1.msra.mxu0 0.0
      %2171 = vmatprep.subr.mxu0 0.0
      %2172 = vmatpush1.msra.mxu0 0.0
      %2173 = vmatprep.subr.mxu0 0.0
      %2174 = vmatpush1.msra.mxu0 0.0
      %2175 = vmatprep.subr.mxu0 0.0
      %2176 = vmatpush1.msra.mxu0 0.0
      %v2177 = vand.u32 %v216, 4294901760
      %2178 = vmatprep.subr.mxu0 %v2177
      %v2179 = vand.u32 %v215, 4294901760
      %2180 = vmatpush1.msra.mxu0 %v2179
      %v2181 = vand.u32 %v210, 4294901760
      %2182 = vmatprep.subr.mxu0 %v2181
      %v2183 = vand.u32 %v209, 4294901760
      %2184 = vmatpush1.msra.mxu0 %v2183
      %2185 = vmatprep.subr.mxu0 0.0
      %2186 = vmatpush2.msra.mxu0 0.0
      %2187 = vmatprep.subr.mxu0 0.0
      %2188 = vmatpush2.msra.mxu0 0.0
      %2189 = vmatprep.subr.mxu0 0.0
      %2190 = vmatpush2.msra.mxu0 0.0
      %2191 = vmatprep.subr.mxu0 0.0
      %2192 = vmatpush2.msra.mxu0 0.0
      %2193 = vmatprep.subr.mxu0 0.0
      %2194 = vmatpush2.msra.mxu0 0.0
      %2195 = vmatprep.subr.mxu0 0.0
      %2196 = vmatpush2.msra.mxu0 0.0
      %2197 = vmatprep.subr.mxu0 0.0
      %2198 = vmatpush2.msra.mxu0 0.0
      %2199 = vmatprep.subr.mxu0 0.0
      %2200 = vmatpush2.msra.mxu0 0.0
      %2201 = vmatprep.subr.mxu0 0.0
      %2202 = vmatpush2.msra.mxu0 0.0
      %2203 = vmatprep.subr.mxu0 0.0
      %2204 = vmatpush2.msra.mxu0 0.0
      %2205 = vmatprep.subr.mxu0 0.0
      %2206 = vmatpush2.msra.mxu0 0.0
      %2207 = vmatprep.subr.mxu0 0.0
      %2208 = vmatpush2.msra.mxu0 0.0
      %2209 = vmatprep.subr.mxu0 0.0
      %2210 = vmatpush2.msra.mxu0 0.0
      %2211 = vmatprep.subr.mxu0 0.0
      %2212 = vmatpush2.msra.mxu0 0.0
      %2213 = vmatprep.subr.mxu0 0.0
      %2214 = vmatpush2.msra.mxu0 0.0
      %2215 = vmatprep.subr.mxu0 0.0
      %2216 = vmatpush2.msra.mxu0 0.0
      %2217 = vmatprep.mubr.f32.mxu0 0.0
      %v2218 = vand.u32 %v1865, 4294901760
      %v2219 = vsub.f32 %v1865, %v2218
      %v2220 = vand.u32 %v2219, 4294901760
      %2221 = vmatmul.mubr.f32.gmra.mxu0 %v2220
      %v2222 = vpop.f32.mrf.mxu0
      %v2223 = vadd.f32 %v2137, %v2222
      %v2224 = vpop.f32.mrf.mxu0
      %v2225 = vadd.f32 %v2139, %v2224
      %2226 = vmatprep.mubr.f32.mxu0 0.0
      %v2227 = vand.u32 %v1868, 4294901760
      %v2228 = vsub.f32 %v1868, %v2227
      %v2229 = vand.u32 %v2228, 4294901760
      %2230 = vmatmul.mubr.f32.gmra.mxu0 %v2229
      %v2231 = vpop.f32.mrf.mxu0
      %v2232 = vadd.f32 %v2145, %v2231
      %v2233 = vpop.f32.mrf.mxu0
      %v2234 = vadd.f32 %v2147, %v2233
      %2235 = vdwg.mxu0
      %2236 = vmatprep.subr.mxu0 0.0
      %2237 = vmatpush1.msra.mxu0 0.0
      %2238 = vmatprep.subr.mxu0 0.0
      %2239 = vmatpush1.msra.mxu0 0.0
      %2240 = vmatprep.subr.mxu0 0.0
      %2241 = vmatpush1.msra.mxu0 0.0
      %2242 = vmatprep.subr.mxu0 0.0
      %2243 = vmatpush1.msra.mxu0 0.0
      %2244 = vmatprep.subr.mxu0 0.0
      %2245 = vmatpush1.msra.mxu0 0.0
      %2246 = vmatprep.subr.mxu0 0.0
      %2247 = vmatpush1.msra.mxu0 0.0
      %2248 = vmatprep.subr.mxu0 0.0
      %2249 = vmatpush1.msra.mxu0 0.0
      %2250 = vmatprep.subr.mxu0 0.0
      %2251 = vmatpush1.msra.mxu0 0.0
      %2252 = vmatprep.subr.mxu0 0.0
      %2253 = vmatpush1.msra.mxu0 0.0
      %2254 = vmatprep.subr.mxu0 0.0
      %2255 = vmatpush1.msra.mxu0 0.0
      %2256 = vmatprep.subr.mxu0 0.0
      %2257 = vmatpush1.msra.mxu0 0.0
      %2258 = vmatprep.subr.mxu0 0.0
      %2259 = vmatpush1.msra.mxu0 0.0
      %2260 = vmatprep.subr.mxu0 0.0
      %2261 = vmatpush1.msra.mxu0 0.0
      %2262 = vmatprep.subr.mxu0 0.0
      %2263 = vmatpush1.msra.mxu0 0.0
      %v2264 = vand.u32 %v216, 4294901760
      %v2265 = vsub.f32 %v216, %v2264
      %v2266 = vand.u32 %v2265, 4294901760
      %2267 = vmatprep.subr.mxu0 %v2266
      %v2268 = vand.u32 %v215, 4294901760
      %v2269 = vsub.f32 %v215, %v2268
      %v2270 = vand.u32 %v2269, 4294901760
      %2271 = vmatpush1.msra.mxu0 %v2270
      %v2272 = vand.u32 %v210, 4294901760
      %v2273 = vsub.f32 %v210, %v2272
      %v2274 = vand.u32 %v2273, 4294901760
      %2275 = vmatprep.subr.mxu0 %v2274
      %v2276 = vand.u32 %v209, 4294901760
      %v2277 = vsub.f32 %v209, %v2276
      %v2278 = vand.u32 %v2277, 4294901760
      %2279 = vmatpush1.msra.mxu0 %v2278
      %2280 = vmatprep.subr.mxu0 0.0
      %2281 = vmatpush2.msra.mxu0 0.0
      %2282 = vmatprep.subr.mxu0 0.0
      %2283 = vmatpush2.msra.mxu0 0.0
      %2284 = vmatprep.subr.mxu0 0.0
      %2285 = vmatpush2.msra.mxu0 0.0
      %2286 = vmatprep.subr.mxu0 0.0
      %2287 = vmatpush2.msra.mxu0 0.0
      %2288 = vmatprep.subr.mxu0 0.0
      %2289 = vmatpush2.msra.mxu0 0.0
      %2290 = vmatprep.subr.mxu0 0.0
      %2291 = vmatpush2.msra.mxu0 0.0
      %2292 = vmatprep.subr.mxu0 0.0
      %2293 = vmatpush2.msra.mxu0 0.0
      %2294 = vmatprep.subr.mxu0 0.0
      %2295 = vmatpush2.msra.mxu0 0.0
      %2296 = vmatprep.subr.mxu0 0.0
      %2297 = vmatpush2.msra.mxu0 0.0
      %2298 = vmatprep.subr.mxu0 0.0
      %2299 = vmatpush2.msra.mxu0 0.0
      %2300 = vmatprep.subr.mxu0 0.0
      %2301 = vmatpush2.msra.mxu0 0.0
      %2302 = vmatprep.subr.mxu0 0.0
      %2303 = vmatpush2.msra.mxu0 0.0
      %2304 = vmatprep.subr.mxu0 0.0
      %2305 = vmatpush2.msra.mxu0 0.0
      %2306 = vmatprep.subr.mxu0 0.0
      %2307 = vmatpush2.msra.mxu0 0.0
      %2308 = vmatprep.subr.mxu0 0.0
      %2309 = vmatpush2.msra.mxu0 0.0
      %2310 = vmatprep.subr.mxu0 0.0
      %2311 = vmatpush2.msra.mxu0 0.0
      %2312 = vmatprep.mubr.f32.mxu0 0.0
      %v2313 = vand.u32 %v1865, 4294901760
      %2314 = vmatmul.mubr.f32.gmra.mxu0 %v2313
      %v2315 = vpop.f32.mrf.mxu0
      %v2316 = vadd.f32 %v2223, %v2315
      %v2317 = vpop.f32.mrf.mxu0
      %v2318 = vadd.f32 %v2225, %v2317
      %2319 = vmatprep.mubr.f32.mxu0 0.0
      %v2320 = vand.u32 %v1868, 4294901760
      %2321 = vmatmul.mubr.f32.gmra.mxu0 %v2320
      %v2322 = vpop.f32.mrf.mxu0
      %v2323 = vadd.f32 %v2232, %v2322
      %v2324 = vpop.f32.mrf.mxu0
      %v2325 = vadd.f32 %v2234, %v2324
      %2326 = vdwg.mxu0
      %2327 = vmatprep.subr.mxu0 0.0
      %2328 = vmatpush1.msra.mxu0 0.0
      %2329 = vmatprep.subr.mxu0 0.0
      %2330 = vmatpush1.msra.mxu0 0.0
      %2331 = vmatprep.subr.mxu0 0.0
      %2332 = vmatpush1.msra.mxu0 0.0
      %2333 = vmatprep.subr.mxu0 0.0
      %2334 = vmatpush1.msra.mxu0 0.0
      %2335 = vmatprep.subr.mxu0 0.0
      %2336 = vmatpush1.msra.mxu0 0.0
      %2337 = vmatprep.subr.mxu0 0.0
      %2338 = vmatpush1.msra.mxu0 0.0
      %2339 = vmatprep.subr.mxu0 0.0
      %2340 = vmatpush1.msra.mxu0 0.0
      %2341 = vmatprep.subr.mxu0 0.0
      %2342 = vmatpush1.msra.mxu0 0.0
      %2343 = vmatprep.subr.mxu0 0.0
      %2344 = vmatpush1.msra.mxu0 0.0
      %2345 = vmatprep.subr.mxu0 0.0
      %2346 = vmatpush1.msra.mxu0 0.0
      %2347 = vmatprep.subr.mxu0 0.0
      %2348 = vmatpush1.msra.mxu0 0.0
      %2349 = vmatprep.subr.mxu0 0.0
      %2350 = vmatpush1.msra.mxu0 0.0
      %2351 = vmatprep.subr.mxu0 0.0
      %2352 = vmatpush1.msra.mxu0 0.0
      %2353 = vmatprep.subr.mxu0 0.0
      %2354 = vmatpush1.msra.mxu0 0.0
      %v2355 = vand.u32 %v216, 4294901760
      %2356 = vmatprep.subr.mxu0 %v2355
      %v2357 = vand.u32 %v215, 4294901760
      %2358 = vmatpush1.msra.mxu0 %v2357
      %v2359 = vand.u32 %v210, 4294901760
      %2360 = vmatprep.subr.mxu0 %v2359
      %v2361 = vand.u32 %v209, 4294901760
      %2362 = vmatpush1.msra.mxu0 %v2361
      %2363 = vmatprep.subr.mxu0 0.0
      %2364 = vmatpush2.msra.mxu0 0.0
      %2365 = vmatprep.subr.mxu0 0.0
      %2366 = vmatpush2.msra.mxu0 0.0
      %2367 = vmatprep.subr.mxu0 0.0
      %2368 = vmatpush2.msra.mxu0 0.0
      %2369 = vmatprep.subr.mxu0 0.0
      %2370 = vmatpush2.msra.mxu0 0.0
      %2371 = vmatprep.subr.mxu0 0.0
      %2372 = vmatpush2.msra.mxu0 0.0
      %2373 = vmatprep.subr.mxu0 0.0
      %2374 = vmatpush2.msra.mxu0 0.0
      %2375 = vmatprep.subr.mxu0 0.0
      %2376 = vmatpush2.msra.mxu0 0.0
      %2377 = vmatprep.subr.mxu0 0.0
      %2378 = vmatpush2.msra.mxu0 0.0
      %2379 = vmatprep.subr.mxu0 0.0
      %2380 = vmatpush2.msra.mxu0 0.0
      %2381 = vmatprep.subr.mxu0 0.0
      %2382 = vmatpush2.msra.mxu0 0.0
      %2383 = vmatprep.subr.mxu0 0.0
      %2384 = vmatpush2.msra.mxu0 0.0
      %2385 = vmatprep.subr.mxu0 0.0
      %2386 = vmatpush2.msra.mxu0 0.0
      %2387 = vmatprep.subr.mxu0 0.0
      %2388 = vmatpush2.msra.mxu0 0.0
      %2389 = vmatprep.subr.mxu0 0.0
      %2390 = vmatpush2.msra.mxu0 0.0
      %2391 = vmatprep.subr.mxu0 0.0
      %2392 = vmatpush2.msra.mxu0 0.0
      %2393 = vmatprep.subr.mxu0 0.0
      %2394 = vmatpush2.msra.mxu0 0.0
      %2395 = vmatprep.mubr.f32.mxu0 0.0
      %v2396 = vand.u32 %v1865, 4294901760
      %2397 = vmatmul.mubr.f32.gmra.mxu0 %v2396
      %v2398 = vpop.f32.mrf.mxu0
      %v2399 = vadd.f32 %v2316, %v2398
      %v2400 = vpop.f32.mrf.mxu0
      %v2401 = vadd.f32 %v2318, %v2400
      %2402 = vmatprep.mubr.f32.mxu0 0.0
      %v2403 = vand.u32 %v1868, 4294901760
      %2404 = vmatmul.mubr.f32.gmra.mxu0 %v2403
      %v2405 = vpop.f32.mrf.mxu0
      %v2406 = vadd.f32 %v2323, %v2405
      %v2407 = vpop.f32.mrf.mxu0
      %v2408 = vadd.f32 %v2325, %v2407
      %2409 = vdwg.mxu0
      %2410 = vmatprep.subr.mxu0 0.0
      %2411 = vmatpush1.msra.mxu0 0.0
      %2412 = vmatprep.subr.mxu0 0.0
      %2413 = vmatpush1.msra.mxu0 0.0
      %2414 = vmatprep.subr.mxu0 0.0
      %2415 = vmatpush1.msra.mxu0 0.0
      %2416 = vmatprep.subr.mxu0 0.0
      %2417 = vmatpush1.msra.mxu0 0.0
      %2418 = vmatprep.subr.mxu0 0.0
      %2419 = vmatpush1.msra.mxu0 0.0
      %2420 = vmatprep.subr.mxu0 0.0
      %2421 = vmatpush1.msra.mxu0 0.0
      %2422 = vmatprep.subr.mxu0 0.0
      %2423 = vmatpush1.msra.mxu0 0.0
      %2424 = vmatprep.subr.mxu0 0.0
      %2425 = vmatpush1.msra.mxu0 0.0
      %2426 = vmatprep.subr.mxu0 0.0
      %2427 = vmatpush1.msra.mxu0 0.0
      %2428 = vmatprep.subr.mxu0 0.0
      %2429 = vmatpush1.msra.mxu0 0.0
      %2430 = vmatprep.subr.mxu0 0.0
      %2431 = vmatpush1.msra.mxu0 0.0
      %2432 = vmatprep.subr.mxu0 0.0
      %2433 = vmatpush1.msra.mxu0 0.0
      %2434 = vmatprep.subr.mxu0 0.0
      %2435 = vmatpush1.msra.mxu0 0.0
      %2436 = vmatprep.subr.mxu0 0.0
      %2437 = vmatpush1.msra.mxu0 0.0
      %v2438 = vand.u32 %v218, 4294901760
      %2439 = vmatprep.subr.mxu0 %v2438
      %v2440 = vand.u32 %v217, 4294901760
      %2441 = vmatpush1.msra.mxu0 %v2440
      %v2442 = vand.u32 %v212, 4294901760
      %2443 = vmatprep.subr.mxu0 %v2442
      %v2444 = vand.u32 %v211, 4294901760
      %2445 = vmatpush1.msra.mxu0 %v2444
      %2446 = vmatprep.subr.mxu0 0.0
      %2447 = vmatpush2.msra.mxu0 0.0
      %2448 = vmatprep.subr.mxu0 0.0
      %2449 = vmatpush2.msra.mxu0 0.0
      %2450 = vmatprep.subr.mxu0 0.0
      %2451 = vmatpush2.msra.mxu0 0.0
      %2452 = vmatprep.subr.mxu0 0.0
      %2453 = vmatpush2.msra.mxu0 0.0
      %2454 = vmatprep.subr.mxu0 0.0
      %2455 = vmatpush2.msra.mxu0 0.0
      %2456 = vmatprep.subr.mxu0 0.0
      %2457 = vmatpush2.msra.mxu0 0.0
      %2458 = vmatprep.subr.mxu0 0.0
      %2459 = vmatpush2.msra.mxu0 0.0
      %2460 = vmatprep.subr.mxu0 0.0
      %2461 = vmatpush2.msra.mxu0 0.0
      %2462 = vmatprep.subr.mxu0 0.0
      %2463 = vmatpush2.msra.mxu0 0.0
      %2464 = vmatprep.subr.mxu0 0.0
      %2465 = vmatpush2.msra.mxu0 0.0
      %2466 = vmatprep.subr.mxu0 0.0
      %2467 = vmatpush2.msra.mxu0 0.0
      %2468 = vmatprep.subr.mxu0 0.0
      %2469 = vmatpush2.msra.mxu0 0.0
      %2470 = vmatprep.subr.mxu0 0.0
      %2471 = vmatpush2.msra.mxu0 0.0
      %2472 = vmatprep.subr.mxu0 0.0
      %2473 = vmatpush2.msra.mxu0 0.0
      %2474 = vmatprep.subr.mxu0 0.0
      %2475 = vmatpush2.msra.mxu0 0.0
      %2476 = vmatprep.subr.mxu0 0.0
      %2477 = vmatpush2.msra.mxu0 0.0
      %2478 = vmatprep.mubr.f32.mxu0 0.0
      %v2479 = vand.u32 %v1865, 4294901760
      %v2480 = vsub.f32 %v1865, %v2479
      %v2481 = vand.u32 %v2480, 4294901760
      %v2482 = vsub.f32 %v2480, %v2481
      %v2483 = vand.u32 %v2482, 4294901760
      %2484 = vmatmul.mubr.f32.gmra.mxu0 %v2483
      %v2485 = vpop.f32.mrf.mxu0
      %v2486 = vadd.f32 %v1313, %v2485
      %v2487 = vpop.f32.mrf.mxu0
      %v2488 = vadd.f32 %v1315, %v2487
      %2489 = vmatprep.mubr.f32.mxu0 0.0
      %v2490 = vand.u32 %v1868, 4294901760
      %v2491 = vsub.f32 %v1868, %v2490
      %v2492 = vand.u32 %v2491, 4294901760
      %v2493 = vsub.f32 %v2491, %v2492
      %v2494 = vand.u32 %v2493, 4294901760
      %2495 = vmatmul.mubr.f32.gmra.mxu0 %v2494
      %v2496 = vpop.f32.mrf.mxu0
      %v2497 = vadd.f32 %v1320, %v2496
      %v2498 = vpop.f32.mrf.mxu0
      %v2499 = vadd.f32 %v1322, %v2498
      %2500 = vdwg.mxu0
      %2501 = vmatprep.subr.mxu0 0.0
      %2502 = vmatpush1.msra.mxu0 0.0
      %2503 = vmatprep.subr.mxu0 0.0
      %2504 = vmatpush1.msra.mxu0 0.0
      %2505 = vmatprep.subr.mxu0 0.0
      %2506 = vmatpush1.msra.mxu0 0.0
      %2507 = vmatprep.subr.mxu0 0.0
      %2508 = vmatpush1.msra.mxu0 0.0
      %2509 = vmatprep.subr.mxu0 0.0
      %2510 = vmatpush1.msra.mxu0 0.0
      %2511 = vmatprep.subr.mxu0 0.0
      %2512 = vmatpush1.msra.mxu0 0.0
      %2513 = vmatprep.subr.mxu0 0.0
      %2514 = vmatpush1.msra.mxu0 0.0
      %2515 = vmatprep.subr.mxu0 0.0
      %2516 = vmatpush1.msra.mxu0 0.0
      %2517 = vmatprep.subr.mxu0 0.0
      %2518 = vmatpush1.msra.mxu0 0.0
      %2519 = vmatprep.subr.mxu0 0.0
      %2520 = vmatpush1.msra.mxu0 0.0
      %2521 = vmatprep.subr.mxu0 0.0
      %2522 = vmatpush1.msra.mxu0 0.0
      %2523 = vmatprep.subr.mxu0 0.0
      %2524 = vmatpush1.msra.mxu0 0.0
      %2525 = vmatprep.subr.mxu0 0.0
      %2526 = vmatpush1.msra.mxu0 0.0
      %2527 = vmatprep.subr.mxu0 0.0
      %2528 = vmatpush1.msra.mxu0 0.0
      %v2529 = vand.u32 %v218, 4294901760
      %v2530 = vsub.f32 %v218, %v2529
      %v2531 = vand.u32 %v2530, 4294901760
      %v2532 = vsub.f32 %v2530, %v2531
      %v2533 = vand.u32 %v2532, 4294901760
      %2534 = vmatprep.subr.mxu0 %v2533
      %v2535 = vand.u32 %v217, 4294901760
      %v2536 = vsub.f32 %v217, %v2535
      %v2537 = vand.u32 %v2536, 4294901760
      %v2538 = vsub.f32 %v2536, %v2537
      %v2539 = vand.u32 %v2538, 4294901760
      %2540 = vmatpush1.msra.mxu0 %v2539
      %v2541 = vand.u32 %v212, 4294901760
      %v2542 = vsub.f32 %v212, %v2541
      %v2543 = vand.u32 %v2542, 4294901760
      %v2544 = vsub.f32 %v2542, %v2543
      %v2545 = vand.u32 %v2544, 4294901760
      %2546 = vmatprep.subr.mxu0 %v2545
      %v2547 = vand.u32 %v211, 4294901760
      %v2548 = vsub.f32 %v211, %v2547
      %v2549 = vand.u32 %v2548, 4294901760
      %v2550 = vsub.f32 %v2548, %v2549
      %v2551 = vand.u32 %v2550, 4294901760
      %2552 = vmatpush1.msra.mxu0 %v2551
      %2553 = vmatprep.subr.mxu0 0.0
      %2554 = vmatpush2.msra.mxu0 0.0
      %2555 = vmatprep.subr.mxu0 0.0
      %2556 = vmatpush2.msra.mxu0 0.0
      %2557 = vmatprep.subr.mxu0 0.0
      %2558 = vmatpush2.msra.mxu0 0.0
      %2559 = vmatprep.subr.mxu0 0.0
      %2560 = vmatpush2.msra.mxu0 0.0
      %2561 = vmatprep.subr.mxu0 0.0
      %2562 = vmatpush2.msra.mxu0 0.0
      %2563 = vmatprep.subr.mxu0 0.0
      %2564 = vmatpush2.msra.mxu0 0.0
      %2565 = vmatprep.subr.mxu0 0.0
      %2566 = vmatpush2.msra.mxu0 0.0
      %2567 = vmatprep.subr.mxu0 0.0
      %2568 = vmatpush2.msra.mxu0 0.0
      %2569 = vmatprep.subr.mxu0 0.0
      %2570 = vmatpush2.msra.mxu0 0.0
      %2571 = vmatprep.subr.mxu0 0.0
      %2572 = vmatpush2.msra.mxu0 0.0
      %2573 = vmatprep.subr.mxu0 0.0
      %2574 = vmatpush2.msra.mxu0 0.0
      %2575 = vmatprep.subr.mxu0 0.0
      %2576 = vmatpush2.msra.mxu0 0.0
      %2577 = vmatprep.subr.mxu0 0.0
      %2578 = vmatpush2.msra.mxu0 0.0
      %2579 = vmatprep.subr.mxu0 0.0
      %2580 = vmatpush2.msra.mxu0 0.0
      %2581 = vmatprep.subr.mxu0 0.0
      %2582 = vmatpush2.msra.mxu0 0.0
      %2583 = vmatprep.subr.mxu0 0.0
      %2584 = vmatpush2.msra.mxu0 0.0
      %2585 = vmatprep.mubr.f32.mxu0 0.0
      %v2586 = vand.u32 %v1865, 4294901760
      %2587 = vmatmul.mubr.f32.gmra.mxu0 %v2586
      %v2588 = vpop.f32.mrf.mxu0
      %v2589 = vadd.f32 %v2486, %v2588
      %v2590 = vpop.f32.mrf.mxu0
      %v2591 = vadd.f32 %v2488, %v2590
      %2592 = vmatprep.mubr.f32.mxu0 0.0
      %v2593 = vand.u32 %v1868, 4294901760
      %2594 = vmatmul.mubr.f32.gmra.mxu0 %v2593
      %v2595 = vpop.f32.mrf.mxu0
      %v2596 = vadd.f32 %v2497, %v2595
      %v2597 = vpop.f32.mrf.mxu0
      %v2598 = vadd.f32 %v2499, %v2597
      %2599 = vdwg.mxu0
      %2600 = vmatprep.subr.mxu0 0.0
      %2601 = vmatpush1.msra.mxu0 0.0
      %2602 = vmatprep.subr.mxu0 0.0
      %2603 = vmatpush1.msra.mxu0 0.0
      %2604 = vmatprep.subr.mxu0 0.0
      %2605 = vmatpush1.msra.mxu0 0.0
      %2606 = vmatprep.subr.mxu0 0.0
      %2607 = vmatpush1.msra.mxu0 0.0
      %2608 = vmatprep.subr.mxu0 0.0
      %2609 = vmatpush1.msra.mxu0 0.0
      %2610 = vmatprep.subr.mxu0 0.0
      %2611 = vmatpush1.msra.mxu0 0.0
      %2612 = vmatprep.subr.mxu0 0.0
      %2613 = vmatpush1.msra.mxu0 0.0
      %2614 = vmatprep.subr.mxu0 0.0
      %2615 = vmatpush1.msra.mxu0 0.0
      %2616 = vmatprep.subr.mxu0 0.0
      %2617 = vmatpush1.msra.mxu0 0.0
      %2618 = vmatprep.subr.mxu0 0.0
      %2619 = vmatpush1.msra.mxu0 0.0
      %2620 = vmatprep.subr.mxu0 0.0
      %2621 = vmatpush1.msra.mxu0 0.0
      %2622 = vmatprep.subr.mxu0 0.0
      %2623 = vmatpush1.msra.mxu0 0.0
      %2624 = vmatprep.subr.mxu0 0.0
      %2625 = vmatpush1.msra.mxu0 0.0
      %2626 = vmatprep.subr.mxu0 0.0
      %2627 = vmatpush1.msra.mxu0 0.0
      %v2628 = vand.u32 %v218, 4294901760
      %v2629 = vsub.f32 %v218, %v2628
      %2630 = vmatprep.subr.mxu0 %v2629
      %v2631 = vand.u32 %v217, 4294901760
      %v2632 = vsub.f32 %v217, %v2631
      %2633 = vmatpush1.msra.mxu0 %v2632
      %v2634 = vand.u32 %v212, 4294901760
      %v2635 = vsub.f32 %v212, %v2634
      %2636 = vmatprep.subr.mxu0 %v2635
      %v2637 = vand.u32 %v211, 4294901760
      %v2638 = vsub.f32 %v211, %v2637
      %2639 = vmatpush1.msra.mxu0 %v2638
      %2640 = vmatprep.subr.mxu0 0.0
      %2641 = vmatpush2.msra.mxu0 0.0
      %2642 = vmatprep.subr.mxu0 0.0
      %2643 = vmatpush2.msra.mxu0 0.0
      %2644 = vmatprep.subr.mxu0 0.0
      %2645 = vmatpush2.msra.mxu0 0.0
      %2646 = vmatprep.subr.mxu0 0.0
      %2647 = vmatpush2.msra.mxu0 0.0
      %2648 = vmatprep.subr.mxu0 0.0
      %2649 = vmatpush2.msra.mxu0 0.0
      %2650 = vmatprep.subr.mxu0 0.0
      %2651 = vmatpush2.msra.mxu0 0.0
      %2652 = vmatprep.subr.mxu0 0.0
      %2653 = vmatpush2.msra.mxu0 0.0
      %2654 = vmatprep.subr.mxu0 0.0
      %2655 = vmatpush2.msra.mxu0 0.0
      %2656 = vmatprep.subr.mxu0 0.0
      %2657 = vmatpush2.msra.mxu0 0.0
      %2658 = vmatprep.subr.mxu0 0.0
      %2659 = vmatpush2.msra.mxu0 0.0
      %2660 = vmatprep.subr.mxu0 0.0
      %2661 = vmatpush2.msra.mxu0 0.0
      %2662 = vmatprep.subr.mxu0 0.0
      %2663 = vmatpush2.msra.mxu0 0.0
      %2664 = vmatprep.subr.mxu0 0.0
      %2665 = vmatpush2.msra.mxu0 0.0
      %2666 = vmatprep.subr.mxu0 0.0
      %2667 = vmatpush2.msra.mxu0 0.0
      %2668 = vmatprep.subr.mxu0 0.0
      %2669 = vmatpush2.msra.mxu0 0.0
      %2670 = vmatprep.subr.mxu0 0.0
      %2671 = vmatpush2.msra.mxu0 0.0
      %2672 = vmatprep.mubr.f32.mxu0 0.0
      %v2673 = vand.u32 %v1865, 4294901760
      %v2674 = vsub.f32 %v1865, %v2673
      %2675 = vmatmul.mubr.f32.gmra.mxu0 %v2674
      %v2676 = vpop.f32.mrf.mxu0
      %v2677 = vadd.f32 %v2589, %v2676
      %v2678 = vpop.f32.mrf.mxu0
      %v2679 = vadd.f32 %v2591, %v2678
      %2680 = vmatprep.mubr.f32.mxu0 0.0
      %v2681 = vand.u32 %v1868, 4294901760
      %v2682 = vsub.f32 %v1868, %v2681
      %2683 = vmatmul.mubr.f32.gmra.mxu0 %v2682
      %v2684 = vpop.f32.mrf.mxu0
      %v2685 = vadd.f32 %v2596, %v2684
      %v2686 = vpop.f32.mrf.mxu0
      %v2687 = vadd.f32 %v2598, %v2686
      %2688 = vdwg.mxu0
      %2689 = vmatprep.subr.mxu0 0.0
      %2690 = vmatpush1.msra.mxu0 0.0
      %2691 = vmatprep.subr.mxu0 0.0
      %2692 = vmatpush1.msra.mxu0 0.0
      %2693 = vmatprep.subr.mxu0 0.0
      %2694 = vmatpush1.msra.mxu0 0.0
      %2695 = vmatprep.subr.mxu0 0.0
      %2696 = vmatpush1.msra.mxu0 0.0
      %2697 = vmatprep.subr.mxu0 0.0
      %2698 = vmatpush1.msra.mxu0 0.0
      %2699 = vmatprep.subr.mxu0 0.0
      %2700 = vmatpush1.msra.mxu0 0.0
      %2701 = vmatprep.subr.mxu0 0.0
      %2702 = vmatpush1.msra.mxu0 0.0
      %2703 = vmatprep.subr.mxu0 0.0
      %2704 = vmatpush1.msra.mxu0 0.0
      %2705 = vmatprep.subr.mxu0 0.0
      %2706 = vmatpush1.msra.mxu0 0.0
      %2707 = vmatprep.subr.mxu0 0.0
      %2708 = vmatpush1.msra.mxu0 0.0
      %2709 = vmatprep.subr.mxu0 0.0
      %2710 = vmatpush1.msra.mxu0 0.0
      %2711 = vmatprep.subr.mxu0 0.0
      %2712 = vmatpush1.msra.mxu0 0.0
      %2713 = vmatprep.subr.mxu0 0.0
      %2714 = vmatpush1.msra.mxu0 0.0
      %2715 = vmatprep.subr.mxu0 0.0
      %2716 = vmatpush1.msra.mxu0 0.0
      %v2717 = vand.u32 %v218, 4294901760
      %2718 = vmatprep.subr.mxu0 %v2717
      %v2719 = vand.u32 %v217, 4294901760
      %2720 = vmatpush1.msra.mxu0 %v2719
      %v2721 = vand.u32 %v212, 4294901760
      %2722 = vmatprep.subr.mxu0 %v2721
      %v2723 = vand.u32 %v211, 4294901760
      %2724 = vmatpush1.msra.mxu0 %v2723
      %2725 = vmatprep.subr.mxu0 0.0
      %2726 = vmatpush2.msra.mxu0 0.0
      %2727 = vmatprep.subr.mxu0 0.0
      %2728 = vmatpush2.msra.mxu0 0.0
      %2729 = vmatprep.subr.mxu0 0.0
      %2730 = vmatpush2.msra.mxu0 0.0
      %2731 = vmatprep.subr.mxu0 0.0
      %2732 = vmatpush2.msra.mxu0 0.0
      %2733 = vmatprep.subr.mxu0 0.0
      %2734 = vmatpush2.msra.mxu0 0.0
      %2735 = vmatprep.subr.mxu0 0.0
      %2736 = vmatpush2.msra.mxu0 0.0
      %2737 = vmatprep.subr.mxu0 0.0
      %2738 = vmatpush2.msra.mxu0 0.0
      %2739 = vmatprep.subr.mxu0 0.0
      %2740 = vmatpush2.msra.mxu0 0.0
      %2741 = vmatprep.subr.mxu0 0.0
      %2742 = vmatpush2.msra.mxu0 0.0
      %2743 = vmatprep.subr.mxu0 0.0
      %2744 = vmatpush2.msra.mxu0 0.0
      %2745 = vmatprep.subr.mxu0 0.0
      %2746 = vmatpush2.msra.mxu0 0.0
      %2747 = vmatprep.subr.mxu0 0.0
      %2748 = vmatpush2.msra.mxu0 0.0
      %2749 = vmatprep.subr.mxu0 0.0
      %2750 = vmatpush2.msra.mxu0 0.0
      %2751 = vmatprep.subr.mxu0 0.0
      %2752 = vmatpush2.msra.mxu0 0.0
      %2753 = vmatprep.subr.mxu0 0.0
      %2754 = vmatpush2.msra.mxu0 0.0
      %2755 = vmatprep.subr.mxu0 0.0
      %2756 = vmatpush2.msra.mxu0 0.0
      %2757 = vmatprep.mubr.f32.mxu0 0.0
      %v2758 = vand.u32 %v1865, 4294901760
      %v2759 = vsub.f32 %v1865, %v2758
      %v2760 = vand.u32 %v2759, 4294901760
      %2761 = vmatmul.mubr.f32.gmra.mxu0 %v2760
      %v2762 = vpop.f32.mrf.mxu0
      %v2763 = vadd.f32 %v2677, %v2762
      %v2764 = vpop.f32.mrf.mxu0
      %v2765 = vadd.f32 %v2679, %v2764
      %2766 = vmatprep.mubr.f32.mxu0 0.0
      %v2767 = vand.u32 %v1868, 4294901760
      %v2768 = vsub.f32 %v1868, %v2767
      %v2769 = vand.u32 %v2768, 4294901760
      %2770 = vmatmul.mubr.f32.gmra.mxu0 %v2769
      %v2771 = vpop.f32.mrf.mxu0
      %v2772 = vadd.f32 %v2685, %v2771
      %v2773 = vpop.f32.mrf.mxu0
      %v2774 = vadd.f32 %v2687, %v2773
      %2775 = vdwg.mxu0
      %2776 = vmatprep.subr.mxu0 0.0
      %2777 = vmatpush1.msra.mxu0 0.0
      %2778 = vmatprep.subr.mxu0 0.0
      %2779 = vmatpush1.msra.mxu0 0.0
      %2780 = vmatprep.subr.mxu0 0.0
      %2781 = vmatpush1.msra.mxu0 0.0
      %2782 = vmatprep.subr.mxu0 0.0
      %2783 = vmatpush1.msra.mxu0 0.0
      %2784 = vmatprep.subr.mxu0 0.0
      %2785 = vmatpush1.msra.mxu0 0.0
      %2786 = vmatprep.subr.mxu0 0.0
      %2787 = vmatpush1.msra.mxu0 0.0
      %2788 = vmatprep.subr.mxu0 0.0
      %2789 = vmatpush1.msra.mxu0 0.0
      %2790 = vmatprep.subr.mxu0 0.0
      %2791 = vmatpush1.msra.mxu0 0.0
      %2792 = vmatprep.subr.mxu0 0.0
      %2793 = vmatpush1.msra.mxu0 0.0
      %2794 = vmatprep.subr.mxu0 0.0
      %2795 = vmatpush1.msra.mxu0 0.0
      %2796 = vmatprep.subr.mxu0 0.0
      %2797 = vmatpush1.msra.mxu0 0.0
      %2798 = vmatprep.subr.mxu0 0.0
      %2799 = vmatpush1.msra.mxu0 0.0
      %2800 = vmatprep.subr.mxu0 0.0
      %2801 = vmatpush1.msra.mxu0 0.0
      %2802 = vmatprep.subr.mxu0 0.0
      %2803 = vmatpush1.msra.mxu0 0.0
      %v2804 = vand.u32 %v218, 4294901760
      %v2805 = vsub.f32 %v218, %v2804
      %v2806 = vand.u32 %v2805, 4294901760
      %2807 = vmatprep.subr.mxu0 %v2806
      %v2808 = vand.u32 %v217, 4294901760
      %v2809 = vsub.f32 %v217, %v2808
      %v2810 = vand.u32 %v2809, 4294901760
      %2811 = vmatpush1.msra.mxu0 %v2810
      %v2812 = vand.u32 %v212, 4294901760
      %v2813 = vsub.f32 %v212, %v2812
      %v2814 = vand.u32 %v2813, 4294901760
      %2815 = vmatprep.subr.mxu0 %v2814
      %v2816 = vand.u32 %v211, 4294901760
      %v2817 = vsub.f32 %v211, %v2816
      %v2818 = vand.u32 %v2817, 4294901760
      %2819 = vmatpush1.msra.mxu0 %v2818
      %2820 = vmatprep.subr.mxu0 0.0
      %2821 = vmatpush2.msra.mxu0 0.0
      %2822 = vmatprep.subr.mxu0 0.0
      %2823 = vmatpush2.msra.mxu0 0.0
      %2824 = vmatprep.subr.mxu0 0.0
      %2825 = vmatpush2.msra.mxu0 0.0
      %2826 = vmatprep.subr.mxu0 0.0
      %2827 = vmatpush2.msra.mxu0 0.0
      %2828 = vmatprep.subr.mxu0 0.0
      %2829 = vmatpush2.msra.mxu0 0.0
      %2830 = vmatprep.subr.mxu0 0.0
      %2831 = vmatpush2.msra.mxu0 0.0
      %2832 = vmatprep.subr.mxu0 0.0
      %2833 = vmatpush2.msra.mxu0 0.0
      %2834 = vmatprep.subr.mxu0 0.0
      %2835 = vmatpush2.msra.mxu0 0.0
      %2836 = vmatprep.subr.mxu0 0.0
      %2837 = vmatpush2.msra.mxu0 0.0
      %2838 = vmatprep.subr.mxu0 0.0
      %2839 = vmatpush2.msra.mxu0 0.0
      %2840 = vmatprep.subr.mxu0 0.0
      %2841 = vmatpush2.msra.mxu0 0.0
      %2842 = vmatprep.subr.mxu0 0.0
      %2843 = vmatpush2.msra.mxu0 0.0
      %2844 = vmatprep.subr.mxu0 0.0
      %2845 = vmatpush2.msra.mxu0 0.0
      %2846 = vmatprep.subr.mxu0 0.0
      %2847 = vmatpush2.msra.mxu0 0.0
      %2848 = vmatprep.subr.mxu0 0.0
      %2849 = vmatpush2.msra.mxu0 0.0
      %2850 = vmatprep.subr.mxu0 0.0
      %2851 = vmatpush2.msra.mxu0 0.0
      %2852 = vmatprep.mubr.f32.mxu0 0.0
      %v2853 = vand.u32 %v1865, 4294901760
      %2854 = vmatmul.mubr.f32.gmra.mxu0 %v2853
      %v2855 = vpop.f32.mrf.mxu0
      %v2856 = vadd.f32 %v2763, %v2855
      %v2857 = vpop.f32.mrf.mxu0
      %v2858 = vadd.f32 %v2765, %v2857
      %2859 = vmatprep.mubr.f32.mxu0 0.0
      %v2860 = vand.u32 %v1868, 4294901760
      %2861 = vmatmul.mubr.f32.gmra.mxu0 %v2860
      %v2862 = vpop.f32.mrf.mxu0
      %v2863 = vadd.f32 %v2772, %v2862
      %v2864 = vpop.f32.mrf.mxu0
      %v2865 = vadd.f32 %v2774, %v2864
      %2866 = vdwg.mxu0
      %2867 = vmatprep.subr.mxu0 0.0
      %2868 = vmatpush1.msra.mxu0 0.0
      %2869 = vmatprep.subr.mxu0 0.0
      %2870 = vmatpush1.msra.mxu0 0.0
      %2871 = vmatprep.subr.mxu0 0.0
      %2872 = vmatpush1.msra.mxu0 0.0
      %2873 = vmatprep.subr.mxu0 0.0
      %2874 = vmatpush1.msra.mxu0 0.0
      %2875 = vmatprep.subr.mxu0 0.0
      %2876 = vmatpush1.msra.mxu0 0.0
      %2877 = vmatprep.subr.mxu0 0.0
      %2878 = vmatpush1.msra.mxu0 0.0
      %2879 = vmatprep.subr.mxu0 0.0
      %2880 = vmatpush1.msra.mxu0 0.0
      %2881 = vmatprep.subr.mxu0 0.0
      %2882 = vmatpush1.msra.mxu0 0.0
      %2883 = vmatprep.subr.mxu0 0.0
      %2884 = vmatpush1.msra.mxu0 0.0
      %2885 = vmatprep.subr.mxu0 0.0
      %2886 = vmatpush1.msra.mxu0 0.0
      %2887 = vmatprep.subr.mxu0 0.0
      %2888 = vmatpush1.msra.mxu0 0.0
      %2889 = vmatprep.subr.mxu0 0.0
      %2890 = vmatpush1.msra.mxu0 0.0
      %2891 = vmatprep.subr.mxu0 0.0
      %2892 = vmatpush1.msra.mxu0 0.0
      %2893 = vmatprep.subr.mxu0 0.0
      %2894 = vmatpush1.msra.mxu0 0.0
      %v2895 = vand.u32 %v218, 4294901760
      %2896 = vmatprep.subr.mxu0 %v2895
      %v2897 = vand.u32 %v217, 4294901760
      %2898 = vmatpush1.msra.mxu0 %v2897
      %v2899 = vand.u32 %v212, 4294901760
      %2900 = vmatprep.subr.mxu0 %v2899
      %v2901 = vand.u32 %v211, 4294901760
      %2902 = vmatpush1.msra.mxu0 %v2901
      %2903 = vmatprep.subr.mxu0 0.0
      %2904 = vmatpush2.msra.mxu0 0.0
      %2905 = vmatprep.subr.mxu0 0.0
      %2906 = vmatpush2.msra.mxu0 0.0
      %2907 = vmatprep.subr.mxu0 0.0
      %2908 = vmatpush2.msra.mxu0 0.0
      %2909 = vmatprep.subr.mxu0 0.0
      %2910 = vmatpush2.msra.mxu0 0.0
      %2911 = vmatprep.subr.mxu0 0.0
      %2912 = vmatpush2.msra.mxu0 0.0
      %2913 = vmatprep.subr.mxu0 0.0
      %2914 = vmatpush2.msra.mxu0 0.0
      %2915 = vmatprep.subr.mxu0 0.0
      %2916 = vmatpush2.msra.mxu0 0.0
      %2917 = vmatprep.subr.mxu0 0.0
      %2918 = vmatpush2.msra.mxu0 0.0
      %2919 = vmatprep.subr.mxu0 0.0
      %2920 = vmatpush2.msra.mxu0 0.0
      %2921 = vmatprep.subr.mxu0 0.0
      %2922 = vmatpush2.msra.mxu0 0.0
      %2923 = vmatprep.subr.mxu0 0.0
      %2924 = vmatpush2.msra.mxu0 0.0
      %2925 = vmatprep.subr.mxu0 0.0
      %2926 = vmatpush2.msra.mxu0 0.0
      %2927 = vmatprep.subr.mxu0 0.0
      %2928 = vmatpush2.msra.mxu0 0.0
      %2929 = vmatprep.subr.mxu0 0.0
      %2930 = vmatpush2.msra.mxu0 0.0
      %2931 = vmatprep.subr.mxu0 0.0
      %2932 = vmatpush2.msra.mxu0 0.0
      %2933 = vmatprep.subr.mxu0 0.0
      %2934 = vmatpush2.msra.mxu0 0.0
      %2935 = vmatprep.mubr.f32.mxu0 0.0
      %v2936 = vand.u32 %v1865, 4294901760
      %2937 = vmatmul.mubr.f32.gmra.mxu0 %v2936
      %v2938 = vpop.f32.mrf.mxu0
      %v2939 = vadd.f32 %v2856, %v2938
      %v2940 = vpop.f32.mrf.mxu0
      %v2941 = vadd.f32 %v2858, %v2940
      %2942 = vmatprep.mubr.f32.mxu0 0.0
      %v2943 = vand.u32 %v1868, 4294901760
      %2944 = vmatmul.mubr.f32.gmra.mxu0 %v2943
      %v2945 = vpop.f32.mrf.mxu0
      %v2946 = vadd.f32 %v2863, %v2945
      %v2947 = vpop.f32.mrf.mxu0
      %v2948 = vadd.f32 %v2865, %v2947
      %2949 = vdwg.mxu0
      %2950 = vmatprep.subr.mxu0 0.0
      %2951 = vmatpush1.msra.mxu0 0.0
      %2952 = vmatprep.subr.mxu0 0.0
      %2953 = vmatpush1.msra.mxu0 0.0
      %2954 = vmatprep.subr.mxu0 0.0
      %2955 = vmatpush1.msra.mxu0 0.0
      %2956 = vmatprep.subr.mxu0 0.0
      %2957 = vmatpush1.msra.mxu0 0.0
      %2958 = vmatprep.subr.mxu0 0.0
      %2959 = vmatpush1.msra.mxu0 0.0
      %2960 = vmatprep.subr.mxu0 0.0
      %2961 = vmatpush1.msra.mxu0 0.0
      %2962 = vmatprep.subr.mxu0 0.0
      %2963 = vmatpush1.msra.mxu0 0.0
      %2964 = vmatprep.subr.mxu0 0.0
      %2965 = vmatpush1.msra.mxu0 0.0
      %2966 = vmatprep.subr.mxu0 0.0
      %2967 = vmatpush1.msra.mxu0 0.0
      %2968 = vmatprep.subr.mxu0 0.0
      %2969 = vmatpush1.msra.mxu0 0.0
      %2970 = vmatprep.subr.mxu0 0.0
      %2971 = vmatpush1.msra.mxu0 0.0
      %2972 = vmatprep.subr.mxu0 0.0
      %2973 = vmatpush1.msra.mxu0 0.0
      %2974 = vmatprep.subr.mxu0 0.0
      %2975 = vmatpush1.msra.mxu0 0.0
      %2976 = vmatprep.subr.mxu0 0.0
      %2977 = vmatpush1.msra.mxu0 0.0
      %v2978 = vand.u32 %v220, 4294901760
      %2979 = vmatprep.subr.mxu0 %v2978
      %v2980 = vand.u32 %v219, 4294901760
      %2981 = vmatpush1.msra.mxu0 %v2980
      %v2982 = vand.u32 %v214, 4294901760
      %2983 = vmatprep.subr.mxu0 %v2982
      %v2984 = vand.u32 %v213, 4294901760
      %2985 = vmatpush1.msra.mxu0 %v2984
      %2986 = vmatprep.subr.mxu0 0.0
      %2987 = vmatpush2.msra.mxu0 0.0
      %2988 = vmatprep.subr.mxu0 0.0
      %2989 = vmatpush2.msra.mxu0 0.0
      %2990 = vmatprep.subr.mxu0 0.0
      %2991 = vmatpush2.msra.mxu0 0.0
      %2992 = vmatprep.subr.mxu0 0.0
      %2993 = vmatpush2.msra.mxu0 0.0
      %2994 = vmatprep.subr.mxu0 0.0
      %2995 = vmatpush2.msra.mxu0 0.0
      %2996 = vmatprep.subr.mxu0 0.0
      %2997 = vmatpush2.msra.mxu0 0.0
      %2998 = vmatprep.subr.mxu0 0.0
      %2999 = vmatpush2.msra.mxu0 0.0
      %3000 = vmatprep.subr.mxu0 0.0
      %3001 = vmatpush2.msra.mxu0 0.0
      %3002 = vmatprep.subr.mxu0 0.0
      %3003 = vmatpush2.msra.mxu0 0.0
      %3004 = vmatprep.subr.mxu0 0.0
      %3005 = vmatpush2.msra.mxu0 0.0
      %3006 = vmatprep.subr.mxu0 0.0
      %3007 = vmatpush2.msra.mxu0 0.0
      %3008 = vmatprep.subr.mxu0 0.0
      %3009 = vmatpush2.msra.mxu0 0.0
      %3010 = vmatprep.subr.mxu0 0.0
      %3011 = vmatpush2.msra.mxu0 0.0
      %3012 = vmatprep.subr.mxu0 0.0
      %3013 = vmatpush2.msra.mxu0 0.0
      %3014 = vmatprep.subr.mxu0 0.0
      %3015 = vmatpush2.msra.mxu0 0.0
      %3016 = vmatprep.subr.mxu0 0.0
      %3017 = vmatpush2.msra.mxu0 0.0
      %3018 = vmatprep.mubr.f32.mxu0 0.0
      %v3019 = vand.u32 %v1865, 4294901760
      %v3020 = vsub.f32 %v1865, %v3019
      %v3021 = vand.u32 %v3020, 4294901760
      %v3022 = vsub.f32 %v3020, %v3021
      %v3023 = vand.u32 %v3022, 4294901760
      %3024 = vmatmul.mubr.f32.gmra.mxu0 %v3023
      %v3025 = vpop.f32.mrf.mxu0
      %v3026 = vadd.f32 %v1853, %v3025
      %v3027 = vpop.f32.mrf.mxu0
      %v3028 = vadd.f32 %v1855, %v3027
      %3029 = vmatprep.mubr.f32.mxu0 0.0
      %v3030 = vand.u32 %v1868, 4294901760
      %v3031 = vsub.f32 %v1868, %v3030
      %v3032 = vand.u32 %v3031, 4294901760
      %v3033 = vsub.f32 %v3031, %v3032
      %v3034 = vand.u32 %v3033, 4294901760
      %3035 = vmatmul.mubr.f32.gmra.mxu0 %v3034
      %v3036 = vpop.f32.mrf.mxu0
      %v3037 = vadd.f32 %v1860, %v3036
      %v3038 = vpop.f32.mrf.mxu0
      %v3039 = vadd.f32 %v1862, %v3038
      %3040 = vdwg.mxu0
      %3041 = vmatprep.subr.mxu0 0.0
      %3042 = vmatpush1.msra.mxu0 0.0
      %3043 = vmatprep.subr.mxu0 0.0
      %3044 = vmatpush1.msra.mxu0 0.0
      %3045 = vmatprep.subr.mxu0 0.0
      %3046 = vmatpush1.msra.mxu0 0.0
      %3047 = vmatprep.subr.mxu0 0.0
      %3048 = vmatpush1.msra.mxu0 0.0
      %3049 = vmatprep.subr.mxu0 0.0
      %3050 = vmatpush1.msra.mxu0 0.0
      %3051 = vmatprep.subr.mxu0 0.0
      %3052 = vmatpush1.msra.mxu0 0.0
      %3053 = vmatprep.subr.mxu0 0.0
      %3054 = vmatpush1.msra.mxu0 0.0
      %3055 = vmatprep.subr.mxu0 0.0
      %3056 = vmatpush1.msra.mxu0 0.0
      %3057 = vmatprep.subr.mxu0 0.0
      %3058 = vmatpush1.msra.mxu0 0.0
      %3059 = vmatprep.subr.mxu0 0.0
      %3060 = vmatpush1.msra.mxu0 0.0
      %3061 = vmatprep.subr.mxu0 0.0
      %3062 = vmatpush1.msra.mxu0 0.0
      %3063 = vmatprep.subr.mxu0 0.0
      %3064 = vmatpush1.msra.mxu0 0.0
      %3065 = vmatprep.subr.mxu0 0.0
      %3066 = vmatpush1.msra.mxu0 0.0
      %3067 = vmatprep.subr.mxu0 0.0
      %3068 = vmatpush1.msra.mxu0 0.0
      %v3069 = vand.u32 %v220, 4294901760
      %v3070 = vsub.f32 %v220, %v3069
      %v3071 = vand.u32 %v3070, 4294901760
      %v3072 = vsub.f32 %v3070, %v3071
      %v3073 = vand.u32 %v3072, 4294901760
      %3074 = vmatprep.subr.mxu0 %v3073
      %v3075 = vand.u32 %v219, 4294901760
      %v3076 = vsub.f32 %v219, %v3075
      %v3077 = vand.u32 %v3076, 4294901760
      %v3078 = vsub.f32 %v3076, %v3077
      %v3079 = vand.u32 %v3078, 4294901760
      %3080 = vmatpush1.msra.mxu0 %v3079
      %v3081 = vand.u32 %v214, 4294901760
      %v3082 = vsub.f32 %v214, %v3081
      %v3083 = vand.u32 %v3082, 4294901760
      %v3084 = vsub.f32 %v3082, %v3083
      %v3085 = vand.u32 %v3084, 4294901760
      %3086 = vmatprep.subr.mxu0 %v3085
      %v3087 = vand.u32 %v213, 4294901760
      %v3088 = vsub.f32 %v213, %v3087
      %v3089 = vand.u32 %v3088, 4294901760
      %v3090 = vsub.f32 %v3088, %v3089
      %v3091 = vand.u32 %v3090, 4294901760
      %3092 = vmatpush1.msra.mxu0 %v3091
      %3093 = vmatprep.subr.mxu0 0.0
      %3094 = vmatpush2.msra.mxu0 0.0
      %3095 = vmatprep.subr.mxu0 0.0
      %3096 = vmatpush2.msra.mxu0 0.0
      %3097 = vmatprep.subr.mxu0 0.0
      %3098 = vmatpush2.msra.mxu0 0.0
      %3099 = vmatprep.subr.mxu0 0.0
      %3100 = vmatpush2.msra.mxu0 0.0
      %3101 = vmatprep.subr.mxu0 0.0
      %3102 = vmatpush2.msra.mxu0 0.0
      %3103 = vmatprep.subr.mxu0 0.0
      %3104 = vmatpush2.msra.mxu0 0.0
      %3105 = vmatprep.subr.mxu0 0.0
      %3106 = vmatpush2.msra.mxu0 0.0
      %3107 = vmatprep.subr.mxu0 0.0
      %3108 = vmatpush2.msra.mxu0 0.0
      %3109 = vmatprep.subr.mxu0 0.0
      %3110 = vmatpush2.msra.mxu0 0.0
      %3111 = vmatprep.subr.mxu0 0.0
      %3112 = vmatpush2.msra.mxu0 0.0
      %3113 = vmatprep.subr.mxu0 0.0
      %3114 = vmatpush2.msra.mxu0 0.0
      %3115 = vmatprep.subr.mxu0 0.0
      %3116 = vmatpush2.msra.mxu0 0.0
      %3117 = vmatprep.subr.mxu0 0.0
      %3118 = vmatpush2.msra.mxu0 0.0
      %3119 = vmatprep.subr.mxu0 0.0
      %3120 = vmatpush2.msra.mxu0 0.0
      %3121 = vmatprep.subr.mxu0 0.0
      %3122 = vmatpush2.msra.mxu0 0.0
      %3123 = vmatprep.subr.mxu0 0.0
      %3124 = vmatpush2.msra.mxu0 0.0
      %3125 = vmatprep.mubr.f32.mxu0 0.0
      %v3126 = vand.u32 %v1865, 4294901760
      %3127 = vmatmul.mubr.f32.gmra.mxu0 %v3126
      %v3128 = vpop.f32.mrf.mxu0
      %v3129 = vadd.f32 %v3026, %v3128
      %v3130 = vpop.f32.mrf.mxu0
      %v3131 = vadd.f32 %v3028, %v3130
      %3132 = vmatprep.mubr.f32.mxu0 0.0
      %v3133 = vand.u32 %v1868, 4294901760
      %3134 = vmatmul.mubr.f32.gmra.mxu0 %v3133
      %v3135 = vpop.f32.mrf.mxu0
      %v3136 = vadd.f32 %v3037, %v3135
      %v3137 = vpop.f32.mrf.mxu0
      %v3138 = vadd.f32 %v3039, %v3137
      %3139 = vdwg.mxu0
      %3140 = vmatprep.subr.mxu0 0.0
      %3141 = vmatpush1.msra.mxu0 0.0
      %3142 = vmatprep.subr.mxu0 0.0
      %3143 = vmatpush1.msra.mxu0 0.0
      %3144 = vmatprep.subr.mxu0 0.0
      %3145 = vmatpush1.msra.mxu0 0.0
      %3146 = vmatprep.subr.mxu0 0.0
      %3147 = vmatpush1.msra.mxu0 0.0
      %3148 = vmatprep.subr.mxu0 0.0
      %3149 = vmatpush1.msra.mxu0 0.0
      %3150 = vmatprep.subr.mxu0 0.0
      %3151 = vmatpush1.msra.mxu0 0.0
      %3152 = vmatprep.subr.mxu0 0.0
      %3153 = vmatpush1.msra.mxu0 0.0
      %3154 = vmatprep.subr.mxu0 0.0
      %3155 = vmatpush1.msra.mxu0 0.0
      %3156 = vmatprep.subr.mxu0 0.0
      %3157 = vmatpush1.msra.mxu0 0.0
      %3158 = vmatprep.subr.mxu0 0.0
      %3159 = vmatpush1.msra.mxu0 0.0
      %3160 = vmatprep.subr.mxu0 0.0
      %3161 = vmatpush1.msra.mxu0 0.0
      %3162 = vmatprep.subr.mxu0 0.0
      %3163 = vmatpush1.msra.mxu0 0.0
      %3164 = vmatprep.subr.mxu0 0.0
      %3165 = vmatpush1.msra.mxu0 0.0
      %3166 = vmatprep.subr.mxu0 0.0
      %3167 = vmatpush1.msra.mxu0 0.0
      %v3168 = vand.u32 %v220, 4294901760
      %v3169 = vsub.f32 %v220, %v3168
      %3170 = vmatprep.subr.mxu0 %v3169
      %v3171 = vand.u32 %v219, 4294901760
      %v3172 = vsub.f32 %v219, %v3171
      %3173 = vmatpush1.msra.mxu0 %v3172
      %v3174 = vand.u32 %v214, 4294901760
      %v3175 = vsub.f32 %v214, %v3174
      %3176 = vmatprep.subr.mxu0 %v3175
      %v3177 = vand.u32 %v213, 4294901760
      %v3178 = vsub.f32 %v213, %v3177
      %3179 = vmatpush1.msra.mxu0 %v3178
      %3180 = vmatprep.subr.mxu0 0.0
      %3181 = vmatpush2.msra.mxu0 0.0
      %3182 = vmatprep.subr.mxu0 0.0
      %3183 = vmatpush2.msra.mxu0 0.0
      %3184 = vmatprep.subr.mxu0 0.0
      %3185 = vmatpush2.msra.mxu0 0.0
      %3186 = vmatprep.subr.mxu0 0.0
      %3187 = vmatpush2.msra.mxu0 0.0
      %3188 = vmatprep.subr.mxu0 0.0
      %3189 = vmatpush2.msra.mxu0 0.0
      %3190 = vmatprep.subr.mxu0 0.0
      %3191 = vmatpush2.msra.mxu0 0.0
      %3192 = vmatprep.subr.mxu0 0.0
      %3193 = vmatpush2.msra.mxu0 0.0
      %3194 = vmatprep.subr.mxu0 0.0
      %3195 = vmatpush2.msra.mxu0 0.0
      %3196 = vmatprep.subr.mxu0 0.0
      %3197 = vmatpush2.msra.mxu0 0.0
      %3198 = vmatprep.subr.mxu0 0.0
      %3199 = vmatpush2.msra.mxu0 0.0
      %3200 = vmatprep.subr.mxu0 0.0
      %3201 = vmatpush2.msra.mxu0 0.0
      %3202 = vmatprep.subr.mxu0 0.0
      %3203 = vmatpush2.msra.mxu0 0.0
      %3204 = vmatprep.subr.mxu0 0.0
      %3205 = vmatpush2.msra.mxu0 0.0
      %3206 = vmatprep.subr.mxu0 0.0
      %3207 = vmatpush2.msra.mxu0 0.0
      %3208 = vmatprep.subr.mxu0 0.0
      %3209 = vmatpush2.msra.mxu0 0.0
      %3210 = vmatprep.subr.mxu0 0.0
      %3211 = vmatpush2.msra.mxu0 0.0
      %3212 = vmatprep.mubr.f32.mxu0 0.0
      %v3213 = vand.u32 %v1865, 4294901760
      %v3214 = vsub.f32 %v1865, %v3213
      %3215 = vmatmul.mubr.f32.gmra.mxu0 %v3214
      %v3216 = vpop.f32.mrf.mxu0
      %v3217 = vadd.f32 %v3129, %v3216
      %v3218 = vpop.f32.mrf.mxu0
      %v3219 = vadd.f32 %v3131, %v3218
      %3220 = vmatprep.mubr.f32.mxu0 0.0
      %v3221 = vand.u32 %v1868, 4294901760
      %v3222 = vsub.f32 %v1868, %v3221
      %3223 = vmatmul.mubr.f32.gmra.mxu0 %v3222
      %v3224 = vpop.f32.mrf.mxu0
      %v3225 = vadd.f32 %v3136, %v3224
      %v3226 = vpop.f32.mrf.mxu0
      %v3227 = vadd.f32 %v3138, %v3226
      %3228 = vdwg.mxu0
      %3229 = vmatprep.subr.mxu0 0.0
      %3230 = vmatpush1.msra.mxu0 0.0
      %3231 = vmatprep.subr.mxu0 0.0
      %3232 = vmatpush1.msra.mxu0 0.0
      %3233 = vmatprep.subr.mxu0 0.0
      %3234 = vmatpush1.msra.mxu0 0.0
      %3235 = vmatprep.subr.mxu0 0.0
      %3236 = vmatpush1.msra.mxu0 0.0
      %3237 = vmatprep.subr.mxu0 0.0
      %3238 = vmatpush1.msra.mxu0 0.0
      %3239 = vmatprep.subr.mxu0 0.0
      %3240 = vmatpush1.msra.mxu0 0.0
      %3241 = vmatprep.subr.mxu0 0.0
      %3242 = vmatpush1.msra.mxu0 0.0
      %3243 = vmatprep.subr.mxu0 0.0
      %3244 = vmatpush1.msra.mxu0 0.0
      %3245 = vmatprep.subr.mxu0 0.0
      %3246 = vmatpush1.msra.mxu0 0.0
      %3247 = vmatprep.subr.mxu0 0.0
      %3248 = vmatpush1.msra.mxu0 0.0
      %3249 = vmatprep.subr.mxu0 0.0
      %3250 = vmatpush1.msra.mxu0 0.0
      %3251 = vmatprep.subr.mxu0 0.0
      %3252 = vmatpush1.msra.mxu0 0.0
      %3253 = vmatprep.subr.mxu0 0.0
      %3254 = vmatpush1.msra.mxu0 0.0
      %3255 = vmatprep.subr.mxu0 0.0
      %3256 = vmatpush1.msra.mxu0 0.0
      %v3257 = vand.u32 %v220, 4294901760
      %3258 = vmatprep.subr.mxu0 %v3257
      %v3259 = vand.u32 %v219, 4294901760
      %3260 = vmatpush1.msra.mxu0 %v3259
      %v3261 = vand.u32 %v214, 4294901760
      %3262 = vmatprep.subr.mxu0 %v3261
      %v3263 = vand.u32 %v213, 4294901760
      %3264 = vmatpush1.msra.mxu0 %v3263
      %3265 = vmatprep.subr.mxu0 0.0
      %3266 = vmatpush2.msra.mxu0 0.0
      %3267 = vmatprep.subr.mxu0 0.0
      %3268 = vmatpush2.msra.mxu0 0.0
      %3269 = vmatprep.subr.mxu0 0.0
      %3270 = vmatpush2.msra.mxu0 0.0
      %3271 = vmatprep.subr.mxu0 0.0
      %3272 = vmatpush2.msra.mxu0 0.0
      %3273 = vmatprep.subr.mxu0 0.0
      %3274 = vmatpush2.msra.mxu0 0.0
      %3275 = vmatprep.subr.mxu0 0.0
      %3276 = vmatpush2.msra.mxu0 0.0
      %3277 = vmatprep.subr.mxu0 0.0
      %3278 = vmatpush2.msra.mxu0 0.0
      %3279 = vmatprep.subr.mxu0 0.0
      %3280 = vmatpush2.msra.mxu0 0.0
      %3281 = vmatprep.subr.mxu0 0.0
      %3282 = vmatpush2.msra.mxu0 0.0
      %3283 = vmatprep.subr.mxu0 0.0
      %3284 = vmatpush2.msra.mxu0 0.0
      %3285 = vmatprep.subr.mxu0 0.0
      %3286 = vmatpush2.msra.mxu0 0.0
      %3287 = vmatprep.subr.mxu0 0.0
      %3288 = vmatpush2.msra.mxu0 0.0
      %3289 = vmatprep.subr.mxu0 0.0
      %3290 = vmatpush2.msra.mxu0 0.0
      %3291 = vmatprep.subr.mxu0 0.0
      %3292 = vmatpush2.msra.mxu0 0.0
      %3293 = vmatprep.subr.mxu0 0.0
      %3294 = vmatpush2.msra.mxu0 0.0
      %3295 = vmatprep.subr.mxu0 0.0
      %3296 = vmatpush2.msra.mxu0 0.0
      %3297 = vmatprep.mubr.f32.mxu0 0.0
      %v3298 = vand.u32 %v1865, 4294901760
      %v3299 = vsub.f32 %v1865, %v3298
      %v3300 = vand.u32 %v3299, 4294901760
      %3301 = vmatmul.mubr.f32.gmra.mxu0 %v3300
      %v3302 = vpop.f32.mrf.mxu0
      %v3303 = vadd.f32 %v3217, %v3302
      %v3304 = vpop.f32.mrf.mxu0
      %v3305 = vadd.f32 %v3219, %v3304
      %3306 = vmatprep.mubr.f32.mxu0 0.0
      %v3307 = vand.u32 %v1868, 4294901760
      %v3308 = vsub.f32 %v1868, %v3307
      %v3309 = vand.u32 %v3308, 4294901760
      %3310 = vmatmul.mubr.f32.gmra.mxu0 %v3309
      %v3311 = vpop.f32.mrf.mxu0
      %v3312 = vadd.f32 %v3225, %v3311
      %v3313 = vpop.f32.mrf.mxu0
      %v3314 = vadd.f32 %v3227, %v3313
      %3315 = vdwg.mxu0
      %3316 = vmatprep.subr.mxu0 0.0
      %3317 = vmatpush1.msra.mxu0 0.0
      %3318 = vmatprep.subr.mxu0 0.0
      %3319 = vmatpush1.msra.mxu0 0.0
      %3320 = vmatprep.subr.mxu0 0.0
      %3321 = vmatpush1.msra.mxu0 0.0
      %3322 = vmatprep.subr.mxu0 0.0
      %3323 = vmatpush1.msra.mxu0 0.0
      %3324 = vmatprep.subr.mxu0 0.0
      %3325 = vmatpush1.msra.mxu0 0.0
      %3326 = vmatprep.subr.mxu0 0.0
      %3327 = vmatpush1.msra.mxu0 0.0
      %3328 = vmatprep.subr.mxu0 0.0
      %3329 = vmatpush1.msra.mxu0 0.0
      %3330 = vmatprep.subr.mxu0 0.0
      %3331 = vmatpush1.msra.mxu0 0.0
      %3332 = vmatprep.subr.mxu0 0.0
      %3333 = vmatpush1.msra.mxu0 0.0
      %3334 = vmatprep.subr.mxu0 0.0
      %3335 = vmatpush1.msra.mxu0 0.0
      %3336 = vmatprep.subr.mxu0 0.0
      %3337 = vmatpush1.msra.mxu0 0.0
      %3338 = vmatprep.subr.mxu0 0.0
      %3339 = vmatpush1.msra.mxu0 0.0
      %3340 = vmatprep.subr.mxu0 0.0
      %3341 = vmatpush1.msra.mxu0 0.0
      %3342 = vmatprep.subr.mxu0 0.0
      %3343 = vmatpush1.msra.mxu0 0.0
      %v3344 = vand.u32 %v220, 4294901760
      %v3345 = vsub.f32 %v220, %v3344
      %v3346 = vand.u32 %v3345, 4294901760
      %3347 = vmatprep.subr.mxu0 %v3346
      %v3348 = vand.u32 %v219, 4294901760
      %v3349 = vsub.f32 %v219, %v3348
      %v3350 = vand.u32 %v3349, 4294901760
      %3351 = vmatpush1.msra.mxu0 %v3350
      %v3352 = vand.u32 %v214, 4294901760
      %v3353 = vsub.f32 %v214, %v3352
      %v3354 = vand.u32 %v3353, 4294901760
      %3355 = vmatprep.subr.mxu0 %v3354
      %v3356 = vand.u32 %v213, 4294901760
      %v3357 = vsub.f32 %v213, %v3356
      %v3358 = vand.u32 %v3357, 4294901760
      %3359 = vmatpush1.msra.mxu0 %v3358
      %3360 = vmatprep.subr.mxu0 0.0
      %3361 = vmatpush2.msra.mxu0 0.0
      %3362 = vmatprep.subr.mxu0 0.0
      %3363 = vmatpush2.msra.mxu0 0.0
      %3364 = vmatprep.subr.mxu0 0.0
      %3365 = vmatpush2.msra.mxu0 0.0
      %3366 = vmatprep.subr.mxu0 0.0
      %3367 = vmatpush2.msra.mxu0 0.0
      %3368 = vmatprep.subr.mxu0 0.0
      %3369 = vmatpush2.msra.mxu0 0.0
      %3370 = vmatprep.subr.mxu0 0.0
      %3371 = vmatpush2.msra.mxu0 0.0
      %3372 = vmatprep.subr.mxu0 0.0
      %3373 = vmatpush2.msra.mxu0 0.0
      %3374 = vmatprep.subr.mxu0 0.0
      %3375 = vmatpush2.msra.mxu0 0.0
      %3376 = vmatprep.subr.mxu0 0.0
      %3377 = vmatpush2.msra.mxu0 0.0
      %3378 = vmatprep.subr.mxu0 0.0
      %3379 = vmatpush2.msra.mxu0 0.0
      %3380 = vmatprep.subr.mxu0 0.0
      %3381 = vmatpush2.msra.mxu0 0.0
      %3382 = vmatprep.subr.mxu0 0.0
      %3383 = vmatpush2.msra.mxu0 0.0
      %3384 = vmatprep.subr.mxu0 0.0
      %3385 = vmatpush2.msra.mxu0 0.0
      %3386 = vmatprep.subr.mxu0 0.0
      %3387 = vmatpush2.msra.mxu0 0.0
      %3388 = vmatprep.subr.mxu0 0.0
      %3389 = vmatpush2.msra.mxu0 0.0
      %3390 = vmatprep.subr.mxu0 0.0
      %3391 = vmatpush2.msra.mxu0 0.0
      %3392 = vmatprep.mubr.f32.mxu0 0.0
      %v3393 = vand.u32 %v1865, 4294901760
      %3394 = vmatmul.mubr.f32.gmra.mxu0 %v3393
      %v3395 = vpop.f32.mrf.mxu0
      %v3396 = vadd.f32 %v3303, %v3395
      %v3397 = vpop.f32.mrf.mxu0
      %v3398 = vadd.f32 %v3305, %v3397
      %3399 = vmatprep.mubr.f32.mxu0 0.0
      %v3400 = vand.u32 %v1868, 4294901760
      %3401 = vmatmul.mubr.f32.gmra.mxu0 %v3400
      %v3402 = vpop.f32.mrf.mxu0
      %v3403 = vadd.f32 %v3312, %v3402
      %v3404 = vpop.f32.mrf.mxu0
      %v3405 = vadd.f32 %v3314, %v3404
      %3406 = vdwg.mxu0
      %3407 = vmatprep.subr.mxu0 0.0
      %3408 = vmatpush1.msra.mxu0 0.0
      %3409 = vmatprep.subr.mxu0 0.0
      %3410 = vmatpush1.msra.mxu0 0.0
      %3411 = vmatprep.subr.mxu0 0.0
      %3412 = vmatpush1.msra.mxu0 0.0
      %3413 = vmatprep.subr.mxu0 0.0
      %3414 = vmatpush1.msra.mxu0 0.0
      %3415 = vmatprep.subr.mxu0 0.0
      %3416 = vmatpush1.msra.mxu0 0.0
      %3417 = vmatprep.subr.mxu0 0.0
      %3418 = vmatpush1.msra.mxu0 0.0
      %3419 = vmatprep.subr.mxu0 0.0
      %3420 = vmatpush1.msra.mxu0 0.0
      %3421 = vmatprep.subr.mxu0 0.0
      %3422 = vmatpush1.msra.mxu0 0.0
      %3423 = vmatprep.subr.mxu0 0.0
      %3424 = vmatpush1.msra.mxu0 0.0
      %3425 = vmatprep.subr.mxu0 0.0
      %3426 = vmatpush1.msra.mxu0 0.0
      %3427 = vmatprep.subr.mxu0 0.0
      %3428 = vmatpush1.msra.mxu0 0.0
      %3429 = vmatprep.subr.mxu0 0.0
      %3430 = vmatpush1.msra.mxu0 0.0
      %3431 = vmatprep.subr.mxu0 0.0
      %3432 = vmatpush1.msra.mxu0 0.0
      %3433 = vmatprep.subr.mxu0 0.0
      %3434 = vmatpush1.msra.mxu0 0.0
      %v3435 = vand.u32 %v220, 4294901760
      %3436 = vmatprep.subr.mxu0 %v3435
      %v3437 = vand.u32 %v219, 4294901760
      %3438 = vmatpush1.msra.mxu0 %v3437
      %v3439 = vand.u32 %v214, 4294901760
      %3440 = vmatprep.subr.mxu0 %v3439
      %v3441 = vand.u32 %v213, 4294901760
      %3442 = vmatpush1.msra.mxu0 %v3441
      %3443 = vmatprep.subr.mxu0 0.0
      %3444 = vmatpush2.msra.mxu0 0.0
      %3445 = vmatprep.subr.mxu0 0.0
      %3446 = vmatpush2.msra.mxu0 0.0
      %3447 = vmatprep.subr.mxu0 0.0
      %3448 = vmatpush2.msra.mxu0 0.0
      %3449 = vmatprep.subr.mxu0 0.0
      %3450 = vmatpush2.msra.mxu0 0.0
      %3451 = vmatprep.subr.mxu0 0.0
      %3452 = vmatpush2.msra.mxu0 0.0
      %3453 = vmatprep.subr.mxu0 0.0
      %3454 = vmatpush2.msra.mxu0 0.0
      %3455 = vmatprep.subr.mxu0 0.0
      %3456 = vmatpush2.msra.mxu0 0.0
      %3457 = vmatprep.subr.mxu0 0.0
      %3458 = vmatpush2.msra.mxu0 0.0
      %3459 = vmatprep.subr.mxu0 0.0
      %3460 = vmatpush2.msra.mxu0 0.0
      %3461 = vmatprep.subr.mxu0 0.0
      %3462 = vmatpush2.msra.mxu0 0.0
      %3463 = vmatprep.subr.mxu0 0.0
      %3464 = vmatpush2.msra.mxu0 0.0
      %3465 = vmatprep.subr.mxu0 0.0
      %3466 = vmatpush2.msra.mxu0 0.0
      %3467 = vmatprep.subr.mxu0 0.0
      %3468 = vmatpush2.msra.mxu0 0.0
      %3469 = vmatprep.subr.mxu0 0.0
      %3470 = vmatpush2.msra.mxu0 0.0
      %3471 = vmatprep.subr.mxu0 0.0
      %3472 = vmatpush2.msra.mxu0 0.0
      %3473 = vmatprep.subr.mxu0 0.0
      %3474 = vmatpush2.msra.mxu0 0.0
      %3475 = vmatprep.mubr.f32.mxu0 0.0
      %v3476 = vand.u32 %v1865, 4294901760
      %3477 = vmatmul.mubr.f32.gmra.mxu0 %v3476
      %v3478 = vpop.f32.mrf.mxu0
      %v3479 = vadd.f32 %v3396, %v3478
      %v3480 = vpop.f32.mrf.mxu0
      %v3481 = vadd.f32 %v3398, %v3480
      %3482 = vmatprep.mubr.f32.mxu0 0.0
      %v3483 = vand.u32 %v1868, 4294901760
      %3484 = vmatmul.mubr.f32.gmra.mxu0 %v3483
      %v3485 = vpop.f32.mrf.mxu0
      %v3486 = vadd.f32 %v3403, %v3485
      %v3487 = vpop.f32.mrf.mxu0
      %v3488 = vadd.f32 %v3405, %v3487
      %3489 = vdwg.mxu0
      %s3490 = scalar_lea.vmem %s192, 32
      %v3491 = vld [vmem:[%s3490] sm:$0xff]
      %v3492 = vld [vmem:[%s3490 + $0x8] sm:$0xff]
      %s3493 = scalar_lea.vmem %s1, 192
      %v3494 = vld [vmem:[%s3493] sm:$0xff]
      %v3495 = vld [vmem:[%s3493 + $0x8] sm:$0xff]
      %v3496 = vld [vmem:[%s3493 + $0x10] sm:$0xff]
      %v3497 = vld [vmem:[%s3493 + $0x18] sm:$0xff]
      %v3498 = vld [vmem:[%s3493 + $0x20] sm:$0xff]
      %v3499 = vld [vmem:[%s3493 + $0x28] sm:$0xff]
      %v3500 = vld [vmem:[%s3493 + $0x30] sm:$0xff]
      %v3501 = vld [vmem:[%s3493 + $0x38] sm:$0xff]
      %v3502 = vld [vmem:[%s3493 + $0x40] sm:$0xff]
      %v3503 = vld [vmem:[%s3493 + $0x48] sm:$0xff]
      %v3504 = vld [vmem:[%s3493 + $0x50] sm:$0xff]
      %v3505 = vld [vmem:[%s3493 + $0x58] sm:$0xff]
      %v3507 = vsel %vm237, %v3491, 0
      %v3510 = vsel %vm237, %v3492, 0
      %3512 = vmatprep.subr.mxu0 0.0
      %3513 = vmatpush1.msra.mxu0 0.0
      %3514 = vmatprep.subr.mxu0 0.0
      %3515 = vmatpush1.msra.mxu0 0.0
      %3516 = vmatprep.subr.mxu0 0.0
      %3517 = vmatpush1.msra.mxu0 0.0
      %3518 = vmatprep.subr.mxu0 0.0
      %3519 = vmatpush1.msra.mxu0 0.0
      %3520 = vmatprep.subr.mxu0 0.0
      %3521 = vmatpush1.msra.mxu0 0.0
      %3522 = vmatprep.subr.mxu0 0.0
      %3523 = vmatpush1.msra.mxu0 0.0
      %3524 = vmatprep.subr.mxu0 0.0
      %3525 = vmatpush1.msra.mxu0 0.0
      %3526 = vmatprep.subr.mxu0 0.0
      %3527 = vmatpush1.msra.mxu0 0.0
      %3528 = vmatprep.subr.mxu0 0.0
      %3529 = vmatpush1.msra.mxu0 0.0
      %3530 = vmatprep.subr.mxu0 0.0
      %3531 = vmatpush1.msra.mxu0 0.0
      %3532 = vmatprep.subr.mxu0 0.0
      %3533 = vmatpush1.msra.mxu0 0.0
      %3534 = vmatprep.subr.mxu0 0.0
      %3535 = vmatpush1.msra.mxu0 0.0
      %3536 = vmatprep.subr.mxu0 0.0
      %3537 = vmatpush1.msra.mxu0 0.0
      %3538 = vmatprep.subr.mxu0 0.0
      %3539 = vmatpush1.msra.mxu0 0.0
      %v3540 = vand.u32 %v3501, 4294901760
      %3541 = vmatprep.subr.mxu0 %v3540
      %v3542 = vand.u32 %v3500, 4294901760
      %3543 = vmatpush1.msra.mxu0 %v3542
      %v3544 = vand.u32 %v3495, 4294901760
      %3545 = vmatprep.subr.mxu0 %v3544
      %v3546 = vand.u32 %v3494, 4294901760
      %3547 = vmatpush1.msra.mxu0 %v3546
      %3548 = vmatprep.subr.mxu0 0.0
      %3549 = vmatpush2.msra.mxu0 0.0
      %3550 = vmatprep.subr.mxu0 0.0
      %3551 = vmatpush2.msra.mxu0 0.0
      %3552 = vmatprep.subr.mxu0 0.0
      %3553 = vmatpush2.msra.mxu0 0.0
      %3554 = vmatprep.subr.mxu0 0.0
      %3555 = vmatpush2.msra.mxu0 0.0
      %3556 = vmatprep.subr.mxu0 0.0
      %3557 = vmatpush2.msra.mxu0 0.0
      %3558 = vmatprep.subr.mxu0 0.0
      %3559 = vmatpush2.msra.mxu0 0.0
      %3560 = vmatprep.subr.mxu0 0.0
      %3561 = vmatpush2.msra.mxu0 0.0
      %3562 = vmatprep.subr.mxu0 0.0
      %3563 = vmatpush2.msra.mxu0 0.0
      %3564 = vmatprep.subr.mxu0 0.0
      %3565 = vmatpush2.msra.mxu0 0.0
      %3566 = vmatprep.subr.mxu0 0.0
      %3567 = vmatpush2.msra.mxu0 0.0
      %3568 = vmatprep.subr.mxu0 0.0
      %3569 = vmatpush2.msra.mxu0 0.0
      %3570 = vmatprep.subr.mxu0 0.0
      %3571 = vmatpush2.msra.mxu0 0.0
      %3572 = vmatprep.subr.mxu0 0.0
      %3573 = vmatpush2.msra.mxu0 0.0
      %3574 = vmatprep.subr.mxu0 0.0
      %3575 = vmatpush2.msra.mxu0 0.0
      %3576 = vmatprep.subr.mxu0 0.0
      %3577 = vmatpush2.msra.mxu0 0.0
      %3578 = vmatprep.subr.mxu0 0.0
      %3579 = vmatpush2.msra.mxu0 0.0
      %3580 = vmatprep.mubr.f32.mxu0 0.0
      %v3581 = vand.u32 %v3507, 4294901760
      %v3582 = vsub.f32 %v3507, %v3581
      %v3583 = vand.u32 %v3582, 4294901760
      %v3584 = vsub.f32 %v3582, %v3583
      %v3585 = vand.u32 %v3584, 4294901760
      %3586 = vmatmul.mubr.f32.gmra.mxu0 %v3585
      %v3587 = vpop.f32.mrf.mxu0
      %v3588 = vadd.f32 0.0, %v3587
      %v3589 = vpop.f32.mrf.mxu0
      %v3590 = vadd.f32 0.0, %v3589
      %3591 = vmatprep.mubr.f32.mxu0 0.0
      %v3592 = vand.u32 %v3510, 4294901760
      %v3593 = vsub.f32 %v3510, %v3592
      %v3594 = vand.u32 %v3593, 4294901760
      %v3595 = vsub.f32 %v3593, %v3594
      %v3596 = vand.u32 %v3595, 4294901760
      %3597 = vmatmul.mubr.f32.gmra.mxu0 %v3596
      %v3598 = vpop.f32.mrf.mxu0
      %v3599 = vadd.f32 0.0, %v3598
      %v3600 = vpop.f32.mrf.mxu0
      %v3601 = vadd.f32 0.0, %v3600
      %3602 = vdwg.mxu0
      %3603 = vmatprep.subr.mxu0 0.0
      %3604 = vmatpush1.msra.mxu0 0.0
      %3605 = vmatprep.subr.mxu0 0.0
      %3606 = vmatpush1.msra.mxu0 0.0
      %3607 = vmatprep.subr.mxu0 0.0
      %3608 = vmatpush1.msra.mxu0 0.0
      %3609 = vmatprep.subr.mxu0 0.0
      %3610 = vmatpush1.msra.mxu0 0.0
      %3611 = vmatprep.subr.mxu0 0.0
      %3612 = vmatpush1.msra.mxu0 0.0
      %3613 = vmatprep.subr.mxu0 0.0
      %3614 = vmatpush1.msra.mxu0 0.0
      %3615 = vmatprep.subr.mxu0 0.0
      %3616 = vmatpush1.msra.mxu0 0.0
      %3617 = vmatprep.subr.mxu0 0.0
      %3618 = vmatpush1.msra.mxu0 0.0
      %3619 = vmatprep.subr.mxu0 0.0
      %3620 = vmatpush1.msra.mxu0 0.0
      %3621 = vmatprep.subr.mxu0 0.0
      %3622 = vmatpush1.msra.mxu0 0.0
      %3623 = vmatprep.subr.mxu0 0.0
      %3624 = vmatpush1.msra.mxu0 0.0
      %3625 = vmatprep.subr.mxu0 0.0
      %3626 = vmatpush1.msra.mxu0 0.0
      %3627 = vmatprep.subr.mxu0 0.0
      %3628 = vmatpush1.msra.mxu0 0.0
      %3629 = vmatprep.subr.mxu0 0.0
      %3630 = vmatpush1.msra.mxu0 0.0
      %v3631 = vand.u32 %v3501, 4294901760
      %v3632 = vsub.f32 %v3501, %v3631
      %v3633 = vand.u32 %v3632, 4294901760
      %v3634 = vsub.f32 %v3632, %v3633
      %v3635 = vand.u32 %v3634, 4294901760
      %3636 = vmatprep.subr.mxu0 %v3635
      %v3637 = vand.u32 %v3500, 4294901760
      %v3638 = vsub.f32 %v3500, %v3637
      %v3639 = vand.u32 %v3638, 4294901760
      %v3640 = vsub.f32 %v3638, %v3639
      %v3641 = vand.u32 %v3640, 4294901760
      %3642 = vmatpush1.msra.mxu0 %v3641
      %v3643 = vand.u32 %v3495, 4294901760
      %v3644 = vsub.f32 %v3495, %v3643
      %v3645 = vand.u32 %v3644, 4294901760
      %v3646 = vsub.f32 %v3644, %v3645
      %v3647 = vand.u32 %v3646, 4294901760
      %3648 = vmatprep.subr.mxu0 %v3647
      %v3649 = vand.u32 %v3494, 4294901760
      %v3650 = vsub.f32 %v3494, %v3649
      %v3651 = vand.u32 %v3650, 4294901760
      %v3652 = vsub.f32 %v3650, %v3651
      %v3653 = vand.u32 %v3652, 4294901760
      %3654 = vmatpush1.msra.mxu0 %v3653
      %3655 = vmatprep.subr.mxu0 0.0
      %3656 = vmatpush2.msra.mxu0 0.0
      %3657 = vmatprep.subr.mxu0 0.0
      %3658 = vmatpush2.msra.mxu0 0.0
      %3659 = vmatprep.subr.mxu0 0.0
      %3660 = vmatpush2.msra.mxu0 0.0
      %3661 = vmatprep.subr.mxu0 0.0
      %3662 = vmatpush2.msra.mxu0 0.0
      %3663 = vmatprep.subr.mxu0 0.0
      %3664 = vmatpush2.msra.mxu0 0.0
      %3665 = vmatprep.subr.mxu0 0.0
      %3666 = vmatpush2.msra.mxu0 0.0
      %3667 = vmatprep.subr.mxu0 0.0
      %3668 = vmatpush2.msra.mxu0 0.0
      %3669 = vmatprep.subr.mxu0 0.0
      %3670 = vmatpush2.msra.mxu0 0.0
      %3671 = vmatprep.subr.mxu0 0.0
      %3672 = vmatpush2.msra.mxu0 0.0
      %3673 = vmatprep.subr.mxu0 0.0
      %3674 = vmatpush2.msra.mxu0 0.0
      %3675 = vmatprep.subr.mxu0 0.0
      %3676 = vmatpush2.msra.mxu0 0.0
      %3677 = vmatprep.subr.mxu0 0.0
      %3678 = vmatpush2.msra.mxu0 0.0
      %3679 = vmatprep.subr.mxu0 0.0
      %3680 = vmatpush2.msra.mxu0 0.0
      %3681 = vmatprep.subr.mxu0 0.0
      %3682 = vmatpush2.msra.mxu0 0.0
      %3683 = vmatprep.subr.mxu0 0.0
      %3684 = vmatpush2.msra.mxu0 0.0
      %3685 = vmatprep.subr.mxu0 0.0
      %3686 = vmatpush2.msra.mxu0 0.0
      %3687 = vmatprep.mubr.f32.mxu0 0.0
      %v3688 = vand.u32 %v3507, 4294901760
      %3689 = vmatmul.mubr.f32.gmra.mxu0 %v3688
      %v3690 = vpop.f32.mrf.mxu0
      %v3691 = vadd.f32 %v3588, %v3690
      %v3692 = vpop.f32.mrf.mxu0
      %v3693 = vadd.f32 %v3590, %v3692
      %3694 = vmatprep.mubr.f32.mxu0 0.0
      %v3695 = vand.u32 %v3510, 4294901760
      %3696 = vmatmul.mubr.f32.gmra.mxu0 %v3695
      %v3697 = vpop.f32.mrf.mxu0
      %v3698 = vadd.f32 %v3599, %v3697
      %v3699 = vpop.f32.mrf.mxu0
      %v3700 = vadd.f32 %v3601, %v3699
      %3701 = vdwg.mxu0
      %3702 = vmatprep.subr.mxu0 0.0
      %3703 = vmatpush1.msra.mxu0 0.0
      %3704 = vmatprep.subr.mxu0 0.0
      %3705 = vmatpush1.msra.mxu0 0.0
      %3706 = vmatprep.subr.mxu0 0.0
      %3707 = vmatpush1.msra.mxu0 0.0
      %3708 = vmatprep.subr.mxu0 0.0
      %3709 = vmatpush1.msra.mxu0 0.0
      %3710 = vmatprep.subr.mxu0 0.0
      %3711 = vmatpush1.msra.mxu0 0.0
      %3712 = vmatprep.subr.mxu0 0.0
      %3713 = vmatpush1.msra.mxu0 0.0
      %3714 = vmatprep.subr.mxu0 0.0
      %3715 = vmatpush1.msra.mxu0 0.0
      %3716 = vmatprep.subr.mxu0 0.0
      %3717 = vmatpush1.msra.mxu0 0.0
      %3718 = vmatprep.subr.mxu0 0.0
      %3719 = vmatpush1.msra.mxu0 0.0
      %3720 = vmatprep.subr.mxu0 0.0
      %3721 = vmatpush1.msra.mxu0 0.0
      %3722 = vmatprep.subr.mxu0 0.0
      %3723 = vmatpush1.msra.mxu0 0.0
      %3724 = vmatprep.subr.mxu0 0.0
      %3725 = vmatpush1.msra.mxu0 0.0
      %3726 = vmatprep.subr.mxu0 0.0
      %3727 = vmatpush1.msra.mxu0 0.0
      %3728 = vmatprep.subr.mxu0 0.0
      %3729 = vmatpush1.msra.mxu0 0.0
      %v3730 = vand.u32 %v3501, 4294901760
      %v3731 = vsub.f32 %v3501, %v3730
      %3732 = vmatprep.subr.mxu0 %v3731
      %v3733 = vand.u32 %v3500, 4294901760
      %v3734 = vsub.f32 %v3500, %v3733
      %3735 = vmatpush1.msra.mxu0 %v3734
      %v3736 = vand.u32 %v3495, 4294901760
      %v3737 = vsub.f32 %v3495, %v3736
      %3738 = vmatprep.subr.mxu0 %v3737
      %v3739 = vand.u32 %v3494, 4294901760
      %v3740 = vsub.f32 %v3494, %v3739
      %3741 = vmatpush1.msra.mxu0 %v3740
      %3742 = vmatprep.subr.mxu0 0.0
      %3743 = vmatpush2.msra.mxu0 0.0
      %3744 = vmatprep.subr.mxu0 0.0
      %3745 = vmatpush2.msra.mxu0 0.0
      %3746 = vmatprep.subr.mxu0 0.0
      %3747 = vmatpush2.msra.mxu0 0.0
      %3748 = vmatprep.subr.mxu0 0.0
      %3749 = vmatpush2.msra.mxu0 0.0
      %3750 = vmatprep.subr.mxu0 0.0
      %3751 = vmatpush2.msra.mxu0 0.0
      %3752 = vmatprep.subr.mxu0 0.0
      %3753 = vmatpush2.msra.mxu0 0.0
      %3754 = vmatprep.subr.mxu0 0.0
      %3755 = vmatpush2.msra.mxu0 0.0
      %3756 = vmatprep.subr.mxu0 0.0
      %3757 = vmatpush2.msra.mxu0 0.0
      %3758 = vmatprep.subr.mxu0 0.0
      %3759 = vmatpush2.msra.mxu0 0.0
      %3760 = vmatprep.subr.mxu0 0.0
      %3761 = vmatpush2.msra.mxu0 0.0
      %3762 = vmatprep.subr.mxu0 0.0
      %3763 = vmatpush2.msra.mxu0 0.0
      %3764 = vmatprep.subr.mxu0 0.0
      %3765 = vmatpush2.msra.mxu0 0.0
      %3766 = vmatprep.subr.mxu0 0.0
      %3767 = vmatpush2.msra.mxu0 0.0
      %3768 = vmatprep.subr.mxu0 0.0
      %3769 = vmatpush2.msra.mxu0 0.0
      %3770 = vmatprep.subr.mxu0 0.0
      %3771 = vmatpush2.msra.mxu0 0.0
      %3772 = vmatprep.subr.mxu0 0.0
      %3773 = vmatpush2.msra.mxu0 0.0
      %3774 = vmatprep.mubr.f32.mxu0 0.0
      %v3775 = vand.u32 %v3507, 4294901760
      %v3776 = vsub.f32 %v3507, %v3775
      %3777 = vmatmul.mubr.f32.gmra.mxu0 %v3776
      %v3778 = vpop.f32.mrf.mxu0
      %v3779 = vadd.f32 %v3691, %v3778
      %v3780 = vpop.f32.mrf.mxu0
      %v3781 = vadd.f32 %v3693, %v3780
      %3782 = vmatprep.mubr.f32.mxu0 0.0
      %v3783 = vand.u32 %v3510, 4294901760
      %v3784 = vsub.f32 %v3510, %v3783
      %3785 = vmatmul.mubr.f32.gmra.mxu0 %v3784
      %v3786 = vpop.f32.mrf.mxu0
      %v3787 = vadd.f32 %v3698, %v3786
      %v3788 = vpop.f32.mrf.mxu0
      %v3789 = vadd.f32 %v3700, %v3788
      %3790 = vdwg.mxu0
      %3791 = vmatprep.subr.mxu0 0.0
      %3792 = vmatpush1.msra.mxu0 0.0
      %3793 = vmatprep.subr.mxu0 0.0
      %3794 = vmatpush1.msra.mxu0 0.0
      %3795 = vmatprep.subr.mxu0 0.0
      %3796 = vmatpush1.msra.mxu0 0.0
      %3797 = vmatprep.subr.mxu0 0.0
      %3798 = vmatpush1.msra.mxu0 0.0
      %3799 = vmatprep.subr.mxu0 0.0
      %3800 = vmatpush1.msra.mxu0 0.0
      %3801 = vmatprep.subr.mxu0 0.0
      %3802 = vmatpush1.msra.mxu0 0.0
      %3803 = vmatprep.subr.mxu0 0.0
      %3804 = vmatpush1.msra.mxu0 0.0
      %3805 = vmatprep.subr.mxu0 0.0
      %3806 = vmatpush1.msra.mxu0 0.0
      %3807 = vmatprep.subr.mxu0 0.0
      %3808 = vmatpush1.msra.mxu0 0.0
      %3809 = vmatprep.subr.mxu0 0.0
      %3810 = vmatpush1.msra.mxu0 0.0
      %3811 = vmatprep.subr.mxu0 0.0
      %3812 = vmatpush1.msra.mxu0 0.0
      %3813 = vmatprep.subr.mxu0 0.0
      %3814 = vmatpush1.msra.mxu0 0.0
      %3815 = vmatprep.subr.mxu0 0.0
      %3816 = vmatpush1.msra.mxu0 0.0
      %3817 = vmatprep.subr.mxu0 0.0
      %3818 = vmatpush1.msra.mxu0 0.0
      %v3819 = vand.u32 %v3501, 4294901760
      %3820 = vmatprep.subr.mxu0 %v3819
      %v3821 = vand.u32 %v3500, 4294901760
      %3822 = vmatpush1.msra.mxu0 %v3821
      %v3823 = vand.u32 %v3495, 4294901760
      %3824 = vmatprep.subr.mxu0 %v3823
      %v3825 = vand.u32 %v3494, 4294901760
      %3826 = vmatpush1.msra.mxu0 %v3825
      %3827 = vmatprep.subr.mxu0 0.0
      %3828 = vmatpush2.msra.mxu0 0.0
      %3829 = vmatprep.subr.mxu0 0.0
      %3830 = vmatpush2.msra.mxu0 0.0
      %3831 = vmatprep.subr.mxu0 0.0
      %3832 = vmatpush2.msra.mxu0 0.0
      %3833 = vmatprep.subr.mxu0 0.0
      %3834 = vmatpush2.msra.mxu0 0.0
      %3835 = vmatprep.subr.mxu0 0.0
      %3836 = vmatpush2.msra.mxu0 0.0
      %3837 = vmatprep.subr.mxu0 0.0
      %3838 = vmatpush2.msra.mxu0 0.0
      %3839 = vmatprep.subr.mxu0 0.0
      %3840 = vmatpush2.msra.mxu0 0.0
      %3841 = vmatprep.subr.mxu0 0.0
      %3842 = vmatpush2.msra.mxu0 0.0
      %3843 = vmatprep.subr.mxu0 0.0
      %3844 = vmatpush2.msra.mxu0 0.0
      %3845 = vmatprep.subr.mxu0 0.0
      %3846 = vmatpush2.msra.mxu0 0.0
      %3847 = vmatprep.subr.mxu0 0.0
      %3848 = vmatpush2.msra.mxu0 0.0
      %3849 = vmatprep.subr.mxu0 0.0
      %3850 = vmatpush2.msra.mxu0 0.0
      %3851 = vmatprep.subr.mxu0 0.0
      %3852 = vmatpush2.msra.mxu0 0.0
      %3853 = vmatprep.subr.mxu0 0.0
      %3854 = vmatpush2.msra.mxu0 0.0
      %3855 = vmatprep.subr.mxu0 0.0
      %3856 = vmatpush2.msra.mxu0 0.0
      %3857 = vmatprep.subr.mxu0 0.0
      %3858 = vmatpush2.msra.mxu0 0.0
      %3859 = vmatprep.mubr.f32.mxu0 0.0
      %v3860 = vand.u32 %v3507, 4294901760
      %v3861 = vsub.f32 %v3507, %v3860
      %v3862 = vand.u32 %v3861, 4294901760
      %3863 = vmatmul.mubr.f32.gmra.mxu0 %v3862
      %v3864 = vpop.f32.mrf.mxu0
      %v3865 = vadd.f32 %v3779, %v3864
      %v3866 = vpop.f32.mrf.mxu0
      %v3867 = vadd.f32 %v3781, %v3866
      %3868 = vmatprep.mubr.f32.mxu0 0.0
      %v3869 = vand.u32 %v3510, 4294901760
      %v3870 = vsub.f32 %v3510, %v3869
      %v3871 = vand.u32 %v3870, 4294901760
      %3872 = vmatmul.mubr.f32.gmra.mxu0 %v3871
      %v3873 = vpop.f32.mrf.mxu0
      %v3874 = vadd.f32 %v3787, %v3873
      %v3875 = vpop.f32.mrf.mxu0
      %v3876 = vadd.f32 %v3789, %v3875
      %3877 = vdwg.mxu0
      %3878 = vmatprep.subr.mxu0 0.0
      %3879 = vmatpush1.msra.mxu0 0.0
      %3880 = vmatprep.subr.mxu0 0.0
      %3881 = vmatpush1.msra.mxu0 0.0
      %3882 = vmatprep.subr.mxu0 0.0
      %3883 = vmatpush1.msra.mxu0 0.0
      %3884 = vmatprep.subr.mxu0 0.0
      %3885 = vmatpush1.msra.mxu0 0.0
      %3886 = vmatprep.subr.mxu0 0.0
      %3887 = vmatpush1.msra.mxu0 0.0
      %3888 = vmatprep.subr.mxu0 0.0
      %3889 = vmatpush1.msra.mxu0 0.0
      %3890 = vmatprep.subr.mxu0 0.0
      %3891 = vmatpush1.msra.mxu0 0.0
      %3892 = vmatprep.subr.mxu0 0.0
      %3893 = vmatpush1.msra.mxu0 0.0
      %3894 = vmatprep.subr.mxu0 0.0
      %3895 = vmatpush1.msra.mxu0 0.0
      %3896 = vmatprep.subr.mxu0 0.0
      %3897 = vmatpush1.msra.mxu0 0.0
      %3898 = vmatprep.subr.mxu0 0.0
      %3899 = vmatpush1.msra.mxu0 0.0
      %3900 = vmatprep.subr.mxu0 0.0
      %3901 = vmatpush1.msra.mxu0 0.0
      %3902 = vmatprep.subr.mxu0 0.0
      %3903 = vmatpush1.msra.mxu0 0.0
      %3904 = vmatprep.subr.mxu0 0.0
      %3905 = vmatpush1.msra.mxu0 0.0
      %v3906 = vand.u32 %v3501, 4294901760
      %v3907 = vsub.f32 %v3501, %v3906
      %v3908 = vand.u32 %v3907, 4294901760
      %3909 = vmatprep.subr.mxu0 %v3908
      %v3910 = vand.u32 %v3500, 4294901760
      %v3911 = vsub.f32 %v3500, %v3910
      %v3912 = vand.u32 %v3911, 4294901760
      %3913 = vmatpush1.msra.mxu0 %v3912
      %v3914 = vand.u32 %v3495, 4294901760
      %v3915 = vsub.f32 %v3495, %v3914
      %v3916 = vand.u32 %v3915, 4294901760
      %3917 = vmatprep.subr.mxu0 %v3916
      %v3918 = vand.u32 %v3494, 4294901760
      %v3919 = vsub.f32 %v3494, %v3918
      %v3920 = vand.u32 %v3919, 4294901760
      %3921 = vmatpush1.msra.mxu0 %v3920
      %3922 = vmatprep.subr.mxu0 0.0
      %3923 = vmatpush2.msra.mxu0 0.0
      %3924 = vmatprep.subr.mxu0 0.0
      %3925 = vmatpush2.msra.mxu0 0.0
      %3926 = vmatprep.subr.mxu0 0.0
      %3927 = vmatpush2.msra.mxu0 0.0
      %3928 = vmatprep.subr.mxu0 0.0
      %3929 = vmatpush2.msra.mxu0 0.0
      %3930 = vmatprep.subr.mxu0 0.0
      %3931 = vmatpush2.msra.mxu0 0.0
      %3932 = vmatprep.subr.mxu0 0.0
      %3933 = vmatpush2.msra.mxu0 0.0
      %3934 = vmatprep.subr.mxu0 0.0
      %3935 = vmatpush2.msra.mxu0 0.0
      %3936 = vmatprep.subr.mxu0 0.0
      %3937 = vmatpush2.msra.mxu0 0.0
      %3938 = vmatprep.subr.mxu0 0.0
      %3939 = vmatpush2.msra.mxu0 0.0
      %3940 = vmatprep.subr.mxu0 0.0
      %3941 = vmatpush2.msra.mxu0 0.0
      %3942 = vmatprep.subr.mxu0 0.0
      %3943 = vmatpush2.msra.mxu0 0.0
      %3944 = vmatprep.subr.mxu0 0.0
      %3945 = vmatpush2.msra.mxu0 0.0
      %3946 = vmatprep.subr.mxu0 0.0
      %3947 = vmatpush2.msra.mxu0 0.0
      %3948 = vmatprep.subr.mxu0 0.0
      %3949 = vmatpush2.msra.mxu0 0.0
      %3950 = vmatprep.subr.mxu0 0.0
      %3951 = vmatpush2.msra.mxu0 0.0
      %3952 = vmatprep.subr.mxu0 0.0
      %3953 = vmatpush2.msra.mxu0 0.0
      %3954 = vmatprep.mubr.f32.mxu0 0.0
      %v3955 = vand.u32 %v3507, 4294901760
      %3956 = vmatmul.mubr.f32.gmra.mxu0 %v3955
      %v3957 = vpop.f32.mrf.mxu0
      %v3958 = vadd.f32 %v3865, %v3957
      %v3959 = vpop.f32.mrf.mxu0
      %v3960 = vadd.f32 %v3867, %v3959
      %3961 = vmatprep.mubr.f32.mxu0 0.0
      %v3962 = vand.u32 %v3510, 4294901760
      %3963 = vmatmul.mubr.f32.gmra.mxu0 %v3962
      %v3964 = vpop.f32.mrf.mxu0
      %v3965 = vadd.f32 %v3874, %v3964
      %v3966 = vpop.f32.mrf.mxu0
      %v3967 = vadd.f32 %v3876, %v3966
      %3968 = vdwg.mxu0
      %3969 = vmatprep.subr.mxu0 0.0
      %3970 = vmatpush1.msra.mxu0 0.0
      %3971 = vmatprep.subr.mxu0 0.0
      %3972 = vmatpush1.msra.mxu0 0.0
      %3973 = vmatprep.subr.mxu0 0.0
      %3974 = vmatpush1.msra.mxu0 0.0
      %3975 = vmatprep.subr.mxu0 0.0
      %3976 = vmatpush1.msra.mxu0 0.0
      %3977 = vmatprep.subr.mxu0 0.0
      %3978 = vmatpush1.msra.mxu0 0.0
      %3979 = vmatprep.subr.mxu0 0.0
      %3980 = vmatpush1.msra.mxu0 0.0
      %3981 = vmatprep.subr.mxu0 0.0
      %3982 = vmatpush1.msra.mxu0 0.0
      %3983 = vmatprep.subr.mxu0 0.0
      %3984 = vmatpush1.msra.mxu0 0.0
      %3985 = vmatprep.subr.mxu0 0.0
      %3986 = vmatpush1.msra.mxu0 0.0
      %3987 = vmatprep.subr.mxu0 0.0
      %3988 = vmatpush1.msra.mxu0 0.0
      %3989 = vmatprep.subr.mxu0 0.0
      %3990 = vmatpush1.msra.mxu0 0.0
      %3991 = vmatprep.subr.mxu0 0.0
      %3992 = vmatpush1.msra.mxu0 0.0
      %3993 = vmatprep.subr.mxu0 0.0
      %3994 = vmatpush1.msra.mxu0 0.0
      %3995 = vmatprep.subr.mxu0 0.0
      %3996 = vmatpush1.msra.mxu0 0.0
      %v3997 = vand.u32 %v3501, 4294901760
      %3998 = vmatprep.subr.mxu0 %v3997
      %v3999 = vand.u32 %v3500, 4294901760
      %4000 = vmatpush1.msra.mxu0 %v3999
      %v4001 = vand.u32 %v3495, 4294901760
      %4002 = vmatprep.subr.mxu0 %v4001
      %v4003 = vand.u32 %v3494, 4294901760
      %4004 = vmatpush1.msra.mxu0 %v4003
      %4005 = vmatprep.subr.mxu0 0.0
      %4006 = vmatpush2.msra.mxu0 0.0
      %4007 = vmatprep.subr.mxu0 0.0
      %4008 = vmatpush2.msra.mxu0 0.0
      %4009 = vmatprep.subr.mxu0 0.0
      %4010 = vmatpush2.msra.mxu0 0.0
      %4011 = vmatprep.subr.mxu0 0.0
      %4012 = vmatpush2.msra.mxu0 0.0
      %4013 = vmatprep.subr.mxu0 0.0
      %4014 = vmatpush2.msra.mxu0 0.0
      %4015 = vmatprep.subr.mxu0 0.0
      %4016 = vmatpush2.msra.mxu0 0.0
      %4017 = vmatprep.subr.mxu0 0.0
      %4018 = vmatpush2.msra.mxu0 0.0
      %4019 = vmatprep.subr.mxu0 0.0
      %4020 = vmatpush2.msra.mxu0 0.0
      %4021 = vmatprep.subr.mxu0 0.0
      %4022 = vmatpush2.msra.mxu0 0.0
      %4023 = vmatprep.subr.mxu0 0.0
      %4024 = vmatpush2.msra.mxu0 0.0
      %4025 = vmatprep.subr.mxu0 0.0
      %4026 = vmatpush2.msra.mxu0 0.0
      %4027 = vmatprep.subr.mxu0 0.0
      %4028 = vmatpush2.msra.mxu0 0.0
      %4029 = vmatprep.subr.mxu0 0.0
      %4030 = vmatpush2.msra.mxu0 0.0
      %4031 = vmatprep.subr.mxu0 0.0
      %4032 = vmatpush2.msra.mxu0 0.0
      %4033 = vmatprep.subr.mxu0 0.0
      %4034 = vmatpush2.msra.mxu0 0.0
      %4035 = vmatprep.subr.mxu0 0.0
      %4036 = vmatpush2.msra.mxu0 0.0
      %4037 = vmatprep.mubr.f32.mxu0 0.0
      %v4038 = vand.u32 %v3507, 4294901760
      %4039 = vmatmul.mubr.f32.gmra.mxu0 %v4038
      %v4040 = vpop.f32.mrf.mxu0
      %v4041 = vadd.f32 %v3958, %v4040
      %v4042 = vpop.f32.mrf.mxu0
      %v4043 = vadd.f32 %v3960, %v4042
      %4044 = vmatprep.mubr.f32.mxu0 0.0
      %v4045 = vand.u32 %v3510, 4294901760
      %4046 = vmatmul.mubr.f32.gmra.mxu0 %v4045
      %v4047 = vpop.f32.mrf.mxu0
      %v4048 = vadd.f32 %v3965, %v4047
      %v4049 = vpop.f32.mrf.mxu0
      %v4050 = vadd.f32 %v3967, %v4049
      %4051 = vdwg.mxu0
      %4052 = vmatprep.subr.mxu0 0.0
      %4053 = vmatpush1.msra.mxu0 0.0
      %4054 = vmatprep.subr.mxu0 0.0
      %4055 = vmatpush1.msra.mxu0 0.0
      %4056 = vmatprep.subr.mxu0 0.0
      %4057 = vmatpush1.msra.mxu0 0.0
      %4058 = vmatprep.subr.mxu0 0.0
      %4059 = vmatpush1.msra.mxu0 0.0
      %4060 = vmatprep.subr.mxu0 0.0
      %4061 = vmatpush1.msra.mxu0 0.0
      %4062 = vmatprep.subr.mxu0 0.0
      %4063 = vmatpush1.msra.mxu0 0.0
      %4064 = vmatprep.subr.mxu0 0.0
      %4065 = vmatpush1.msra.mxu0 0.0
      %4066 = vmatprep.subr.mxu0 0.0
      %4067 = vmatpush1.msra.mxu0 0.0
      %4068 = vmatprep.subr.mxu0 0.0
      %4069 = vmatpush1.msra.mxu0 0.0
      %4070 = vmatprep.subr.mxu0 0.0
      %4071 = vmatpush1.msra.mxu0 0.0
      %4072 = vmatprep.subr.mxu0 0.0
      %4073 = vmatpush1.msra.mxu0 0.0
      %4074 = vmatprep.subr.mxu0 0.0
      %4075 = vmatpush1.msra.mxu0 0.0
      %4076 = vmatprep.subr.mxu0 0.0
      %4077 = vmatpush1.msra.mxu0 0.0
      %4078 = vmatprep.subr.mxu0 0.0
      %4079 = vmatpush1.msra.mxu0 0.0
      %v4080 = vand.u32 %v3503, 4294901760
      %4081 = vmatprep.subr.mxu0 %v4080
      %v4082 = vand.u32 %v3502, 4294901760
      %4083 = vmatpush1.msra.mxu0 %v4082
      %v4084 = vand.u32 %v3497, 4294901760
      %4085 = vmatprep.subr.mxu0 %v4084
      %v4086 = vand.u32 %v3496, 4294901760
      %4087 = vmatpush1.msra.mxu0 %v4086
      %4088 = vmatprep.subr.mxu0 0.0
      %4089 = vmatpush2.msra.mxu0 0.0
      %4090 = vmatprep.subr.mxu0 0.0
      %4091 = vmatpush2.msra.mxu0 0.0
      %4092 = vmatprep.subr.mxu0 0.0
      %4093 = vmatpush2.msra.mxu0 0.0
      %4094 = vmatprep.subr.mxu0 0.0
      %4095 = vmatpush2.msra.mxu0 0.0
      %4096 = vmatprep.subr.mxu0 0.0
      %4097 = vmatpush2.msra.mxu0 0.0
      %4098 = vmatprep.subr.mxu0 0.0
      %4099 = vmatpush2.msra.mxu0 0.0
      %4100 = vmatprep.subr.mxu0 0.0
      %4101 = vmatpush2.msra.mxu0 0.0
      %4102 = vmatprep.subr.mxu0 0.0
      %4103 = vmatpush2.msra.mxu0 0.0
      %4104 = vmatprep.subr.mxu0 0.0
      %4105 = vmatpush2.msra.mxu0 0.0
      %4106 = vmatprep.subr.mxu0 0.0
      %4107 = vmatpush2.msra.mxu0 0.0
      %4108 = vmatprep.subr.mxu0 0.0
      %4109 = vmatpush2.msra.mxu0 0.0
      %4110 = vmatprep.subr.mxu0 0.0
      %4111 = vmatpush2.msra.mxu0 0.0
      %4112 = vmatprep.subr.mxu0 0.0
      %4113 = vmatpush2.msra.mxu0 0.0
      %4114 = vmatprep.subr.mxu0 0.0
      %4115 = vmatpush2.msra.mxu0 0.0
      %4116 = vmatprep.subr.mxu0 0.0
      %4117 = vmatpush2.msra.mxu0 0.0
      %4118 = vmatprep.subr.mxu0 0.0
      %4119 = vmatpush2.msra.mxu0 0.0
      %4120 = vmatprep.mubr.f32.mxu0 0.0
      %v4121 = vand.u32 %v3507, 4294901760
      %v4122 = vsub.f32 %v3507, %v4121
      %v4123 = vand.u32 %v4122, 4294901760
      %v4124 = vsub.f32 %v4122, %v4123
      %v4125 = vand.u32 %v4124, 4294901760
      %4126 = vmatmul.mubr.f32.gmra.mxu0 %v4125
      %v4127 = vpop.f32.mrf.mxu0
      %v4128 = vadd.f32 0.0, %v4127
      %v4129 = vpop.f32.mrf.mxu0
      %v4130 = vadd.f32 0.0, %v4129
      %4131 = vmatprep.mubr.f32.mxu0 0.0
      %v4132 = vand.u32 %v3510, 4294901760
      %v4133 = vsub.f32 %v3510, %v4132
      %v4134 = vand.u32 %v4133, 4294901760
      %v4135 = vsub.f32 %v4133, %v4134
      %v4136 = vand.u32 %v4135, 4294901760
      %4137 = vmatmul.mubr.f32.gmra.mxu0 %v4136
      %v4138 = vpop.f32.mrf.mxu0
      %v4139 = vadd.f32 0.0, %v4138
      %v4140 = vpop.f32.mrf.mxu0
      %v4141 = vadd.f32 0.0, %v4140
      %4142 = vdwg.mxu0
      %4143 = vmatprep.subr.mxu0 0.0
      %4144 = vmatpush1.msra.mxu0 0.0
      %4145 = vmatprep.subr.mxu0 0.0
      %4146 = vmatpush1.msra.mxu0 0.0
      %4147 = vmatprep.subr.mxu0 0.0
      %4148 = vmatpush1.msra.mxu0 0.0
      %4149 = vmatprep.subr.mxu0 0.0
      %4150 = vmatpush1.msra.mxu0 0.0
      %4151 = vmatprep.subr.mxu0 0.0
      %4152 = vmatpush1.msra.mxu0 0.0
      %4153 = vmatprep.subr.mxu0 0.0
      %4154 = vmatpush1.msra.mxu0 0.0
      %4155 = vmatprep.subr.mxu0 0.0
      %4156 = vmatpush1.msra.mxu0 0.0
      %4157 = vmatprep.subr.mxu0 0.0
      %4158 = vmatpush1.msra.mxu0 0.0
      %4159 = vmatprep.subr.mxu0 0.0
      %4160 = vmatpush1.msra.mxu0 0.0
      %4161 = vmatprep.subr.mxu0 0.0
      %4162 = vmatpush1.msra.mxu0 0.0
      %4163 = vmatprep.subr.mxu0 0.0
      %4164 = vmatpush1.msra.mxu0 0.0
      %4165 = vmatprep.subr.mxu0 0.0
      %4166 = vmatpush1.msra.mxu0 0.0
      %4167 = vmatprep.subr.mxu0 0.0
      %4168 = vmatpush1.msra.mxu0 0.0
      %4169 = vmatprep.subr.mxu0 0.0
      %4170 = vmatpush1.msra.mxu0 0.0
      %v4171 = vand.u32 %v3503, 4294901760
      %v4172 = vsub.f32 %v3503, %v4171
      %v4173 = vand.u32 %v4172, 4294901760
      %v4174 = vsub.f32 %v4172, %v4173
      %v4175 = vand.u32 %v4174, 4294901760
      %4176 = vmatprep.subr.mxu0 %v4175
      %v4177 = vand.u32 %v3502, 4294901760
      %v4178 = vsub.f32 %v3502, %v4177
      %v4179 = vand.u32 %v4178, 4294901760
      %v4180 = vsub.f32 %v4178, %v4179
      %v4181 = vand.u32 %v4180, 4294901760
      %4182 = vmatpush1.msra.mxu0 %v4181
      %v4183 = vand.u32 %v3497, 4294901760
      %v4184 = vsub.f32 %v3497, %v4183
      %v4185 = vand.u32 %v4184, 4294901760
      %v4186 = vsub.f32 %v4184, %v4185
      %v4187 = vand.u32 %v4186, 4294901760
      %4188 = vmatprep.subr.mxu0 %v4187
      %v4189 = vand.u32 %v3496, 4294901760
      %v4190 = vsub.f32 %v3496, %v4189
      %v4191 = vand.u32 %v4190, 4294901760
      %v4192 = vsub.f32 %v4190, %v4191
      %v4193 = vand.u32 %v4192, 4294901760
      %4194 = vmatpush1.msra.mxu0 %v4193
      %4195 = vmatprep.subr.mxu0 0.0
      %4196 = vmatpush2.msra.mxu0 0.0
      %4197 = vmatprep.subr.mxu0 0.0
      %4198 = vmatpush2.msra.mxu0 0.0
      %4199 = vmatprep.subr.mxu0 0.0
      %4200 = vmatpush2.msra.mxu0 0.0
      %4201 = vmatprep.subr.mxu0 0.0
      %4202 = vmatpush2.msra.mxu0 0.0
      %4203 = vmatprep.subr.mxu0 0.0
      %4204 = vmatpush2.msra.mxu0 0.0
      %4205 = vmatprep.subr.mxu0 0.0
      %4206 = vmatpush2.msra.mxu0 0.0
      %4207 = vmatprep.subr.mxu0 0.0
      %4208 = vmatpush2.msra.mxu0 0.0
      %4209 = vmatprep.subr.mxu0 0.0
      %4210 = vmatpush2.msra.mxu0 0.0
      %4211 = vmatprep.subr.mxu0 0.0
      %4212 = vmatpush2.msra.mxu0 0.0
      %4213 = vmatprep.subr.mxu0 0.0
      %4214 = vmatpush2.msra.mxu0 0.0
      %4215 = vmatprep.subr.mxu0 0.0
      %4216 = vmatpush2.msra.mxu0 0.0
      %4217 = vmatprep.subr.mxu0 0.0
      %4218 = vmatpush2.msra.mxu0 0.0
      %4219 = vmatprep.subr.mxu0 0.0
      %4220 = vmatpush2.msra.mxu0 0.0
      %4221 = vmatprep.subr.mxu0 0.0
      %4222 = vmatpush2.msra.mxu0 0.0
      %4223 = vmatprep.subr.mxu0 0.0
      %4224 = vmatpush2.msra.mxu0 0.0
      %4225 = vmatprep.subr.mxu0 0.0
      %4226 = vmatpush2.msra.mxu0 0.0
      %4227 = vmatprep.mubr.f32.mxu0 0.0
      %v4228 = vand.u32 %v3507, 4294901760
      %4229 = vmatmul.mubr.f32.gmra.mxu0 %v4228
      %v4230 = vpop.f32.mrf.mxu0
      %v4231 = vadd.f32 %v4128, %v4230
      %v4232 = vpop.f32.mrf.mxu0
      %v4233 = vadd.f32 %v4130, %v4232
      %4234 = vmatprep.mubr.f32.mxu0 0.0
      %v4235 = vand.u32 %v3510, 4294901760
      %4236 = vmatmul.mubr.f32.gmra.mxu0 %v4235
      %v4237 = vpop.f32.mrf.mxu0
      %v4238 = vadd.f32 %v4139, %v4237
      %v4239 = vpop.f32.mrf.mxu0
      %v4240 = vadd.f32 %v4141, %v4239
      %4241 = vdwg.mxu0
      %4242 = vmatprep.subr.mxu0 0.0
      %4243 = vmatpush1.msra.mxu0 0.0
      %4244 = vmatprep.subr.mxu0 0.0
      %4245 = vmatpush1.msra.mxu0 0.0
      %4246 = vmatprep.subr.mxu0 0.0
      %4247 = vmatpush1.msra.mxu0 0.0
      %4248 = vmatprep.subr.mxu0 0.0
      %4249 = vmatpush1.msra.mxu0 0.0
      %4250 = vmatprep.subr.mxu0 0.0
      %4251 = vmatpush1.msra.mxu0 0.0
      %4252 = vmatprep.subr.mxu0 0.0
      %4253 = vmatpush1.msra.mxu0 0.0
      %4254 = vmatprep.subr.mxu0 0.0
      %4255 = vmatpush1.msra.mxu0 0.0
      %4256 = vmatprep.subr.mxu0 0.0
      %4257 = vmatpush1.msra.mxu0 0.0
      %4258 = vmatprep.subr.mxu0 0.0
      %4259 = vmatpush1.msra.mxu0 0.0
      %4260 = vmatprep.subr.mxu0 0.0
      %4261 = vmatpush1.msra.mxu0 0.0
      %4262 = vmatprep.subr.mxu0 0.0
      %4263 = vmatpush1.msra.mxu0 0.0
      %4264 = vmatprep.subr.mxu0 0.0
      %4265 = vmatpush1.msra.mxu0 0.0
      %4266 = vmatprep.subr.mxu0 0.0
      %4267 = vmatpush1.msra.mxu0 0.0
      %4268 = vmatprep.subr.mxu0 0.0
      %4269 = vmatpush1.msra.mxu0 0.0
      %v4270 = vand.u32 %v3503, 4294901760
      %v4271 = vsub.f32 %v3503, %v4270
      %4272 = vmatprep.subr.mxu0 %v4271
      %v4273 = vand.u32 %v3502, 4294901760
      %v4274 = vsub.f32 %v3502, %v4273
      %4275 = vmatpush1.msra.mxu0 %v4274
      %v4276 = vand.u32 %v3497, 4294901760
      %v4277 = vsub.f32 %v3497, %v4276
      %4278 = vmatprep.subr.mxu0 %v4277
      %v4279 = vand.u32 %v3496, 4294901760
      %v4280 = vsub.f32 %v3496, %v4279
      %4281 = vmatpush1.msra.mxu0 %v4280
      %4282 = vmatprep.subr.mxu0 0.0
      %4283 = vmatpush2.msra.mxu0 0.0
      %4284 = vmatprep.subr.mxu0 0.0
      %4285 = vmatpush2.msra.mxu0 0.0
      %4286 = vmatprep.subr.mxu0 0.0
      %4287 = vmatpush2.msra.mxu0 0.0
      %4288 = vmatprep.subr.mxu0 0.0
      %4289 = vmatpush2.msra.mxu0 0.0
      %4290 = vmatprep.subr.mxu0 0.0
      %4291 = vmatpush2.msra.mxu0 0.0
      %4292 = vmatprep.subr.mxu0 0.0
      %4293 = vmatpush2.msra.mxu0 0.0
      %4294 = vmatprep.subr.mxu0 0.0
      %4295 = vmatpush2.msra.mxu0 0.0
      %4296 = vmatprep.subr.mxu0 0.0
      %4297 = vmatpush2.msra.mxu0 0.0
      %4298 = vmatprep.subr.mxu0 0.0
      %4299 = vmatpush2.msra.mxu0 0.0
      %4300 = vmatprep.subr.mxu0 0.0
      %4301 = vmatpush2.msra.mxu0 0.0
      %4302 = vmatprep.subr.mxu0 0.0
      %4303 = vmatpush2.msra.mxu0 0.0
      %4304 = vmatprep.subr.mxu0 0.0
      %4305 = vmatpush2.msra.mxu0 0.0
      %4306 = vmatprep.subr.mxu0 0.0
      %4307 = vmatpush2.msra.mxu0 0.0
      %4308 = vmatprep.subr.mxu0 0.0
      %4309 = vmatpush2.msra.mxu0 0.0
      %4310 = vmatprep.subr.mxu0 0.0
      %4311 = vmatpush2.msra.mxu0 0.0
      %4312 = vmatprep.subr.mxu0 0.0
      %4313 = vmatpush2.msra.mxu0 0.0
      %4314 = vmatprep.mubr.f32.mxu0 0.0
      %v4315 = vand.u32 %v3507, 4294901760
      %v4316 = vsub.f32 %v3507, %v4315
      %4317 = vmatmul.mubr.f32.gmra.mxu0 %v4316
      %v4318 = vpop.f32.mrf.mxu0
      %v4319 = vadd.f32 %v4231, %v4318
      %v4320 = vpop.f32.mrf.mxu0
      %v4321 = vadd.f32 %v4233, %v4320
      %4322 = vmatprep.mubr.f32.mxu0 0.0
      %v4323 = vand.u32 %v3510, 4294901760
      %v4324 = vsub.f32 %v3510, %v4323
      %4325 = vmatmul.mubr.f32.gmra.mxu0 %v4324
      %v4326 = vpop.f32.mrf.mxu0
      %v4327 = vadd.f32 %v4238, %v4326
      %v4328 = vpop.f32.mrf.mxu0
      %v4329 = vadd.f32 %v4240, %v4328
      %4330 = vdwg.mxu0
      %4331 = vmatprep.subr.mxu0 0.0
      %4332 = vmatpush1.msra.mxu0 0.0
      %4333 = vmatprep.subr.mxu0 0.0
      %4334 = vmatpush1.msra.mxu0 0.0
      %4335 = vmatprep.subr.mxu0 0.0
      %4336 = vmatpush1.msra.mxu0 0.0
      %4337 = vmatprep.subr.mxu0 0.0
      %4338 = vmatpush1.msra.mxu0 0.0
      %4339 = vmatprep.subr.mxu0 0.0
      %4340 = vmatpush1.msra.mxu0 0.0
      %4341 = vmatprep.subr.mxu0 0.0
      %4342 = vmatpush1.msra.mxu0 0.0
      %4343 = vmatprep.subr.mxu0 0.0
      %4344 = vmatpush1.msra.mxu0 0.0
      %4345 = vmatprep.subr.mxu0 0.0
      %4346 = vmatpush1.msra.mxu0 0.0
      %4347 = vmatprep.subr.mxu0 0.0
      %4348 = vmatpush1.msra.mxu0 0.0
      %4349 = vmatprep.subr.mxu0 0.0
      %4350 = vmatpush1.msra.mxu0 0.0
      %4351 = vmatprep.subr.mxu0 0.0
      %4352 = vmatpush1.msra.mxu0 0.0
      %4353 = vmatprep.subr.mxu0 0.0
      %4354 = vmatpush1.msra.mxu0 0.0
      %4355 = vmatprep.subr.mxu0 0.0
      %4356 = vmatpush1.msra.mxu0 0.0
      %4357 = vmatprep.subr.mxu0 0.0
      %4358 = vmatpush1.msra.mxu0 0.0
      %v4359 = vand.u32 %v3503, 4294901760
      %4360 = vmatprep.subr.mxu0 %v4359
      %v4361 = vand.u32 %v3502, 4294901760
      %4362 = vmatpush1.msra.mxu0 %v4361
      %v4363 = vand.u32 %v3497, 4294901760
      %4364 = vmatprep.subr.mxu0 %v4363
      %v4365 = vand.u32 %v3496, 4294901760
      %4366 = vmatpush1.msra.mxu0 %v4365
      %4367 = vmatprep.subr.mxu0 0.0
      %4368 = vmatpush2.msra.mxu0 0.0
      %4369 = vmatprep.subr.mxu0 0.0
      %4370 = vmatpush2.msra.mxu0 0.0
      %4371 = vmatprep.subr.mxu0 0.0
      %4372 = vmatpush2.msra.mxu0 0.0
      %4373 = vmatprep.subr.mxu0 0.0
      %4374 = vmatpush2.msra.mxu0 0.0
      %4375 = vmatprep.subr.mxu0 0.0
      %4376 = vmatpush2.msra.mxu0 0.0
      %4377 = vmatprep.subr.mxu0 0.0
      %4378 = vmatpush2.msra.mxu0 0.0
      %4379 = vmatprep.subr.mxu0 0.0
      %4380 = vmatpush2.msra.mxu0 0.0
      %4381 = vmatprep.subr.mxu0 0.0
      %4382 = vmatpush2.msra.mxu0 0.0
      %4383 = vmatprep.subr.mxu0 0.0
      %4384 = vmatpush2.msra.mxu0 0.0
      %4385 = vmatprep.subr.mxu0 0.0
      %4386 = vmatpush2.msra.mxu0 0.0
      %4387 = vmatprep.subr.mxu0 0.0
      %4388 = vmatpush2.msra.mxu0 0.0
      %4389 = vmatprep.subr.mxu0 0.0
      %4390 = vmatpush2.msra.mxu0 0.0
      %4391 = vmatprep.subr.mxu0 0.0
      %4392 = vmatpush2.msra.mxu0 0.0
      %4393 = vmatprep.subr.mxu0 0.0
      %4394 = vmatpush2.msra.mxu0 0.0
      %4395 = vmatprep.subr.mxu0 0.0
      %4396 = vmatpush2.msra.mxu0 0.0
      %4397 = vmatprep.subr.mxu0 0.0
      %4398 = vmatpush2.msra.mxu0 0.0
      %4399 = vmatprep.mubr.f32.mxu0 0.0
      %v4400 = vand.u32 %v3507, 4294901760
      %v4401 = vsub.f32 %v3507, %v4400
      %v4402 = vand.u32 %v4401, 4294901760
      %4403 = vmatmul.mubr.f32.gmra.mxu0 %v4402
      %v4404 = vpop.f32.mrf.mxu0
      %v4405 = vadd.f32 %v4319, %v4404
      %v4406 = vpop.f32.mrf.mxu0
      %v4407 = vadd.f32 %v4321, %v4406
      %4408 = vmatprep.mubr.f32.mxu0 0.0
      %v4409 = vand.u32 %v3510, 4294901760
      %v4410 = vsub.f32 %v3510, %v4409
      %v4411 = vand.u32 %v4410, 4294901760
      %4412 = vmatmul.mubr.f32.gmra.mxu0 %v4411
      %v4413 = vpop.f32.mrf.mxu0
      %v4414 = vadd.f32 %v4327, %v4413
      %v4415 = vpop.f32.mrf.mxu0
      %v4416 = vadd.f32 %v4329, %v4415
      %4417 = vdwg.mxu0
      %4418 = vmatprep.subr.mxu0 0.0
      %4419 = vmatpush1.msra.mxu0 0.0
      %4420 = vmatprep.subr.mxu0 0.0
      %4421 = vmatpush1.msra.mxu0 0.0
      %4422 = vmatprep.subr.mxu0 0.0
      %4423 = vmatpush1.msra.mxu0 0.0
      %4424 = vmatprep.subr.mxu0 0.0
      %4425 = vmatpush1.msra.mxu0 0.0
      %4426 = vmatprep.subr.mxu0 0.0
      %4427 = vmatpush1.msra.mxu0 0.0
      %4428 = vmatprep.subr.mxu0 0.0
      %4429 = vmatpush1.msra.mxu0 0.0
      %4430 = vmatprep.subr.mxu0 0.0
      %4431 = vmatpush1.msra.mxu0 0.0
      %4432 = vmatprep.subr.mxu0 0.0
      %4433 = vmatpush1.msra.mxu0 0.0
      %4434 = vmatprep.subr.mxu0 0.0
      %4435 = vmatpush1.msra.mxu0 0.0
      %4436 = vmatprep.subr.mxu0 0.0
      %4437 = vmatpush1.msra.mxu0 0.0
      %4438 = vmatprep.subr.mxu0 0.0
      %4439 = vmatpush1.msra.mxu0 0.0
      %4440 = vmatprep.subr.mxu0 0.0
      %4441 = vmatpush1.msra.mxu0 0.0
      %4442 = vmatprep.subr.mxu0 0.0
      %4443 = vmatpush1.msra.mxu0 0.0
      %4444 = vmatprep.subr.mxu0 0.0
      %4445 = vmatpush1.msra.mxu0 0.0
      %v4446 = vand.u32 %v3503, 4294901760
      %v4447 = vsub.f32 %v3503, %v4446
      %v4448 = vand.u32 %v4447, 4294901760
      %4449 = vmatprep.subr.mxu0 %v4448
      %v4450 = vand.u32 %v3502, 4294901760
      %v4451 = vsub.f32 %v3502, %v4450
      %v4452 = vand.u32 %v4451, 4294901760
      %4453 = vmatpush1.msra.mxu0 %v4452
      %v4454 = vand.u32 %v3497, 4294901760
      %v4455 = vsub.f32 %v3497, %v4454
      %v4456 = vand.u32 %v4455, 4294901760
      %4457 = vmatprep.subr.mxu0 %v4456
      %v4458 = vand.u32 %v3496, 4294901760
      %v4459 = vsub.f32 %v3496, %v4458
      %v4460 = vand.u32 %v4459, 4294901760
      %4461 = vmatpush1.msra.mxu0 %v4460
      %4462 = vmatprep.subr.mxu0 0.0
      %4463 = vmatpush2.msra.mxu0 0.0
      %4464 = vmatprep.subr.mxu0 0.0
      %4465 = vmatpush2.msra.mxu0 0.0
      %4466 = vmatprep.subr.mxu0 0.0
      %4467 = vmatpush2.msra.mxu0 0.0
      %4468 = vmatprep.subr.mxu0 0.0
      %4469 = vmatpush2.msra.mxu0 0.0
      %4470 = vmatprep.subr.mxu0 0.0
      %4471 = vmatpush2.msra.mxu0 0.0
      %4472 = vmatprep.subr.mxu0 0.0
      %4473 = vmatpush2.msra.mxu0 0.0
      %4474 = vmatprep.subr.mxu0 0.0
      %4475 = vmatpush2.msra.mxu0 0.0
      %4476 = vmatprep.subr.mxu0 0.0
      %4477 = vmatpush2.msra.mxu0 0.0
      %4478 = vmatprep.subr.mxu0 0.0
      %4479 = vmatpush2.msra.mxu0 0.0
      %4480 = vmatprep.subr.mxu0 0.0
      %4481 = vmatpush2.msra.mxu0 0.0
      %4482 = vmatprep.subr.mxu0 0.0
      %4483 = vmatpush2.msra.mxu0 0.0
      %4484 = vmatprep.subr.mxu0 0.0
      %4485 = vmatpush2.msra.mxu0 0.0
      %4486 = vmatprep.subr.mxu0 0.0
      %4487 = vmatpush2.msra.mxu0 0.0
      %4488 = vmatprep.subr.mxu0 0.0
      %4489 = vmatpush2.msra.mxu0 0.0
      %4490 = vmatprep.subr.mxu0 0.0
      %4491 = vmatpush2.msra.mxu0 0.0
      %4492 = vmatprep.subr.mxu0 0.0
      %4493 = vmatpush2.msra.mxu0 0.0
      %4494 = vmatprep.mubr.f32.mxu0 0.0
      %v4495 = vand.u32 %v3507, 4294901760
      %4496 = vmatmul.mubr.f32.gmra.mxu0 %v4495
      %v4497 = vpop.f32.mrf.mxu0
      %v4498 = vadd.f32 %v4405, %v4497
      %v4499 = vpop.f32.mrf.mxu0
      %v4500 = vadd.f32 %v4407, %v4499
      %4501 = vmatprep.mubr.f32.mxu0 0.0
      %v4502 = vand.u32 %v3510, 4294901760
      %4503 = vmatmul.mubr.f32.gmra.mxu0 %v4502
      %v4504 = vpop.f32.mrf.mxu0
      %v4505 = vadd.f32 %v4414, %v4504
      %v4506 = vpop.f32.mrf.mxu0
      %v4507 = vadd.f32 %v4416, %v4506
      %4508 = vdwg.mxu0
      %4509 = vmatprep.subr.mxu0 0.0
      %4510 = vmatpush1.msra.mxu0 0.0
      %4511 = vmatprep.subr.mxu0 0.0
      %4512 = vmatpush1.msra.mxu0 0.0
      %4513 = vmatprep.subr.mxu0 0.0
      %4514 = vmatpush1.msra.mxu0 0.0
      %4515 = vmatprep.subr.mxu0 0.0
      %4516 = vmatpush1.msra.mxu0 0.0
      %4517 = vmatprep.subr.mxu0 0.0
      %4518 = vmatpush1.msra.mxu0 0.0
      %4519 = vmatprep.subr.mxu0 0.0
      %4520 = vmatpush1.msra.mxu0 0.0
      %4521 = vmatprep.subr.mxu0 0.0
      %4522 = vmatpush1.msra.mxu0 0.0
      %4523 = vmatprep.subr.mxu0 0.0
      %4524 = vmatpush1.msra.mxu0 0.0
      %4525 = vmatprep.subr.mxu0 0.0
      %4526 = vmatpush1.msra.mxu0 0.0
      %4527 = vmatprep.subr.mxu0 0.0
      %4528 = vmatpush1.msra.mxu0 0.0
      %4529 = vmatprep.subr.mxu0 0.0
      %4530 = vmatpush1.msra.mxu0 0.0
      %4531 = vmatprep.subr.mxu0 0.0
      %4532 = vmatpush1.msra.mxu0 0.0
      %4533 = vmatprep.subr.mxu0 0.0
      %4534 = vmatpush1.msra.mxu0 0.0
      %4535 = vmatprep.subr.mxu0 0.0
      %4536 = vmatpush1.msra.mxu0 0.0
      %v4537 = vand.u32 %v3503, 4294901760
      %4538 = vmatprep.subr.mxu0 %v4537
      %v4539 = vand.u32 %v3502, 4294901760
      %4540 = vmatpush1.msra.mxu0 %v4539
      %v4541 = vand.u32 %v3497, 4294901760
      %4542 = vmatprep.subr.mxu0 %v4541
      %v4543 = vand.u32 %v3496, 4294901760
      %4544 = vmatpush1.msra.mxu0 %v4543
      %4545 = vmatprep.subr.mxu0 0.0
      %4546 = vmatpush2.msra.mxu0 0.0
      %4547 = vmatprep.subr.mxu0 0.0
      %4548 = vmatpush2.msra.mxu0 0.0
      %4549 = vmatprep.subr.mxu0 0.0
      %4550 = vmatpush2.msra.mxu0 0.0
      %4551 = vmatprep.subr.mxu0 0.0
      %4552 = vmatpush2.msra.mxu0 0.0
      %4553 = vmatprep.subr.mxu0 0.0
      %4554 = vmatpush2.msra.mxu0 0.0
      %4555 = vmatprep.subr.mxu0 0.0
      %4556 = vmatpush2.msra.mxu0 0.0
      %4557 = vmatprep.subr.mxu0 0.0
      %4558 = vmatpush2.msra.mxu0 0.0
      %4559 = vmatprep.subr.mxu0 0.0
      %4560 = vmatpush2.msra.mxu0 0.0
      %4561 = vmatprep.subr.mxu0 0.0
      %4562 = vmatpush2.msra.mxu0 0.0
      %4563 = vmatprep.subr.mxu0 0.0
      %4564 = vmatpush2.msra.mxu0 0.0
      %4565 = vmatprep.subr.mxu0 0.0
      %4566 = vmatpush2.msra.mxu0 0.0
      %4567 = vmatprep.subr.mxu0 0.0
      %4568 = vmatpush2.msra.mxu0 0.0
      %4569 = vmatprep.subr.mxu0 0.0
      %4570 = vmatpush2.msra.mxu0 0.0
      %4571 = vmatprep.subr.mxu0 0.0
      %4572 = vmatpush2.msra.mxu0 0.0
      %4573 = vmatprep.subr.mxu0 0.0
      %4574 = vmatpush2.msra.mxu0 0.0
      %4575 = vmatprep.subr.mxu0 0.0
      %4576 = vmatpush2.msra.mxu0 0.0
      %4577 = vmatprep.mubr.f32.mxu0 0.0
      %v4578 = vand.u32 %v3507, 4294901760
      %4579 = vmatmul.mubr.f32.gmra.mxu0 %v4578
      %v4580 = vpop.f32.mrf.mxu0
      %v4581 = vadd.f32 %v4498, %v4580
      %v4582 = vpop.f32.mrf.mxu0
      %v4583 = vadd.f32 %v4500, %v4582
      %4584 = vmatprep.mubr.f32.mxu0 0.0
      %v4585 = vand.u32 %v3510, 4294901760
      %4586 = vmatmul.mubr.f32.gmra.mxu0 %v4585
      %v4587 = vpop.f32.mrf.mxu0
      %v4588 = vadd.f32 %v4505, %v4587
      %v4589 = vpop.f32.mrf.mxu0
      %v4590 = vadd.f32 %v4507, %v4589
      %4591 = vdwg.mxu0
      %4592 = vmatprep.subr.mxu0 0.0
      %4593 = vmatpush1.msra.mxu0 0.0
      %4594 = vmatprep.subr.mxu0 0.0
      %4595 = vmatpush1.msra.mxu0 0.0
      %4596 = vmatprep.subr.mxu0 0.0
      %4597 = vmatpush1.msra.mxu0 0.0
      %4598 = vmatprep.subr.mxu0 0.0
      %4599 = vmatpush1.msra.mxu0 0.0
      %4600 = vmatprep.subr.mxu0 0.0
      %4601 = vmatpush1.msra.mxu0 0.0
      %4602 = vmatprep.subr.mxu0 0.0
      %4603 = vmatpush1.msra.mxu0 0.0
      %4604 = vmatprep.subr.mxu0 0.0
      %4605 = vmatpush1.msra.mxu0 0.0
      %4606 = vmatprep.subr.mxu0 0.0
      %4607 = vmatpush1.msra.mxu0 0.0
      %4608 = vmatprep.subr.mxu0 0.0
      %4609 = vmatpush1.msra.mxu0 0.0
      %4610 = vmatprep.subr.mxu0 0.0
      %4611 = vmatpush1.msra.mxu0 0.0
      %4612 = vmatprep.subr.mxu0 0.0
      %4613 = vmatpush1.msra.mxu0 0.0
      %4614 = vmatprep.subr.mxu0 0.0
      %4615 = vmatpush1.msra.mxu0 0.0
      %4616 = vmatprep.subr.mxu0 0.0
      %4617 = vmatpush1.msra.mxu0 0.0
      %4618 = vmatprep.subr.mxu0 0.0
      %4619 = vmatpush1.msra.mxu0 0.0
      %v4620 = vand.u32 %v3505, 4294901760
      %4621 = vmatprep.subr.mxu0 %v4620
      %v4622 = vand.u32 %v3504, 4294901760
      %4623 = vmatpush1.msra.mxu0 %v4622
      %v4624 = vand.u32 %v3499, 4294901760
      %4625 = vmatprep.subr.mxu0 %v4624
      %v4626 = vand.u32 %v3498, 4294901760
      %4627 = vmatpush1.msra.mxu0 %v4626
      %4628 = vmatprep.subr.mxu0 0.0
      %4629 = vmatpush2.msra.mxu0 0.0
      %4630 = vmatprep.subr.mxu0 0.0
      %4631 = vmatpush2.msra.mxu0 0.0
      %4632 = vmatprep.subr.mxu0 0.0
      %4633 = vmatpush2.msra.mxu0 0.0
      %4634 = vmatprep.subr.mxu0 0.0
      %4635 = vmatpush2.msra.mxu0 0.0
      %4636 = vmatprep.subr.mxu0 0.0
      %4637 = vmatpush2.msra.mxu0 0.0
      %4638 = vmatprep.subr.mxu0 0.0
      %4639 = vmatpush2.msra.mxu0 0.0
      %4640 = vmatprep.subr.mxu0 0.0
      %4641 = vmatpush2.msra.mxu0 0.0
      %4642 = vmatprep.subr.mxu0 0.0
      %4643 = vmatpush2.msra.mxu0 0.0
      %4644 = vmatprep.subr.mxu0 0.0
      %4645 = vmatpush2.msra.mxu0 0.0
      %4646 = vmatprep.subr.mxu0 0.0
      %4647 = vmatpush2.msra.mxu0 0.0
      %4648 = vmatprep.subr.mxu0 0.0
      %4649 = vmatpush2.msra.mxu0 0.0
      %4650 = vmatprep.subr.mxu0 0.0
      %4651 = vmatpush2.msra.mxu0 0.0
      %4652 = vmatprep.subr.mxu0 0.0
      %4653 = vmatpush2.msra.mxu0 0.0
      %4654 = vmatprep.subr.mxu0 0.0
      %4655 = vmatpush2.msra.mxu0 0.0
      %4656 = vmatprep.subr.mxu0 0.0
      %4657 = vmatpush2.msra.mxu0 0.0
      %4658 = vmatprep.subr.mxu0 0.0
      %4659 = vmatpush2.msra.mxu0 0.0
      %4660 = vmatprep.mubr.f32.mxu0 0.0
      %v4661 = vand.u32 %v3507, 4294901760
      %v4662 = vsub.f32 %v3507, %v4661
      %v4663 = vand.u32 %v4662, 4294901760
      %v4664 = vsub.f32 %v4662, %v4663
      %v4665 = vand.u32 %v4664, 4294901760
      %4666 = vmatmul.mubr.f32.gmra.mxu0 %v4665
      %v4667 = vpop.f32.mrf.mxu0
      %v4668 = vadd.f32 0.0, %v4667
      %v4669 = vpop.f32.mrf.mxu0
      %v4670 = vadd.f32 0.0, %v4669
      %4671 = vmatprep.mubr.f32.mxu0 0.0
      %v4672 = vand.u32 %v3510, 4294901760
      %v4673 = vsub.f32 %v3510, %v4672
      %v4674 = vand.u32 %v4673, 4294901760
      %v4675 = vsub.f32 %v4673, %v4674
      %v4676 = vand.u32 %v4675, 4294901760
      %4677 = vmatmul.mubr.f32.gmra.mxu0 %v4676
      %v4678 = vpop.f32.mrf.mxu0
      %v4679 = vadd.f32 0.0, %v4678
      %v4680 = vpop.f32.mrf.mxu0
      %v4681 = vadd.f32 0.0, %v4680
      %4682 = vdwg.mxu0
      %4683 = vmatprep.subr.mxu0 0.0
      %4684 = vmatpush1.msra.mxu0 0.0
      %4685 = vmatprep.subr.mxu0 0.0
      %4686 = vmatpush1.msra.mxu0 0.0
      %4687 = vmatprep.subr.mxu0 0.0
      %4688 = vmatpush1.msra.mxu0 0.0
      %4689 = vmatprep.subr.mxu0 0.0
      %4690 = vmatpush1.msra.mxu0 0.0
      %4691 = vmatprep.subr.mxu0 0.0
      %4692 = vmatpush1.msra.mxu0 0.0
      %4693 = vmatprep.subr.mxu0 0.0
      %4694 = vmatpush1.msra.mxu0 0.0
      %4695 = vmatprep.subr.mxu0 0.0
      %4696 = vmatpush1.msra.mxu0 0.0
      %4697 = vmatprep.subr.mxu0 0.0
      %4698 = vmatpush1.msra.mxu0 0.0
      %4699 = vmatprep.subr.mxu0 0.0
      %4700 = vmatpush1.msra.mxu0 0.0
      %4701 = vmatprep.subr.mxu0 0.0
      %4702 = vmatpush1.msra.mxu0 0.0
      %4703 = vmatprep.subr.mxu0 0.0
      %4704 = vmatpush1.msra.mxu0 0.0
      %4705 = vmatprep.subr.mxu0 0.0
      %4706 = vmatpush1.msra.mxu0 0.0
      %4707 = vmatprep.subr.mxu0 0.0
      %4708 = vmatpush1.msra.mxu0 0.0
      %4709 = vmatprep.subr.mxu0 0.0
      %4710 = vmatpush1.msra.mxu0 0.0
      %v4711 = vand.u32 %v3505, 4294901760
      %v4712 = vsub.f32 %v3505, %v4711
      %v4713 = vand.u32 %v4712, 4294901760
      %v4714 = vsub.f32 %v4712, %v4713
      %v4715 = vand.u32 %v4714, 4294901760
      %4716 = vmatprep.subr.mxu0 %v4715
      %v4717 = vand.u32 %v3504, 4294901760
      %v4718 = vsub.f32 %v3504, %v4717
      %v4719 = vand.u32 %v4718, 4294901760
      %v4720 = vsub.f32 %v4718, %v4719
      %v4721 = vand.u32 %v4720, 4294901760
      %4722 = vmatpush1.msra.mxu0 %v4721
      %v4723 = vand.u32 %v3499, 4294901760
      %v4724 = vsub.f32 %v3499, %v4723
      %v4725 = vand.u32 %v4724, 4294901760
      %v4726 = vsub.f32 %v4724, %v4725
      %v4727 = vand.u32 %v4726, 4294901760
      %4728 = vmatprep.subr.mxu0 %v4727
      %v4729 = vand.u32 %v3498, 4294901760
      %v4730 = vsub.f32 %v3498, %v4729
      %v4731 = vand.u32 %v4730, 4294901760
      %v4732 = vsub.f32 %v4730, %v4731
      %v4733 = vand.u32 %v4732, 4294901760
      %4734 = vmatpush1.msra.mxu0 %v4733
      %4735 = vmatprep.subr.mxu0 0.0
      %4736 = vmatpush2.msra.mxu0 0.0
      %4737 = vmatprep.subr.mxu0 0.0
      %4738 = vmatpush2.msra.mxu0 0.0
      %4739 = vmatprep.subr.mxu0 0.0
      %4740 = vmatpush2.msra.mxu0 0.0
      %4741 = vmatprep.subr.mxu0 0.0
      %4742 = vmatpush2.msra.mxu0 0.0
      %4743 = vmatprep.subr.mxu0 0.0
      %4744 = vmatpush2.msra.mxu0 0.0
      %4745 = vmatprep.subr.mxu0 0.0
      %4746 = vmatpush2.msra.mxu0 0.0
      %4747 = vmatprep.subr.mxu0 0.0
      %4748 = vmatpush2.msra.mxu0 0.0
      %4749 = vmatprep.subr.mxu0 0.0
      %4750 = vmatpush2.msra.mxu0 0.0
      %4751 = vmatprep.subr.mxu0 0.0
      %4752 = vmatpush2.msra.mxu0 0.0
      %4753 = vmatprep.subr.mxu0 0.0
      %4754 = vmatpush2.msra.mxu0 0.0
      %4755 = vmatprep.subr.mxu0 0.0
      %4756 = vmatpush2.msra.mxu0 0.0
      %4757 = vmatprep.subr.mxu0 0.0
      %4758 = vmatpush2.msra.mxu0 0.0
      %4759 = vmatprep.subr.mxu0 0.0
      %4760 = vmatpush2.msra.mxu0 0.0
      %4761 = vmatprep.subr.mxu0 0.0
      %4762 = vmatpush2.msra.mxu0 0.0
      %4763 = vmatprep.subr.mxu0 0.0
      %4764 = vmatpush2.msra.mxu0 0.0
      %4765 = vmatprep.subr.mxu0 0.0
      %4766 = vmatpush2.msra.mxu0 0.0
      %4767 = vmatprep.mubr.f32.mxu0 0.0
      %v4768 = vand.u32 %v3507, 4294901760
      %4769 = vmatmul.mubr.f32.gmra.mxu0 %v4768
      %v4770 = vpop.f32.mrf.mxu0
      %v4771 = vadd.f32 %v4668, %v4770
      %v4772 = vpop.f32.mrf.mxu0
      %v4773 = vadd.f32 %v4670, %v4772
      %4774 = vmatprep.mubr.f32.mxu0 0.0
      %v4775 = vand.u32 %v3510, 4294901760
      %4776 = vmatmul.mubr.f32.gmra.mxu0 %v4775
      %v4777 = vpop.f32.mrf.mxu0
      %v4778 = vadd.f32 %v4679, %v4777
      %v4779 = vpop.f32.mrf.mxu0
      %v4780 = vadd.f32 %v4681, %v4779
      %4781 = vdwg.mxu0
      %4782 = vmatprep.subr.mxu0 0.0
      %4783 = vmatpush1.msra.mxu0 0.0
      %4784 = vmatprep.subr.mxu0 0.0
      %4785 = vmatpush1.msra.mxu0 0.0
      %4786 = vmatprep.subr.mxu0 0.0
      %4787 = vmatpush1.msra.mxu0 0.0
      %4788 = vmatprep.subr.mxu0 0.0
      %4789 = vmatpush1.msra.mxu0 0.0
      %4790 = vmatprep.subr.mxu0 0.0
      %4791 = vmatpush1.msra.mxu0 0.0
      %4792 = vmatprep.subr.mxu0 0.0
      %4793 = vmatpush1.msra.mxu0 0.0
      %4794 = vmatprep.subr.mxu0 0.0
      %4795 = vmatpush1.msra.mxu0 0.0
      %4796 = vmatprep.subr.mxu0 0.0
      %4797 = vmatpush1.msra.mxu0 0.0
      %4798 = vmatprep.subr.mxu0 0.0
      %4799 = vmatpush1.msra.mxu0 0.0
      %4800 = vmatprep.subr.mxu0 0.0
      %4801 = vmatpush1.msra.mxu0 0.0
      %4802 = vmatprep.subr.mxu0 0.0
      %4803 = vmatpush1.msra.mxu0 0.0
      %4804 = vmatprep.subr.mxu0 0.0
      %4805 = vmatpush1.msra.mxu0 0.0
      %4806 = vmatprep.subr.mxu0 0.0
      %4807 = vmatpush1.msra.mxu0 0.0
      %4808 = vmatprep.subr.mxu0 0.0
      %4809 = vmatpush1.msra.mxu0 0.0
      %v4810 = vand.u32 %v3505, 4294901760
      %v4811 = vsub.f32 %v3505, %v4810
      %4812 = vmatprep.subr.mxu0 %v4811
      %v4813 = vand.u32 %v3504, 4294901760
      %v4814 = vsub.f32 %v3504, %v4813
      %4815 = vmatpush1.msra.mxu0 %v4814
      %v4816 = vand.u32 %v3499, 4294901760
      %v4817 = vsub.f32 %v3499, %v4816
      %4818 = vmatprep.subr.mxu0 %v4817
      %v4819 = vand.u32 %v3498, 4294901760
      %v4820 = vsub.f32 %v3498, %v4819
      %4821 = vmatpush1.msra.mxu0 %v4820
      %4822 = vmatprep.subr.mxu0 0.0
      %4823 = vmatpush2.msra.mxu0 0.0
      %4824 = vmatprep.subr.mxu0 0.0
      %4825 = vmatpush2.msra.mxu0 0.0
      %4826 = vmatprep.subr.mxu0 0.0
      %4827 = vmatpush2.msra.mxu0 0.0
      %4828 = vmatprep.subr.mxu0 0.0
      %4829 = vmatpush2.msra.mxu0 0.0
      %4830 = vmatprep.subr.mxu0 0.0
      %4831 = vmatpush2.msra.mxu0 0.0
      %4832 = vmatprep.subr.mxu0 0.0
      %4833 = vmatpush2.msra.mxu0 0.0
      %4834 = vmatprep.subr.mxu0 0.0
      %4835 = vmatpush2.msra.mxu0 0.0
      %4836 = vmatprep.subr.mxu0 0.0
      %4837 = vmatpush2.msra.mxu0 0.0
      %4838 = vmatprep.subr.mxu0 0.0
      %4839 = vmatpush2.msra.mxu0 0.0
      %4840 = vmatprep.subr.mxu0 0.0
      %4841 = vmatpush2.msra.mxu0 0.0
      %4842 = vmatprep.subr.mxu0 0.0
      %4843 = vmatpush2.msra.mxu0 0.0
      %4844 = vmatprep.subr.mxu0 0.0
      %4845 = vmatpush2.msra.mxu0 0.0
      %4846 = vmatprep.subr.mxu0 0.0
      %4847 = vmatpush2.msra.mxu0 0.0
      %4848 = vmatprep.subr.mxu0 0.0
      %4849 = vmatpush2.msra.mxu0 0.0
      %4850 = vmatprep.subr.mxu0 0.0
      %4851 = vmatpush2.msra.mxu0 0.0
      %4852 = vmatprep.subr.mxu0 0.0
      %4853 = vmatpush2.msra.mxu0 0.0
      %4854 = vmatprep.mubr.f32.mxu0 0.0
      %v4855 = vand.u32 %v3507, 4294901760
      %v4856 = vsub.f32 %v3507, %v4855
      %4857 = vmatmul.mubr.f32.gmra.mxu0 %v4856
      %v4858 = vpop.f32.mrf.mxu0
      %v4859 = vadd.f32 %v4771, %v4858
      %v4860 = vpop.f32.mrf.mxu0
      %v4861 = vadd.f32 %v4773, %v4860
      %4862 = vmatprep.mubr.f32.mxu0 0.0
      %v4863 = vand.u32 %v3510, 4294901760
      %v4864 = vsub.f32 %v3510, %v4863
      %4865 = vmatmul.mubr.f32.gmra.mxu0 %v4864
      %v4866 = vpop.f32.mrf.mxu0
      %v4867 = vadd.f32 %v4778, %v4866
      %v4868 = vpop.f32.mrf.mxu0
      %v4869 = vadd.f32 %v4780, %v4868
      %4870 = vdwg.mxu0
      %4871 = vmatprep.subr.mxu0 0.0
      %4872 = vmatpush1.msra.mxu0 0.0
      %4873 = vmatprep.subr.mxu0 0.0
      %4874 = vmatpush1.msra.mxu0 0.0
      %4875 = vmatprep.subr.mxu0 0.0
      %4876 = vmatpush1.msra.mxu0 0.0
      %4877 = vmatprep.subr.mxu0 0.0
      %4878 = vmatpush1.msra.mxu0 0.0
      %4879 = vmatprep.subr.mxu0 0.0
      %4880 = vmatpush1.msra.mxu0 0.0
      %4881 = vmatprep.subr.mxu0 0.0
      %4882 = vmatpush1.msra.mxu0 0.0
      %4883 = vmatprep.subr.mxu0 0.0
      %4884 = vmatpush1.msra.mxu0 0.0
      %4885 = vmatprep.subr.mxu0 0.0
      %4886 = vmatpush1.msra.mxu0 0.0
      %4887 = vmatprep.subr.mxu0 0.0
      %4888 = vmatpush1.msra.mxu0 0.0
      %4889 = vmatprep.subr.mxu0 0.0
      %4890 = vmatpush1.msra.mxu0 0.0
      %4891 = vmatprep.subr.mxu0 0.0
      %4892 = vmatpush1.msra.mxu0 0.0
      %4893 = vmatprep.subr.mxu0 0.0
      %4894 = vmatpush1.msra.mxu0 0.0
      %4895 = vmatprep.subr.mxu0 0.0
      %4896 = vmatpush1.msra.mxu0 0.0
      %4897 = vmatprep.subr.mxu0 0.0
      %4898 = vmatpush1.msra.mxu0 0.0
      %v4899 = vand.u32 %v3505, 4294901760
      %4900 = vmatprep.subr.mxu0 %v4899
      %v4901 = vand.u32 %v3504, 4294901760
      %4902 = vmatpush1.msra.mxu0 %v4901
      %v4903 = vand.u32 %v3499, 4294901760
      %4904 = vmatprep.subr.mxu0 %v4903
      %v4905 = vand.u32 %v3498, 4294901760
      %4906 = vmatpush1.msra.mxu0 %v4905
      %4907 = vmatprep.subr.mxu0 0.0
      %4908 = vmatpush2.msra.mxu0 0.0
      %4909 = vmatprep.subr.mxu0 0.0
      %4910 = vmatpush2.msra.mxu0 0.0
      %4911 = vmatprep.subr.mxu0 0.0
      %4912 = vmatpush2.msra.mxu0 0.0
      %4913 = vmatprep.subr.mxu0 0.0
      %4914 = vmatpush2.msra.mxu0 0.0
      %4915 = vmatprep.subr.mxu0 0.0
      %4916 = vmatpush2.msra.mxu0 0.0
      %4917 = vmatprep.subr.mxu0 0.0
      %4918 = vmatpush2.msra.mxu0 0.0
      %4919 = vmatprep.subr.mxu0 0.0
      %4920 = vmatpush2.msra.mxu0 0.0
      %4921 = vmatprep.subr.mxu0 0.0
      %4922 = vmatpush2.msra.mxu0 0.0
      %4923 = vmatprep.subr.mxu0 0.0
      %4924 = vmatpush2.msra.mxu0 0.0
      %4925 = vmatprep.subr.mxu0 0.0
      %4926 = vmatpush2.msra.mxu0 0.0
      %4927 = vmatprep.subr.mxu0 0.0
      %4928 = vmatpush2.msra.mxu0 0.0
      %4929 = vmatprep.subr.mxu0 0.0
      %4930 = vmatpush2.msra.mxu0 0.0
      %4931 = vmatprep.subr.mxu0 0.0
      %4932 = vmatpush2.msra.mxu0 0.0
      %4933 = vmatprep.subr.mxu0 0.0
      %4934 = vmatpush2.msra.mxu0 0.0
      %4935 = vmatprep.subr.mxu0 0.0
      %4936 = vmatpush2.msra.mxu0 0.0
      %4937 = vmatprep.subr.mxu0 0.0
      %4938 = vmatpush2.msra.mxu0 0.0
      %4939 = vmatprep.mubr.f32.mxu0 0.0
      %v4940 = vand.u32 %v3507, 4294901760
      %v4941 = vsub.f32 %v3507, %v4940
      %v4942 = vand.u32 %v4941, 4294901760
      %4943 = vmatmul.mubr.f32.gmra.mxu0 %v4942
      %v4944 = vpop.f32.mrf.mxu0
      %v4945 = vadd.f32 %v4859, %v4944
      %v4946 = vpop.f32.mrf.mxu0
      %v4947 = vadd.f32 %v4861, %v4946
      %4948 = vmatprep.mubr.f32.mxu0 0.0
      %v4949 = vand.u32 %v3510, 4294901760
      %v4950 = vsub.f32 %v3510, %v4949
      %v4951 = vand.u32 %v4950, 4294901760
      %4952 = vmatmul.mubr.f32.gmra.mxu0 %v4951
      %v4953 = vpop.f32.mrf.mxu0
      %v4954 = vadd.f32 %v4867, %v4953
      %v4955 = vpop.f32.mrf.mxu0
      %v4956 = vadd.f32 %v4869, %v4955
      %4957 = vdwg.mxu0
      %4958 = vmatprep.subr.mxu0 0.0
      %4959 = vmatpush1.msra.mxu0 0.0
      %4960 = vmatprep.subr.mxu0 0.0
      %4961 = vmatpush1.msra.mxu0 0.0
      %4962 = vmatprep.subr.mxu0 0.0
      %4963 = vmatpush1.msra.mxu0 0.0
      %4964 = vmatprep.subr.mxu0 0.0
      %4965 = vmatpush1.msra.mxu0 0.0
      %4966 = vmatprep.subr.mxu0 0.0
      %4967 = vmatpush1.msra.mxu0 0.0
      %4968 = vmatprep.subr.mxu0 0.0
      %4969 = vmatpush1.msra.mxu0 0.0
      %4970 = vmatprep.subr.mxu0 0.0
      %4971 = vmatpush1.msra.mxu0 0.0
      %4972 = vmatprep.subr.mxu0 0.0
      %4973 = vmatpush1.msra.mxu0 0.0
      %4974 = vmatprep.subr.mxu0 0.0
      %4975 = vmatpush1.msra.mxu0 0.0
      %4976 = vmatprep.subr.mxu0 0.0
      %4977 = vmatpush1.msra.mxu0 0.0
      %4978 = vmatprep.subr.mxu0 0.0
      %4979 = vmatpush1.msra.mxu0 0.0
      %4980 = vmatprep.subr.mxu0 0.0
      %4981 = vmatpush1.msra.mxu0 0.0
      %4982 = vmatprep.subr.mxu0 0.0
      %4983 = vmatpush1.msra.mxu0 0.0
      %4984 = vmatprep.subr.mxu0 0.0
      %4985 = vmatpush1.msra.mxu0 0.0
      %v4986 = vand.u32 %v3505, 4294901760
      %v4987 = vsub.f32 %v3505, %v4986
      %v4988 = vand.u32 %v4987, 4294901760
      %4989 = vmatprep.subr.mxu0 %v4988
      %v4990 = vand.u32 %v3504, 4294901760
      %v4991 = vsub.f32 %v3504, %v4990
      %v4992 = vand.u32 %v4991, 4294901760
      %4993 = vmatpush1.msra.mxu0 %v4992
      %v4994 = vand.u32 %v3499, 4294901760
      %v4995 = vsub.f32 %v3499, %v4994
      %v4996 = vand.u32 %v4995, 4294901760
      %4997 = vmatprep.subr.mxu0 %v4996
      %v4998 = vand.u32 %v3498, 4294901760
      %v4999 = vsub.f32 %v3498, %v4998
      %v5000 = vand.u32 %v4999, 4294901760
      %5001 = vmatpush1.msra.mxu0 %v5000
      %5002 = vmatprep.subr.mxu0 0.0
      %5003 = vmatpush2.msra.mxu0 0.0
      %5004 = vmatprep.subr.mxu0 0.0
      %5005 = vmatpush2.msra.mxu0 0.0
      %5006 = vmatprep.subr.mxu0 0.0
      %5007 = vmatpush2.msra.mxu0 0.0
      %5008 = vmatprep.subr.mxu0 0.0
      %5009 = vmatpush2.msra.mxu0 0.0
      %5010 = vmatprep.subr.mxu0 0.0
      %5011 = vmatpush2.msra.mxu0 0.0
      %5012 = vmatprep.subr.mxu0 0.0
      %5013 = vmatpush2.msra.mxu0 0.0
      %5014 = vmatprep.subr.mxu0 0.0
      %5015 = vmatpush2.msra.mxu0 0.0
      %5016 = vmatprep.subr.mxu0 0.0
      %5017 = vmatpush2.msra.mxu0 0.0
      %5018 = vmatprep.subr.mxu0 0.0
      %5019 = vmatpush2.msra.mxu0 0.0
      %5020 = vmatprep.subr.mxu0 0.0
      %5021 = vmatpush2.msra.mxu0 0.0
      %5022 = vmatprep.subr.mxu0 0.0
      %5023 = vmatpush2.msra.mxu0 0.0
      %5024 = vmatprep.subr.mxu0 0.0
      %5025 = vmatpush2.msra.mxu0 0.0
      %5026 = vmatprep.subr.mxu0 0.0
      %5027 = vmatpush2.msra.mxu0 0.0
      %5028 = vmatprep.subr.mxu0 0.0
      %5029 = vmatpush2.msra.mxu0 0.0
      %5030 = vmatprep.subr.mxu0 0.0
      %5031 = vmatpush2.msra.mxu0 0.0
      %5032 = vmatprep.subr.mxu0 0.0
      %5033 = vmatpush2.msra.mxu0 0.0
      %5034 = vmatprep.mubr.f32.mxu0 0.0
      %v5035 = vand.u32 %v3507, 4294901760
      %5036 = vmatmul.mubr.f32.gmra.mxu0 %v5035
      %v5037 = vpop.f32.mrf.mxu0
      %v5038 = vadd.f32 %v4945, %v5037
      %v5039 = vpop.f32.mrf.mxu0
      %v5040 = vadd.f32 %v4947, %v5039
      %5041 = vmatprep.mubr.f32.mxu0 0.0
      %v5042 = vand.u32 %v3510, 4294901760
      %5043 = vmatmul.mubr.f32.gmra.mxu0 %v5042
      %v5044 = vpop.f32.mrf.mxu0
      %v5045 = vadd.f32 %v4954, %v5044
      %v5046 = vpop.f32.mrf.mxu0
      %v5047 = vadd.f32 %v4956, %v5046
      %5048 = vdwg.mxu0
      %5049 = vmatprep.subr.mxu0 0.0
      %5050 = vmatpush1.msra.mxu0 0.0
      %5051 = vmatprep.subr.mxu0 0.0
      %5052 = vmatpush1.msra.mxu0 0.0
      %5053 = vmatprep.subr.mxu0 0.0
      %5054 = vmatpush1.msra.mxu0 0.0
      %5055 = vmatprep.subr.mxu0 0.0
      %5056 = vmatpush1.msra.mxu0 0.0
      %5057 = vmatprep.subr.mxu0 0.0
      %5058 = vmatpush1.msra.mxu0 0.0
      %5059 = vmatprep.subr.mxu0 0.0
      %5060 = vmatpush1.msra.mxu0 0.0
      %5061 = vmatprep.subr.mxu0 0.0
      %5062 = vmatpush1.msra.mxu0 0.0
      %5063 = vmatprep.subr.mxu0 0.0
      %5064 = vmatpush1.msra.mxu0 0.0
      %5065 = vmatprep.subr.mxu0 0.0
      %5066 = vmatpush1.msra.mxu0 0.0
      %5067 = vmatprep.subr.mxu0 0.0
      %5068 = vmatpush1.msra.mxu0 0.0
      %5069 = vmatprep.subr.mxu0 0.0
      %5070 = vmatpush1.msra.mxu0 0.0
      %5071 = vmatprep.subr.mxu0 0.0
      %5072 = vmatpush1.msra.mxu0 0.0
      %5073 = vmatprep.subr.mxu0 0.0
      %5074 = vmatpush1.msra.mxu0 0.0
      %5075 = vmatprep.subr.mxu0 0.0
      %5076 = vmatpush1.msra.mxu0 0.0
      %v5077 = vand.u32 %v3505, 4294901760
      %5078 = vmatprep.subr.mxu0 %v5077
      %v5079 = vand.u32 %v3504, 4294901760
      %5080 = vmatpush1.msra.mxu0 %v5079
      %v5081 = vand.u32 %v3499, 4294901760
      %5082 = vmatprep.subr.mxu0 %v5081
      %v5083 = vand.u32 %v3498, 4294901760
      %5084 = vmatpush1.msra.mxu0 %v5083
      %5085 = vmatprep.subr.mxu0 0.0
      %5086 = vmatpush2.msra.mxu0 0.0
      %5087 = vmatprep.subr.mxu0 0.0
      %5088 = vmatpush2.msra.mxu0 0.0
      %5089 = vmatprep.subr.mxu0 0.0
      %5090 = vmatpush2.msra.mxu0 0.0
      %5091 = vmatprep.subr.mxu0 0.0
      %5092 = vmatpush2.msra.mxu0 0.0
      %5093 = vmatprep.subr.mxu0 0.0
      %5094 = vmatpush2.msra.mxu0 0.0
      %5095 = vmatprep.subr.mxu0 0.0
      %5096 = vmatpush2.msra.mxu0 0.0
      %5097 = vmatprep.subr.mxu0 0.0
      %5098 = vmatpush2.msra.mxu0 0.0
      %5099 = vmatprep.subr.mxu0 0.0
      %5100 = vmatpush2.msra.mxu0 0.0
      %5101 = vmatprep.subr.mxu0 0.0
      %5102 = vmatpush2.msra.mxu0 0.0
      %5103 = vmatprep.subr.mxu0 0.0
      %5104 = vmatpush2.msra.mxu0 0.0
      %5105 = vmatprep.subr.mxu0 0.0
      %5106 = vmatpush2.msra.mxu0 0.0
      %5107 = vmatprep.subr.mxu0 0.0
      %5108 = vmatpush2.msra.mxu0 0.0
      %5109 = vmatprep.subr.mxu0 0.0
      %5110 = vmatpush2.msra.mxu0 0.0
      %5111 = vmatprep.subr.mxu0 0.0
      %5112 = vmatpush2.msra.mxu0 0.0
      %5113 = vmatprep.subr.mxu0 0.0
      %5114 = vmatpush2.msra.mxu0 0.0
      %5115 = vmatprep.subr.mxu0 0.0
      %5116 = vmatpush2.msra.mxu0 0.0
      %5117 = vmatprep.mubr.f32.mxu0 0.0
      %v5118 = vand.u32 %v3507, 4294901760
      %5119 = vmatmul.mubr.f32.gmra.mxu0 %v5118
      %v5120 = vpop.f32.mrf.mxu0
      %v5121 = vadd.f32 %v5038, %v5120
      %v5122 = vpop.f32.mrf.mxu0
      %v5123 = vadd.f32 %v5040, %v5122
      %5124 = vmatprep.mubr.f32.mxu0 0.0
      %v5125 = vand.u32 %v3510, 4294901760
      %5126 = vmatmul.mubr.f32.gmra.mxu0 %v5125
      %v5127 = vpop.f32.mrf.mxu0
      %v5128 = vadd.f32 %v5045, %v5127
      %v5129 = vpop.f32.mrf.mxu0
      %v5130 = vadd.f32 %v5047, %v5129
      %5131 = vdwg.mxu0
      %v5132 = vadd.f32 %v2399, %v4041
      %v5133 = vadd.f32 %v2401, %v4043
      %v5134 = vadd.f32 %v2939, %v4581
      %v5135 = vadd.f32 %v2941, %v4583
      %v5136 = vadd.f32 %v3479, %v5121
      %v5137 = vadd.f32 %v3481, %v5123
      %v5138 = vadd.f32 %v2406, %v4048
      %v5139 = vadd.f32 %v2408, %v4050
      %v5140 = vadd.f32 %v2946, %v4588
      %v5141 = vadd.f32 %v2948, %v4590
      %v5142 = vadd.f32 %v3486, %v5128
      %v5143 = vadd.f32 %v3488, %v5130
      %s5144 = scalar_lea.vmem %s192, 48
      %v5145 = vld [vmem:[%s5144] sm:$0xff]
      %v5146 = vld [vmem:[%s5144 + $0x8] sm:$0xff]
      %s5147 = scalar_lea.vmem %s1, 288
      %v5148 = vld [vmem:[%s5147] sm:$0xff]
      %v5149 = vld [vmem:[%s5147 + $0x8] sm:$0xff]
      %v5150 = vld [vmem:[%s5147 + $0x10] sm:$0xff]
      %v5151 = vld [vmem:[%s5147 + $0x18] sm:$0xff]
      %v5152 = vld [vmem:[%s5147 + $0x20] sm:$0xff]
      %v5153 = vld [vmem:[%s5147 + $0x28] sm:$0xff]
      %v5154 = vld [vmem:[%s5147 + $0x30] sm:$0xff]
      %v5155 = vld [vmem:[%s5147 + $0x38] sm:$0xff]
      %v5156 = vld [vmem:[%s5147 + $0x40] sm:$0xff]
      %v5157 = vld [vmem:[%s5147 + $0x48] sm:$0xff]
      %v5158 = vld [vmem:[%s5147 + $0x50] sm:$0xff]
      %v5159 = vld [vmem:[%s5147 + $0x58] sm:$0xff]
      %v5161 = vsel %vm237, %v5145, 0
      %v5164 = vsel %vm237, %v5146, 0
      %5166 = vmatprep.subr.mxu0 0.0
      %5167 = vmatpush1.msra.mxu0 0.0
      %5168 = vmatprep.subr.mxu0 0.0
      %5169 = vmatpush1.msra.mxu0 0.0
      %5170 = vmatprep.subr.mxu0 0.0
      %5171 = vmatpush1.msra.mxu0 0.0
      %5172 = vmatprep.subr.mxu0 0.0
      %5173 = vmatpush1.msra.mxu0 0.0
      %5174 = vmatprep.subr.mxu0 0.0
      %5175 = vmatpush1.msra.mxu0 0.0
      %5176 = vmatprep.subr.mxu0 0.0
      %5177 = vmatpush1.msra.mxu0 0.0
      %5178 = vmatprep.subr.mxu0 0.0
      %5179 = vmatpush1.msra.mxu0 0.0
      %5180 = vmatprep.subr.mxu0 0.0
      %5181 = vmatpush1.msra.mxu0 0.0
      %5182 = vmatprep.subr.mxu0 0.0
      %5183 = vmatpush1.msra.mxu0 0.0
      %5184 = vmatprep.subr.mxu0 0.0
      %5185 = vmatpush1.msra.mxu0 0.0
      %5186 = vmatprep.subr.mxu0 0.0
      %5187 = vmatpush1.msra.mxu0 0.0
      %5188 = vmatprep.subr.mxu0 0.0
      %5189 = vmatpush1.msra.mxu0 0.0
      %5190 = vmatprep.subr.mxu0 0.0
      %5191 = vmatpush1.msra.mxu0 0.0
      %5192 = vmatprep.subr.mxu0 0.0
      %5193 = vmatpush1.msra.mxu0 0.0
      %v5194 = vand.u32 %v5155, 4294901760
      %5195 = vmatprep.subr.mxu0 %v5194
      %v5196 = vand.u32 %v5154, 4294901760
      %5197 = vmatpush1.msra.mxu0 %v5196
      %v5198 = vand.u32 %v5149, 4294901760
      %5199 = vmatprep.subr.mxu0 %v5198
      %v5200 = vand.u32 %v5148, 4294901760
      %5201 = vmatpush1.msra.mxu0 %v5200
      %5202 = vmatprep.subr.mxu0 0.0
      %5203 = vmatpush2.msra.mxu0 0.0
      %5204 = vmatprep.subr.mxu0 0.0
      %5205 = vmatpush2.msra.mxu0 0.0
      %5206 = vmatprep.subr.mxu0 0.0
      %5207 = vmatpush2.msra.mxu0 0.0
      %5208 = vmatprep.subr.mxu0 0.0
      %5209 = vmatpush2.msra.mxu0 0.0
      %5210 = vmatprep.subr.mxu0 0.0
      %5211 = vmatpush2.msra.mxu0 0.0
      %5212 = vmatprep.subr.mxu0 0.0
      %5213 = vmatpush2.msra.mxu0 0.0
      %5214 = vmatprep.subr.mxu0 0.0
      %5215 = vmatpush2.msra.mxu0 0.0
      %5216 = vmatprep.subr.mxu0 0.0
      %5217 = vmatpush2.msra.mxu0 0.0
      %5218 = vmatprep.subr.mxu0 0.0
      %5219 = vmatpush2.msra.mxu0 0.0
      %5220 = vmatprep.subr.mxu0 0.0
      %5221 = vmatpush2.msra.mxu0 0.0
      %5222 = vmatprep.subr.mxu0 0.0
      %5223 = vmatpush2.msra.mxu0 0.0
      %5224 = vmatprep.subr.mxu0 0.0
      %5225 = vmatpush2.msra.mxu0 0.0
      %5226 = vmatprep.subr.mxu0 0.0
      %5227 = vmatpush2.msra.mxu0 0.0
      %5228 = vmatprep.subr.mxu0 0.0
      %5229 = vmatpush2.msra.mxu0 0.0
      %5230 = vmatprep.subr.mxu0 0.0
      %5231 = vmatpush2.msra.mxu0 0.0
      %5232 = vmatprep.subr.mxu0 0.0
      %5233 = vmatpush2.msra.mxu0 0.0
      %5234 = vmatprep.mubr.f32.mxu0 0.0
      %v5235 = vand.u32 %v5161, 4294901760
      %v5236 = vsub.f32 %v5161, %v5235
      %v5237 = vand.u32 %v5236, 4294901760
      %v5238 = vsub.f32 %v5236, %v5237
      %v5239 = vand.u32 %v5238, 4294901760
      %5240 = vmatmul.mubr.f32.gmra.mxu0 %v5239
      %v5241 = vpop.f32.mrf.mxu0
      %v5242 = vadd.f32 0.0, %v5241
      %v5243 = vpop.f32.mrf.mxu0
      %v5244 = vadd.f32 0.0, %v5243
      %5245 = vmatprep.mubr.f32.mxu0 0.0
      %v5246 = vand.u32 %v5164, 4294901760
      %v5247 = vsub.f32 %v5164, %v5246
      %v5248 = vand.u32 %v5247, 4294901760
      %v5249 = vsub.f32 %v5247, %v5248
      %v5250 = vand.u32 %v5249, 4294901760
      %5251 = vmatmul.mubr.f32.gmra.mxu0 %v5250
      %v5252 = vpop.f32.mrf.mxu0
      %v5253 = vadd.f32 0.0, %v5252
      %v5254 = vpop.f32.mrf.mxu0
      %v5255 = vadd.f32 0.0, %v5254
      %5256 = vdwg.mxu0
      %5257 = vmatprep.subr.mxu0 0.0
      %5258 = vmatpush1.msra.mxu0 0.0
      %5259 = vmatprep.subr.mxu0 0.0
      %5260 = vmatpush1.msra.mxu0 0.0
      %5261 = vmatprep.subr.mxu0 0.0
      %5262 = vmatpush1.msra.mxu0 0.0
      %5263 = vmatprep.subr.mxu0 0.0
      %5264 = vmatpush1.msra.mxu0 0.0
      %5265 = vmatprep.subr.mxu0 0.0
      %5266 = vmatpush1.msra.mxu0 0.0
      %5267 = vmatprep.subr.mxu0 0.0
      %5268 = vmatpush1.msra.mxu0 0.0
      %5269 = vmatprep.subr.mxu0 0.0
      %5270 = vmatpush1.msra.mxu0 0.0
      %5271 = vmatprep.subr.mxu0 0.0
      %5272 = vmatpush1.msra.mxu0 0.0
      %5273 = vmatprep.subr.mxu0 0.0
      %5274 = vmatpush1.msra.mxu0 0.0
      %5275 = vmatprep.subr.mxu0 0.0
      %5276 = vmatpush1.msra.mxu0 0.0
      %5277 = vmatprep.subr.mxu0 0.0
      %5278 = vmatpush1.msra.mxu0 0.0
      %5279 = vmatprep.subr.mxu0 0.0
      %5280 = vmatpush1.msra.mxu0 0.0
      %5281 = vmatprep.subr.mxu0 0.0
      %5282 = vmatpush1.msra.mxu0 0.0
      %5283 = vmatprep.subr.mxu0 0.0
      %5284 = vmatpush1.msra.mxu0 0.0
      %v5285 = vand.u32 %v5155, 4294901760
      %v5286 = vsub.f32 %v5155, %v5285
      %v5287 = vand.u32 %v5286, 4294901760
      %v5288 = vsub.f32 %v5286, %v5287
      %v5289 = vand.u32 %v5288, 4294901760
      %5290 = vmatprep.subr.mxu0 %v5289
      %v5291 = vand.u32 %v5154, 4294901760
      %v5292 = vsub.f32 %v5154, %v5291
      %v5293 = vand.u32 %v5292, 4294901760
      %v5294 = vsub.f32 %v5292, %v5293
      %v5295 = vand.u32 %v5294, 4294901760
      %5296 = vmatpush1.msra.mxu0 %v5295
      %v5297 = vand.u32 %v5149, 4294901760
      %v5298 = vsub.f32 %v5149, %v5297
      %v5299 = vand.u32 %v5298, 4294901760
      %v5300 = vsub.f32 %v5298, %v5299
      %v5301 = vand.u32 %v5300, 4294901760
      %5302 = vmatprep.subr.mxu0 %v5301
      %v5303 = vand.u32 %v5148, 4294901760
      %v5304 = vsub.f32 %v5148, %v5303
      %v5305 = vand.u32 %v5304, 4294901760
      %v5306 = vsub.f32 %v5304, %v5305
      %v5307 = vand.u32 %v5306, 4294901760
      %5308 = vmatpush1.msra.mxu0 %v5307
      %5309 = vmatprep.subr.mxu0 0.0
      %5310 = vmatpush2.msra.mxu0 0.0
      %5311 = vmatprep.subr.mxu0 0.0
      %5312 = vmatpush2.msra.mxu0 0.0
      %5313 = vmatprep.subr.mxu0 0.0
      %5314 = vmatpush2.msra.mxu0 0.0
      %5315 = vmatprep.subr.mxu0 0.0
      %5316 = vmatpush2.msra.mxu0 0.0
      %5317 = vmatprep.subr.mxu0 0.0
      %5318 = vmatpush2.msra.mxu0 0.0
      %5319 = vmatprep.subr.mxu0 0.0
      %5320 = vmatpush2.msra.mxu0 0.0
      %5321 = vmatprep.subr.mxu0 0.0
      %5322 = vmatpush2.msra.mxu0 0.0
      %5323 = vmatprep.subr.mxu0 0.0
      %5324 = vmatpush2.msra.mxu0 0.0
      %5325 = vmatprep.subr.mxu0 0.0
      %5326 = vmatpush2.msra.mxu0 0.0
      %5327 = vmatprep.subr.mxu0 0.0
      %5328 = vmatpush2.msra.mxu0 0.0
      %5329 = vmatprep.subr.mxu0 0.0
      %5330 = vmatpush2.msra.mxu0 0.0
      %5331 = vmatprep.subr.mxu0 0.0
      %5332 = vmatpush2.msra.mxu0 0.0
      %5333 = vmatprep.subr.mxu0 0.0
      %5334 = vmatpush2.msra.mxu0 0.0
      %5335 = vmatprep.subr.mxu0 0.0
      %5336 = vmatpush2.msra.mxu0 0.0
      %5337 = vmatprep.subr.mxu0 0.0
      %5338 = vmatpush2.msra.mxu0 0.0
      %5339 = vmatprep.subr.mxu0 0.0
      %5340 = vmatpush2.msra.mxu0 0.0
      %5341 = vmatprep.mubr.f32.mxu0 0.0
      %v5342 = vand.u32 %v5161, 4294901760
      %5343 = vmatmul.mubr.f32.gmra.mxu0 %v5342
      %v5344 = vpop.f32.mrf.mxu0
      %v5345 = vadd.f32 %v5242, %v5344
      %v5346 = vpop.f32.mrf.mxu0
      %v5347 = vadd.f32 %v5244, %v5346
      %5348 = vmatprep.mubr.f32.mxu0 0.0
      %v5349 = vand.u32 %v5164, 4294901760
      %5350 = vmatmul.mubr.f32.gmra.mxu0 %v5349
      %v5351 = vpop.f32.mrf.mxu0
      %v5352 = vadd.f32 %v5253, %v5351
      %v5353 = vpop.f32.mrf.mxu0
      %v5354 = vadd.f32 %v5255, %v5353
      %5355 = vdwg.mxu0
      %5356 = vmatprep.subr.mxu0 0.0
      %5357 = vmatpush1.msra.mxu0 0.0
      %5358 = vmatprep.subr.mxu0 0.0
      %5359 = vmatpush1.msra.mxu0 0.0
      %5360 = vmatprep.subr.mxu0 0.0
      %5361 = vmatpush1.msra.mxu0 0.0
      %5362 = vmatprep.subr.mxu0 0.0
      %5363 = vmatpush1.msra.mxu0 0.0
      %5364 = vmatprep.subr.mxu0 0.0
      %5365 = vmatpush1.msra.mxu0 0.0
      %5366 = vmatprep.subr.mxu0 0.0
      %5367 = vmatpush1.msra.mxu0 0.0
      %5368 = vmatprep.subr.mxu0 0.0
      %5369 = vmatpush1.msra.mxu0 0.0
      %5370 = vmatprep.subr.mxu0 0.0
      %5371 = vmatpush1.msra.mxu0 0.0
      %5372 = vmatprep.subr.mxu0 0.0
      %5373 = vmatpush1.msra.mxu0 0.0
      %5374 = vmatprep.subr.mxu0 0.0
      %5375 = vmatpush1.msra.mxu0 0.0
      %5376 = vmatprep.subr.mxu0 0.0
      %5377 = vmatpush1.msra.mxu0 0.0
      %5378 = vmatprep.subr.mxu0 0.0
      %5379 = vmatpush1.msra.mxu0 0.0
      %5380 = vmatprep.subr.mxu0 0.0
      %5381 = vmatpush1.msra.mxu0 0.0
      %5382 = vmatprep.subr.mxu0 0.0
      %5383 = vmatpush1.msra.mxu0 0.0
      %v5384 = vand.u32 %v5155, 4294901760
      %v5385 = vsub.f32 %v5155, %v5384
      %5386 = vmatprep.subr.mxu0 %v5385
      %v5387 = vand.u32 %v5154, 4294901760
      %v5388 = vsub.f32 %v5154, %v5387
      %5389 = vmatpush1.msra.mxu0 %v5388
      %v5390 = vand.u32 %v5149, 4294901760
      %v5391 = vsub.f32 %v5149, %v5390
      %5392 = vmatprep.subr.mxu0 %v5391
      %v5393 = vand.u32 %v5148, 4294901760
      %v5394 = vsub.f32 %v5148, %v5393
      %5395 = vmatpush1.msra.mxu0 %v5394
      %5396 = vmatprep.subr.mxu0 0.0
      %5397 = vmatpush2.msra.mxu0 0.0
      %5398 = vmatprep.subr.mxu0 0.0
      %5399 = vmatpush2.msra.mxu0 0.0
      %5400 = vmatprep.subr.mxu0 0.0
      %5401 = vmatpush2.msra.mxu0 0.0
      %5402 = vmatprep.subr.mxu0 0.0
      %5403 = vmatpush2.msra.mxu0 0.0
      %5404 = vmatprep.subr.mxu0 0.0
      %5405 = vmatpush2.msra.mxu0 0.0
      %5406 = vmatprep.subr.mxu0 0.0
      %5407 = vmatpush2.msra.mxu0 0.0
      %5408 = vmatprep.subr.mxu0 0.0
      %5409 = vmatpush2.msra.mxu0 0.0
      %5410 = vmatprep.subr.mxu0 0.0
      %5411 = vmatpush2.msra.mxu0 0.0
      %5412 = vmatprep.subr.mxu0 0.0
      %5413 = vmatpush2.msra.mxu0 0.0
      %5414 = vmatprep.subr.mxu0 0.0
      %5415 = vmatpush2.msra.mxu0 0.0
      %5416 = vmatprep.subr.mxu0 0.0
      %5417 = vmatpush2.msra.mxu0 0.0
      %5418 = vmatprep.subr.mxu0 0.0
      %5419 = vmatpush2.msra.mxu0 0.0
      %5420 = vmatprep.subr.mxu0 0.0
      %5421 = vmatpush2.msra.mxu0 0.0
      %5422 = vmatprep.subr.mxu0 0.0
      %5423 = vmatpush2.msra.mxu0 0.0
      %5424 = vmatprep.subr.mxu0 0.0
      %5425 = vmatpush2.msra.mxu0 0.0
      %5426 = vmatprep.subr.mxu0 0.0
      %5427 = vmatpush2.msra.mxu0 0.0
      %5428 = vmatprep.mubr.f32.mxu0 0.0
      %v5429 = vand.u32 %v5161, 4294901760
      %v5430 = vsub.f32 %v5161, %v5429
      %5431 = vmatmul.mubr.f32.gmra.mxu0 %v5430
      %v5432 = vpop.f32.mrf.mxu0
      %v5433 = vadd.f32 %v5345, %v5432
      %v5434 = vpop.f32.mrf.mxu0
      %v5435 = vadd.f32 %v5347, %v5434
      %5436 = vmatprep.mubr.f32.mxu0 0.0
      %v5437 = vand.u32 %v5164, 4294901760
      %v5438 = vsub.f32 %v5164, %v5437
      %5439 = vmatmul.mubr.f32.gmra.mxu0 %v5438
      %v5440 = vpop.f32.mrf.mxu0
      %v5441 = vadd.f32 %v5352, %v5440
      %v5442 = vpop.f32.mrf.mxu0
      %v5443 = vadd.f32 %v5354, %v5442
      %5444 = vdwg.mxu0
      %5445 = vmatprep.subr.mxu0 0.0
      %5446 = vmatpush1.msra.mxu0 0.0
      %5447 = vmatprep.subr.mxu0 0.0
      %5448 = vmatpush1.msra.mxu0 0.0
      %5449 = vmatprep.subr.mxu0 0.0
      %5450 = vmatpush1.msra.mxu0 0.0
      %5451 = vmatprep.subr.mxu0 0.0
      %5452 = vmatpush1.msra.mxu0 0.0
      %5453 = vmatprep.subr.mxu0 0.0
      %5454 = vmatpush1.msra.mxu0 0.0
      %5455 = vmatprep.subr.mxu0 0.0
      %5456 = vmatpush1.msra.mxu0 0.0
      %5457 = vmatprep.subr.mxu0 0.0
      %5458 = vmatpush1.msra.mxu0 0.0
      %5459 = vmatprep.subr.mxu0 0.0
      %5460 = vmatpush1.msra.mxu0 0.0
      %5461 = vmatprep.subr.mxu0 0.0
      %5462 = vmatpush1.msra.mxu0 0.0
      %5463 = vmatprep.subr.mxu0 0.0
      %5464 = vmatpush1.msra.mxu0 0.0
      %5465 = vmatprep.subr.mxu0 0.0
      %5466 = vmatpush1.msra.mxu0 0.0
      %5467 = vmatprep.subr.mxu0 0.0
      %5468 = vmatpush1.msra.mxu0 0.0
      %5469 = vmatprep.subr.mxu0 0.0
      %5470 = vmatpush1.msra.mxu0 0.0
      %5471 = vmatprep.subr.mxu0 0.0
      %5472 = vmatpush1.msra.mxu0 0.0
      %v5473 = vand.u32 %v5155, 4294901760
      %5474 = vmatprep.subr.mxu0 %v5473
      %v5475 = vand.u32 %v5154, 4294901760
      %5476 = vmatpush1.msra.mxu0 %v5475
      %v5477 = vand.u32 %v5149, 4294901760
      %5478 = vmatprep.subr.mxu0 %v5477
      %v5479 = vand.u32 %v5148, 4294901760
      %5480 = vmatpush1.msra.mxu0 %v5479
      %5481 = vmatprep.subr.mxu0 0.0
      %5482 = vmatpush2.msra.mxu0 0.0
      %5483 = vmatprep.subr.mxu0 0.0
      %5484 = vmatpush2.msra.mxu0 0.0
      %5485 = vmatprep.subr.mxu0 0.0
      %5486 = vmatpush2.msra.mxu0 0.0
      %5487 = vmatprep.subr.mxu0 0.0
      %5488 = vmatpush2.msra.mxu0 0.0
      %5489 = vmatprep.subr.mxu0 0.0
      %5490 = vmatpush2.msra.mxu0 0.0
      %5491 = vmatprep.subr.mxu0 0.0
      %5492 = vmatpush2.msra.mxu0 0.0
      %5493 = vmatprep.subr.mxu0 0.0
      %5494 = vmatpush2.msra.mxu0 0.0
      %5495 = vmatprep.subr.mxu0 0.0
      %5496 = vmatpush2.msra.mxu0 0.0
      %5497 = vmatprep.subr.mxu0 0.0
      %5498 = vmatpush2.msra.mxu0 0.0
      %5499 = vmatprep.subr.mxu0 0.0
      %5500 = vmatpush2.msra.mxu0 0.0
      %5501 = vmatprep.subr.mxu0 0.0
      %5502 = vmatpush2.msra.mxu0 0.0
      %5503 = vmatprep.subr.mxu0 0.0
      %5504 = vmatpush2.msra.mxu0 0.0
      %5505 = vmatprep.subr.mxu0 0.0
      %5506 = vmatpush2.msra.mxu0 0.0
      %5507 = vmatprep.subr.mxu0 0.0
      %5508 = vmatpush2.msra.mxu0 0.0
      %5509 = vmatprep.subr.mxu0 0.0
      %5510 = vmatpush2.msra.mxu0 0.0
      %5511 = vmatprep.subr.mxu0 0.0
      %5512 = vmatpush2.msra.mxu0 0.0
      %5513 = vmatprep.mubr.f32.mxu0 0.0
      %v5514 = vand.u32 %v5161, 4294901760
      %v5515 = vsub.f32 %v5161, %v5514
      %v5516 = vand.u32 %v5515, 4294901760
      %5517 = vmatmul.mubr.f32.gmra.mxu0 %v5516
      %v5518 = vpop.f32.mrf.mxu0
      %v5519 = vadd.f32 %v5433, %v5518
      %v5520 = vpop.f32.mrf.mxu0
      %v5521 = vadd.f32 %v5435, %v5520
      %5522 = vmatprep.mubr.f32.mxu0 0.0
      %v5523 = vand.u32 %v5164, 4294901760
      %v5524 = vsub.f32 %v5164, %v5523
      %v5525 = vand.u32 %v5524, 4294901760
      %5526 = vmatmul.mubr.f32.gmra.mxu0 %v5525
      %v5527 = vpop.f32.mrf.mxu0
      %v5528 = vadd.f32 %v5441, %v5527
      %v5529 = vpop.f32.mrf.mxu0
      %v5530 = vadd.f32 %v5443, %v5529
      %5531 = vdwg.mxu0
      %5532 = vmatprep.subr.mxu0 0.0
      %5533 = vmatpush1.msra.mxu0 0.0
      %5534 = vmatprep.subr.mxu0 0.0
      %5535 = vmatpush1.msra.mxu0 0.0
      %5536 = vmatprep.subr.mxu0 0.0
      %5537 = vmatpush1.msra.mxu0 0.0
      %5538 = vmatprep.subr.mxu0 0.0
      %5539 = vmatpush1.msra.mxu0 0.0
      %5540 = vmatprep.subr.mxu0 0.0
      %5541 = vmatpush1.msra.mxu0 0.0
      %5542 = vmatprep.subr.mxu0 0.0
      %5543 = vmatpush1.msra.mxu0 0.0
      %5544 = vmatprep.subr.mxu0 0.0
      %5545 = vmatpush1.msra.mxu0 0.0
      %5546 = vmatprep.subr.mxu0 0.0
      %5547 = vmatpush1.msra.mxu0 0.0
      %5548 = vmatprep.subr.mxu0 0.0
      %5549 = vmatpush1.msra.mxu0 0.0
      %5550 = vmatprep.subr.mxu0 0.0
      %5551 = vmatpush1.msra.mxu0 0.0
      %5552 = vmatprep.subr.mxu0 0.0
      %5553 = vmatpush1.msra.mxu0 0.0
      %5554 = vmatprep.subr.mxu0 0.0
      %5555 = vmatpush1.msra.mxu0 0.0
      %5556 = vmatprep.subr.mxu0 0.0
      %5557 = vmatpush1.msra.mxu0 0.0
      %5558 = vmatprep.subr.mxu0 0.0
      %5559 = vmatpush1.msra.mxu0 0.0
      %v5560 = vand.u32 %v5155, 4294901760
      %v5561 = vsub.f32 %v5155, %v5560
      %v5562 = vand.u32 %v5561, 4294901760
      %5563 = vmatprep.subr.mxu0 %v5562
      %v5564 = vand.u32 %v5154, 4294901760
      %v5565 = vsub.f32 %v5154, %v5564
      %v5566 = vand.u32 %v5565, 4294901760
      %5567 = vmatpush1.msra.mxu0 %v5566
      %v5568 = vand.u32 %v5149, 4294901760
      %v5569 = vsub.f32 %v5149, %v5568
      %v5570 = vand.u32 %v5569, 4294901760
      %5571 = vmatprep.subr.mxu0 %v5570
      %v5572 = vand.u32 %v5148, 4294901760
      %v5573 = vsub.f32 %v5148, %v5572
      %v5574 = vand.u32 %v5573, 4294901760
      %5575 = vmatpush1.msra.mxu0 %v5574
      %5576 = vmatprep.subr.mxu0 0.0
      %5577 = vmatpush2.msra.mxu0 0.0
      %5578 = vmatprep.subr.mxu0 0.0
      %5579 = vmatpush2.msra.mxu0 0.0
      %5580 = vmatprep.subr.mxu0 0.0
      %5581 = vmatpush2.msra.mxu0 0.0
      %5582 = vmatprep.subr.mxu0 0.0
      %5583 = vmatpush2.msra.mxu0 0.0
      %5584 = vmatprep.subr.mxu0 0.0
      %5585 = vmatpush2.msra.mxu0 0.0
      %5586 = vmatprep.subr.mxu0 0.0
      %5587 = vmatpush2.msra.mxu0 0.0
      %5588 = vmatprep.subr.mxu0 0.0
      %5589 = vmatpush2.msra.mxu0 0.0
      %5590 = vmatprep.subr.mxu0 0.0
      %5591 = vmatpush2.msra.mxu0 0.0
      %5592 = vmatprep.subr.mxu0 0.0
      %5593 = vmatpush2.msra.mxu0 0.0
      %5594 = vmatprep.subr.mxu0 0.0
      %5595 = vmatpush2.msra.mxu0 0.0
      %5596 = vmatprep.subr.mxu0 0.0
      %5597 = vmatpush2.msra.mxu0 0.0
      %5598 = vmatprep.subr.mxu0 0.0
      %5599 = vmatpush2.msra.mxu0 0.0
      %5600 = vmatprep.subr.mxu0 0.0
      %5601 = vmatpush2.msra.mxu0 0.0
      %5602 = vmatprep.subr.mxu0 0.0
      %5603 = vmatpush2.msra.mxu0 0.0
      %5604 = vmatprep.subr.mxu0 0.0
      %5605 = vmatpush2.msra.mxu0 0.0
      %5606 = vmatprep.subr.mxu0 0.0
      %5607 = vmatpush2.msra.mxu0 0.0
      %5608 = vmatprep.mubr.f32.mxu0 0.0
      %v5609 = vand.u32 %v5161, 4294901760
      %5610 = vmatmul.mubr.f32.gmra.mxu0 %v5609
      %v5611 = vpop.f32.mrf.mxu0
      %v5612 = vadd.f32 %v5519, %v5611
      %v5613 = vpop.f32.mrf.mxu0
      %v5614 = vadd.f32 %v5521, %v5613
      %5615 = vmatprep.mubr.f32.mxu0 0.0
      %v5616 = vand.u32 %v5164, 4294901760
      %5617 = vmatmul.mubr.f32.gmra.mxu0 %v5616
      %v5618 = vpop.f32.mrf.mxu0
      %v5619 = vadd.f32 %v5528, %v5618
      %v5620 = vpop.f32.mrf.mxu0
      %v5621 = vadd.f32 %v5530, %v5620
      %5622 = vdwg.mxu0
      %5623 = vmatprep.subr.mxu0 0.0
      %5624 = vmatpush1.msra.mxu0 0.0
      %5625 = vmatprep.subr.mxu0 0.0
      %5626 = vmatpush1.msra.mxu0 0.0
      %5627 = vmatprep.subr.mxu0 0.0
      %5628 = vmatpush1.msra.mxu0 0.0
      %5629 = vmatprep.subr.mxu0 0.0
      %5630 = vmatpush1.msra.mxu0 0.0
      %5631 = vmatprep.subr.mxu0 0.0
      %5632 = vmatpush1.msra.mxu0 0.0
      %5633 = vmatprep.subr.mxu0 0.0
      %5634 = vmatpush1.msra.mxu0 0.0
      %5635 = vmatprep.subr.mxu0 0.0
      %5636 = vmatpush1.msra.mxu0 0.0
      %5637 = vmatprep.subr.mxu0 0.0
      %5638 = vmatpush1.msra.mxu0 0.0
      %5639 = vmatprep.subr.mxu0 0.0
      %5640 = vmatpush1.msra.mxu0 0.0
      %5641 = vmatprep.subr.mxu0 0.0
      %5642 = vmatpush1.msra.mxu0 0.0
      %5643 = vmatprep.subr.mxu0 0.0
      %5644 = vmatpush1.msra.mxu0 0.0
      %5645 = vmatprep.subr.mxu0 0.0
      %5646 = vmatpush1.msra.mxu0 0.0
      %5647 = vmatprep.subr.mxu0 0.0
      %5648 = vmatpush1.msra.mxu0 0.0
      %5649 = vmatprep.subr.mxu0 0.0
      %5650 = vmatpush1.msra.mxu0 0.0
      %v5651 = vand.u32 %v5155, 4294901760
      %5652 = vmatprep.subr.mxu0 %v5651
      %v5653 = vand.u32 %v5154, 4294901760
      %5654 = vmatpush1.msra.mxu0 %v5653
      %v5655 = vand.u32 %v5149, 4294901760
      %5656 = vmatprep.subr.mxu0 %v5655
      %v5657 = vand.u32 %v5148, 4294901760
      %5658 = vmatpush1.msra.mxu0 %v5657
      %5659 = vmatprep.subr.mxu0 0.0
      %5660 = vmatpush2.msra.mxu0 0.0
      %5661 = vmatprep.subr.mxu0 0.0
      %5662 = vmatpush2.msra.mxu0 0.0
      %5663 = vmatprep.subr.mxu0 0.0
      %5664 = vmatpush2.msra.mxu0 0.0
      %5665 = vmatprep.subr.mxu0 0.0
      %5666 = vmatpush2.msra.mxu0 0.0
      %5667 = vmatprep.subr.mxu0 0.0
      %5668 = vmatpush2.msra.mxu0 0.0
      %5669 = vmatprep.subr.mxu0 0.0
      %5670 = vmatpush2.msra.mxu0 0.0
      %5671 = vmatprep.subr.mxu0 0.0
      %5672 = vmatpush2.msra.mxu0 0.0
      %5673 = vmatprep.subr.mxu0 0.0
      %5674 = vmatpush2.msra.mxu0 0.0
      %5675 = vmatprep.subr.mxu0 0.0
      %5676 = vmatpush2.msra.mxu0 0.0
      %5677 = vmatprep.subr.mxu0 0.0
      %5678 = vmatpush2.msra.mxu0 0.0
      %5679 = vmatprep.subr.mxu0 0.0
      %5680 = vmatpush2.msra.mxu0 0.0
      %5681 = vmatprep.subr.mxu0 0.0
      %5682 = vmatpush2.msra.mxu0 0.0
      %5683 = vmatprep.subr.mxu0 0.0
      %5684 = vmatpush2.msra.mxu0 0.0
      %5685 = vmatprep.subr.mxu0 0.0
      %5686 = vmatpush2.msra.mxu0 0.0
      %5687 = vmatprep.subr.mxu0 0.0
      %5688 = vmatpush2.msra.mxu0 0.0
      %5689 = vmatprep.subr.mxu0 0.0
      %5690 = vmatpush2.msra.mxu0 0.0
      %5691 = vmatprep.mubr.f32.mxu0 0.0
      %v5692 = vand.u32 %v5161, 4294901760
      %5693 = vmatmul.mubr.f32.gmra.mxu0 %v5692
      %v5694 = vpop.f32.mrf.mxu0
      %v5695 = vadd.f32 %v5612, %v5694
      %v5696 = vpop.f32.mrf.mxu0
      %v5697 = vadd.f32 %v5614, %v5696
      %5698 = vmatprep.mubr.f32.mxu0 0.0
      %v5699 = vand.u32 %v5164, 4294901760
      %5700 = vmatmul.mubr.f32.gmra.mxu0 %v5699
      %v5701 = vpop.f32.mrf.mxu0
      %v5702 = vadd.f32 %v5619, %v5701
      %v5703 = vpop.f32.mrf.mxu0
      %v5704 = vadd.f32 %v5621, %v5703
      %5705 = vdwg.mxu0
      %5706 = vmatprep.subr.mxu0 0.0
      %5707 = vmatpush1.msra.mxu0 0.0
      %5708 = vmatprep.subr.mxu0 0.0
      %5709 = vmatpush1.msra.mxu0 0.0
      %5710 = vmatprep.subr.mxu0 0.0
      %5711 = vmatpush1.msra.mxu0 0.0
      %5712 = vmatprep.subr.mxu0 0.0
      %5713 = vmatpush1.msra.mxu0 0.0
      %5714 = vmatprep.subr.mxu0 0.0
      %5715 = vmatpush1.msra.mxu0 0.0
      %5716 = vmatprep.subr.mxu0 0.0
      %5717 = vmatpush1.msra.mxu0 0.0
      %5718 = vmatprep.subr.mxu0 0.0
      %5719 = vmatpush1.msra.mxu0 0.0
      %5720 = vmatprep.subr.mxu0 0.0
      %5721 = vmatpush1.msra.mxu0 0.0
      %5722 = vmatprep.subr.mxu0 0.0
      %5723 = vmatpush1.msra.mxu0 0.0
      %5724 = vmatprep.subr.mxu0 0.0
      %5725 = vmatpush1.msra.mxu0 0.0
      %5726 = vmatprep.subr.mxu0 0.0
      %5727 = vmatpush1.msra.mxu0 0.0
      %5728 = vmatprep.subr.mxu0 0.0
      %5729 = vmatpush1.msra.mxu0 0.0
      %5730 = vmatprep.subr.mxu0 0.0
      %5731 = vmatpush1.msra.mxu0 0.0
      %5732 = vmatprep.subr.mxu0 0.0
      %5733 = vmatpush1.msra.mxu0 0.0
      %v5734 = vand.u32 %v5157, 4294901760
      %5735 = vmatprep.subr.mxu0 %v5734
      %v5736 = vand.u32 %v5156, 4294901760
      %5737 = vmatpush1.msra.mxu0 %v5736
      %v5738 = vand.u32 %v5151, 4294901760
      %5739 = vmatprep.subr.mxu0 %v5738
      %v5740 = vand.u32 %v5150, 4294901760
      %5741 = vmatpush1.msra.mxu0 %v5740
      %5742 = vmatprep.subr.mxu0 0.0
      %5743 = vmatpush2.msra.mxu0 0.0
      %5744 = vmatprep.subr.mxu0 0.0
      %5745 = vmatpush2.msra.mxu0 0.0
      %5746 = vmatprep.subr.mxu0 0.0
      %5747 = vmatpush2.msra.mxu0 0.0
      %5748 = vmatprep.subr.mxu0 0.0
      %5749 = vmatpush2.msra.mxu0 0.0
      %5750 = vmatprep.subr.mxu0 0.0
      %5751 = vmatpush2.msra.mxu0 0.0
      %5752 = vmatprep.subr.mxu0 0.0
      %5753 = vmatpush2.msra.mxu0 0.0
      %5754 = vmatprep.subr.mxu0 0.0
      %5755 = vmatpush2.msra.mxu0 0.0
      %5756 = vmatprep.subr.mxu0 0.0
      %5757 = vmatpush2.msra.mxu0 0.0
      %5758 = vmatprep.subr.mxu0 0.0
      %5759 = vmatpush2.msra.mxu0 0.0
      %5760 = vmatprep.subr.mxu0 0.0
      %5761 = vmatpush2.msra.mxu0 0.0
      %5762 = vmatprep.subr.mxu0 0.0
      %5763 = vmatpush2.msra.mxu0 0.0
      %5764 = vmatprep.subr.mxu0 0.0
      %5765 = vmatpush2.msra.mxu0 0.0
      %5766 = vmatprep.subr.mxu0 0.0
      %5767 = vmatpush2.msra.mxu0 0.0
      %5768 = vmatprep.subr.mxu0 0.0
      %5769 = vmatpush2.msra.mxu0 0.0
      %5770 = vmatprep.subr.mxu0 0.0
      %5771 = vmatpush2.msra.mxu0 0.0
      %5772 = vmatprep.subr.mxu0 0.0
      %5773 = vmatpush2.msra.mxu0 0.0
      %5774 = vmatprep.mubr.f32.mxu0 0.0
      %v5775 = vand.u32 %v5161, 4294901760
      %v5776 = vsub.f32 %v5161, %v5775
      %v5777 = vand.u32 %v5776, 4294901760
      %v5778 = vsub.f32 %v5776, %v5777
      %v5779 = vand.u32 %v5778, 4294901760
      %5780 = vmatmul.mubr.f32.gmra.mxu0 %v5779
      %v5781 = vpop.f32.mrf.mxu0
      %v5782 = vadd.f32 0.0, %v5781
      %v5783 = vpop.f32.mrf.mxu0
      %v5784 = vadd.f32 0.0, %v5783
      %5785 = vmatprep.mubr.f32.mxu0 0.0
      %v5786 = vand.u32 %v5164, 4294901760
      %v5787 = vsub.f32 %v5164, %v5786
      %v5788 = vand.u32 %v5787, 4294901760
      %v5789 = vsub.f32 %v5787, %v5788
      %v5790 = vand.u32 %v5789, 4294901760
      %5791 = vmatmul.mubr.f32.gmra.mxu0 %v5790
      %v5792 = vpop.f32.mrf.mxu0
      %v5793 = vadd.f32 0.0, %v5792
      %v5794 = vpop.f32.mrf.mxu0
      %v5795 = vadd.f32 0.0, %v5794
      %5796 = vdwg.mxu0
      %5797 = vmatprep.subr.mxu0 0.0
      %5798 = vmatpush1.msra.mxu0 0.0
      %5799 = vmatprep.subr.mxu0 0.0
      %5800 = vmatpush1.msra.mxu0 0.0
      %5801 = vmatprep.subr.mxu0 0.0
      %5802 = vmatpush1.msra.mxu0 0.0
      %5803 = vmatprep.subr.mxu0 0.0
      %5804 = vmatpush1.msra.mxu0 0.0
      %5805 = vmatprep.subr.mxu0 0.0
      %5806 = vmatpush1.msra.mxu0 0.0
      %5807 = vmatprep.subr.mxu0 0.0
      %5808 = vmatpush1.msra.mxu0 0.0
      %5809 = vmatprep.subr.mxu0 0.0
      %5810 = vmatpush1.msra.mxu0 0.0
      %5811 = vmatprep.subr.mxu0 0.0
      %5812 = vmatpush1.msra.mxu0 0.0
      %5813 = vmatprep.subr.mxu0 0.0
      %5814 = vmatpush1.msra.mxu0 0.0
      %5815 = vmatprep.subr.mxu0 0.0
      %5816 = vmatpush1.msra.mxu0 0.0
      %5817 = vmatprep.subr.mxu0 0.0
      %5818 = vmatpush1.msra.mxu0 0.0
      %5819 = vmatprep.subr.mxu0 0.0
      %5820 = vmatpush1.msra.mxu0 0.0
      %5821 = vmatprep.subr.mxu0 0.0
      %5822 = vmatpush1.msra.mxu0 0.0
      %5823 = vmatprep.subr.mxu0 0.0
      %5824 = vmatpush1.msra.mxu0 0.0
      %v5825 = vand.u32 %v5157, 4294901760
      %v5826 = vsub.f32 %v5157, %v5825
      %v5827 = vand.u32 %v5826, 4294901760
      %v5828 = vsub.f32 %v5826, %v5827
      %v5829 = vand.u32 %v5828, 4294901760
      %5830 = vmatprep.subr.mxu0 %v5829
      %v5831 = vand.u32 %v5156, 4294901760
      %v5832 = vsub.f32 %v5156, %v5831
      %v5833 = vand.u32 %v5832, 4294901760
      %v5834 = vsub.f32 %v5832, %v5833
      %v5835 = vand.u32 %v5834, 4294901760
      %5836 = vmatpush1.msra.mxu0 %v5835
      %v5837 = vand.u32 %v5151, 4294901760
      %v5838 = vsub.f32 %v5151, %v5837
      %v5839 = vand.u32 %v5838, 4294901760
      %v5840 = vsub.f32 %v5838, %v5839
      %v5841 = vand.u32 %v5840, 4294901760
      %5842 = vmatprep.subr.mxu0 %v5841
      %v5843 = vand.u32 %v5150, 4294901760
      %v5844 = vsub.f32 %v5150, %v5843
      %v5845 = vand.u32 %v5844, 4294901760
      %v5846 = vsub.f32 %v5844, %v5845
      %v5847 = vand.u32 %v5846, 4294901760
      %5848 = vmatpush1.msra.mxu0 %v5847
      %5849 = vmatprep.subr.mxu0 0.0
      %5850 = vmatpush2.msra.mxu0 0.0
      %5851 = vmatprep.subr.mxu0 0.0
      %5852 = vmatpush2.msra.mxu0 0.0
      %5853 = vmatprep.subr.mxu0 0.0
      %5854 = vmatpush2.msra.mxu0 0.0
      %5855 = vmatprep.subr.mxu0 0.0
      %5856 = vmatpush2.msra.mxu0 0.0
      %5857 = vmatprep.subr.mxu0 0.0
      %5858 = vmatpush2.msra.mxu0 0.0
      %5859 = vmatprep.subr.mxu0 0.0
      %5860 = vmatpush2.msra.mxu0 0.0
      %5861 = vmatprep.subr.mxu0 0.0
      %5862 = vmatpush2.msra.mxu0 0.0
      %5863 = vmatprep.subr.mxu0 0.0
      %5864 = vmatpush2.msra.mxu0 0.0
      %5865 = vmatprep.subr.mxu0 0.0
      %5866 = vmatpush2.msra.mxu0 0.0
      %5867 = vmatprep.subr.mxu0 0.0
      %5868 = vmatpush2.msra.mxu0 0.0
      %5869 = vmatprep.subr.mxu0 0.0
      %5870 = vmatpush2.msra.mxu0 0.0
      %5871 = vmatprep.subr.mxu0 0.0
      %5872 = vmatpush2.msra.mxu0 0.0
      %5873 = vmatprep.subr.mxu0 0.0
      %5874 = vmatpush2.msra.mxu0 0.0
      %5875 = vmatprep.subr.mxu0 0.0
      %5876 = vmatpush2.msra.mxu0 0.0
      %5877 = vmatprep.subr.mxu0 0.0
      %5878 = vmatpush2.msra.mxu0 0.0
      %5879 = vmatprep.subr.mxu0 0.0
      %5880 = vmatpush2.msra.mxu0 0.0
      %5881 = vmatprep.mubr.f32.mxu0 0.0
      %v5882 = vand.u32 %v5161, 4294901760
      %5883 = vmatmul.mubr.f32.gmra.mxu0 %v5882
      %v5884 = vpop.f32.mrf.mxu0
      %v5885 = vadd.f32 %v5782, %v5884
      %v5886 = vpop.f32.mrf.mxu0
      %v5887 = vadd.f32 %v5784, %v5886
      %5888 = vmatprep.mubr.f32.mxu0 0.0
      %v5889 = vand.u32 %v5164, 4294901760
      %5890 = vmatmul.mubr.f32.gmra.mxu0 %v5889
      %v5891 = vpop.f32.mrf.mxu0
      %v5892 = vadd.f32 %v5793, %v5891
      %v5893 = vpop.f32.mrf.mxu0
      %v5894 = vadd.f32 %v5795, %v5893
      %5895 = vdwg.mxu0
      %5896 = vmatprep.subr.mxu0 0.0
      %5897 = vmatpush1.msra.mxu0 0.0
      %5898 = vmatprep.subr.mxu0 0.0
      %5899 = vmatpush1.msra.mxu0 0.0
      %5900 = vmatprep.subr.mxu0 0.0
      %5901 = vmatpush1.msra.mxu0 0.0
      %5902 = vmatprep.subr.mxu0 0.0
      %5903 = vmatpush1.msra.mxu0 0.0
      %5904 = vmatprep.subr.mxu0 0.0
      %5905 = vmatpush1.msra.mxu0 0.0
      %5906 = vmatprep.subr.mxu0 0.0
      %5907 = vmatpush1.msra.mxu0 0.0
      %5908 = vmatprep.subr.mxu0 0.0
      %5909 = vmatpush1.msra.mxu0 0.0
      %5910 = vmatprep.subr.mxu0 0.0
      %5911 = vmatpush1.msra.mxu0 0.0
      %5912 = vmatprep.subr.mxu0 0.0
      %5913 = vmatpush1.msra.mxu0 0.0
      %5914 = vmatprep.subr.mxu0 0.0
      %5915 = vmatpush1.msra.mxu0 0.0
      %5916 = vmatprep.subr.mxu0 0.0
      %5917 = vmatpush1.msra.mxu0 0.0
      %5918 = vmatprep.subr.mxu0 0.0
      %5919 = vmatpush1.msra.mxu0 0.0
      %5920 = vmatprep.subr.mxu0 0.0
      %5921 = vmatpush1.msra.mxu0 0.0
      %5922 = vmatprep.subr.mxu0 0.0
      %5923 = vmatpush1.msra.mxu0 0.0
      %v5924 = vand.u32 %v5157, 4294901760
      %v5925 = vsub.f32 %v5157, %v5924
      %5926 = vmatprep.subr.mxu0 %v5925
      %v5927 = vand.u32 %v5156, 4294901760
      %v5928 = vsub.f32 %v5156, %v5927
      %5929 = vmatpush1.msra.mxu0 %v5928
      %v5930 = vand.u32 %v5151, 4294901760
      %v5931 = vsub.f32 %v5151, %v5930
      %5932 = vmatprep.subr.mxu0 %v5931
      %v5933 = vand.u32 %v5150, 4294901760
      %v5934 = vsub.f32 %v5150, %v5933
      %5935 = vmatpush1.msra.mxu0 %v5934
      %5936 = vmatprep.subr.mxu0 0.0
      %5937 = vmatpush2.msra.mxu0 0.0
      %5938 = vmatprep.subr.mxu0 0.0
      %5939 = vmatpush2.msra.mxu0 0.0
      %5940 = vmatprep.subr.mxu0 0.0
      %5941 = vmatpush2.msra.mxu0 0.0
      %5942 = vmatprep.subr.mxu0 0.0
      %5943 = vmatpush2.msra.mxu0 0.0
      %5944 = vmatprep.subr.mxu0 0.0
      %5945 = vmatpush2.msra.mxu0 0.0
      %5946 = vmatprep.subr.mxu0 0.0
      %5947 = vmatpush2.msra.mxu0 0.0
      %5948 = vmatprep.subr.mxu0 0.0
      %5949 = vmatpush2.msra.mxu0 0.0
      %5950 = vmatprep.subr.mxu0 0.0
      %5951 = vmatpush2.msra.mxu0 0.0
      %5952 = vmatprep.subr.mxu0 0.0
      %5953 = vmatpush2.msra.mxu0 0.0
      %5954 = vmatprep.subr.mxu0 0.0
      %5955 = vmatpush2.msra.mxu0 0.0
      %5956 = vmatprep.subr.mxu0 0.0
      %5957 = vmatpush2.msra.mxu0 0.0
      %5958 = vmatprep.subr.mxu0 0.0
      %5959 = vmatpush2.msra.mxu0 0.0
      %5960 = vmatprep.subr.mxu0 0.0
      %5961 = vmatpush2.msra.mxu0 0.0
      %5962 = vmatprep.subr.mxu0 0.0
      %5963 = vmatpush2.msra.mxu0 0.0
      %5964 = vmatprep.subr.mxu0 0.0
      %5965 = vmatpush2.msra.mxu0 0.0
      %5966 = vmatprep.subr.mxu0 0.0
      %5967 = vmatpush2.msra.mxu0 0.0
      %5968 = vmatprep.mubr.f32.mxu0 0.0
      %v5969 = vand.u32 %v5161, 4294901760
      %v5970 = vsub.f32 %v5161, %v5969
      %5971 = vmatmul.mubr.f32.gmra.mxu0 %v5970
      %v5972 = vpop.f32.mrf.mxu0
      %v5973 = vadd.f32 %v5885, %v5972
      %v5974 = vpop.f32.mrf.mxu0
      %v5975 = vadd.f32 %v5887, %v5974
      %5976 = vmatprep.mubr.f32.mxu0 0.0
      %v5977 = vand.u32 %v5164, 4294901760
      %v5978 = vsub.f32 %v5164, %v5977
      %5979 = vmatmul.mubr.f32.gmra.mxu0 %v5978
      %v5980 = vpop.f32.mrf.mxu0
      %v5981 = vadd.f32 %v5892, %v5980
      %v5982 = vpop.f32.mrf.mxu0
      %v5983 = vadd.f32 %v5894, %v5982
      %5984 = vdwg.mxu0
      %5985 = vmatprep.subr.mxu0 0.0
      %5986 = vmatpush1.msra.mxu0 0.0
      %5987 = vmatprep.subr.mxu0 0.0
      %5988 = vmatpush1.msra.mxu0 0.0
      %5989 = vmatprep.subr.mxu0 0.0
      %5990 = vmatpush1.msra.mxu0 0.0
      %5991 = vmatprep.subr.mxu0 0.0
      %5992 = vmatpush1.msra.mxu0 0.0
      %5993 = vmatprep.subr.mxu0 0.0
      %5994 = vmatpush1.msra.mxu0 0.0
      %5995 = vmatprep.subr.mxu0 0.0
      %5996 = vmatpush1.msra.mxu0 0.0
      %5997 = vmatprep.subr.mxu0 0.0
      %5998 = vmatpush1.msra.mxu0 0.0
      %5999 = vmatprep.subr.mxu0 0.0
      %6000 = vmatpush1.msra.mxu0 0.0
      %6001 = vmatprep.subr.mxu0 0.0
      %6002 = vmatpush1.msra.mxu0 0.0
      %6003 = vmatprep.subr.mxu0 0.0
      %6004 = vmatpush1.msra.mxu0 0.0
      %6005 = vmatprep.subr.mxu0 0.0
      %6006 = vmatpush1.msra.mxu0 0.0
      %6007 = vmatprep.subr.mxu0 0.0
      %6008 = vmatpush1.msra.mxu0 0.0
      %6009 = vmatprep.subr.mxu0 0.0
      %6010 = vmatpush1.msra.mxu0 0.0
      %6011 = vmatprep.subr.mxu0 0.0
      %6012 = vmatpush1.msra.mxu0 0.0
      %v6013 = vand.u32 %v5157, 4294901760
      %6014 = vmatprep.subr.mxu0 %v6013
      %v6015 = vand.u32 %v5156, 4294901760
      %6016 = vmatpush1.msra.mxu0 %v6015
      %v6017 = vand.u32 %v5151, 4294901760
      %6018 = vmatprep.subr.mxu0 %v6017
      %v6019 = vand.u32 %v5150, 4294901760
      %6020 = vmatpush1.msra.mxu0 %v6019
      %6021 = vmatprep.subr.mxu0 0.0
      %6022 = vmatpush2.msra.mxu0 0.0
      %6023 = vmatprep.subr.mxu0 0.0
      %6024 = vmatpush2.msra.mxu0 0.0
      %6025 = vmatprep.subr.mxu0 0.0
      %6026 = vmatpush2.msra.mxu0 0.0
      %6027 = vmatprep.subr.mxu0 0.0
      %6028 = vmatpush2.msra.mxu0 0.0
      %6029 = vmatprep.subr.mxu0 0.0
      %6030 = vmatpush2.msra.mxu0 0.0
      %6031 = vmatprep.subr.mxu0 0.0
      %6032 = vmatpush2.msra.mxu0 0.0
      %6033 = vmatprep.subr.mxu0 0.0
      %6034 = vmatpush2.msra.mxu0 0.0
      %6035 = vmatprep.subr.mxu0 0.0
      %6036 = vmatpush2.msra.mxu0 0.0
      %6037 = vmatprep.subr.mxu0 0.0
      %6038 = vmatpush2.msra.mxu0 0.0
      %6039 = vmatprep.subr.mxu0 0.0
      %6040 = vmatpush2.msra.mxu0 0.0
      %6041 = vmatprep.subr.mxu0 0.0
      %6042 = vmatpush2.msra.mxu0 0.0
      %6043 = vmatprep.subr.mxu0 0.0
      %6044 = vmatpush2.msra.mxu0 0.0
      %6045 = vmatprep.subr.mxu0 0.0
      %6046 = vmatpush2.msra.mxu0 0.0
      %6047 = vmatprep.subr.mxu0 0.0
      %6048 = vmatpush2.msra.mxu0 0.0
      %6049 = vmatprep.subr.mxu0 0.0
      %6050 = vmatpush2.msra.mxu0 0.0
      %6051 = vmatprep.subr.mxu0 0.0
      %6052 = vmatpush2.msra.mxu0 0.0
      %6053 = vmatprep.mubr.f32.mxu0 0.0
      %v6054 = vand.u32 %v5161, 4294901760
      %v6055 = vsub.f32 %v5161, %v6054
      %v6056 = vand.u32 %v6055, 4294901760
      %6057 = vmatmul.mubr.f32.gmra.mxu0 %v6056
      %v6058 = vpop.f32.mrf.mxu0
      %v6059 = vadd.f32 %v5973, %v6058
      %v6060 = vpop.f32.mrf.mxu0
      %v6061 = vadd.f32 %v5975, %v6060
      %6062 = vmatprep.mubr.f32.mxu0 0.0
      %v6063 = vand.u32 %v5164, 4294901760
      %v6064 = vsub.f32 %v5164, %v6063
      %v6065 = vand.u32 %v6064, 4294901760
      %6066 = vmatmul.mubr.f32.gmra.mxu0 %v6065
      %v6067 = vpop.f32.mrf.mxu0
      %v6068 = vadd.f32 %v5981, %v6067
      %v6069 = vpop.f32.mrf.mxu0
      %v6070 = vadd.f32 %v5983, %v6069
      %6071 = vdwg.mxu0
      %6072 = vmatprep.subr.mxu0 0.0
      %6073 = vmatpush1.msra.mxu0 0.0
      %6074 = vmatprep.subr.mxu0 0.0
      %6075 = vmatpush1.msra.mxu0 0.0
      %6076 = vmatprep.subr.mxu0 0.0
      %6077 = vmatpush1.msra.mxu0 0.0
      %6078 = vmatprep.subr.mxu0 0.0
      %6079 = vmatpush1.msra.mxu0 0.0
      %6080 = vmatprep.subr.mxu0 0.0
      %6081 = vmatpush1.msra.mxu0 0.0
      %6082 = vmatprep.subr.mxu0 0.0
      %6083 = vmatpush1.msra.mxu0 0.0
      %6084 = vmatprep.subr.mxu0 0.0
      %6085 = vmatpush1.msra.mxu0 0.0
      %6086 = vmatprep.subr.mxu0 0.0
      %6087 = vmatpush1.msra.mxu0 0.0
      %6088 = vmatprep.subr.mxu0 0.0
      %6089 = vmatpush1.msra.mxu0 0.0
      %6090 = vmatprep.subr.mxu0 0.0
      %6091 = vmatpush1.msra.mxu0 0.0
      %6092 = vmatprep.subr.mxu0 0.0
      %6093 = vmatpush1.msra.mxu0 0.0
      %6094 = vmatprep.subr.mxu0 0.0
      %6095 = vmatpush1.msra.mxu0 0.0
      %6096 = vmatprep.subr.mxu0 0.0
      %6097 = vmatpush1.msra.mxu0 0.0
      %6098 = vmatprep.subr.mxu0 0.0
      %6099 = vmatpush1.msra.mxu0 0.0
      %v6100 = vand.u32 %v5157, 4294901760
      %v6101 = vsub.f32 %v5157, %v6100
      %v6102 = vand.u32 %v6101, 4294901760
      %6103 = vmatprep.subr.mxu0 %v6102
      %v6104 = vand.u32 %v5156, 4294901760
      %v6105 = vsub.f32 %v5156, %v6104
      %v6106 = vand.u32 %v6105, 4294901760
      %6107 = vmatpush1.msra.mxu0 %v6106
      %v6108 = vand.u32 %v5151, 4294901760
      %v6109 = vsub.f32 %v5151, %v6108
      %v6110 = vand.u32 %v6109, 4294901760
      %6111 = vmatprep.subr.mxu0 %v6110
      %v6112 = vand.u32 %v5150, 4294901760
      %v6113 = vsub.f32 %v5150, %v6112
      %v6114 = vand.u32 %v6113, 4294901760
      %6115 = vmatpush1.msra.mxu0 %v6114
      %6116 = vmatprep.subr.mxu0 0.0
      %6117 = vmatpush2.msra.mxu0 0.0
      %6118 = vmatprep.subr.mxu0 0.0
      %6119 = vmatpush2.msra.mxu0 0.0
      %6120 = vmatprep.subr.mxu0 0.0
      %6121 = vmatpush2.msra.mxu0 0.0
      %6122 = vmatprep.subr.mxu0 0.0
      %6123 = vmatpush2.msra.mxu0 0.0
      %6124 = vmatprep.subr.mxu0 0.0
      %6125 = vmatpush2.msra.mxu0 0.0
      %6126 = vmatprep.subr.mxu0 0.0
      %6127 = vmatpush2.msra.mxu0 0.0
      %6128 = vmatprep.subr.mxu0 0.0
      %6129 = vmatpush2.msra.mxu0 0.0
      %6130 = vmatprep.subr.mxu0 0.0
      %6131 = vmatpush2.msra.mxu0 0.0
      %6132 = vmatprep.subr.mxu0 0.0
      %6133 = vmatpush2.msra.mxu0 0.0
      %6134 = vmatprep.subr.mxu0 0.0
      %6135 = vmatpush2.msra.mxu0 0.0
      %6136 = vmatprep.subr.mxu0 0.0
      %6137 = vmatpush2.msra.mxu0 0.0
      %6138 = vmatprep.subr.mxu0 0.0
      %6139 = vmatpush2.msra.mxu0 0.0
      %6140 = vmatprep.subr.mxu0 0.0
      %6141 = vmatpush2.msra.mxu0 0.0
      %6142 = vmatprep.subr.mxu0 0.0
      %6143 = vmatpush2.msra.mxu0 0.0
      %6144 = vmatprep.subr.mxu0 0.0
      %6145 = vmatpush2.msra.mxu0 0.0
      %6146 = vmatprep.subr.mxu0 0.0
      %6147 = vmatpush2.msra.mxu0 0.0
      %6148 = vmatprep.mubr.f32.mxu0 0.0
      %v6149 = vand.u32 %v5161, 4294901760
      %6150 = vmatmul.mubr.f32.gmra.mxu0 %v6149
      %v6151 = vpop.f32.mrf.mxu0
      %v6152 = vadd.f32 %v6059, %v6151
      %v6153 = vpop.f32.mrf.mxu0
      %v6154 = vadd.f32 %v6061, %v6153
      %6155 = vmatprep.mubr.f32.mxu0 0.0
      %v6156 = vand.u32 %v5164, 4294901760
      %6157 = vmatmul.mubr.f32.gmra.mxu0 %v6156
      %v6158 = vpop.f32.mrf.mxu0
      %v6159 = vadd.f32 %v6068, %v6158
      %v6160 = vpop.f32.mrf.mxu0
      %v6161 = vadd.f32 %v6070, %v6160
      %6162 = vdwg.mxu0
      %6163 = vmatprep.subr.mxu0 0.0
      %6164 = vmatpush1.msra.mxu0 0.0
      %6165 = vmatprep.subr.mxu0 0.0
      %6166 = vmatpush1.msra.mxu0 0.0
      %6167 = vmatprep.subr.mxu0 0.0
      %6168 = vmatpush1.msra.mxu0 0.0
      %6169 = vmatprep.subr.mxu0 0.0
      %6170 = vmatpush1.msra.mxu0 0.0
      %6171 = vmatprep.subr.mxu0 0.0
      %6172 = vmatpush1.msra.mxu0 0.0
      %6173 = vmatprep.subr.mxu0 0.0
      %6174 = vmatpush1.msra.mxu0 0.0
      %6175 = vmatprep.subr.mxu0 0.0
      %6176 = vmatpush1.msra.mxu0 0.0
      %6177 = vmatprep.subr.mxu0 0.0
      %6178 = vmatpush1.msra.mxu0 0.0
      %6179 = vmatprep.subr.mxu0 0.0
      %6180 = vmatpush1.msra.mxu0 0.0
      %6181 = vmatprep.subr.mxu0 0.0
      %6182 = vmatpush1.msra.mxu0 0.0
      %6183 = vmatprep.subr.mxu0 0.0
      %6184 = vmatpush1.msra.mxu0 0.0
      %6185 = vmatprep.subr.mxu0 0.0
      %6186 = vmatpush1.msra.mxu0 0.0
      %6187 = vmatprep.subr.mxu0 0.0
      %6188 = vmatpush1.msra.mxu0 0.0
      %6189 = vmatprep.subr.mxu0 0.0
      %6190 = vmatpush1.msra.mxu0 0.0
      %v6191 = vand.u32 %v5157, 4294901760
      %6192 = vmatprep.subr.mxu0 %v6191
      %v6193 = vand.u32 %v5156, 4294901760
      %6194 = vmatpush1.msra.mxu0 %v6193
      %v6195 = vand.u32 %v5151, 4294901760
      %6196 = vmatprep.subr.mxu0 %v6195
      %v6197 = vand.u32 %v5150, 4294901760
      %6198 = vmatpush1.msra.mxu0 %v6197
      %6199 = vmatprep.subr.mxu0 0.0
      %6200 = vmatpush2.msra.mxu0 0.0
      %6201 = vmatprep.subr.mxu0 0.0
      %6202 = vmatpush2.msra.mxu0 0.0
      %6203 = vmatprep.subr.mxu0 0.0
      %6204 = vmatpush2.msra.mxu0 0.0
      %6205 = vmatprep.subr.mxu0 0.0
      %6206 = vmatpush2.msra.mxu0 0.0
      %6207 = vmatprep.subr.mxu0 0.0
      %6208 = vmatpush2.msra.mxu0 0.0
      %6209 = vmatprep.subr.mxu0 0.0
      %6210 = vmatpush2.msra.mxu0 0.0
      %6211 = vmatprep.subr.mxu0 0.0
      %6212 = vmatpush2.msra.mxu0 0.0
      %6213 = vmatprep.subr.mxu0 0.0
      %6214 = vmatpush2.msra.mxu0 0.0
      %6215 = vmatprep.subr.mxu0 0.0
      %6216 = vmatpush2.msra.mxu0 0.0
      %6217 = vmatprep.subr.mxu0 0.0
      %6218 = vmatpush2.msra.mxu0 0.0
      %6219 = vmatprep.subr.mxu0 0.0
      %6220 = vmatpush2.msra.mxu0 0.0
      %6221 = vmatprep.subr.mxu0 0.0
      %6222 = vmatpush2.msra.mxu0 0.0
      %6223 = vmatprep.subr.mxu0 0.0
      %6224 = vmatpush2.msra.mxu0 0.0
      %6225 = vmatprep.subr.mxu0 0.0
      %6226 = vmatpush2.msra.mxu0 0.0
      %6227 = vmatprep.subr.mxu0 0.0
      %6228 = vmatpush2.msra.mxu0 0.0
      %6229 = vmatprep.subr.mxu0 0.0
      %6230 = vmatpush2.msra.mxu0 0.0
      %6231 = vmatprep.mubr.f32.mxu0 0.0
      %v6232 = vand.u32 %v5161, 4294901760
      %6233 = vmatmul.mubr.f32.gmra.mxu0 %v6232
      %v6234 = vpop.f32.mrf.mxu0
      %v6235 = vadd.f32 %v6152, %v6234
      %v6236 = vpop.f32.mrf.mxu0
      %v6237 = vadd.f32 %v6154, %v6236
      %6238 = vmatprep.mubr.f32.mxu0 0.0
      %v6239 = vand.u32 %v5164, 4294901760
      %6240 = vmatmul.mubr.f32.gmra.mxu0 %v6239
      %v6241 = vpop.f32.mrf.mxu0
      %v6242 = vadd.f32 %v6159, %v6241
      %v6243 = vpop.f32.mrf.mxu0
      %v6244 = vadd.f32 %v6161, %v6243
      %6245 = vdwg.mxu0
      %6246 = vmatprep.subr.mxu0 0.0
      %6247 = vmatpush1.msra.mxu0 0.0
      %6248 = vmatprep.subr.mxu0 0.0
      %6249 = vmatpush1.msra.mxu0 0.0
      %6250 = vmatprep.subr.mxu0 0.0
      %6251 = vmatpush1.msra.mxu0 0.0
      %6252 = vmatprep.subr.mxu0 0.0
      %6253 = vmatpush1.msra.mxu0 0.0
      %6254 = vmatprep.subr.mxu0 0.0
      %6255 = vmatpush1.msra.mxu0 0.0
      %6256 = vmatprep.subr.mxu0 0.0
      %6257 = vmatpush1.msra.mxu0 0.0
      %6258 = vmatprep.subr.mxu0 0.0
      %6259 = vmatpush1.msra.mxu0 0.0
      %6260 = vmatprep.subr.mxu0 0.0
      %6261 = vmatpush1.msra.mxu0 0.0
      %6262 = vmatprep.subr.mxu0 0.0
      %6263 = vmatpush1.msra.mxu0 0.0
      %6264 = vmatprep.subr.mxu0 0.0
      %6265 = vmatpush1.msra.mxu0 0.0
      %6266 = vmatprep.subr.mxu0 0.0
      %6267 = vmatpush1.msra.mxu0 0.0
      %6268 = vmatprep.subr.mxu0 0.0
      %6269 = vmatpush1.msra.mxu0 0.0
      %6270 = vmatprep.subr.mxu0 0.0
      %6271 = vmatpush1.msra.mxu0 0.0
      %6272 = vmatprep.subr.mxu0 0.0
      %6273 = vmatpush1.msra.mxu0 0.0
      %v6274 = vand.u32 %v5159, 4294901760
      %6275 = vmatprep.subr.mxu0 %v6274
      %v6276 = vand.u32 %v5158, 4294901760
      %6277 = vmatpush1.msra.mxu0 %v6276
      %v6278 = vand.u32 %v5153, 4294901760
      %6279 = vmatprep.subr.mxu0 %v6278
      %v6280 = vand.u32 %v5152, 4294901760
      %6281 = vmatpush1.msra.mxu0 %v6280
      %6282 = vmatprep.subr.mxu0 0.0
      %6283 = vmatpush2.msra.mxu0 0.0
      %6284 = vmatprep.subr.mxu0 0.0
      %6285 = vmatpush2.msra.mxu0 0.0
      %6286 = vmatprep.subr.mxu0 0.0
      %6287 = vmatpush2.msra.mxu0 0.0
      %6288 = vmatprep.subr.mxu0 0.0
      %6289 = vmatpush2.msra.mxu0 0.0
      %6290 = vmatprep.subr.mxu0 0.0
      %6291 = vmatpush2.msra.mxu0 0.0
      %6292 = vmatprep.subr.mxu0 0.0
      %6293 = vmatpush2.msra.mxu0 0.0
      %6294 = vmatprep.subr.mxu0 0.0
      %6295 = vmatpush2.msra.mxu0 0.0
      %6296 = vmatprep.subr.mxu0 0.0
      %6297 = vmatpush2.msra.mxu0 0.0
      %6298 = vmatprep.subr.mxu0 0.0
      %6299 = vmatpush2.msra.mxu0 0.0
      %6300 = vmatprep.subr.mxu0 0.0
      %6301 = vmatpush2.msra.mxu0 0.0
      %6302 = vmatprep.subr.mxu0 0.0
      %6303 = vmatpush2.msra.mxu0 0.0
      %6304 = vmatprep.subr.mxu0 0.0
      %6305 = vmatpush2.msra.mxu0 0.0
      %6306 = vmatprep.subr.mxu0 0.0
      %6307 = vmatpush2.msra.mxu0 0.0
      %6308 = vmatprep.subr.mxu0 0.0
      %6309 = vmatpush2.msra.mxu0 0.0
      %6310 = vmatprep.subr.mxu0 0.0
      %6311 = vmatpush2.msra.mxu0 0.0
      %6312 = vmatprep.subr.mxu0 0.0
      %6313 = vmatpush2.msra.mxu0 0.0
      %6314 = vmatprep.mubr.f32.mxu0 0.0
      %v6315 = vand.u32 %v5161, 4294901760
      %v6316 = vsub.f32 %v5161, %v6315
      %v6317 = vand.u32 %v6316, 4294901760
      %v6318 = vsub.f32 %v6316, %v6317
      %v6319 = vand.u32 %v6318, 4294901760
      %6320 = vmatmul.mubr.f32.gmra.mxu0 %v6319
      %v6321 = vpop.f32.mrf.mxu0
      %v6322 = vadd.f32 0.0, %v6321
      %v6323 = vpop.f32.mrf.mxu0
      %v6324 = vadd.f32 0.0, %v6323
      %6325 = vmatprep.mubr.f32.mxu0 0.0
      %v6326 = vand.u32 %v5164, 4294901760
      %v6327 = vsub.f32 %v5164, %v6326
      %v6328 = vand.u32 %v6327, 4294901760
      %v6329 = vsub.f32 %v6327, %v6328
      %v6330 = vand.u32 %v6329, 4294901760
      %6331 = vmatmul.mubr.f32.gmra.mxu0 %v6330
      %v6332 = vpop.f32.mrf.mxu0
      %v6333 = vadd.f32 0.0, %v6332
      %v6334 = vpop.f32.mrf.mxu0
      %v6335 = vadd.f32 0.0, %v6334
      %6336 = vdwg.mxu0
      %6337 = vmatprep.subr.mxu0 0.0
      %6338 = vmatpush1.msra.mxu0 0.0
      %6339 = vmatprep.subr.mxu0 0.0
      %6340 = vmatpush1.msra.mxu0 0.0
      %6341 = vmatprep.subr.mxu0 0.0
      %6342 = vmatpush1.msra.mxu0 0.0
      %6343 = vmatprep.subr.mxu0 0.0
      %6344 = vmatpush1.msra.mxu0 0.0
      %6345 = vmatprep.subr.mxu0 0.0
      %6346 = vmatpush1.msra.mxu0 0.0
      %6347 = vmatprep.subr.mxu0 0.0
      %6348 = vmatpush1.msra.mxu0 0.0
      %6349 = vmatprep.subr.mxu0 0.0
      %6350 = vmatpush1.msra.mxu0 0.0
      %6351 = vmatprep.subr.mxu0 0.0
      %6352 = vmatpush1.msra.mxu0 0.0
      %6353 = vmatprep.subr.mxu0 0.0
      %6354 = vmatpush1.msra.mxu0 0.0
      %6355 = vmatprep.subr.mxu0 0.0
      %6356 = vmatpush1.msra.mxu0 0.0
      %6357 = vmatprep.subr.mxu0 0.0
      %6358 = vmatpush1.msra.mxu0 0.0
      %6359 = vmatprep.subr.mxu0 0.0
      %6360 = vmatpush1.msra.mxu0 0.0
      %6361 = vmatprep.subr.mxu0 0.0
      %6362 = vmatpush1.msra.mxu0 0.0
      %6363 = vmatprep.subr.mxu0 0.0
      %6364 = vmatpush1.msra.mxu0 0.0
      %v6365 = vand.u32 %v5159, 4294901760
      %v6366 = vsub.f32 %v5159, %v6365
      %v6367 = vand.u32 %v6366, 4294901760
      %v6368 = vsub.f32 %v6366, %v6367
      %v6369 = vand.u32 %v6368, 4294901760
      %6370 = vmatprep.subr.mxu0 %v6369
      %v6371 = vand.u32 %v5158, 4294901760
      %v6372 = vsub.f32 %v5158, %v6371
      %v6373 = vand.u32 %v6372, 4294901760
      %v6374 = vsub.f32 %v6372, %v6373
      %v6375 = vand.u32 %v6374, 4294901760
      %6376 = vmatpush1.msra.mxu0 %v6375
      %v6377 = vand.u32 %v5153, 4294901760
      %v6378 = vsub.f32 %v5153, %v6377
      %v6379 = vand.u32 %v6378, 4294901760
      %v6380 = vsub.f32 %v6378, %v6379
      %v6381 = vand.u32 %v6380, 4294901760
      %6382 = vmatprep.subr.mxu0 %v6381
      %v6383 = vand.u32 %v5152, 4294901760
      %v6384 = vsub.f32 %v5152, %v6383
      %v6385 = vand.u32 %v6384, 4294901760
      %v6386 = vsub.f32 %v6384, %v6385
      %v6387 = vand.u32 %v6386, 4294901760
      %6388 = vmatpush1.msra.mxu0 %v6387
      %6389 = vmatprep.subr.mxu0 0.0
      %6390 = vmatpush2.msra.mxu0 0.0
      %6391 = vmatprep.subr.mxu0 0.0
      %6392 = vmatpush2.msra.mxu0 0.0
      %6393 = vmatprep.subr.mxu0 0.0
      %6394 = vmatpush2.msra.mxu0 0.0
      %6395 = vmatprep.subr.mxu0 0.0
      %6396 = vmatpush2.msra.mxu0 0.0
      %6397 = vmatprep.subr.mxu0 0.0
      %6398 = vmatpush2.msra.mxu0 0.0
      %6399 = vmatprep.subr.mxu0 0.0
      %6400 = vmatpush2.msra.mxu0 0.0
      %6401 = vmatprep.subr.mxu0 0.0
      %6402 = vmatpush2.msra.mxu0 0.0
      %6403 = vmatprep.subr.mxu0 0.0
      %6404 = vmatpush2.msra.mxu0 0.0
      %6405 = vmatprep.subr.mxu0 0.0
      %6406 = vmatpush2.msra.mxu0 0.0
      %6407 = vmatprep.subr.mxu0 0.0
      %6408 = vmatpush2.msra.mxu0 0.0
      %6409 = vmatprep.subr.mxu0 0.0
      %6410 = vmatpush2.msra.mxu0 0.0
      %6411 = vmatprep.subr.mxu0 0.0
      %6412 = vmatpush2.msra.mxu0 0.0
      %6413 = vmatprep.subr.mxu0 0.0
      %6414 = vmatpush2.msra.mxu0 0.0
      %6415 = vmatprep.subr.mxu0 0.0
      %6416 = vmatpush2.msra.mxu0 0.0
      %6417 = vmatprep.subr.mxu0 0.0
      %6418 = vmatpush2.msra.mxu0 0.0
      %6419 = vmatprep.subr.mxu0 0.0
      %6420 = vmatpush2.msra.mxu0 0.0
      %6421 = vmatprep.mubr.f32.mxu0 0.0
      %v6422 = vand.u32 %v5161, 4294901760
      %6423 = vmatmul.mubr.f32.gmra.mxu0 %v6422
      %v6424 = vpop.f32.mrf.mxu0
      %v6425 = vadd.f32 %v6322, %v6424
      %v6426 = vpop.f32.mrf.mxu0
      %v6427 = vadd.f32 %v6324, %v6426
      %6428 = vmatprep.mubr.f32.mxu0 0.0
      %v6429 = vand.u32 %v5164, 4294901760
      %6430 = vmatmul.mubr.f32.gmra.mxu0 %v6429
      %v6431 = vpop.f32.mrf.mxu0
      %v6432 = vadd.f32 %v6333, %v6431
      %v6433 = vpop.f32.mrf.mxu0
      %v6434 = vadd.f32 %v6335, %v6433
      %6435 = vdwg.mxu0
      %6436 = vmatprep.subr.mxu0 0.0
      %6437 = vmatpush1.msra.mxu0 0.0
      %6438 = vmatprep.subr.mxu0 0.0
      %6439 = vmatpush1.msra.mxu0 0.0
      %6440 = vmatprep.subr.mxu0 0.0
      %6441 = vmatpush1.msra.mxu0 0.0
      %6442 = vmatprep.subr.mxu0 0.0
      %6443 = vmatpush1.msra.mxu0 0.0
      %6444 = vmatprep.subr.mxu0 0.0
      %6445 = vmatpush1.msra.mxu0 0.0
      %6446 = vmatprep.subr.mxu0 0.0
      %6447 = vmatpush1.msra.mxu0 0.0
      %6448 = vmatprep.subr.mxu0 0.0
      %6449 = vmatpush1.msra.mxu0 0.0
      %6450 = vmatprep.subr.mxu0 0.0
      %6451 = vmatpush1.msra.mxu0 0.0
      %6452 = vmatprep.subr.mxu0 0.0
      %6453 = vmatpush1.msra.mxu0 0.0
      %6454 = vmatprep.subr.mxu0 0.0
      %6455 = vmatpush1.msra.mxu0 0.0
      %6456 = vmatprep.subr.mxu0 0.0
      %6457 = vmatpush1.msra.mxu0 0.0
      %6458 = vmatprep.subr.mxu0 0.0
      %6459 = vmatpush1.msra.mxu0 0.0
      %6460 = vmatprep.subr.mxu0 0.0
      %6461 = vmatpush1.msra.mxu0 0.0
      %6462 = vmatprep.subr.mxu0 0.0
      %6463 = vmatpush1.msra.mxu0 0.0
      %v6464 = vand.u32 %v5159, 4294901760
      %v6465 = vsub.f32 %v5159, %v6464
      %6466 = vmatprep.subr.mxu0 %v6465
      %v6467 = vand.u32 %v5158, 4294901760
      %v6468 = vsub.f32 %v5158, %v6467
      %6469 = vmatpush1.msra.mxu0 %v6468
      %v6470 = vand.u32 %v5153, 4294901760
      %v6471 = vsub.f32 %v5153, %v6470
      %6472 = vmatprep.subr.mxu0 %v6471
      %v6473 = vand.u32 %v5152, 4294901760
      %v6474 = vsub.f32 %v5152, %v6473
      %6475 = vmatpush1.msra.mxu0 %v6474
      %6476 = vmatprep.subr.mxu0 0.0
      %6477 = vmatpush2.msra.mxu0 0.0
      %6478 = vmatprep.subr.mxu0 0.0
      %6479 = vmatpush2.msra.mxu0 0.0
      %6480 = vmatprep.subr.mxu0 0.0
      %6481 = vmatpush2.msra.mxu0 0.0
      %6482 = vmatprep.subr.mxu0 0.0
      %6483 = vmatpush2.msra.mxu0 0.0
      %6484 = vmatprep.subr.mxu0 0.0
      %6485 = vmatpush2.msra.mxu0 0.0
      %6486 = vmatprep.subr.mxu0 0.0
      %6487 = vmatpush2.msra.mxu0 0.0
      %6488 = vmatprep.subr.mxu0 0.0
      %6489 = vmatpush2.msra.mxu0 0.0
      %6490 = vmatprep.subr.mxu0 0.0
      %6491 = vmatpush2.msra.mxu0 0.0
      %6492 = vmatprep.subr.mxu0 0.0
      %6493 = vmatpush2.msra.mxu0 0.0
      %6494 = vmatprep.subr.mxu0 0.0
      %6495 = vmatpush2.msra.mxu0 0.0
      %6496 = vmatprep.subr.mxu0 0.0
      %6497 = vmatpush2.msra.mxu0 0.0
      %6498 = vmatprep.subr.mxu0 0.0
      %6499 = vmatpush2.msra.mxu0 0.0
      %6500 = vmatprep.subr.mxu0 0.0
      %6501 = vmatpush2.msra.mxu0 0.0
      %6502 = vmatprep.subr.mxu0 0.0
      %6503 = vmatpush2.msra.mxu0 0.0
      %6504 = vmatprep.subr.mxu0 0.0
      %6505 = vmatpush2.msra.mxu0 0.0
      %6506 = vmatprep.subr.mxu0 0.0
      %6507 = vmatpush2.msra.mxu0 0.0
      %6508 = vmatprep.mubr.f32.mxu0 0.0
      %v6509 = vand.u32 %v5161, 4294901760
      %v6510 = vsub.f32 %v5161, %v6509
      %6511 = vmatmul.mubr.f32.gmra.mxu0 %v6510
      %v6512 = vpop.f32.mrf.mxu0
      %v6513 = vadd.f32 %v6425, %v6512
      %v6514 = vpop.f32.mrf.mxu0
      %v6515 = vadd.f32 %v6427, %v6514
      %6516 = vmatprep.mubr.f32.mxu0 0.0
      %v6517 = vand.u32 %v5164, 4294901760
      %v6518 = vsub.f32 %v5164, %v6517
      %6519 = vmatmul.mubr.f32.gmra.mxu0 %v6518
      %v6520 = vpop.f32.mrf.mxu0
      %v6521 = vadd.f32 %v6432, %v6520
      %v6522 = vpop.f32.mrf.mxu0
      %v6523 = vadd.f32 %v6434, %v6522
      %6524 = vdwg.mxu0
      %6525 = vmatprep.subr.mxu0 0.0
      %6526 = vmatpush1.msra.mxu0 0.0
      %6527 = vmatprep.subr.mxu0 0.0
      %6528 = vmatpush1.msra.mxu0 0.0
      %6529 = vmatprep.subr.mxu0 0.0
      %6530 = vmatpush1.msra.mxu0 0.0
      %6531 = vmatprep.subr.mxu0 0.0
      %6532 = vmatpush1.msra.mxu0 0.0
      %6533 = vmatprep.subr.mxu0 0.0
      %6534 = vmatpush1.msra.mxu0 0.0
      %6535 = vmatprep.subr.mxu0 0.0
      %6536 = vmatpush1.msra.mxu0 0.0
      %6537 = vmatprep.subr.mxu0 0.0
      %6538 = vmatpush1.msra.mxu0 0.0
      %6539 = vmatprep.subr.mxu0 0.0
      %6540 = vmatpush1.msra.mxu0 0.0
      %6541 = vmatprep.subr.mxu0 0.0
      %6542 = vmatpush1.msra.mxu0 0.0
      %6543 = vmatprep.subr.mxu0 0.0
      %6544 = vmatpush1.msra.mxu0 0.0
      %6545 = vmatprep.subr.mxu0 0.0
      %6546 = vmatpush1.msra.mxu0 0.0
      %6547 = vmatprep.subr.mxu0 0.0
      %6548 = vmatpush1.msra.mxu0 0.0
      %6549 = vmatprep.subr.mxu0 0.0
      %6550 = vmatpush1.msra.mxu0 0.0
      %6551 = vmatprep.subr.mxu0 0.0
      %6552 = vmatpush1.msra.mxu0 0.0
      %v6553 = vand.u32 %v5159, 4294901760
      %6554 = vmatprep.subr.mxu0 %v6553
      %v6555 = vand.u32 %v5158, 4294901760
      %6556 = vmatpush1.msra.mxu0 %v6555
      %v6557 = vand.u32 %v5153, 4294901760
      %6558 = vmatprep.subr.mxu0 %v6557
      %v6559 = vand.u32 %v5152, 4294901760
      %6560 = vmatpush1.msra.mxu0 %v6559
      %6561 = vmatprep.subr.mxu0 0.0
      %6562 = vmatpush2.msra.mxu0 0.0
      %6563 = vmatprep.subr.mxu0 0.0
      %6564 = vmatpush2.msra.mxu0 0.0
      %6565 = vmatprep.subr.mxu0 0.0
      %6566 = vmatpush2.msra.mxu0 0.0
      %6567 = vmatprep.subr.mxu0 0.0
      %6568 = vmatpush2.msra.mxu0 0.0
      %6569 = vmatprep.subr.mxu0 0.0
      %6570 = vmatpush2.msra.mxu0 0.0
      %6571 = vmatprep.subr.mxu0 0.0
      %6572 = vmatpush2.msra.mxu0 0.0
      %6573 = vmatprep.subr.mxu0 0.0
      %6574 = vmatpush2.msra.mxu0 0.0
      %6575 = vmatprep.subr.mxu0 0.0
      %6576 = vmatpush2.msra.mxu0 0.0
      %6577 = vmatprep.subr.mxu0 0.0
      %6578 = vmatpush2.msra.mxu0 0.0
      %6579 = vmatprep.subr.mxu0 0.0
      %6580 = vmatpush2.msra.mxu0 0.0
      %6581 = vmatprep.subr.mxu0 0.0
      %6582 = vmatpush2.msra.mxu0 0.0
      %6583 = vmatprep.subr.mxu0 0.0
      %6584 = vmatpush2.msra.mxu0 0.0
      %6585 = vmatprep.subr.mxu0 0.0
      %6586 = vmatpush2.msra.mxu0 0.0
      %6587 = vmatprep.subr.mxu0 0.0
      %6588 = vmatpush2.msra.mxu0 0.0
      %6589 = vmatprep.subr.mxu0 0.0
      %6590 = vmatpush2.msra.mxu0 0.0
      %6591 = vmatprep.subr.mxu0 0.0
      %6592 = vmatpush2.msra.mxu0 0.0
      %6593 = vmatprep.mubr.f32.mxu0 0.0
      %v6594 = vand.u32 %v5161, 4294901760
      %v6595 = vsub.f32 %v5161, %v6594
      %v6596 = vand.u32 %v6595, 4294901760
      %6597 = vmatmul.mubr.f32.gmra.mxu0 %v6596
      %v6598 = vpop.f32.mrf.mxu0
      %v6599 = vadd.f32 %v6513, %v6598
      %v6600 = vpop.f32.mrf.mxu0
      %v6601 = vadd.f32 %v6515, %v6600
      %6602 = vmatprep.mubr.f32.mxu0 0.0
      %v6603 = vand.u32 %v5164, 4294901760
      %v6604 = vsub.f32 %v5164, %v6603
      %v6605 = vand.u32 %v6604, 4294901760
      %6606 = vmatmul.mubr.f32.gmra.mxu0 %v6605
      %v6607 = vpop.f32.mrf.mxu0
      %v6608 = vadd.f32 %v6521, %v6607
      %v6609 = vpop.f32.mrf.mxu0
      %v6610 = vadd.f32 %v6523, %v6609
      %6611 = vdwg.mxu0
      %6612 = vmatprep.subr.mxu0 0.0
      %6613 = vmatpush1.msra.mxu0 0.0
      %6614 = vmatprep.subr.mxu0 0.0
      %6615 = vmatpush1.msra.mxu0 0.0
      %6616 = vmatprep.subr.mxu0 0.0
      %6617 = vmatpush1.msra.mxu0 0.0
      %6618 = vmatprep.subr.mxu0 0.0
      %6619 = vmatpush1.msra.mxu0 0.0
      %6620 = vmatprep.subr.mxu0 0.0
      %6621 = vmatpush1.msra.mxu0 0.0
      %6622 = vmatprep.subr.mxu0 0.0
      %6623 = vmatpush1.msra.mxu0 0.0
      %6624 = vmatprep.subr.mxu0 0.0
      %6625 = vmatpush1.msra.mxu0 0.0
      %6626 = vmatprep.subr.mxu0 0.0
      %6627 = vmatpush1.msra.mxu0 0.0
      %6628 = vmatprep.subr.mxu0 0.0
      %6629 = vmatpush1.msra.mxu0 0.0
      %6630 = vmatprep.subr.mxu0 0.0
      %6631 = vmatpush1.msra.mxu0 0.0
      %6632 = vmatprep.subr.mxu0 0.0
      %6633 = vmatpush1.msra.mxu0 0.0
      %6634 = vmatprep.subr.mxu0 0.0
      %6635 = vmatpush1.msra.mxu0 0.0
      %6636 = vmatprep.subr.mxu0 0.0
      %6637 = vmatpush1.msra.mxu0 0.0
      %6638 = vmatprep.subr.mxu0 0.0
      %6639 = vmatpush1.msra.mxu0 0.0
      %v6640 = vand.u32 %v5159, 4294901760
      %v6641 = vsub.f32 %v5159, %v6640
      %v6642 = vand.u32 %v6641, 4294901760
      %6643 = vmatprep.subr.mxu0 %v6642
      %v6644 = vand.u32 %v5158, 4294901760
      %v6645 = vsub.f32 %v5158, %v6644
      %v6646 = vand.u32 %v6645, 4294901760
      %6647 = vmatpush1.msra.mxu0 %v6646
      %v6648 = vand.u32 %v5153, 4294901760
      %v6649 = vsub.f32 %v5153, %v6648
      %v6650 = vand.u32 %v6649, 4294901760
      %6651 = vmatprep.subr.mxu0 %v6650
      %v6652 = vand.u32 %v5152, 4294901760
      %v6653 = vsub.f32 %v5152, %v6652
      %v6654 = vand.u32 %v6653, 4294901760
      %6655 = vmatpush1.msra.mxu0 %v6654
      %6656 = vmatprep.subr.mxu0 0.0
      %6657 = vmatpush2.msra.mxu0 0.0
      %6658 = vmatprep.subr.mxu0 0.0
      %6659 = vmatpush2.msra.mxu0 0.0
      %6660 = vmatprep.subr.mxu0 0.0
      %6661 = vmatpush2.msra.mxu0 0.0
      %6662 = vmatprep.subr.mxu0 0.0
      %6663 = vmatpush2.msra.mxu0 0.0
      %6664 = vmatprep.subr.mxu0 0.0
      %6665 = vmatpush2.msra.mxu0 0.0
      %6666 = vmatprep.subr.mxu0 0.0
      %6667 = vmatpush2.msra.mxu0 0.0
      %6668 = vmatprep.subr.mxu0 0.0
      %6669 = vmatpush2.msra.mxu0 0.0
      %6670 = vmatprep.subr.mxu0 0.0
      %6671 = vmatpush2.msra.mxu0 0.0
      %6672 = vmatprep.subr.mxu0 0.0
      %6673 = vmatpush2.msra.mxu0 0.0
      %6674 = vmatprep.subr.mxu0 0.0
      %6675 = vmatpush2.msra.mxu0 0.0
      %6676 = vmatprep.subr.mxu0 0.0
      %6677 = vmatpush2.msra.mxu0 0.0
      %6678 = vmatprep.subr.mxu0 0.0
      %6679 = vmatpush2.msra.mxu0 0.0
      %6680 = vmatprep.subr.mxu0 0.0
      %6681 = vmatpush2.msra.mxu0 0.0
      %6682 = vmatprep.subr.mxu0 0.0
      %6683 = vmatpush2.msra.mxu0 0.0
      %6684 = vmatprep.subr.mxu0 0.0
      %6685 = vmatpush2.msra.mxu0 0.0
      %6686 = vmatprep.subr.mxu0 0.0
      %6687 = vmatpush2.msra.mxu0 0.0
      %6688 = vmatprep.mubr.f32.mxu0 0.0
      %v6689 = vand.u32 %v5161, 4294901760
      %6690 = vmatmul.mubr.f32.gmra.mxu0 %v6689
      %v6691 = vpop.f32.mrf.mxu0
      %v6692 = vadd.f32 %v6599, %v6691
      %v6693 = vpop.f32.mrf.mxu0
      %v6694 = vadd.f32 %v6601, %v6693
      %6695 = vmatprep.mubr.f32.mxu0 0.0
      %v6696 = vand.u32 %v5164, 4294901760
      %6697 = vmatmul.mubr.f32.gmra.mxu0 %v6696
      %v6698 = vpop.f32.mrf.mxu0
      %v6699 = vadd.f32 %v6608, %v6698
      %v6700 = vpop.f32.mrf.mxu0
      %v6701 = vadd.f32 %v6610, %v6700
      %6702 = vdwg.mxu0
      %6703 = vmatprep.subr.mxu0 0.0
      %6704 = vmatpush1.msra.mxu0 0.0
      %6705 = vmatprep.subr.mxu0 0.0
      %6706 = vmatpush1.msra.mxu0 0.0
      %6707 = vmatprep.subr.mxu0 0.0
      %6708 = vmatpush1.msra.mxu0 0.0
      %6709 = vmatprep.subr.mxu0 0.0
      %6710 = vmatpush1.msra.mxu0 0.0
      %6711 = vmatprep.subr.mxu0 0.0
      %6712 = vmatpush1.msra.mxu0 0.0
      %6713 = vmatprep.subr.mxu0 0.0
      %6714 = vmatpush1.msra.mxu0 0.0
      %6715 = vmatprep.subr.mxu0 0.0
      %6716 = vmatpush1.msra.mxu0 0.0
      %6717 = vmatprep.subr.mxu0 0.0
      %6718 = vmatpush1.msra.mxu0 0.0
      %6719 = vmatprep.subr.mxu0 0.0
      %6720 = vmatpush1.msra.mxu0 0.0
      %6721 = vmatprep.subr.mxu0 0.0
      %6722 = vmatpush1.msra.mxu0 0.0
      %6723 = vmatprep.subr.mxu0 0.0
      %6724 = vmatpush1.msra.mxu0 0.0
      %6725 = vmatprep.subr.mxu0 0.0
      %6726 = vmatpush1.msra.mxu0 0.0
      %6727 = vmatprep.subr.mxu0 0.0
      %6728 = vmatpush1.msra.mxu0 0.0
      %6729 = vmatprep.subr.mxu0 0.0
      %6730 = vmatpush1.msra.mxu0 0.0
      %v6731 = vand.u32 %v5159, 4294901760
      %6732 = vmatprep.subr.mxu0 %v6731
      %v6733 = vand.u32 %v5158, 4294901760
      %6734 = vmatpush1.msra.mxu0 %v6733
      %v6735 = vand.u32 %v5153, 4294901760
      %6736 = vmatprep.subr.mxu0 %v6735
      %v6737 = vand.u32 %v5152, 4294901760
      %6738 = vmatpush1.msra.mxu0 %v6737
      %6739 = vmatprep.subr.mxu0 0.0
      %6740 = vmatpush2.msra.mxu0 0.0
      %6741 = vmatprep.subr.mxu0 0.0
      %6742 = vmatpush2.msra.mxu0 0.0
      %6743 = vmatprep.subr.mxu0 0.0
      %6744 = vmatpush2.msra.mxu0 0.0
      %6745 = vmatprep.subr.mxu0 0.0
      %6746 = vmatpush2.msra.mxu0 0.0
      %6747 = vmatprep.subr.mxu0 0.0
      %6748 = vmatpush2.msra.mxu0 0.0
      %6749 = vmatprep.subr.mxu0 0.0
      %6750 = vmatpush2.msra.mxu0 0.0
      %6751 = vmatprep.subr.mxu0 0.0
      %6752 = vmatpush2.msra.mxu0 0.0
      %6753 = vmatprep.subr.mxu0 0.0
      %6754 = vmatpush2.msra.mxu0 0.0
      %6755 = vmatprep.subr.mxu0 0.0
      %6756 = vmatpush2.msra.mxu0 0.0
      %6757 = vmatprep.subr.mxu0 0.0
      %6758 = vmatpush2.msra.mxu0 0.0
      %6759 = vmatprep.subr.mxu0 0.0
      %6760 = vmatpush2.msra.mxu0 0.0
      %6761 = vmatprep.subr.mxu0 0.0
      %6762 = vmatpush2.msra.mxu0 0.0
      %6763 = vmatprep.subr.mxu0 0.0
      %6764 = vmatpush2.msra.mxu0 0.0
      %6765 = vmatprep.subr.mxu0 0.0
      %6766 = vmatpush2.msra.mxu0 0.0
      %6767 = vmatprep.subr.mxu0 0.0
      %6768 = vmatpush2.msra.mxu0 0.0
      %6769 = vmatprep.subr.mxu0 0.0
      %6770 = vmatpush2.msra.mxu0 0.0
      %6771 = vmatprep.mubr.f32.mxu0 0.0
      %v6772 = vand.u32 %v5161, 4294901760
      %6773 = vmatmul.mubr.f32.gmra.mxu0 %v6772
      %v6774 = vpop.f32.mrf.mxu0
      %v6775 = vadd.f32 %v6692, %v6774
      %v6776 = vpop.f32.mrf.mxu0
      %v6777 = vadd.f32 %v6694, %v6776
      %6778 = vmatprep.mubr.f32.mxu0 0.0
      %v6779 = vand.u32 %v5164, 4294901760
      %6780 = vmatmul.mubr.f32.gmra.mxu0 %v6779
      %v6781 = vpop.f32.mrf.mxu0
      %v6782 = vadd.f32 %v6699, %v6781
      %v6783 = vpop.f32.mrf.mxu0
      %v6784 = vadd.f32 %v6701, %v6783
      %6785 = vdwg.mxu0
      %v6786 = vadd.f32 %v5132, %v5695
      %v6787 = vadd.f32 %v5133, %v5697
      %v6788 = vadd.f32 %v5134, %v6235
      %v6789 = vadd.f32 %v5135, %v6237
      %v6790 = vadd.f32 %v5136, %v6775
      %v6791 = vadd.f32 %v5137, %v6777
      %v6792 = vadd.f32 %v5138, %v5702
      %v6793 = vadd.f32 %v5139, %v5704
      %v6794 = vadd.f32 %v5140, %v6242
      %v6795 = vadd.f32 %v5141, %v6244
      %v6796 = vadd.f32 %v5142, %v6782
      %v6797 = vadd.f32 %v5143, %v6784
      %vm6810 = vcmask 1040384
      %v6811 = vrot.slane %v6786, 7
      %v6812 = vrot.slane %v6787, 7
      %v6813 = vrot.slane %v6788, 7
      %v6814 = vrot.slane %v6789, 7
      %v6815 = vrot.slane %v6790, 7
      %v6816 = vrot.slane %v6791, 7
      %v6817 = vrot.slane %v6792, 7
      %v6818 = vsel %vm6810, %v6811, %v6817
      %v6819 = vrot.slane %v6793, 7
      %v6820 = vsel %vm6810, %v6812, %v6819
      %v6821 = vrot.slane %v6794, 7
      %v6822 = vsel %vm6810, %v6813, %v6821
      %v6823 = vrot.slane %v6795, 7
      %v6824 = vsel %vm6810, %v6814, %v6823
      %v6825 = vrot.slane %v6796, 7
      %v6826 = vsel %vm6810, %v6815, %v6825
      %v6827 = vrot.slane %v6797, 7
      %v6828 = vsel %vm6810, %v6816, %v6827
      %6847 = vst [vmem:[#allocation2] sm:$0xfe] %v6811
      %6848 = vst [vmem:[#allocation2 + $0x8] sm:$0xfe] %v6812
      %6849 = vst [vmem:[#allocation2 + $0x10] sm:$0xfe] %v6813
      %6850 = vst [vmem:[#allocation2 + $0x18] sm:$0xfe] %v6814
      %6851 = vst [vmem:[#allocation2 + $0x20] sm:$0xfe] %v6815
      %6852 = vst [vmem:[#allocation2 + $0x28] sm:$0xfe] %v6816
      %6853 = vst [vmem:[#allocation2 + $0x30] sm:$0xff] %v6818
      %6854 = vst [vmem:[#allocation2 + $0x38] sm:$0xff] %v6820
      %6855 = vst [vmem:[#allocation2 + $0x40] sm:$0xff] %v6822
      %6856 = vst [vmem:[#allocation2 + $0x48] sm:$0xff] %v6824
      %6857 = vst [vmem:[#allocation2 + $0x50] sm:$0xff] %v6826
      %6858 = vst [vmem:[#allocation2 + $0x58] sm:$0xff] %v6828
      %6859 = vst [vmem:[#allocation2 + $0x60] sm:$0x1] %v6817
      %6860 = vst [vmem:[#allocation2 + $0x68] sm:$0x1] %v6819
      %6861 = vst [vmem:[#allocation2 + $0x70] sm:$0x1] %v6821
      %6862 = vst [vmem:[#allocation2 + $0x78] sm:$0x1] %v6823
      %6863 = vst [vmem:[#allocation2 + $0x80] sm:$0x1] %v6825
      %6864 = vst [vmem:[#allocation2 + $0x88] sm:$0x1] %v6827
      %v6865 = vld [vmem:[%s3] sm:$0x1]
      %v6867 = vlaneseq
      %v6868 = vshrl.u32 %v6867, 7
      %v6869 = vsub.s32 0, %v6868
      %v6870 = vrot.slane %v6865, %v6869
      %v6872 = vld [vmem:[#allocation2] sm:$0xff]
      %v6873 = vld [vmem:[#allocation2 + $0x30] sm:$0xff]
      %v6874 = vld [vmem:[%s2] sm:$0x1]
      %v6875 = vlaneseq
      %v6876 = vshrl.u32 %v6875, 7
      %v6877 = vsub.s32 0, %v6876
      %v6878 = vrot.slane %v6874, %v6877
      %v6879 = vmul.f32 %v6872, %v6878
      %v6880 = vmul.f32 %v6873, %v6878
      %v6881 = vadd.f32 %v6870, %v6879
      %v6882 = vadd.f32 %v6870, %v6880
      %v6883 = vld [vmem:[#allocation2 + $0x8] sm:$0xff]
      %v6884 = vld [vmem:[#allocation2 + $0x38] sm:$0xff]
      %v6885 = vld [vmem:[%s2 + $0x1] sm:$0x1]
      %v6886 = vlaneseq
      %v6887 = vshrl.u32 %v6886, 7
      %v6888 = vsub.s32 0, %v6887
      %v6889 = vrot.slane %v6885, %v6888
      %v6890 = vmul.f32 %v6883, %v6889
      %v6891 = vmul.f32 %v6884, %v6889
      %v6892 = vadd.f32 %v6881, %v6890
      %v6893 = vadd.f32 %v6882, %v6891
      %v6894 = vld [vmem:[#allocation2 + $0x10] sm:$0xff]
      %v6895 = vld [vmem:[#allocation2 + $0x40] sm:$0xff]
      %v6896 = vld [vmem:[%s2 + $0x2] sm:$0x1]
      %v6897 = vlaneseq
      %v6898 = vshrl.u32 %v6897, 7
      %v6899 = vsub.s32 0, %v6898
      %v6900 = vrot.slane %v6896, %v6899
      %v6901 = vmul.f32 %v6894, %v6900
      %v6902 = vmul.f32 %v6895, %v6900
      %v6903 = vadd.f32 %v6892, %v6901
      %v6904 = vadd.f32 %v6893, %v6902
      %v6905 = vld [vmem:[#allocation2] sm:$0xfe]
      %v6906 = vld [vmem:[#allocation2 + $0x60] sm:$0x1]
      %v6907 = vld [vmem:[%s2 + $0x3] sm:$0x1]
      %v6908 = vlaneseq
      %v6909 = vshrl.u32 %v6908, 7
      %v6910 = vsub.s32 0, %v6909
      %v6911 = vrot.slane %v6907, %v6910
      %v6912 = vmul.f32 %v6905, %v6911
      %v6913 = vmul.f32 %v6873, %v6911
      %v6914 = vmul.f32 %v6906, %v6911
      %vm6918 = vcmask 1046528
      %v6919 = vrot.slane %v6912, 1
      %v6920 = vrot.slane %v6913, 1
      %v6921 = vsel %vm6918, %v6919, %v6920
      %v6922 = vrot.slane %v6914, 1
      %v6923 = vsel %vm6918, %v6920, %v6922
      %v6926 = vadd.f32 %v6903, %v6921
      %v6927 = vadd.f32 %v6904, %v6923
      %v6928 = vld [vmem:[#allocation2 + $0x8] sm:$0xfe]
      %v6929 = vld [vmem:[#allocation2 + $0x68] sm:$0x1]
      %v6930 = vld [vmem:[%s2 + $0x4] sm:$0x1]
      %v6931 = vlaneseq
      %v6932 = vshrl.u32 %v6931, 7
      %v6933 = vsub.s32 0, %v6932
      %v6934 = vrot.slane %v6930, %v6933
      %v6935 = vmul.f32 %v6928, %v6934
      %v6936 = vmul.f32 %v6884, %v6934
      %v6937 = vmul.f32 %v6929, %v6934
      %v6941 = vrot.slane %v6935, 1
      %v6942 = vrot.slane %v6936, 1
      %v6943 = vsel %vm6918, %v6941, %v6942
      %v6944 = vrot.slane %v6937, 1
      %v6945 = vsel %vm6918, %v6942, %v6944
      %v6948 = vadd.f32 %v6926, %v6943
      %v6949 = vadd.f32 %v6927, %v6945
      %v6950 = vld [vmem:[#allocation2 + $0x10] sm:$0xfe]
      %v6951 = vld [vmem:[#allocation2 + $0x70] sm:$0x1]
      %v6952 = vld [vmem:[%s2 + $0x5] sm:$0x1]
      %v6953 = vlaneseq
      %v6954 = vshrl.u32 %v6953, 7
      %v6955 = vsub.s32 0, %v6954
      %v6956 = vrot.slane %v6952, %v6955
      %v6957 = vmul.f32 %v6950, %v6956
      %v6958 = vmul.f32 %v6895, %v6956
      %v6959 = vmul.f32 %v6951, %v6956
      %v6963 = vrot.slane %v6957, 1
      %v6964 = vrot.slane %v6958, 1
      %v6965 = vsel %vm6918, %v6963, %v6964
      %v6966 = vrot.slane %v6959, 1
      %v6967 = vsel %vm6918, %v6964, %v6966
      %v6970 = vadd.f32 %v6948, %v6965
      %v6971 = vadd.f32 %v6949, %v6967
      %v6972 = vld [vmem:[#allocation2] sm:$0xfc]
      %v6973 = vld [vmem:[#allocation2 + $0x60] sm:$0x3]
      %v6974 = vld [vmem:[%s2 + $0x6] sm:$0x1]
      %v6975 = vlaneseq
      %v6976 = vshrl.u32 %v6975, 7
      %v6977 = vsub.s32 0, %v6976
      %v6978 = vrot.slane %v6974, %v6977
      %v6979 = vmul.f32 %v6972, %v6978
      %v6980 = vmul.f32 %v6873, %v6978
      %v6981 = vmul.f32 %v6973, %v6978
      %vm6985 = vcmask 1045504
      %v6986 = vrot.slane %v6979, 2
      %v6987 = vrot.slane %v6980, 2
      %v6988 = vsel %vm6985, %v6986, %v6987
      %v6989 = vrot.slane %v6981, 2
      %v6990 = vsel %vm6985, %v6987, %v6989
      %v6993 = vadd.f32 %v6970, %v6988
      %v6994 = vadd.f32 %v6971, %v6990
      %v6995 = vld [vmem:[#allocation2 + $0x8] sm:$0xfc]
      %v6996 = vld [vmem:[#allocation2 + $0x68] sm:$0x3]
      %v6997 = vld [vmem:[%s2 + $0x7] sm:$0x1]
      %v6998 = vlaneseq
      %v6999 = vshrl.u32 %v6998, 7
      %v7000 = vsub.s32 0, %v6999
      %v7001 = vrot.slane %v6997, %v7000
      %v7002 = vmul.f32 %v6995, %v7001
      %v7003 = vmul.f32 %v6884, %v7001
      %v7004 = vmul.f32 %v6996, %v7001
      %v7008 = vrot.slane %v7002, 2
      %v7009 = vrot.slane %v7003, 2
      %v7010 = vsel %vm6985, %v7008, %v7009
      %v7011 = vrot.slane %v7004, 2
      %v7012 = vsel %vm6985, %v7009, %v7011
      %v7015 = vadd.f32 %v6993, %v7010
      %v7016 = vadd.f32 %v6994, %v7012
      %v7017 = vld [vmem:[#allocation2 + $0x10] sm:$0xfc]
      %v7018 = vld [vmem:[#allocation2 + $0x70] sm:$0x3]
      %v7019 = vld [vmem:[%s2 + $0x8] sm:$0x1]
      %v7020 = vlaneseq
      %v7021 = vshrl.u32 %v7020, 7
      %v7022 = vsub.s32 0, %v7021
      %v7023 = vrot.slane %v7019, %v7022
      %v7024 = vmul.f32 %v7017, %v7023
      %v7025 = vmul.f32 %v6895, %v7023
      %v7026 = vmul.f32 %v7018, %v7023
      %v7030 = vrot.slane %v7024, 2
      %v7031 = vrot.slane %v7025, 2
      %v7032 = vsel %vm6985, %v7030, %v7031
      %v7033 = vrot.slane %v7026, 2
      %v7034 = vsel %vm6985, %v7031, %v7033
      %v7037 = vadd.f32 %v7015, %v7032
      %v7038 = vadd.f32 %v7016, %v7034
      %v7039 = vld [vmem:[#allocation2 + $0x18] sm:$0xff]
      %v7040 = vld [vmem:[#allocation2 + $0x48] sm:$0xff]
      %s7041 = scalar_lea.vmem %s2, 16
      %v7042 = vld [vmem:[%s7041] sm:$0x1]
      %v7043 = vlaneseq
      %v7044 = vshrl.u32 %v7043, 7
      %v7045 = vsub.s32 0, %v7044
      %v7046 = vrot.slane %v7042, %v7045
      %v7047 = vmul.f32 %v7039, %v7046
      %v7048 = vmul.f32 %v7040, %v7046
      %v7049 = vadd.f32 %v7037, %v7047
      %v7050 = vadd.f32 %v7038, %v7048
      %v7051 = vld [vmem:[#allocation2 + $0x20] sm:$0xff]
      %v7052 = vld [vmem:[#allocation2 + $0x50] sm:$0xff]
      %v7053 = vld [vmem:[%s7041 + $0x1] sm:$0x1]
      %v7054 = vlaneseq
      %v7055 = vshrl.u32 %v7054, 7
      %v7056 = vsub.s32 0, %v7055
      %v7057 = vrot.slane %v7053, %v7056
      %v7058 = vmul.f32 %v7051, %v7057
      %v7059 = vmul.f32 %v7052, %v7057
      %v7060 = vadd.f32 %v7049, %v7058
      %v7061 = vadd.f32 %v7050, %v7059
      %v7062 = vld [vmem:[#allocation2 + $0x28] sm:$0xff]
      %v7063 = vld [vmem:[#allocation2 + $0x58] sm:$0xff]
      %v7064 = vld [vmem:[%s7041 + $0x2] sm:$0x1]
      %v7065 = vlaneseq
      %v7066 = vshrl.u32 %v7065, 7
      %v7067 = vsub.s32 0, %v7066
      %v7068 = vrot.slane %v7064, %v7067
      %v7069 = vmul.f32 %v7062, %v7068
      %v7070 = vmul.f32 %v7063, %v7068
      %v7071 = vadd.f32 %v7060, %v7069
      %v7072 = vadd.f32 %v7061, %v7070
      %v7073 = vld [vmem:[#allocation2 + $0x18] sm:$0xfe]
      %v7074 = vld [vmem:[#allocation2 + $0x78] sm:$0x1]
      %v7075 = vld [vmem:[%s7041 + $0x3] sm:$0x1]
      %v7076 = vlaneseq
      %v7077 = vshrl.u32 %v7076, 7
      %v7078 = vsub.s32 0, %v7077
      %v7079 = vrot.slane %v7075, %v7078
      %v7080 = vmul.f32 %v7073, %v7079
      %v7081 = vmul.f32 %v7040, %v7079
      %v7082 = vmul.f32 %v7074, %v7079
      %v7086 = vrot.slane %v7080, 1
      %v7087 = vrot.slane %v7081, 1
      %v7088 = vsel %vm6918, %v7086, %v7087
      %v7089 = vrot.slane %v7082, 1
      %v7090 = vsel %vm6918, %v7087, %v7089
      %v7093 = vadd.f32 %v7071, %v7088
      %v7094 = vadd.f32 %v7072, %v7090
      %v7095 = vld [vmem:[#allocation2 + $0x20] sm:$0xfe]
      %v7096 = vld [vmem:[#allocation2 + $0x80] sm:$0x1]
      %v7097 = vld [vmem:[%s7041 + $0x4] sm:$0x1]
      %v7098 = vlaneseq
      %v7099 = vshrl.u32 %v7098, 7
      %v7100 = vsub.s32 0, %v7099
      %v7101 = vrot.slane %v7097, %v7100
      %v7102 = vmul.f32 %v7095, %v7101
      %v7103 = vmul.f32 %v7052, %v7101
      %v7104 = vmul.f32 %v7096, %v7101
      %v7108 = vrot.slane %v7102, 1
      %v7109 = vrot.slane %v7103, 1
      %v7110 = vsel %vm6918, %v7108, %v7109
      %v7111 = vrot.slane %v7104, 1
      %v7112 = vsel %vm6918, %v7109, %v7111
      %v7115 = vadd.f32 %v7093, %v7110
      %v7116 = vadd.f32 %v7094, %v7112
      %v7117 = vld [vmem:[#allocation2 + $0x28] sm:$0xfe]
      %v7118 = vld [vmem:[#allocation2 + $0x88] sm:$0x1]
      %v7119 = vld [vmem:[%s7041 + $0x5] sm:$0x1]
      %v7120 = vlaneseq
      %v7121 = vshrl.u32 %v7120, 7
      %v7122 = vsub.s32 0, %v7121
      %v7123 = vrot.slane %v7119, %v7122
      %v7124 = vmul.f32 %v7117, %v7123
      %v7125 = vmul.f32 %v7063, %v7123
      %v7126 = vmul.f32 %v7118, %v7123
      %v7130 = vrot.slane %v7124, 1
      %v7131 = vrot.slane %v7125, 1
      %v7132 = vsel %vm6918, %v7130, %v7131
      %v7133 = vrot.slane %v7126, 1
      %v7134 = vsel %vm6918, %v7131, %v7133
      %v7137 = vadd.f32 %v7115, %v7132
      %v7138 = vadd.f32 %v7116, %v7134
      %v7139 = vld [vmem:[#allocation2 + $0x18] sm:$0xfc]
      %v7140 = vld [vmem:[#allocation2 + $0x78] sm:$0x3]
      %v7141 = vld [vmem:[%s7041 + $0x6] sm:$0x1]
      %v7142 = vlaneseq
      %v7143 = vshrl.u32 %v7142, 7
      %v7144 = vsub.s32 0, %v7143
      %v7145 = vrot.slane %v7141, %v7144
      %v7146 = vmul.f32 %v7139, %v7145
      %v7147 = vmul.f32 %v7040, %v7145
      %v7148 = vmul.f32 %v7140, %v7145
      %v7152 = vrot.slane %v7146, 2
      %v7153 = vrot.slane %v7147, 2
      %v7154 = vsel %vm6985, %v7152, %v7153
      %v7155 = vrot.slane %v7148, 2
      %v7156 = vsel %vm6985, %v7153, %v7155
      %v7159 = vadd.f32 %v7137, %v7154
      %v7160 = vadd.f32 %v7138, %v7156
      %v7161 = vld [vmem:[#allocation2 + $0x20] sm:$0xfc]
      %v7162 = vld [vmem:[#allocation2 + $0x80] sm:$0x3]
      %v7163 = vld [vmem:[%s7041 + $0x7] sm:$0x1]
      %v7164 = vlaneseq
      %v7165 = vshrl.u32 %v7164, 7
      %v7166 = vsub.s32 0, %v7165
      %v7167 = vrot.slane %v7163, %v7166
      %v7168 = vmul.f32 %v7161, %v7167
      %v7169 = vmul.f32 %v7052, %v7167
      %v7170 = vmul.f32 %v7162, %v7167
      %v7174 = vrot.slane %v7168, 2
      %v7175 = vrot.slane %v7169, 2
      %v7176 = vsel %vm6985, %v7174, %v7175
      %v7177 = vrot.slane %v7170, 2
      %v7178 = vsel %vm6985, %v7175, %v7177
      %v7181 = vadd.f32 %v7159, %v7176
      %v7182 = vadd.f32 %v7160, %v7178
      %v7183 = vld [vmem:[#allocation2 + $0x28] sm:$0xfc]
      %v7184 = vld [vmem:[#allocation2 + $0x88] sm:$0x3]
      %v7185 = vld [vmem:[%s7041 + $0x8] sm:$0x1]
      %v7186 = vlaneseq
      %v7187 = vshrl.u32 %v7186, 7
      %v7188 = vsub.s32 0, %v7187
      %v7189 = vrot.slane %v7185, %v7188
      %v7190 = vmul.f32 %v7183, %v7189
      %v7191 = vmul.f32 %v7063, %v7189
      %v7192 = vmul.f32 %v7184, %v7189
      %v7196 = vrot.slane %v7190, 2
      %v7197 = vrot.slane %v7191, 2
      %v7198 = vsel %vm6985, %v7196, %v7197
      %v7199 = vrot.slane %v7192, 2
      %v7200 = vsel %vm6985, %v7197, %v7199
      %v7203 = vadd.f32 %v7181, %v7198
      %v7204 = vadd.f32 %v7182, %v7200
      %7205 = vst [vmem:[%s197] sm:$0xff] %v7203
      %7206 = vst [vmem:[%s197 + $0x8] sm:$0xff] %v7204
      %p7207 = scmp.lt.s32.totalorder %s15, 1
      %s7208 = scalar_select %p7207, %s15, 1
      %s7209 = smul.addr %s7208, 2
      %s7210 = smul.addr %s7209, 8
      %s7211 = scalar_lea.vmem %s4, %s7210
      // Predicated region
      $region37: #{multipath_conv.1} parent=35 // pred_check
        %p7212 = pneg %p122
      $region38: #{multipath_conv.1} parent=35 // pred_check_branch
        %7214 = sbr.rel (%p7212) target = $region40
      $region39: #{multipath_conv.1} parent=35 // pred_region
        _
      $region40: #{multipath_conv.1} parent=35 // pred_fallthru
        _
    $region36: #{multipath_conv.1} parent=5 // pred_fallthru
      _
    %p7215 = scmp.le.s32.totalorder 2, %s10
    // Predicated region
    $region41: #{multipath_conv.1} parent=5 // pred_check
      %p7216 = pneg %p7215
    $region42: #{multipath_conv.1} parent=5 // pred_check_branch
      %7218 = sbr.rel (%p7216) target = $region44
    $region43: #{multipath_conv.1} parent=5 // pred_region
      %s7219 = ssub.s32 %s10, 2
      // Predicated region
      $region45: #{multipath_conv.1} parent=43 // pred_check
        %p7220 = pneg %p128
      $region46: #{multipath_conv.1} parent=43 // pred_check_branch
        %7222 = sbr.rel (%p7220) target = $region48
      $region47: #{multipath_conv.1} parent=43 // pred_region
        %p7223 = scmp.lt.s32.totalorder %s16, 1
        %s7224 = scalar_select %p7223, %s16, 1
        %s7225 = smul.addr %s7224, 2
        %s7226 = smul.addr %s7225, 8
        %s7227 = scalar_lea.vmem %s4, %s7226
      $region48: #{multipath_conv.1} parent=43 // pred_fallthru
        _
    $region44: #{multipath_conv.1} parent=5 // pred_fallthru
      _
  $region6: #{multipath_conv.1} parent=0 // loop_footer
    %s14 = sadd.s32 1, %s10
  $region7: #{multipath_conv.1} parent=0 // loop_footer_branch
    %9 = sbr.rel target = $region3
  $region8: #{multipath_conv.1} parent=0 // loop_exit
    _

</llo_original>
